<compile_context>
chip_gen: v7x
topology: tpu7x:2x2x1
jax: 0.10.0
libtpu: 0.0.40
codegen_flags: <defaults>
</compile_context>

<pallas_src>
import math
from functools import partial

import jax
import jax.numpy as jnp
from jax.experimental import pallas as pl
from jax.experimental.pallas import tpu as pltpu

LN_EPS = 1e-5     # nn.LayerNorm default eps
_HAS_BUFFERED = hasattr(pl, "Buffered")

PARAM_ORDER = (
    "wqkv1", "bqkv1", "wo1", "bo1",
    "wq2", "bq2", "wkv2", "bkv2", "wo2", "bo2",
    "w1", "b1", "w2", "b2",
    "g1", "be1", "g2", "be2",
)


# ----------------------------- shared math (used in-kernel and by the ref) ---

def _bf16(x):
    return x.astype(jnp.bfloat16)


def _softmax_lastdim(s, in_kernel):
    s = s - jnp.max(s, axis=-1, keepdims=True)
    p = jnp.exp(s)
    denom = jnp.sum(p, axis=-1, keepdims=True)
    if in_kernel:
        return p * pl.reciprocal(denom, approx=True)   # EUP slot, otherwise idle
    return p / denom


def _layernorm(x2, gamma, beta):
    mu = jnp.mean(x2, axis=-1, keepdims=True)
    var = jnp.mean((x2 - mu) ** 2, axis=-1, keepdims=True)
    return (x2 - mu) * jax.lax.rsqrt(var + LN_EPS) * gamma + beta


def _attention_heads(q, k, v, nhead, in_kernel, slab_ref=None):
    """Scaled-dot-product attention (scale already folded into q).

    q: (Bt, Sq, D) bf16, k/v: (Bt, Sk, D) bf16 -> (Bt*Sq, D) bf16 with all
    heads lane-concatenated, ready for ONE full-width output projection."""
    Bt, Sq, D = q.shape
    Dh = D // nhead
    heads = []
    for h in range(nhead):
        lo = h * Dh
        s = jnp.einsum("bqd,bkd->bqk", q[:, :, lo:lo + Dh], k[:, :, lo:lo + Dh],
                       preferred_element_type=jnp.float32)
        p = _softmax_lastdim(s, in_kernel)
        oh = jnp.einsum("bqk,bkd->bqd", _bf16(p), v[:, :, lo:lo + Dh],
                        preferred_element_type=jnp.float32)
        oh = _bf16(oh).reshape(Bt * Sq, Dh)
        if slab_ref is not None:
            # Head output goes into the VMEM slab at its lane offset; the
            # output projection then contracts over K = D in a single dot.
            slab_ref[:, lo:lo + Dh] = oh
        else:
            heads.append(oh)
    if slab_ref is not None:
        return slab_ref[...]
    return jnp.concatenate(heads, axis=-1)


def _self_attention(x, get, nhead, in_kernel, slab_ref):
    Bt, S, D = x.shape
    x2 = _bf16(x.reshape(Bt * S, D))
    # Fused Q/K/V projection: one (Bt*S, D) x (D, 3D) MXU matmul, f32 accumulate.
    qkv = _bf16(jnp.dot(x2, get("wqkv1"), preferred_element_type=jnp.float32)
                + get("bqkv1"))
    q = qkv[:, 0 * D:1 * D].reshape(Bt, S, D)
    k = qkv[:, 1 * D:2 * D].reshape(Bt, S, D)
    v = qkv[:, 2 * D:3 * D].reshape(Bt, S, D)
    o = _attention_heads(q, k, v, nhead, in_kernel, slab_ref)
    o = jnp.dot(o, get("wo1"), preferred_element_type=jnp.float32) + get("bo1")
    return o.reshape(Bt, S, D)


def _cross_attention(x, mem, get, nhead, in_kernel, slab_ref):
    Bt, S, D = x.shape
    Sm = mem.shape[1]
    x2 = _bf16(x.reshape(Bt * S, D))
    m2 = _bf16(mem.reshape(Bt * Sm, D))
    q = _bf16(jnp.dot(x2, get("wq2"), preferred_element_type=jnp.float32)
              + get("bq2")).reshape(Bt, S, D)
    # K and V share the same LHS (memory): fused (D, 2D) projection.
    kv = _bf16(jnp.dot(m2, get("wkv2"), preferred_element_type=jnp.float32)
               + get("bkv2"))
    k = kv[:, :D].reshape(Bt, Sm, D)
    v = kv[:, D:].reshape(Bt, Sm, D)
    o = _attention_heads(q, k, v, nhead, in_kernel, slab_ref)
    o = jnp.dot(o, get("wo2"), preferred_element_type=jnp.float32) + get("bo2")
    return o.reshape(Bt, S, D)


def _decoder_layer_math(x, mem, get, nhead, in_kernel, slab_ref=None):
    """Full forward for one batch block. x: (Bt, S, D), mem: (Bt, Sm, D)."""
    Bt, S, D = x.shape
    # self attention + residual
    x = x + _self_attention(x, get, nhead, in_kernel, slab_ref)
    # cross attention + residual
    x = x + _cross_attention(x, mem, get, nhead, in_kernel, slab_ref)
    # layer norm 1 (flattened 2-D view from here on)
    x2 = _layernorm(x.reshape(Bt * S, D), get("g1"), get("be1"))
    residual = x2
    # feed-forward; dropout p=0 and LeakyReLU(negative_slope=1.0) are identities.
    h = jnp.dot(_bf16(x2), get("w1"), preferred_element_type=jnp.float32) + get("b1")
    ff = jnp.dot(_bf16(h), get("w2"), preferred_element_type=jnp.float32) + get("b2")
    # Source module: tgt = tgt + tgt2; tgt = tgt + residual  (intentional
    # double-add of the LN1 output, mirrored here).
    x2 = x2 + ff + residual
    x2 = _layernorm(x2, get("g2"), get("be2"))
    return x2.reshape(Bt, S, D)


# ----------------------------------- Pallas kernel ---------------------------

def decoder_layer_kernel(nhead, *refs):
    tgt_ref, mem_ref = refs[0], refs[1]
    param_refs = dict(zip(PARAM_ORDER, refs[2:2 + len(PARAM_ORDER)]))
    out_ref, slab_ref = refs[-2], refs[-1]

    # Lazy parameter reads at point of use (shorter live ranges, less pressure).
    get = lambda name: param_refs[name][...]

    out_ref[...] = _decoder_layer_math(tgt_ref[...], mem_ref[...], get, nhead,
                                       in_kernel=True, slab_ref=slab_ref)


# ----------------------------------- weight prep (one-time, hoisted) ---------

def prepare_params(params, nhead):
    """One-time weight prep (hoisted out of the forward path): bf16 casts,
    fused QKV / KV weights, and the softmax 1/sqrt(Dh) scale folded into the
    Q projections."""
    D = params["wq1"].shape[0]
    Dh = D // nhead
    scale = 1.0 / math.sqrt(Dh)
    f32 = lambda a: a.astype(jnp.float32)
    p = {}
    p["wqkv1"] = _bf16(jnp.concatenate(
        [params["wq1"] * scale, params["wk1"], params["wv1"]], axis=1))
    p["bqkv1"] = f32(jnp.concatenate(
        [params["bq1"] * scale, params["bk1"], params["bv1"]], axis=1))
    p["wo1"], p["bo1"] = _bf16(params["wo1"]), f32(params["bo1"])
    p["wq2"], p["bq2"] = _bf16(params["wq2"] * scale), f32(params["bq2"] * scale)
    p["wkv2"] = _bf16(jnp.concatenate([params["wk2"], params["wv2"]], axis=1))
    p["bkv2"] = f32(jnp.concatenate([params["bk2"], params["bv2"]], axis=1))
    p["wo2"], p["bo2"] = _bf16(params["wo2"]), f32(params["bo2"])
    p["w1"], p["b1"] = _bf16(params["w1"]), f32(params["b1"])
    p["w2"], p["b2"] = _bf16(params["w2"]), f32(params["b2"])
    for k in ("g1", "be1", "g2", "be2"):
        p[k] = f32(params[k])
    return p


# ----------------------------------- topology helpers ------------------------

def _tpu_topology():
    """(tensorcores_per_chip, per-core VMEM capacity bytes), with safe fallbacks."""
    cores, vmem_cap = 1, 128 * 1024 * 1024
    try:
        info = pltpu.get_tpu_info()
        for attr in ("vmem_capacity_bytes", "vmem_size_bytes", "vmem_bytes"):
            v = getattr(info, attr, None)
            if v:
                vmem_cap = int(v)
                break
        for attr in ("num_cores", "tensorcores_per_chip", "num_tensorcores",
                     "core_count"):
            v = getattr(info, attr, None)
            if v:
                cores = int(v)
                break
    except Exception:
        pass
    try:
        kind = jax.devices()[0].device_kind.lower()
        if "v7" in kind or "tpu7" in kind:
            cores = max(cores, 2)                      # 2 TensorCores per v7x chip
            vmem_cap = min(vmem_cap, 64 * 1024 * 1024)
    except Exception:
        pass
    return cores, vmem_cap


# ----------------------------------- wrapper ----------------------------------

def transformer_decoder_layer(tgt, memory, prepared, nhead, block_b=None):
    B, S, D = tgt.shape
    Sm = memory.shape[1]
    cores, vmem_cap = _tpu_topology()
    if block_b is None:
        # Split the batch over the grid only where there are 2 TensorCores
        # (v7x); on single-TC chips (v5e/v6e) a multi-step grid is a serial
        # loop with per-step overhead and worse MXU row fill.
        block_b = B // cores if (cores > 1 and B % cores == 0) else B
        # TODO(synk): for B == 1 (or odd B) on 2-TC chips, add a second
        # parallel grid axis (tile S) so both TensorCores get work.
    assert B % block_b == 0
    grid = (B // block_b,)

    # Leave headroom for Mosaic internal scratch: ~48 MiB on v7x (64 MiB VMEM),
    # ~96 MiB on v5e/v6e (128 MiB VMEM).
    vmem_limit = int(max(32 * 1024 * 1024, (vmem_cap * 3) // 4))

    param_list = [prepared[k] for k in PARAM_ORDER]

    def build(single_buffer_weights):
        def weight_spec(a):
            nd = a.ndim
            idx = lambda b, _nd=nd: (0,) * _nd   # grid-invariant: never re-fetched
            if single_buffer_weights and _HAS_BUFFERED:
                # Grid-invariant weights: single-buffered so the pipeline does
                # not duplicate them in VMEM via default double-buffering.
                return pl.BlockSpec(a.shape, idx, pipeline_mode=pl.Buffered(1))
            return pl.BlockSpec(a.shape, idx)

        in_specs = (
            [pl.BlockSpec((block_b, S, D), lambda b: (b, 0, 0)),
             pl.BlockSpec((block_b, Sm, D), lambda b: (b, 0, 0))]
            + [weight_spec(a) for a in param_list]
        )
        out_spec = pl.BlockSpec((block_b, S, D), lambda b: (b, 0, 0))

        # TODO(synk): at production sizes keep D a multiple of 128 (lane-dense
        # stores) and stream w1/w2 with an inner pltpu.emit_pipeline if the
        # FFN weights do not comfortably fit resident VMEM.
        return pl.pallas_call(
            partial(decoder_layer_kernel, nhead),
            out_shape=jax.ShapeDtypeStruct((B, S, D), jnp.float32),
            grid=grid,
            in_specs=in_specs,
            out_specs=out_spec,
            scratch_shapes=[pltpu.VMEM((block_b * S, D), jnp.bfloat16)],
            compiler_params=pltpu.CompilerParams(
                dimension_semantics=("parallel",),   # batch steps independent
                vmem_limit_bytes=vmem_limit),
        )

    try:
        return build(True)(tgt, memory, *param_list)
    except Exception:
        # Fallback if this JAX version rejects single-buffered weight specs.
        return build(False)(tgt, memory, *param_list)


# ----------------------------------- parameter init --------------------------

def init_params(key, d_model, dim_feedforward):
    keys = jax.random.split(key, 24)
    ki = iter(keys)

    def lin(k, fan_in, fan_out):
        kw, kb = jax.random.split(k)
        bound = 1.0 / math.sqrt(fan_in)
        w = jax.random.uniform(kw, (fan_in, fan_out), jnp.float32, -bound, bound)
        b = jax.random.uniform(kb, (1, fan_out), jnp.float32, -bound, bound)
        return w, b

    p = {}
    # self attention projections
    p["wq1"], p["bq1"] = lin(next(ki), d_model, d_model)
    p["wk1"], p["bk1"] = lin(next(ki), d_model, d_model)
    p["wv1"], p["bv1"] = lin(next(ki), d_model, d_model)
    p["wo1"], p["bo1"] = lin(next(ki), d_model, d_model)
    # cross attention projections
    p["wq2"], p["bq2"] = lin(next(ki), d_model, d_model)
    p["wk2"], p["bk2"] = lin(next(ki), d_model, d_model)
    p["wv2"], p["bv2"] = lin(next(ki), d_model, d_model)
    p["wo2"], p["bo2"] = lin(next(ki), d_model, d_model)
    # feed-forward
    p["w1"], p["b1"] = lin(next(ki), d_model, dim_feedforward)
    p["w2"], p["b2"] = lin(next(ki), dim_feedforward, d_model)
    # layer norms (PyTorch default init: gamma=1, beta=0)
    p["g1"] = jnp.ones((1, d_model), jnp.float32)
    p["be1"] = jnp.zeros((1, d_model), jnp.float32)
    p["g2"] = jnp.ones((1, d_model), jnp.float32)
    p["be2"] = jnp.zeros((1, d_model), jnp.float32)
    return p


def reference_forward(tgt, memory, prepared, nhead):
    """Pure-JAX reference using the identical prepared (bf16-cast, fused) weights."""
    get = lambda name: prepared[name]
    return _decoder_layer_math(tgt, memory, get, nhead, in_kernel=False)


# ----------------------------------- main -------------------------------------

if __name__ == "__main__":
    B, S, D = 2, 8, 32      # batch, w_size (seq len), d_model
    nhead = 4
    dim_feedforward = D     # module default: dim_feedforward = d_model

    key = jax.random.PRNGKey(0)
    k_tgt, k_mem, k_par = jax.random.split(key, 3)
    tgt = jax.random.normal(k_tgt, (B, S, D), jnp.float32)
    memory = jax.random.normal(k_mem, (B, S, D), jnp.float32)
    params = init_params(k_par, D, dim_feedforward)

    # One-time weight prep (hoisted out of the forward path).
    prepared = jax.block_until_ready(prepare_params(params, nhead))

    out = jax.block_until_ready(transformer_decoder_layer(tgt, memory, prepared, nhead))
    ref = jax.block_until_ready(reference_forward(tgt, memory, prepared, nhead))

    assert out.shape == (B, S, D)
    # Kernel and reference share the exact bf16 math; remaining delta is the
    # approx reciprocal in the in-kernel softmax plus accumulation ordering.
    assert jnp.allclose(out, ref, atol=1e-2, rtol=1e-2), "mismatch vs JAX reference"

    print("KERNEL_OK")
</pallas_src>

<mosaic_0001>
module attributes {stable_mosaic.version = 11 : i64} {
  func.func @decoder_layer_kernel(%arg0: i32, %arg1: memref<2x8x32xf32, #tpu.memory_space<vmem>>, %arg2: memref<2x8x32xf32, #tpu.memory_space<vmem>>, %arg3: memref<32x96xbf16, #tpu.memory_space<vmem>>, %arg4: memref<1x96xf32, #tpu.memory_space<vmem>>, %arg5: memref<32x32xbf16, #tpu.memory_space<vmem>>, %arg6: memref<1x32xf32, #tpu.memory_space<vmem>>, %arg7: memref<32x32xbf16, #tpu.memory_space<vmem>>, %arg8: memref<1x32xf32, #tpu.memory_space<vmem>>, %arg9: memref<32x64xbf16, #tpu.memory_space<vmem>>, %arg10: memref<1x64xf32, #tpu.memory_space<vmem>>, %arg11: memref<32x32xbf16, #tpu.memory_space<vmem>>, %arg12: memref<1x32xf32, #tpu.memory_space<vmem>>, %arg13: memref<32x32xbf16, #tpu.memory_space<vmem>>, %arg14: memref<1x32xf32, #tpu.memory_space<vmem>>, %arg15: memref<32x32xbf16, #tpu.memory_space<vmem>>, %arg16: memref<1x32xf32, #tpu.memory_space<vmem>>, %arg17: memref<1x32xf32, #tpu.memory_space<vmem>>, %arg18: memref<1x32xf32, #tpu.memory_space<vmem>>, %arg19: memref<1x32xf32, #tpu.memory_space<vmem>>, %arg20: memref<1x32xf32, #tpu.memory_space<vmem>>, %arg21: memref<2x8x32xf32, #tpu.memory_space<vmem>>, %arg22: memref<16x32xbf16, #tpu.memory_space<vmem>>) attributes {dimension_semantics = [#tpu.dimension_semantics<parallel>], iteration_bounds = array<i64: 1>, scalar_prefetch = 0 : i64, scratch_operands = 1 : i64, tpu.core_type = #tpu.core_type<tc>, window_params = [{transform_indices = @transform_0, window_bounds = array<i64: 2, 8, 32>}, {transform_indices = @transform_1, window_bounds = array<i64: 2, 8, 32>}, {pipeline_mode = #tpu.pipeline_mode<synchronous>, transform_indices = @transform_2, window_bounds = array<i64: 32, 96>}, {pipeline_mode = #tpu.pipeline_mode<synchronous>, transform_indices = @transform_3, window_bounds = array<i64: 1, 96>}, {pipeline_mode = #tpu.pipeline_mode<synchronous>, transform_indices = @transform_4, window_bounds = array<i64: 32, 32>}, {pipeline_mode = #tpu.pipeline_mode<synchronous>, transform_indices = @transform_5, window_bounds = array<i64: 1, 32>}, {pipeline_mode = #tpu.pipeline_mode<synchronous>, transform_indices = @transform_6, window_bounds = array<i64: 32, 32>}, {pipeline_mode = #tpu.pipeline_mode<synchronous>, transform_indices = @transform_7, window_bounds = array<i64: 1, 32>}, {pipeline_mode = #tpu.pipeline_mode<synchronous>, transform_indices = @transform_8, window_bounds = array<i64: 32, 64>}, {pipeline_mode = #tpu.pipeline_mode<synchronous>, transform_indices = @transform_9, window_bounds = array<i64: 1, 64>}, {pipeline_mode = #tpu.pipeline_mode<synchronous>, transform_indices = @transform_10, window_bounds = array<i64: 32, 32>}, {pipeline_mode = #tpu.pipeline_mode<synchronous>, transform_indices = @transform_11, window_bounds = array<i64: 1, 32>}, {pipeline_mode = #tpu.pipeline_mode<synchronous>, transform_indices = @transform_12, window_bounds = array<i64: 32, 32>}, {pipeline_mode = #tpu.pipeline_mode<synchronous>, transform_indices = @transform_13, window_bounds = array<i64: 1, 32>}, {pipeline_mode = #tpu.pipeline_mode<synchronous>, transform_indices = @transform_14, window_bounds = array<i64: 32, 32>}, {pipeline_mode = #tpu.pipeline_mode<synchronous>, transform_indices = @transform_15, window_bounds = array<i64: 1, 32>}, {pipeline_mode = #tpu.pipeline_mode<synchronous>, transform_indices = @transform_16, window_bounds = array<i64: 1, 32>}, {pipeline_mode = #tpu.pipeline_mode<synchronous>, transform_indices = @transform_17, window_bounds = array<i64: 1, 32>}, {pipeline_mode = #tpu.pipeline_mode<synchronous>, transform_indices = @transform_18, window_bounds = array<i64: 1, 32>}, {pipeline_mode = #tpu.pipeline_mode<synchronous>, transform_indices = @transform_19, window_bounds = array<i64: 1, 32>}, {transform_indices = @transform_20, window_bounds = array<i64: 2, 8, 32>}]} {
    %c0 = arith.constant 0 : index
    %c0_0 = arith.constant 0 : index
    %c0_1 = arith.constant 0 : index
    %0 = vector.load %arg1[%c0, %c0_0, %c0_1] : memref<2x8x32xf32, #tpu.memory_space<vmem>>, vector<2x8x32xf32>
    %c0_2 = arith.constant 0 : index
    %c0_3 = arith.constant 0 : index
    %c0_4 = arith.constant 0 : index
    %1 = vector.load %arg2[%c0_2, %c0_3, %c0_4] : memref<2x8x32xf32, #tpu.memory_space<vmem>>, vector<2x8x32xf32>
    %2 = vector.shape_cast %0 : vector<2x8x32xf32> to vector<16x32xf32>
    %3 = arith.truncf %2 : vector<16x32xf32> to vector<16x32xbf16>
    %c0_5 = arith.constant 0 : index
    %c0_6 = arith.constant 0 : index
    %4 = vector.load %arg3[%c0_5, %c0_6] : memref<32x96xbf16, #tpu.memory_space<vmem>>, vector<32x96xbf16>
    %cst = arith.constant dense<0.000000e+00> : vector<16x96xf32>
    %5 = tpu.matmul %3, %4, %cst {dimension_numbers = #tpu.dot_dimension_numbers<[1], [0], [0], [1], [0, 0, 1, 1], [], []>} : vector<16x32xbf16>, vector<32x96xbf16>, vector<16x96xf32> -> vector<16x96xf32>
    %c0_7 = arith.constant 0 : index
    %c0_8 = arith.constant 0 : index
    %6 = vector.load %arg4[%c0_7, %c0_8] : memref<1x96xf32, #tpu.memory_space<vmem>>, vector<1x96xf32>
    %7 = vector.broadcast %6 : vector<1x96xf32> to vector<16x96xf32>
    %8 = arith.addf %5, %7 : vector<16x96xf32>
    %9 = arith.truncf %8 : vector<16x96xf32> to vector<16x96xbf16>
    %10 = vector.extract_strided_slice %9 {offsets = [0, 0], sizes = [16, 32], strides = [1, 1]} : vector<16x96xbf16> to vector<16x32xbf16>
    %11 = vector.shape_cast %10 : vector<16x32xbf16> to vector<2x8x32xbf16>
    %12 = vector.extract_strided_slice %9 {offsets = [0, 32], sizes = [16, 32], strides = [1, 1]} : vector<16x96xbf16> to vector<16x32xbf16>
    %13 = vector.shape_cast %12 : vector<16x32xbf16> to vector<2x8x32xbf16>
    %14 = vector.extract_strided_slice %9 {offsets = [0, 64], sizes = [16, 32], strides = [1, 1]} : vector<16x96xbf16> to vector<16x32xbf16>
    %15 = vector.shape_cast %14 : vector<16x32xbf16> to vector<2x8x32xbf16>
    %16 = vector.extract_strided_slice %11 {offsets = [0, 0, 0], sizes = [2, 8, 8], strides = [1, 1, 1]} : vector<2x8x32xbf16> to vector<2x8x8xbf16>
    %17 = vector.extract_strided_slice %13 {offsets = [0, 0, 0], sizes = [2, 8, 8], strides = [1, 1, 1]} : vector<2x8x32xbf16> to vector<2x8x8xbf16>
    "tpu.trace_start"() <{level = 10 : i32, message = "bqd,bkd->bqk"}> : () -> ()
    %cst_9 = arith.constant dense<0.000000e+00> : vector<2x8x8xf32>
    %18 = tpu.matmul %16, %17, %cst_9 {dimension_numbers = #tpu.dot_dimension_numbers<[2], [2], [1], [1], [0, 0, 0, 1, 1, 1], [0], [0]>} : vector<2x8x8xbf16>, vector<2x8x8xbf16>, vector<2x8x8xf32> -> vector<2x8x8xf32>
    "tpu.trace_stop"() : () -> ()
    %cst_10 = arith.constant dense<0xFF800000> : vector<2x8xf32>
    %19 = vector.multi_reduction <maximumf>, %18, %cst_10 [2] : vector<2x8x8xf32> to vector<2x8xf32>
    %20 = vector.shape_cast %19 : vector<2x8xf32> to vector<2x8x1xf32>
    %21 = vector.broadcast %20 : vector<2x8x1xf32> to vector<2x8x8xf32>
    %22 = arith.subf %18, %21 : vector<2x8x8xf32>
    %23 = math.exp %22 : vector<2x8x8xf32>
    %cst_11 = arith.constant dense<0.000000e+00> : vector<2x8xf32>
    %24 = vector.multi_reduction <add>, %23, %cst_11 [2] : vector<2x8x8xf32> to vector<2x8xf32>
    %25 = vector.shape_cast %24 : vector<2x8xf32> to vector<2x8x1xf32>
    %26 = tpu.reciprocal %25 {approx = true} : vector<2x8x1xf32> -> vector<2x8x1xf32>
    %27 = vector.broadcast %26 : vector<2x8x1xf32> to vector<2x8x8xf32>
    %28 = arith.mulf %23, %27 : vector<2x8x8xf32>
    %29 = arith.truncf %28 : vector<2x8x8xf32> to vector<2x8x8xbf16>
    %30 = vector.extract_strided_slice %15 {offsets = [0, 0, 0], sizes = [2, 8, 8], strides = [1, 1, 1]} : vector<2x8x32xbf16> to vector<2x8x8xbf16>
    "tpu.trace_start"() <{level = 10 : i32, message = "bqk,bkd->bqd"}> : () -> ()
    %cst_12 = arith.constant dense<0.000000e+00> : vector<2x8x8xf32>
    %31 = tpu.matmul %29, %30, %cst_12 {dimension_numbers = #tpu.dot_dimension_numbers<[2], [1], [1], [2], [0, 0, 0, 1, 1, 2], [0], [0]>} : vector<2x8x8xbf16>, vector<2x8x8xbf16>, vector<2x8x8xf32> -> vector<2x8x8xf32>
    "tpu.trace_stop"() : () -> ()
    %32 = arith.truncf %31 : vector<2x8x8xf32> to vector<2x8x8xbf16>
    %33 = vector.shape_cast %32 : vector<2x8x8xbf16> to vector<16x8xbf16>
    %c0_13 = arith.constant 0 : index
    %c0_14 = arith.constant 0 : index
    %34 = vector.load %arg22[%c0_13, %c0_14] : memref<16x32xbf16, #tpu.memory_space<vmem>>, vector<16x8xbf16>
    tpu.vector_store %arg22[%c0_13, %c0_14], %33 {strides = array<i32>} : memref<16x32xbf16, #tpu.memory_space<vmem>>, vector<16x8xbf16>,
    %35 = vector.extract_strided_slice %11 {offsets = [0, 0, 8], sizes = [2, 8, 8], strides = [1, 1, 1]} : vector<2x8x32xbf16> to vector<2x8x8xbf16>
    %36 = vector.extract_strided_slice %13 {offsets = [0, 0, 8], sizes = [2, 8, 8], strides = [1, 1, 1]} : vector<2x8x32xbf16> to vector<2x8x8xbf16>
    "tpu.trace_start"() <{level = 10 : i32, message = "bqd,bkd->bqk"}> : () -> ()
    %cst_15 = arith.constant dense<0.000000e+00> : vector<2x8x8xf32>
    %37 = tpu.matmul %35, %36, %cst_15 {dimension_numbers = #tpu.dot_dimension_numbers<[2], [2], [1], [1], [0, 0, 0, 1, 1, 1], [0], [0]>} : vector<2x8x8xbf16>, vector<2x8x8xbf16>, vector<2x8x8xf32> -> vector<2x8x8xf32>
    "tpu.trace_stop"() : () -> ()
    %cst_16 = arith.constant dense<0xFF800000> : vector<2x8xf32>
    %38 = vector.multi_reduction <maximumf>, %37, %cst_16 [2] : vector<2x8x8xf32> to vector<2x8xf32>
    %39 = vector.shape_cast %38 : vector<2x8xf32> to vector<2x8x1xf32>
    %40 = vector.broadcast %39 : vector<2x8x1xf32> to vector<2x8x8xf32>
    %41 = arith.subf %37, %40 : vector<2x8x8xf32>
    %42 = math.exp %41 : vector<2x8x8xf32>
    %cst_17 = arith.constant dense<0.000000e+00> : vector<2x8xf32>
    %43 = vector.multi_reduction <add>, %42, %cst_17 [2] : vector<2x8x8xf32> to vector<2x8xf32>
    %44 = vector.shape_cast %43 : vector<2x8xf32> to vector<2x8x1xf32>
    %45 = tpu.reciprocal %44 {approx = true} : vector<2x8x1xf32> -> vector<2x8x1xf32>
    %46 = vector.broadcast %45 : vector<2x8x1xf32> to vector<2x8x8xf32>
    %47 = arith.mulf %42, %46 : vector<2x8x8xf32>
    %48 = arith.truncf %47 : vector<2x8x8xf32> to vector<2x8x8xbf16>
    %49 = vector.extract_strided_slice %15 {offsets = [0, 0, 8], sizes = [2, 8, 8], strides = [1, 1, 1]} : vector<2x8x32xbf16> to vector<2x8x8xbf16>
    "tpu.trace_start"() <{level = 10 : i32, message = "bqk,bkd->bqd"}> : () -> ()
    %cst_18 = arith.constant dense<0.000000e+00> : vector<2x8x8xf32>
    %50 = tpu.matmul %48, %49, %cst_18 {dimension_numbers = #tpu.dot_dimension_numbers<[2], [1], [1], [2], [0, 0, 0, 1, 1, 2], [0], [0]>} : vector<2x8x8xbf16>, vector<2x8x8xbf16>, vector<2x8x8xf32> -> vector<2x8x8xf32>
    "tpu.trace_stop"() : () -> ()
    %51 = arith.truncf %50 : vector<2x8x8xf32> to vector<2x8x8xbf16>
    %52 = vector.shape_cast %51 : vector<2x8x8xbf16> to vector<16x8xbf16>
    %c0_19 = arith.constant 0 : index
    %c8 = arith.constant 8 : index
    %53 = vector.load %arg22[%c0_19, %c8] : memref<16x32xbf16, #tpu.memory_space<vmem>>, vector<16x8xbf16>
    tpu.vector_store %arg22[%c0_19, %c8], %52 {strides = array<i32>} : memref<16x32xbf16, #tpu.memory_space<vmem>>, vector<16x8xbf16>,
    %54 = vector.extract_strided_slice %11 {offsets = [0, 0, 16], sizes = [2, 8, 8], strides = [1, 1, 1]} : vector<2x8x32xbf16> to vector<2x8x8xbf16>
    %55 = vector.extract_strided_slice %13 {offsets = [0, 0, 16], sizes = [2, 8, 8], strides = [1, 1, 1]} : vector<2x8x32xbf16> to vector<2x8x8xbf16>
    "tpu.trace_start"() <{level = 10 : i32, message = "bqd,bkd->bqk"}> : () -> ()
    %cst_20 = arith.constant dense<0.000000e+00> : vector<2x8x8xf32>
    %56 = tpu.matmul %54, %55, %cst_20 {dimension_numbers = #tpu.dot_dimension_numbers<[2], [2], [1], [1], [0, 0, 0, 1, 1, 1], [0], [0]>} : vector<2x8x8xbf16>, vector<2x8x8xbf16>, vector<2x8x8xf32> -> vector<2x8x8xf32>
    "tpu.trace_stop"() : () -> ()
    %cst_21 = arith.constant dense<0xFF800000> : vector<2x8xf32>
    %57 = vector.multi_reduction <maximumf>, %56, %cst_21 [2] : vector<2x8x8xf32> to vector<2x8xf32>
    %58 = vector.shape_cast %57 : vector<2x8xf32> to vector<2x8x1xf32>
    %59 = vector.broadcast %58 : vector<2x8x1xf32> to vector<2x8x8xf32>
    %60 = arith.subf %56, %59 : vector<2x8x8xf32>
    %61 = math.exp %60 : vector<2x8x8xf32>
    %cst_22 = arith.constant dense<0.000000e+00> : vector<2x8xf32>
    %62 = vector.multi_reduction <add>, %61, %cst_22 [2] : vector<2x8x8xf32> to vector<2x8xf32>
    %63 = vector.shape_cast %62 : vector<2x8xf32> to vector<2x8x1xf32>
    %64 = tpu.reciprocal %63 {approx = true} : vector<2x8x1xf32> -> vector<2x8x1xf32>
    %65 = vector.broadcast %64 : vector<2x8x1xf32> to vector<2x8x8xf32>
    %66 = arith.mulf %61, %65 : vector<2x8x8xf32>
    %67 = arith.truncf %66 : vector<2x8x8xf32> to vector<2x8x8xbf16>
    %68 = vector.extract_strided_slice %15 {offsets = [0, 0, 16], sizes = [2, 8, 8], strides = [1, 1, 1]} : vector<2x8x32xbf16> to vector<2x8x8xbf16>
    "tpu.trace_start"() <{level = 10 : i32, message = "bqk,bkd->bqd"}> : () -> ()
    %cst_23 = arith.constant dense<0.000000e+00> : vector<2x8x8xf32>
    %69 = tpu.matmul %67, %68, %cst_23 {dimension_numbers = #tpu.dot_dimension_numbers<[2], [1], [1], [2], [0, 0, 0, 1, 1, 2], [0], [0]>} : vector<2x8x8xbf16>, vector<2x8x8xbf16>, vector<2x8x8xf32> -> vector<2x8x8xf32>
    "tpu.trace_stop"() : () -> ()
    %70 = arith.truncf %69 : vector<2x8x8xf32> to vector<2x8x8xbf16>
    %71 = vector.shape_cast %70 : vector<2x8x8xbf16> to vector<16x8xbf16>
    %c0_24 = arith.constant 0 : index
    %c16 = arith.constant 16 : index
    %72 = vector.load %arg22[%c0_24, %c16] : memref<16x32xbf16, #tpu.memory_space<vmem>>, vector<16x8xbf16>
    tpu.vector_store %arg22[%c0_24, %c16], %71 {strides = array<i32>} : memref<16x32xbf16, #tpu.memory_space<vmem>>, vector<16x8xbf16>,
    %73 = vector.extract_strided_slice %11 {offsets = [0, 0, 24], sizes = [2, 8, 8], strides = [1, 1, 1]} : vector<2x8x32xbf16> to vector<2x8x8xbf16>
    %74 = vector.extract_strided_slice %13 {offsets = [0, 0, 24], sizes = [2, 8, 8], strides = [1, 1, 1]} : vector<2x8x32xbf16> to vector<2x8x8xbf16>
    "tpu.trace_start"() <{level = 10 : i32, message = "bqd,bkd->bqk"}> : () -> ()
    %cst_25 = arith.constant dense<0.000000e+00> : vector<2x8x8xf32>
    %75 = tpu.matmul %73, %74, %cst_25 {dimension_numbers = #tpu.dot_dimension_numbers<[2], [2], [1], [1], [0, 0, 0, 1, 1, 1], [0], [0]>} : vector<2x8x8xbf16>, vector<2x8x8xbf16>, vector<2x8x8xf32> -> vector<2x8x8xf32>
    "tpu.trace_stop"() : () -> ()
    %cst_26 = arith.constant dense<0xFF800000> : vector<2x8xf32>
    %76 = vector.multi_reduction <maximumf>, %75, %cst_26 [2] : vector<2x8x8xf32> to vector<2x8xf32>
    %77 = vector.shape_cast %76 : vector<2x8xf32> to vector<2x8x1xf32>
    %78 = vector.broadcast %77 : vector<2x8x1xf32> to vector<2x8x8xf32>
    %79 = arith.subf %75, %78 : vector<2x8x8xf32>
    %80 = math.exp %79 : vector<2x8x8xf32>
    %cst_27 = arith.constant dense<0.000000e+00> : vector<2x8xf32>
    %81 = vector.multi_reduction <add>, %80, %cst_27 [2] : vector<2x8x8xf32> to vector<2x8xf32>
    %82 = vector.shape_cast %81 : vector<2x8xf32> to vector<2x8x1xf32>
    %83 = tpu.reciprocal %82 {approx = true} : vector<2x8x1xf32> -> vector<2x8x1xf32>
    %84 = vector.broadcast %83 : vector<2x8x1xf32> to vector<2x8x8xf32>
    %85 = arith.mulf %80, %84 : vector<2x8x8xf32>
    %86 = arith.truncf %85 : vector<2x8x8xf32> to vector<2x8x8xbf16>
    %87 = vector.extract_strided_slice %15 {offsets = [0, 0, 24], sizes = [2, 8, 8], strides = [1, 1, 1]} : vector<2x8x32xbf16> to vector<2x8x8xbf16>
    "tpu.trace_start"() <{level = 10 : i32, message = "bqk,bkd->bqd"}> : () -> ()
    %cst_28 = arith.constant dense<0.000000e+00> : vector<2x8x8xf32>
    %88 = tpu.matmul %86, %87, %cst_28 {dimension_numbers = #tpu.dot_dimension_numbers<[2], [1], [1], [2], [0, 0, 0, 1, 1, 2], [0], [0]>} : vector<2x8x8xbf16>, vector<2x8x8xbf16>, vector<2x8x8xf32> -> vector<2x8x8xf32>
    "tpu.trace_stop"() : () -> ()
    %89 = arith.truncf %88 : vector<2x8x8xf32> to vector<2x8x8xbf16>
    %90 = vector.shape_cast %89 : vector<2x8x8xbf16> to vector<16x8xbf16>
    %c0_29 = arith.constant 0 : index
    %c24 = arith.constant 24 : index
    %91 = vector.load %arg22[%c0_29, %c24] : memref<16x32xbf16, #tpu.memory_space<vmem>>, vector<16x8xbf16>
    tpu.vector_store %arg22[%c0_29, %c24], %90 {strides = array<i32>} : memref<16x32xbf16, #tpu.memory_space<vmem>>, vector<16x8xbf16>,
    %c0_30 = arith.constant 0 : index
    %c0_31 = arith.constant 0 : index
    %92 = vector.load %arg22[%c0_30, %c0_31] : memref<16x32xbf16, #tpu.memory_space<vmem>>, vector<16x32xbf16>
    %c0_32 = arith.constant 0 : index
    %c0_33 = arith.constant 0 : index
    %93 = vector.load %arg5[%c0_32, %c0_33] : memref<32x32xbf16, #tpu.memory_space<vmem>>, vector<32x32xbf16>
    %cst_34 = arith.constant dense<0.000000e+00> : vector<16x32xf32>
    %94 = tpu.matmul %92, %93, %cst_34 {dimension_numbers = #tpu.dot_dimension_numbers<[1], [0], [0], [1], [0, 0, 1, 1], [], []>} : vector<16x32xbf16>, vector<32x32xbf16>, vector<16x32xf32> -> vector<16x32xf32>
    %c0_35 = arith.constant 0 : index
    %c0_36 = arith.constant 0 : index
    %95 = vector.load %arg6[%c0_35, %c0_36] : memref<1x32xf32, #tpu.memory_space<vmem>>, vector<1x32xf32>
    %96 = vector.broadcast %95 : vector<1x32xf32> to vector<16x32xf32>
    %97 = arith.addf %94, %96 : vector<16x32xf32>
    %98 = vector.shape_cast %97 : vector<16x32xf32> to vector<2x8x32xf32>
    %99 = arith.addf %0, %98 : vector<2x8x32xf32>
    %100 = vector.shape_cast %99 : vector<2x8x32xf32> to vector<16x32xf32>
    %101 = arith.truncf %100 : vector<16x32xf32> to vector<16x32xbf16>
    %102 = vector.shape_cast %1 : vector<2x8x32xf32> to vector<16x32xf32>
    %103 = arith.truncf %102 : vector<16x32xf32> to vector<16x32xbf16>
    %c0_37 = arith.constant 0 : index
    %c0_38 = arith.constant 0 : index
    %104 = vector.load %arg7[%c0_37, %c0_38] : memref<32x32xbf16, #tpu.memory_space<vmem>>, vector<32x32xbf16>
    %cst_39 = arith.constant dense<0.000000e+00> : vector<16x32xf32>
    %105 = tpu.matmul %101, %104, %cst_39 {dimension_numbers = #tpu.dot_dimension_numbers<[1], [0], [0], [1], [0, 0, 1, 1], [], []>} : vector<16x32xbf16>, vector<32x32xbf16>, vector<16x32xf32> -> vector<16x32xf32>
    %c0_40 = arith.constant 0 : index
    %c0_41 = arith.constant 0 : index
    %106 = vector.load %arg8[%c0_40, %c0_41] : memref<1x32xf32, #tpu.memory_space<vmem>>, vector<1x32xf32>
    %107 = vector.broadcast %106 : vector<1x32xf32> to vector<16x32xf32>
    %108 = arith.addf %105, %107 : vector<16x32xf32>
    %109 = arith.truncf %108 : vector<16x32xf32> to vector<16x32xbf16>
    %110 = vector.shape_cast %109 : vector<16x32xbf16> to vector<2x8x32xbf16>
    %c0_42 = arith.constant 0 : index
    %c0_43 = arith.constant 0 : index
    %111 = vector.load %arg9[%c0_42, %c0_43] : memref<32x64xbf16, #tpu.memory_space<vmem>>, vector<32x64xbf16>
    %cst_44 = arith.constant dense<0.000000e+00> : vector<16x64xf32>
    %112 = tpu.matmul %103, %111, %cst_44 {dimension_numbers = #tpu.dot_dimension_numbers<[1], [0], [0], [1], [0, 0, 1, 1], [], []>} : vector<16x32xbf16>, vector<32x64xbf16>, vector<16x64xf32> -> vector<16x64xf32>
    %c0_45 = arith.constant 0 : index
    %c0_46 = arith.constant 0 : index
    %113 = vector.load %arg10[%c0_45, %c0_46] : memref<1x64xf32, #tpu.memory_space<vmem>>, vector<1x64xf32>
    %114 = vector.broadcast %113 : vector<1x64xf32> to vector<16x64xf32>
    %115 = arith.addf %112, %114 : vector<16x64xf32>
    %116 = arith.truncf %115 : vector<16x64xf32> to vector<16x64xbf16>
    %117 = vector.extract_strided_slice %116 {offsets = [0, 0], sizes = [16, 32], strides = [1, 1]} : vector<16x64xbf16> to vector<16x32xbf16>
    %118 = vector.shape_cast %117 : vector<16x32xbf16> to vector<2x8x32xbf16>
    %119 = vector.extract_strided_slice %116 {offsets = [0, 32], sizes = [16, 32], strides = [1, 1]} : vector<16x64xbf16> to vector<16x32xbf16>
    %120 = vector.shape_cast %119 : vector<16x32xbf16> to vector<2x8x32xbf16>
    %121 = vector.extract_strided_slice %110 {offsets = [0, 0, 0], sizes = [2, 8, 8], strides = [1, 1, 1]} : vector<2x8x32xbf16> to vector<2x8x8xbf16>
    %122 = vector.extract_strided_slice %118 {offsets = [0, 0, 0], sizes = [2, 8, 8], strides = [1, 1, 1]} : vector<2x8x32xbf16> to vector<2x8x8xbf16>
    "tpu.trace_start"() <{level = 10 : i32, message = "bqd,bkd->bqk"}> : () -> ()
    %cst_47 = arith.constant dense<0.000000e+00> : vector<2x8x8xf32>
    %123 = tpu.matmul %121, %122, %cst_47 {dimension_numbers = #tpu.dot_dimension_numbers<[2], [2], [1], [1], [0, 0, 0, 1, 1, 1], [0], [0]>} : vector<2x8x8xbf16>, vector<2x8x8xbf16>, vector<2x8x8xf32> -> vector<2x8x8xf32>
    "tpu.trace_stop"() : () -> ()
    %cst_48 = arith.constant dense<0xFF800000> : vector<2x8xf32>
    %124 = vector.multi_reduction <maximumf>, %123, %cst_48 [2] : vector<2x8x8xf32> to vector<2x8xf32>
    %125 = vector.shape_cast %124 : vector<2x8xf32> to vector<2x8x1xf32>
    %126 = vector.broadcast %125 : vector<2x8x1xf32> to vector<2x8x8xf32>
    %127 = arith.subf %123, %126 : vector<2x8x8xf32>
    %128 = math.exp %127 : vector<2x8x8xf32>
    %cst_49 = arith.constant dense<0.000000e+00> : vector<2x8xf32>
    %129 = vector.multi_reduction <add>, %128, %cst_49 [2] : vector<2x8x8xf32> to vector<2x8xf32>
    %130 = vector.shape_cast %129 : vector<2x8xf32> to vector<2x8x1xf32>
    %131 = tpu.reciprocal %130 {approx = true} : vector<2x8x1xf32> -> vector<2x8x1xf32>
    %132 = vector.broadcast %131 : vector<2x8x1xf32> to vector<2x8x8xf32>
    %133 = arith.mulf %128, %132 : vector<2x8x8xf32>
    %134 = arith.truncf %133 : vector<2x8x8xf32> to vector<2x8x8xbf16>
    %135 = vector.extract_strided_slice %120 {offsets = [0, 0, 0], sizes = [2, 8, 8], strides = [1, 1, 1]} : vector<2x8x32xbf16> to vector<2x8x8xbf16>
    "tpu.trace_start"() <{level = 10 : i32, message = "bqk,bkd->bqd"}> : () -> ()
    %cst_50 = arith.constant dense<0.000000e+00> : vector<2x8x8xf32>
    %136 = tpu.matmul %134, %135, %cst_50 {dimension_numbers = #tpu.dot_dimension_numbers<[2], [1], [1], [2], [0, 0, 0, 1, 1, 2], [0], [0]>} : vector<2x8x8xbf16>, vector<2x8x8xbf16>, vector<2x8x8xf32> -> vector<2x8x8xf32>
    "tpu.trace_stop"() : () -> ()
    %137 = arith.truncf %136 : vector<2x8x8xf32> to vector<2x8x8xbf16>
    %138 = vector.shape_cast %137 : vector<2x8x8xbf16> to vector<16x8xbf16>
    %c0_51 = arith.constant 0 : index
    %c0_52 = arith.constant 0 : index
    %139 = vector.load %arg22[%c0_51, %c0_52] : memref<16x32xbf16, #tpu.memory_space<vmem>>, vector<16x8xbf16>
    tpu.vector_store %arg22[%c0_51, %c0_52], %138 {strides = array<i32>} : memref<16x32xbf16, #tpu.memory_space<vmem>>, vector<16x8xbf16>,
    %140 = vector.extract_strided_slice %110 {offsets = [0, 0, 8], sizes = [2, 8, 8], strides = [1, 1, 1]} : vector<2x8x32xbf16> to vector<2x8x8xbf16>
    %141 = vector.extract_strided_slice %118 {offsets = [0, 0, 8], sizes = [2, 8, 8], strides = [1, 1, 1]} : vector<2x8x32xbf16> to vector<2x8x8xbf16>
    "tpu.trace_start"() <{level = 10 : i32, message = "bqd,bkd->bqk"}> : () -> ()
    %cst_53 = arith.constant dense<0.000000e+00> : vector<2x8x8xf32>
    %142 = tpu.matmul %140, %141, %cst_53 {dimension_numbers = #tpu.dot_dimension_numbers<[2], [2], [1], [1], [0, 0, 0, 1, 1, 1], [0], [0]>} : vector<2x8x8xbf16>, vector<2x8x8xbf16>, vector<2x8x8xf32> -> vector<2x8x8xf32>
    "tpu.trace_stop"() : () -> ()
    %cst_54 = arith.constant dense<0xFF800000> : vector<2x8xf32>
    %143 = vector.multi_reduction <maximumf>, %142, %cst_54 [2] : vector<2x8x8xf32> to vector<2x8xf32>
    %144 = vector.shape_cast %143 : vector<2x8xf32> to vector<2x8x1xf32>
    %145 = vector.broadcast %144 : vector<2x8x1xf32> to vector<2x8x8xf32>
    %146 = arith.subf %142, %145 : vector<2x8x8xf32>
    %147 = math.exp %146 : vector<2x8x8xf32>
    %cst_55 = arith.constant dense<0.000000e+00> : vector<2x8xf32>
    %148 = vector.multi_reduction <add>, %147, %cst_55 [2] : vector<2x8x8xf32> to vector<2x8xf32>
    %149 = vector.shape_cast %148 : vector<2x8xf32> to vector<2x8x1xf32>
    %150 = tpu.reciprocal %149 {approx = true} : vector<2x8x1xf32> -> vector<2x8x1xf32>
    %151 = vector.broadcast %150 : vector<2x8x1xf32> to vector<2x8x8xf32>
    %152 = arith.mulf %147, %151 : vector<2x8x8xf32>
    %153 = arith.truncf %152 : vector<2x8x8xf32> to vector<2x8x8xbf16>
    %154 = vector.extract_strided_slice %120 {offsets = [0, 0, 8], sizes = [2, 8, 8], strides = [1, 1, 1]} : vector<2x8x32xbf16> to vector<2x8x8xbf16>
    "tpu.trace_start"() <{level = 10 : i32, message = "bqk,bkd->bqd"}> : () -> ()
    %cst_56 = arith.constant dense<0.000000e+00> : vector<2x8x8xf32>
    %155 = tpu.matmul %153, %154, %cst_56 {dimension_numbers = #tpu.dot_dimension_numbers<[2], [1], [1], [2], [0, 0, 0, 1, 1, 2], [0], [0]>} : vector<2x8x8xbf16>, vector<2x8x8xbf16>, vector<2x8x8xf32> -> vector<2x8x8xf32>
    "tpu.trace_stop"() : () -> ()
    %156 = arith.truncf %155 : vector<2x8x8xf32> to vector<2x8x8xbf16>
    %157 = vector.shape_cast %156 : vector<2x8x8xbf16> to vector<16x8xbf16>
    %c0_57 = arith.constant 0 : index
    %c8_58 = arith.constant 8 : index
    %158 = vector.load %arg22[%c0_57, %c8_58] : memref<16x32xbf16, #tpu.memory_space<vmem>>, vector<16x8xbf16>
    tpu.vector_store %arg22[%c0_57, %c8_58], %157 {strides = array<i32>} : memref<16x32xbf16, #tpu.memory_space<vmem>>, vector<16x8xbf16>,
    %159 = vector.extract_strided_slice %110 {offsets = [0, 0, 16], sizes = [2, 8, 8], strides = [1, 1, 1]} : vector<2x8x32xbf16> to vector<2x8x8xbf16>
    %160 = vector.extract_strided_slice %118 {offsets = [0, 0, 16], sizes = [2, 8, 8], strides = [1, 1, 1]} : vector<2x8x32xbf16> to vector<2x8x8xbf16>
    "tpu.trace_start"() <{level = 10 : i32, message = "bqd,bkd->bqk"}> : () -> ()
    %cst_59 = arith.constant dense<0.000000e+00> : vector<2x8x8xf32>
    %161 = tpu.matmul %159, %160, %cst_59 {dimension_numbers = #tpu.dot_dimension_numbers<[2], [2], [1], [1], [0, 0, 0, 1, 1, 1], [0], [0]>} : vector<2x8x8xbf16>, vector<2x8x8xbf16>, vector<2x8x8xf32> -> vector<2x8x8xf32>
    "tpu.trace_stop"() : () -> ()
    %cst_60 = arith.constant dense<0xFF800000> : vector<2x8xf32>
    %162 = vector.multi_reduction <maximumf>, %161, %cst_60 [2] : vector<2x8x8xf32> to vector<2x8xf32>
    %163 = vector.shape_cast %162 : vector<2x8xf32> to vector<2x8x1xf32>
    %164 = vector.broadcast %163 : vector<2x8x1xf32> to vector<2x8x8xf32>
    %165 = arith.subf %161, %164 : vector<2x8x8xf32>
    %166 = math.exp %165 : vector<2x8x8xf32>
    %cst_61 = arith.constant dense<0.000000e+00> : vector<2x8xf32>
    %167 = vector.multi_reduction <add>, %166, %cst_61 [2] : vector<2x8x8xf32> to vector<2x8xf32>
    %168 = vector.shape_cast %167 : vector<2x8xf32> to vector<2x8x1xf32>
    %169 = tpu.reciprocal %168 {approx = true} : vector<2x8x1xf32> -> vector<2x8x1xf32>
    %170 = vector.broadcast %169 : vector<2x8x1xf32> to vector<2x8x8xf32>
    %171 = arith.mulf %166, %170 : vector<2x8x8xf32>
    %172 = arith.truncf %171 : vector<2x8x8xf32> to vector<2x8x8xbf16>
    %173 = vector.extract_strided_slice %120 {offsets = [0, 0, 16], sizes = [2, 8, 8], strides = [1, 1, 1]} : vector<2x8x32xbf16> to vector<2x8x8xbf16>
    "tpu.trace_start"() <{level = 10 : i32, message = "bqk,bkd->bqd"}> : () -> ()
    %cst_62 = arith.constant dense<0.000000e+00> : vector<2x8x8xf32>
    %174 = tpu.matmul %172, %173, %cst_62 {dimension_numbers = #tpu.dot_dimension_numbers<[2], [1], [1], [2], [0, 0, 0, 1, 1, 2], [0], [0]>} : vector<2x8x8xbf16>, vector<2x8x8xbf16>, vector<2x8x8xf32> -> vector<2x8x8xf32>
    "tpu.trace_stop"() : () -> ()
    %175 = arith.truncf %174 : vector<2x8x8xf32> to vector<2x8x8xbf16>
    %176 = vector.shape_cast %175 : vector<2x8x8xbf16> to vector<16x8xbf16>
    %c0_63 = arith.constant 0 : index
    %c16_64 = arith.constant 16 : index
    %177 = vector.load %arg22[%c0_63, %c16_64] : memref<16x32xbf16, #tpu.memory_space<vmem>>, vector<16x8xbf16>
    tpu.vector_store %arg22[%c0_63, %c16_64], %176 {strides = array<i32>} : memref<16x32xbf16, #tpu.memory_space<vmem>>, vector<16x8xbf16>,
    %178 = vector.extract_strided_slice %110 {offsets = [0, 0, 24], sizes = [2, 8, 8], strides = [1, 1, 1]} : vector<2x8x32xbf16> to vector<2x8x8xbf16>
    %179 = vector.extract_strided_slice %118 {offsets = [0, 0, 24], sizes = [2, 8, 8], strides = [1, 1, 1]} : vector<2x8x32xbf16> to vector<2x8x8xbf16>
    "tpu.trace_start"() <{level = 10 : i32, message = "bqd,bkd->bqk"}> : () -> ()
    %cst_65 = arith.constant dense<0.000000e+00> : vector<2x8x8xf32>
    %180 = tpu.matmul %178, %179, %cst_65 {dimension_numbers = #tpu.dot_dimension_numbers<[2], [2], [1], [1], [0, 0, 0, 1, 1, 1], [0], [0]>} : vector<2x8x8xbf16>, vector<2x8x8xbf16>, vector<2x8x8xf32> -> vector<2x8x8xf32>
    "tpu.trace_stop"() : () -> ()
    %cst_66 = arith.constant dense<0xFF800000> : vector<2x8xf32>
    %181 = vector.multi_reduction <maximumf>, %180, %cst_66 [2] : vector<2x8x8xf32> to vector<2x8xf32>
    %182 = vector.shape_cast %181 : vector<2x8xf32> to vector<2x8x1xf32>
    %183 = vector.broadcast %182 : vector<2x8x1xf32> to vector<2x8x8xf32>
    %184 = arith.subf %180, %183 : vector<2x8x8xf32>
    %185 = math.exp %184 : vector<2x8x8xf32>
    %cst_67 = arith.constant dense<0.000000e+00> : vector<2x8xf32>
    %186 = vector.multi_reduction <add>, %185, %cst_67 [2] : vector<2x8x8xf32> to vector<2x8xf32>
    %187 = vector.shape_cast %186 : vector<2x8xf32> to vector<2x8x1xf32>
    %188 = tpu.reciprocal %187 {approx = true} : vector<2x8x1xf32> -> vector<2x8x1xf32>
    %189 = vector.broadcast %188 : vector<2x8x1xf32> to vector<2x8x8xf32>
    %190 = arith.mulf %185, %189 : vector<2x8x8xf32>
    %191 = arith.truncf %190 : vector<2x8x8xf32> to vector<2x8x8xbf16>
    %192 = vector.extract_strided_slice %120 {offsets = [0, 0, 24], sizes = [2, 8, 8], strides = [1, 1, 1]} : vector<2x8x32xbf16> to vector<2x8x8xbf16>
    "tpu.trace_start"() <{level = 10 : i32, message = "bqk,bkd->bqd"}> : () -> ()
    %cst_68 = arith.constant dense<0.000000e+00> : vector<2x8x8xf32>
    %193 = tpu.matmul %191, %192, %cst_68 {dimension_numbers = #tpu.dot_dimension_numbers<[2], [1], [1], [2], [0, 0, 0, 1, 1, 2], [0], [0]>} : vector<2x8x8xbf16>, vector<2x8x8xbf16>, vector<2x8x8xf32> -> vector<2x8x8xf32>
    "tpu.trace_stop"() : () -> ()
    %194 = arith.truncf %193 : vector<2x8x8xf32> to vector<2x8x8xbf16>
    %195 = vector.shape_cast %194 : vector<2x8x8xbf16> to vector<16x8xbf16>
    %c0_69 = arith.constant 0 : index
    %c24_70 = arith.constant 24 : index
    %196 = vector.load %arg22[%c0_69, %c24_70] : memref<16x32xbf16, #tpu.memory_space<vmem>>, vector<16x8xbf16>
    tpu.vector_store %arg22[%c0_69, %c24_70], %195 {strides = array<i32>} : memref<16x32xbf16, #tpu.memory_space<vmem>>, vector<16x8xbf16>,
    %c0_71 = arith.constant 0 : index
    %c0_72 = arith.constant 0 : index
    %197 = vector.load %arg22[%c0_71, %c0_72] : memref<16x32xbf16, #tpu.memory_space<vmem>>, vector<16x32xbf16>
    %c0_73 = arith.constant 0 : index
    %c0_74 = arith.constant 0 : index
    %198 = vector.load %arg11[%c0_73, %c0_74] : memref<32x32xbf16, #tpu.memory_space<vmem>>, vector<32x32xbf16>
    %cst_75 = arith.constant dense<0.000000e+00> : vector<16x32xf32>
    %199 = tpu.matmul %197, %198, %cst_75 {dimension_numbers = #tpu.dot_dimension_numbers<[1], [0], [0], [1], [0, 0, 1, 1], [], []>} : vector<16x32xbf16>, vector<32x32xbf16>, vector<16x32xf32> -> vector<16x32xf32>
    %c0_76 = arith.constant 0 : index
    %c0_77 = arith.constant 0 : index
    %200 = vector.load %arg12[%c0_76, %c0_77] : memref<1x32xf32, #tpu.memory_space<vmem>>, vector<1x32xf32>
    %201 = vector.broadcast %200 : vector<1x32xf32> to vector<16x32xf32>
    %202 = arith.addf %199, %201 : vector<16x32xf32>
    %203 = vector.shape_cast %202 : vector<16x32xf32> to vector<2x8x32xf32>
    %204 = arith.addf %99, %203 : vector<2x8x32xf32>
    %205 = vector.shape_cast %204 : vector<2x8x32xf32> to vector<16x32xf32>
    %c0_78 = arith.constant 0 : index
    %c0_79 = arith.constant 0 : index
    %206 = vector.load %arg17[%c0_78, %c0_79] : memref<1x32xf32, #tpu.memory_space<vmem>>, vector<1x32xf32>
    %c0_80 = arith.constant 0 : index
    %c0_81 = arith.constant 0 : index
    %207 = vector.load %arg18[%c0_80, %c0_81] : memref<1x32xf32, #tpu.memory_space<vmem>>, vector<1x32xf32>
    %cst_82 = arith.constant dense<0.000000e+00> : vector<16xf32>
    %208 = vector.multi_reduction <add>, %205, %cst_82 [1] : vector<16x32xf32> to vector<16xf32>
    %209 = vector.shape_cast %208 : vector<16xf32> to vector<16x1xf32>
    %cst_83 = arith.constant 3.200000e+01 : f32
    %210 = vector.broadcast %cst_83 : f32 to vector<16x1xf32>
    %211 = arith.divf %209, %210 : vector<16x1xf32>
    %212 = vector.broadcast %211 : vector<16x1xf32> to vector<16x32xf32>
    %213 = arith.subf %205, %212 : vector<16x32xf32>
    %214 = arith.mulf %213, %213 : vector<16x32xf32>
    %cst_84 = arith.constant dense<0.000000e+00> : vector<16xf32>
    %215 = vector.multi_reduction <add>, %214, %cst_84 [1] : vector<16x32xf32> to vector<16xf32>
    %216 = vector.shape_cast %215 : vector<16xf32> to vector<16x1xf32>
    %cst_85 = arith.constant 3.200000e+01 : f32
    %217 = vector.broadcast %cst_85 : f32 to vector<16x1xf32>
    %218 = arith.divf %216, %217 : vector<16x1xf32>
    %219 = vector.broadcast %211 : vector<16x1xf32> to vector<16x32xf32>
    %220 = arith.subf %205, %219 : vector<16x32xf32>
    %cst_86 = arith.constant 9.99999974E-6 : f32
    %221 = vector.broadcast %cst_86 : f32 to vector<16x1xf32>
    %222 = arith.addf %218, %221 : vector<16x1xf32>
    %223 = math.rsqrt %222 : vector<16x1xf32>
    %224 = vector.broadcast %223 : vector<16x1xf32> to vector<16x32xf32>
    %225 = arith.mulf %220, %224 : vector<16x32xf32>
    %226 = vector.broadcast %206 : vector<1x32xf32> to vector<16x32xf32>
    %227 = arith.mulf %225, %226 : vector<16x32xf32>
    %228 = vector.broadcast %207 : vector<1x32xf32> to vector<16x32xf32>
    %229 = arith.addf %227, %228 : vector<16x32xf32>
    %230 = arith.truncf %229 : vector<16x32xf32> to vector<16x32xbf16>
    %c0_87 = arith.constant 0 : index
    %c0_88 = arith.constant 0 : index
    %231 = vector.load %arg13[%c0_87, %c0_88] : memref<32x32xbf16, #tpu.memory_space<vmem>>, vector<32x32xbf16>
    %cst_89 = arith.constant dense<0.000000e+00> : vector<16x32xf32>
    %232 = tpu.matmul %230, %231, %cst_89 {dimension_numbers = #tpu.dot_dimension_numbers<[1], [0], [0], [1], [0, 0, 1, 1], [], []>} : vector<16x32xbf16>, vector<32x32xbf16>, vector<16x32xf32> -> vector<16x32xf32>
    %c0_90 = arith.constant 0 : index
    %c0_91 = arith.constant 0 : index
    %233 = vector.load %arg14[%c0_90, %c0_91] : memref<1x32xf32, #tpu.memory_space<vmem>>, vector<1x32xf32>
    %234 = vector.broadcast %233 : vector<1x32xf32> to vector<16x32xf32>
    %235 = arith.addf %232, %234 : vector<16x32xf32>
    %236 = arith.truncf %235 : vector<16x32xf32> to vector<16x32xbf16>
    %c0_92 = arith.constant 0 : index
    %c0_93 = arith.constant 0 : index
    %237 = vector.load %arg15[%c0_92, %c0_93] : memref<32x32xbf16, #tpu.memory_space<vmem>>, vector<32x32xbf16>
    %cst_94 = arith.constant dense<0.000000e+00> : vector<16x32xf32>
    %238 = tpu.matmul %236, %237, %cst_94 {dimension_numbers = #tpu.dot_dimension_numbers<[1], [0], [0], [1], [0, 0, 1, 1], [], []>} : vector<16x32xbf16>, vector<32x32xbf16>, vector<16x32xf32> -> vector<16x32xf32>
    %c0_95 = arith.constant 0 : index
    %c0_96 = arith.constant 0 : index
    %239 = vector.load %arg16[%c0_95, %c0_96] : memref<1x32xf32, #tpu.memory_space<vmem>>, vector<1x32xf32>
    %240 = vector.broadcast %239 : vector<1x32xf32> to vector<16x32xf32>
    %241 = arith.addf %238, %240 : vector<16x32xf32>
    %242 = arith.addf %229, %241 : vector<16x32xf32>
    %243 = arith.addf %242, %229 : vector<16x32xf32>
    %c0_97 = arith.constant 0 : index
    %c0_98 = arith.constant 0 : index
    %244 = vector.load %arg19[%c0_97, %c0_98] : memref<1x32xf32, #tpu.memory_space<vmem>>, vector<1x32xf32>
    %c0_99 = arith.constant 0 : index
    %c0_100 = arith.constant 0 : index
    %245 = vector.load %arg20[%c0_99, %c0_100] : memref<1x32xf32, #tpu.memory_space<vmem>>, vector<1x32xf32>
    %cst_101 = arith.constant dense<0.000000e+00> : vector<16xf32>
    %246 = vector.multi_reduction <add>, %243, %cst_101 [1] : vector<16x32xf32> to vector<16xf32>
    %247 = vector.shape_cast %246 : vector<16xf32> to vector<16x1xf32>
    %cst_102 = arith.constant 3.200000e+01 : f32
    %248 = vector.broadcast %cst_102 : f32 to vector<16x1xf32>
    %249 = arith.divf %247, %248 : vector<16x1xf32>
    %250 = vector.broadcast %249 : vector<16x1xf32> to vector<16x32xf32>
    %251 = arith.subf %243, %250 : vector<16x32xf32>
    %252 = arith.mulf %251, %251 : vector<16x32xf32>
    %cst_103 = arith.constant dense<0.000000e+00> : vector<16xf32>
    %253 = vector.multi_reduction <add>, %252, %cst_103 [1] : vector<16x32xf32> to vector<16xf32>
    %254 = vector.shape_cast %253 : vector<16xf32> to vector<16x1xf32>
    %cst_104 = arith.constant 3.200000e+01 : f32
    %255 = vector.broadcast %cst_104 : f32 to vector<16x1xf32>
    %256 = arith.divf %254, %255 : vector<16x1xf32>
    %257 = vector.broadcast %249 : vector<16x1xf32> to vector<16x32xf32>
    %258 = arith.subf %243, %257 : vector<16x32xf32>
    %cst_105 = arith.constant 9.99999974E-6 : f32
    %259 = vector.broadcast %cst_105 : f32 to vector<16x1xf32>
    %260 = arith.addf %256, %259 : vector<16x1xf32>
    %261 = math.rsqrt %260 : vector<16x1xf32>
    %262 = vector.broadcast %261 : vector<16x1xf32> to vector<16x32xf32>
    %263 = arith.mulf %258, %262 : vector<16x32xf32>
    %264 = vector.broadcast %244 : vector<1x32xf32> to vector<16x32xf32>
    %265 = arith.mulf %263, %264 : vector<16x32xf32>
    %266 = vector.broadcast %245 : vector<1x32xf32> to vector<16x32xf32>
    %267 = arith.addf %265, %266 : vector<16x32xf32>
    %268 = vector.shape_cast %267 : vector<16x32xf32> to vector<2x8x32xf32>
    %c0_106 = arith.constant 0 : index
    %c0_107 = arith.constant 0 : index
    %c0_108 = arith.constant 0 : index
    %269 = vector.load %arg21[%c0_106, %c0_107, %c0_108] : memref<2x8x32xf32, #tpu.memory_space<vmem>>, vector<2x8x32xf32>
    tpu.vector_store %arg21[%c0_106, %c0_107, %c0_108], %268 {strides = array<i32>} : memref<2x8x32xf32, #tpu.memory_space<vmem>>, vector<2x8x32xf32>,
    return
  }
  func.func @transform_0(%arg0: i32) -> (i32, i32, i32) {
    %c0_i32 = arith.constant 0 : i32
    %c0_i32_0 = arith.constant 0 : i32
    %c0_i32_1 = arith.constant 0 : i32
    return %arg0, %c0_i32, %c0_i32_0 : i32, i32, i32
  }
  func.func @transform_1(%arg0: i32) -> (i32, i32, i32) {
    %c0_i32 = arith.constant 0 : i32
    %c0_i32_0 = arith.constant 0 : i32
    %c0_i32_1 = arith.constant 0 : i32
    return %arg0, %c0_i32, %c0_i32_0 : i32, i32, i32
  }
  func.func @transform_2(%arg0: i32) -> (i32, i32) {
    %c0_i32 = arith.constant 0 : i32
    %c0_i32_0 = arith.constant 0 : i32
    %c0_i32_1 = arith.constant 0 : i32
    return %c0_i32, %c0_i32_0 : i32, i32
  }
  func.func @transform_3(%arg0: i32) -> (i32, i32) {
    %c0_i32 = arith.constant 0 : i32
    %c0_i32_0 = arith.constant 0 : i32
    %c0_i32_1 = arith.constant 0 : i32
    return %c0_i32, %c0_i32_0 : i32, i32
  }
  func.func @transform_4(%arg0: i32) -> (i32, i32) {
    %c0_i32 = arith.constant 0 : i32
    %c0_i32_0 = arith.constant 0 : i32
    %c0_i32_1 = arith.constant 0 : i32
    return %c0_i32, %c0_i32_0 : i32, i32
  }
  func.func @transform_5(%arg0: i32) -> (i32, i32) {
    %c0_i32 = arith.constant 0 : i32
    %c0_i32_0 = arith.constant 0 : i32
    %c0_i32_1 = arith.constant 0 : i32
    return %c0_i32, %c0_i32_0 : i32, i32
  }
  func.func @transform_6(%arg0: i32) -> (i32, i32) {
    %c0_i32 = arith.constant 0 : i32
    %c0_i32_0 = arith.constant 0 : i32
    %c0_i32_1 = arith.constant 0 : i32
    return %c0_i32, %c0_i32_0 : i32, i32
  }
  func.func @transform_7(%arg0: i32) -> (i32, i32) {
    %c0_i32 = arith.constant 0 : i32
    %c0_i32_0 = arith.constant 0 : i32
    %c0_i32_1 = arith.constant 0 : i32
    return %c0_i32, %c0_i32_0 : i32, i32
  }
  func.func @transform_8(%arg0: i32) -> (i32, i32) {
    %c0_i32 = arith.constant 0 : i32
    %c0_i32_0 = arith.constant 0 : i32
    %c0_i32_1 = arith.constant 0 : i32
    return %c0_i32, %c0_i32_0 : i32, i32
  }
  func.func @transform_9(%arg0: i32) -> (i32, i32) {
    %c0_i32 = arith.constant 0 : i32
    %c0_i32_0 = arith.constant 0 : i32
    %c0_i32_1 = arith.constant 0 : i32
    return %c0_i32, %c0_i32_0 : i32, i32
  }
  func.func @transform_10(%arg0: i32) -> (i32, i32) {
    %c0_i32 = arith.constant 0 : i32
    %c0_i32_0 = arith.constant 0 : i32
    %c0_i32_1 = arith.constant 0 : i32
    return %c0_i32, %c0_i32_0 : i32, i32
  }
  func.func @transform_11(%arg0: i32) -> (i32, i32) {
    %c0_i32 = arith.constant 0 : i32
    %c0_i32_0 = arith.constant 0 : i32
    %c0_i32_1 = arith.constant 0 : i32
    return %c0_i32, %c0_i32_0 : i32, i32
  }
  func.func @transform_12(%arg0: i32) -> (i32, i32) {
    %c0_i32 = arith.constant 0 : i32
    %c0_i32_0 = arith.constant 0 : i32
    %c0_i32_1 = arith.constant 0 : i32
    return %c0_i32, %c0_i32_0 : i32, i32
  }
  func.func @transform_13(%arg0: i32) -> (i32, i32) {
    %c0_i32 = arith.constant 0 : i32
    %c0_i32_0 = arith.constant 0 : i32
    %c0_i32_1 = arith.constant 0 : i32
    return %c0_i32, %c0_i32_0 : i32, i32
  }
  func.func @transform_14(%arg0: i32) -> (i32, i32) {
    %c0_i32 = arith.constant 0 : i32
    %c0_i32_0 = arith.constant 0 : i32
    %c0_i32_1 = arith.constant 0 : i32
    return %c0_i32, %c0_i32_0 : i32, i32
  }
  func.func @transform_15(%arg0: i32) -> (i32, i32) {
    %c0_i32 = arith.constant 0 : i32
    %c0_i32_0 = arith.constant 0 : i32
    %c0_i32_1 = arith.constant 0 : i32
    return %c0_i32, %c0_i32_0 : i32, i32
  }
  func.func @transform_16(%arg0: i32) -> (i32, i32) {
    %c0_i32 = arith.constant 0 : i32
    %c0_i32_0 = arith.constant 0 : i32
    %c0_i32_1 = arith.constant 0 : i32
    return %c0_i32, %c0_i32_0 : i32, i32
  }
  func.func @transform_17(%arg0: i32) -> (i32, i32) {
    %c0_i32 = arith.constant 0 : i32
    %c0_i32_0 = arith.constant 0 : i32
    %c0_i32_1 = arith.constant 0 : i32
    return %c0_i32, %c0_i32_0 : i32, i32
  }
  func.func @transform_18(%arg0: i32) -> (i32, i32) {
    %c0_i32 = arith.constant 0 : i32
    %c0_i32_0 = arith.constant 0 : i32
    %c0_i32_1 = arith.constant 0 : i32
    return %c0_i32, %c0_i32_0 : i32, i32
  }
  func.func @transform_19(%arg0: i32) -> (i32, i32) {
    %c0_i32 = arith.constant 0 : i32
    %c0_i32_0 = arith.constant 0 : i32
    %c0_i32_1 = arith.constant 0 : i32
    return %c0_i32, %c0_i32_0 : i32, i32
  }
  func.func @transform_20(%arg0: i32) -> (i32, i32, i32) {
    %c0_i32 = arith.constant 0 : i32
    %c0_i32_0 = arith.constant 0 : i32
    %c0_i32_1 = arith.constant 0 : i32
    return %arg0, %c0_i32, %c0_i32_0 : i32, i32, i32
  }
}

module attributes {stable_mosaic.version = 11 : i64} {
  func.func @decoder_layer_kernel(%arg0: i32, %arg1: memref<2x8x32xf32, #tpu.memory_space<vmem>>, %arg2: memref<2x8x32xf32, #tpu.memory_space<vmem>>, %arg3: memref<32x96xbf16, #tpu.memory_space<vmem>>, %arg4: memref<1x96xf32, #tpu.memory_space<vmem>>, %arg5: memref<32x32xbf16, #tpu.memory_space<vmem>>, %arg6: memref<1x32xf32, #tpu.memory_space<vmem>>, %arg7: memref<32x32xbf16, #tpu.memory_space<vmem>>, %arg8: memref<1x32xf32, #tpu.memory_space<vmem>>, %arg9: memref<32x64xbf16, #tpu.memory_space<vmem>>, %arg10: memref<1x64xf32, #tpu.memory_space<vmem>>, %arg11: memref<32x32xbf16, #tpu.memory_space<vmem>>, %arg12: memref<1x32xf32, #tpu.memory_space<vmem>>, %arg13: memref<32x32xbf16, #tpu.memory_space<vmem>>, %arg14: memref<1x32xf32, #tpu.memory_space<vmem>>, %arg15: memref<32x32xbf16, #tpu.memory_space<vmem>>, %arg16: memref<1x32xf32, #tpu.memory_space<vmem>>, %arg17: memref<1x32xf32, #tpu.memory_space<vmem>>, %arg18: memref<1x32xf32, #tpu.memory_space<vmem>>, %arg19: memref<1x32xf32, #tpu.memory_space<vmem>>, %arg20: memref<1x32xf32, #tpu.memory_space<vmem>>, %arg21: memref<2x8x32xf32, #tpu.memory_space<vmem>>, %arg22: memref<16x32xbf16, #tpu.memory_space<vmem>>) attributes {dimension_semantics = [#tpu.dimension_semantics<parallel>], iteration_bounds = array<i64: 1>, scalar_prefetch = 0 : i64, scratch_operands = 1 : i64, tpu.core_type = #tpu.core_type<tc>, window_params = [{transform_indices = @transform_0, window_bounds = array<i64: 2, 8, 32>}, {transform_indices = @transform_1, window_bounds = array<i64: 2, 8, 32>}, {pipeline_mode = #tpu.pipeline_mode<synchronous>, transform_indices = @transform_2, window_bounds = array<i64: 32, 96>}, {pipeline_mode = #tpu.pipeline_mode<synchronous>, transform_indices = @transform_3, window_bounds = array<i64: 1, 96>}, {pipeline_mode = #tpu.pipeline_mode<synchronous>, transform_indices = @transform_4, window_bounds = array<i64: 32, 32>}, {pipeline_mode = #tpu.pipeline_mode<synchronous>, transform_indices = @transform_5, window_bounds = array<i64: 1, 32>}, {pipeline_mode = #tpu.pipeline_mode<synchronous>, transform_indices = @transform_6, window_bounds = array<i64: 32, 32>}, {pipeline_mode = #tpu.pipeline_mode<synchronous>, transform_indices = @transform_7, window_bounds = array<i64: 1, 32>}, {pipeline_mode = #tpu.pipeline_mode<synchronous>, transform_indices = @transform_8, window_bounds = array<i64: 32, 64>}, {pipeline_mode = #tpu.pipeline_mode<synchronous>, transform_indices = @transform_9, window_bounds = array<i64: 1, 64>}, {pipeline_mode = #tpu.pipeline_mode<synchronous>, transform_indices = @transform_10, window_bounds = array<i64: 32, 32>}, {pipeline_mode = #tpu.pipeline_mode<synchronous>, transform_indices = @transform_11, window_bounds = array<i64: 1, 32>}, {pipeline_mode = #tpu.pipeline_mode<synchronous>, transform_indices = @transform_12, window_bounds = array<i64: 32, 32>}, {pipeline_mode = #tpu.pipeline_mode<synchronous>, transform_indices = @transform_13, window_bounds = array<i64: 1, 32>}, {pipeline_mode = #tpu.pipeline_mode<synchronous>, transform_indices = @transform_14, window_bounds = array<i64: 32, 32>}, {pipeline_mode = #tpu.pipeline_mode<synchronous>, transform_indices = @transform_15, window_bounds = array<i64: 1, 32>}, {pipeline_mode = #tpu.pipeline_mode<synchronous>, transform_indices = @transform_16, window_bounds = array<i64: 1, 32>}, {pipeline_mode = #tpu.pipeline_mode<synchronous>, transform_indices = @transform_17, window_bounds = array<i64: 1, 32>}, {pipeline_mode = #tpu.pipeline_mode<synchronous>, transform_indices = @transform_18, window_bounds = array<i64: 1, 32>}, {pipeline_mode = #tpu.pipeline_mode<synchronous>, transform_indices = @transform_19, window_bounds = array<i64: 1, 32>}, {transform_indices = @transform_20, window_bounds = array<i64: 2, 8, 32>}]} {
    %c0 = arith.constant 0 : index
    %c0_0 = arith.constant 0 : index
    %c0_1 = arith.constant 0 : index
    %0 = vector.load %arg1[%c0, %c0_0, %c0_1] : memref<2x8x32xf32, #tpu.memory_space<vmem>>, vector<2x8x32xf32>
    %c0_2 = arith.constant 0 : index
    %c0_3 = arith.constant 0 : index
    %c0_4 = arith.constant 0 : index
    %1 = vector.load %arg2[%c0_2, %c0_3, %c0_4] : memref<2x8x32xf32, #tpu.memory_space<vmem>>, vector<2x8x32xf32>
    %2 = vector.shape_cast %0 : vector<2x8x32xf32> to vector<16x32xf32>
    %3 = arith.truncf %2 : vector<16x32xf32> to vector<16x32xbf16>
    %c0_5 = arith.constant 0 : index
    %c0_6 = arith.constant 0 : index
    %4 = vector.load %arg3[%c0_5, %c0_6] : memref<32x96xbf16, #tpu.memory_space<vmem>>, vector<32x96xbf16>
    %cst = arith.constant dense<0.000000e+00> : vector<16x96xf32>
    %5 = tpu.matmul %3, %4, %cst {dimension_numbers = #tpu.dot_dimension_numbers<[1], [0], [0], [1], [0, 0, 1, 1], [], []>} : vector<16x32xbf16>, vector<32x96xbf16>, vector<16x96xf32> -> vector<16x96xf32>
    %c0_7 = arith.constant 0 : index
    %c0_8 = arith.constant 0 : index
    %6 = vector.load %arg4[%c0_7, %c0_8] : memref<1x96xf32, #tpu.memory_space<vmem>>, vector<1x96xf32>
    %7 = vector.broadcast %6 : vector<1x96xf32> to vector<16x96xf32>
    %8 = arith.addf %5, %7 : vector<16x96xf32>
    %9 = arith.truncf %8 : vector<16x96xf32> to vector<16x96xbf16>
    %10 = vector.extract_strided_slice %9 {offsets = [0, 0], sizes = [16, 32], strides = [1, 1]} : vector<16x96xbf16> to vector<16x32xbf16>
    %11 = vector.shape_cast %10 : vector<16x32xbf16> to vector<2x8x32xbf16>
    %12 = vector.extract_strided_slice %9 {offsets = [0, 32], sizes = [16, 32], strides = [1, 1]} : vector<16x96xbf16> to vector<16x32xbf16>
    %13 = vector.shape_cast %12 : vector<16x32xbf16> to vector<2x8x32xbf16>
    %14 = vector.extract_strided_slice %9 {offsets = [0, 64], sizes = [16, 32], strides = [1, 1]} : vector<16x96xbf16> to vector<16x32xbf16>
    %15 = vector.shape_cast %14 : vector<16x32xbf16> to vector<2x8x32xbf16>
    %16 = vector.extract_strided_slice %11 {offsets = [0, 0, 0], sizes = [2, 8, 8], strides = [1, 1, 1]} : vector<2x8x32xbf16> to vector<2x8x8xbf16>
    %17 = vector.extract_strided_slice %13 {offsets = [0, 0, 0], sizes = [2, 8, 8], strides = [1, 1, 1]} : vector<2x8x32xbf16> to vector<2x8x8xbf16>
    "tpu.trace_start"() <{level = 10 : i32, message = "bqd,bkd->bqk"}> : () -> ()
    %cst_9 = arith.constant dense<0.000000e+00> : vector<2x8x8xf32>
    %18 = tpu.matmul %16, %17, %cst_9 {dimension_numbers = #tpu.dot_dimension_numbers<[2], [2], [1], [1], [0, 0, 0, 1, 1, 1], [0], [0]>} : vector<2x8x8xbf16>, vector<2x8x8xbf16>, vector<2x8x8xf32> -> vector<2x8x8xf32>
    "tpu.trace_stop"() : () -> ()
    %cst_10 = arith.constant dense<0xFF800000> : vector<2x8xf32>
    %19 = vector.multi_reduction <maximumf>, %18, %cst_10 [2] : vector<2x8x8xf32> to vector<2x8xf32>
    %20 = vector.shape_cast %19 : vector<2x8xf32> to vector<2x8x1xf32>
    %21 = vector.broadcast %20 : vector<2x8x1xf32> to vector<2x8x8xf32>
    %22 = arith.subf %18, %21 : vector<2x8x8xf32>
    %23 = math.exp %22 : vector<2x8x8xf32>
    %cst_11 = arith.constant dense<0.000000e+00> : vector<2x8xf32>
    %24 = vector.multi_reduction <add>, %23, %cst_11 [2] : vector<2x8x8xf32> to vector<2x8xf32>
    %25 = vector.shape_cast %24 : vector<2x8xf32> to vector<2x8x1xf32>
    %26 = tpu.reciprocal %25 {approx = true} : vector<2x8x1xf32> -> vector<2x8x1xf32>
    %27 = vector.broadcast %26 : vector<2x8x1xf32> to vector<2x8x8xf32>
    %28 = arith.mulf %23, %27 : vector<2x8x8xf32>
    %29 = arith.truncf %28 : vector<2x8x8xf32> to vector<2x8x8xbf16>
    %30 = vector.extract_strided_slice %15 {offsets = [0, 0, 0], sizes = [2, 8, 8], strides = [1, 1, 1]} : vector<2x8x32xbf16> to vector<2x8x8xbf16>
    "tpu.trace_start"() <{level = 10 : i32, message = "bqk,bkd->bqd"}> : () -> ()
    %cst_12 = arith.constant dense<0.000000e+00> : vector<2x8x8xf32>
    %31 = tpu.matmul %29, %30, %cst_12 {dimension_numbers = #tpu.dot_dimension_numbers<[2], [1], [1], [2], [0, 0, 0, 1, 1, 2], [0], [0]>} : vector<2x8x8xbf16>, vector<2x8x8xbf16>, vector<2x8x8xf32> -> vector<2x8x8xf32>
    "tpu.trace_stop"() : () -> ()
    %32 = arith.truncf %31 : vector<2x8x8xf32> to vector<2x8x8xbf16>
    %33 = vector.shape_cast %32 : vector<2x8x8xbf16> to vector<16x8xbf16>
    %c0_13 = arith.constant 0 : index
    %c0_14 = arith.constant 0 : index
    %34 = vector.load %arg22[%c0_13, %c0_14] : memref<16x32xbf16, #tpu.memory_space<vmem>>, vector<16x8xbf16>
    tpu.vector_store %arg22[%c0_13, %c0_14], %33 {strides = array<i32>} : memref<16x32xbf16, #tpu.memory_space<vmem>>, vector<16x8xbf16>,
    %35 = vector.extract_strided_slice %11 {offsets = [0, 0, 8], sizes = [2, 8, 8], strides = [1, 1, 1]} : vector<2x8x32xbf16> to vector<2x8x8xbf16>
    %36 = vector.extract_strided_slice %13 {offsets = [0, 0, 8], sizes = [2, 8, 8], strides = [1, 1, 1]} : vector<2x8x32xbf16> to vector<2x8x8xbf16>
    "tpu.trace_start"() <{level = 10 : i32, message = "bqd,bkd->bqk"}> : () -> ()
    %cst_15 = arith.constant dense<0.000000e+00> : vector<2x8x8xf32>
    %37 = tpu.matmul %35, %36, %cst_15 {dimension_numbers = #tpu.dot_dimension_numbers<[2], [2], [1], [1], [0, 0, 0, 1, 1, 1], [0], [0]>} : vector<2x8x8xbf16>, vector<2x8x8xbf16>, vector<2x8x8xf32> -> vector<2x8x8xf32>
    "tpu.trace_stop"() : () -> ()
    %cst_16 = arith.constant dense<0xFF800000> : vector<2x8xf32>
    %38 = vector.multi_reduction <maximumf>, %37, %cst_16 [2] : vector<2x8x8xf32> to vector<2x8xf32>
    %39 = vector.shape_cast %38 : vector<2x8xf32> to vector<2x8x1xf32>
    %40 = vector.broadcast %39 : vector<2x8x1xf32> to vector<2x8x8xf32>
    %41 = arith.subf %37, %40 : vector<2x8x8xf32>
    %42 = math.exp %41 : vector<2x8x8xf32>
    %cst_17 = arith.constant dense<0.000000e+00> : vector<2x8xf32>
    %43 = vector.multi_reduction <add>, %42, %cst_17 [2] : vector<2x8x8xf32> to vector<2x8xf32>
    %44 = vector.shape_cast %43 : vector<2x8xf32> to vector<2x8x1xf32>
    %45 = tpu.reciprocal %44 {approx = true} : vector<2x8x1xf32> -> vector<2x8x1xf32>
    %46 = vector.broadcast %45 : vector<2x8x1xf32> to vector<2x8x8xf32>
    %47 = arith.mulf %42, %46 : vector<2x8x8xf32>
    %48 = arith.truncf %47 : vector<2x8x8xf32> to vector<2x8x8xbf16>
    %49 = vector.extract_strided_slice %15 {offsets = [0, 0, 8], sizes = [2, 8, 8], strides = [1, 1, 1]} : vector<2x8x32xbf16> to vector<2x8x8xbf16>
    "tpu.trace_start"() <{level = 10 : i32, message = "bqk,bkd->bqd"}> : () -> ()
    %cst_18 = arith.constant dense<0.000000e+00> : vector<2x8x8xf32>
    %50 = tpu.matmul %48, %49, %cst_18 {dimension_numbers = #tpu.dot_dimension_numbers<[2], [1], [1], [2], [0, 0, 0, 1, 1, 2], [0], [0]>} : vector<2x8x8xbf16>, vector<2x8x8xbf16>, vector<2x8x8xf32> -> vector<2x8x8xf32>
    "tpu.trace_stop"() : () -> ()
    %51 = arith.truncf %50 : vector<2x8x8xf32> to vector<2x8x8xbf16>
    %52 = vector.shape_cast %51 : vector<2x8x8xbf16> to vector<16x8xbf16>
    %c0_19 = arith.constant 0 : index
    %c8 = arith.constant 8 : index
    %53 = vector.load %arg22[%c0_19, %c8] : memref<16x32xbf16, #tpu.memory_space<vmem>>, vector<16x8xbf16>
    tpu.vector_store %arg22[%c0_19, %c8], %52 {strides = array<i32>} : memref<16x32xbf16, #tpu.memory_space<vmem>>, vector<16x8xbf16>,
    %54 = vector.extract_strided_slice %11 {offsets = [0, 0, 16], sizes = [2, 8, 8], strides = [1, 1, 1]} : vector<2x8x32xbf16> to vector<2x8x8xbf16>
    %55 = vector.extract_strided_slice %13 {offsets = [0, 0, 16], sizes = [2, 8, 8], strides = [1, 1, 1]} : vector<2x8x32xbf16> to vector<2x8x8xbf16>
    "tpu.trace_start"() <{level = 10 : i32, message = "bqd,bkd->bqk"}> : () -> ()
    %cst_20 = arith.constant dense<0.000000e+00> : vector<2x8x8xf32>
    %56 = tpu.matmul %54, %55, %cst_20 {dimension_numbers = #tpu.dot_dimension_numbers<[2], [2], [1], [1], [0, 0, 0, 1, 1, 1], [0], [0]>} : vector<2x8x8xbf16>, vector<2x8x8xbf16>, vector<2x8x8xf32> -> vector<2x8x8xf32>
    "tpu.trace_stop"() : () -> ()
    %cst_21 = arith.constant dense<0xFF800000> : vector<2x8xf32>
    %57 = vector.multi_reduction <maximumf>, %56, %cst_21 [2] : vector<2x8x8xf32> to vector<2x8xf32>
    %58 = vector.shape_cast %57 : vector<2x8xf32> to vector<2x8x1xf32>
    %59 = vector.broadcast %58 : vector<2x8x1xf32> to vector<2x8x8xf32>
    %60 = arith.subf %56, %59 : vector<2x8x8xf32>
    %61 = math.exp %60 : vector<2x8x8xf32>
    %cst_22 = arith.constant dense<0.000000e+00> : vector<2x8xf32>
    %62 = vector.multi_reduction <add>, %61, %cst_22 [2] : vector<2x8x8xf32> to vector<2x8xf32>
    %63 = vector.shape_cast %62 : vector<2x8xf32> to vector<2x8x1xf32>
    %64 = tpu.reciprocal %63 {approx = true} : vector<2x8x1xf32> -> vector<2x8x1xf32>
    %65 = vector.broadcast %64 : vector<2x8x1xf32> to vector<2x8x8xf32>
    %66 = arith.mulf %61, %65 : vector<2x8x8xf32>
    %67 = arith.truncf %66 : vector<2x8x8xf32> to vector<2x8x8xbf16>
    %68 = vector.extract_strided_slice %15 {offsets = [0, 0, 16], sizes = [2, 8, 8], strides = [1, 1, 1]} : vector<2x8x32xbf16> to vector<2x8x8xbf16>
    "tpu.trace_start"() <{level = 10 : i32, message = "bqk,bkd->bqd"}> : () -> ()
    %cst_23 = arith.constant dense<0.000000e+00> : vector<2x8x8xf32>
    %69 = tpu.matmul %67, %68, %cst_23 {dimension_numbers = #tpu.dot_dimension_numbers<[2], [1], [1], [2], [0, 0, 0, 1, 1, 2], [0], [0]>} : vector<2x8x8xbf16>, vector<2x8x8xbf16>, vector<2x8x8xf32> -> vector<2x8x8xf32>
    "tpu.trace_stop"() : () -> ()
    %70 = arith.truncf %69 : vector<2x8x8xf32> to vector<2x8x8xbf16>
    %71 = vector.shape_cast %70 : vector<2x8x8xbf16> to vector<16x8xbf16>
    %c0_24 = arith.constant 0 : index
    %c16 = arith.constant 16 : index
    %72 = vector.load %arg22[%c0_24, %c16] : memref<16x32xbf16, #tpu.memory_space<vmem>>, vector<16x8xbf16>
    tpu.vector_store %arg22[%c0_24, %c16], %71 {strides = array<i32>} : memref<16x32xbf16, #tpu.memory_space<vmem>>, vector<16x8xbf16>,
    %73 = vector.extract_strided_slice %11 {offsets = [0, 0, 24], sizes = [2, 8, 8], strides = [1, 1, 1]} : vector<2x8x32xbf16> to vector<2x8x8xbf16>
    %74 = vector.extract_strided_slice %13 {offsets = [0, 0, 24], sizes = [2, 8, 8], strides = [1, 1, 1]} : vector<2x8x32xbf16> to vector<2x8x8xbf16>
    "tpu.trace_start"() <{level = 10 : i32, message = "bqd,bkd->bqk"}> : () -> ()
    %cst_25 = arith.constant dense<0.000000e+00> : vector<2x8x8xf32>
    %75 = tpu.matmul %73, %74, %cst_25 {dimension_numbers = #tpu.dot_dimension_numbers<[2], [2], [1], [1], [0, 0, 0, 1, 1, 1], [0], [0]>} : vector<2x8x8xbf16>, vector<2x8x8xbf16>, vector<2x8x8xf32> -> vector<2x8x8xf32>
    "tpu.trace_stop"() : () -> ()
    %cst_26 = arith.constant dense<0xFF800000> : vector<2x8xf32>
    %76 = vector.multi_reduction <maximumf>, %75, %cst_26 [2] : vector<2x8x8xf32> to vector<2x8xf32>
    %77 = vector.shape_cast %76 : vector<2x8xf32> to vector<2x8x1xf32>
    %78 = vector.broadcast %77 : vector<2x8x1xf32> to vector<2x8x8xf32>
    %79 = arith.subf %75, %78 : vector<2x8x8xf32>
    %80 = math.exp %79 : vector<2x8x8xf32>
    %cst_27 = arith.constant dense<0.000000e+00> : vector<2x8xf32>
    %81 = vector.multi_reduction <add>, %80, %cst_27 [2] : vector<2x8x8xf32> to vector<2x8xf32>
    %82 = vector.shape_cast %81 : vector<2x8xf32> to vector<2x8x1xf32>
    %83 = tpu.reciprocal %82 {approx = true} : vector<2x8x1xf32> -> vector<2x8x1xf32>
    %84 = vector.broadcast %83 : vector<2x8x1xf32> to vector<2x8x8xf32>
    %85 = arith.mulf %80, %84 : vector<2x8x8xf32>
    %86 = arith.truncf %85 : vector<2x8x8xf32> to vector<2x8x8xbf16>
    %87 = vector.extract_strided_slice %15 {offsets = [0, 0, 24], sizes = [2, 8, 8], strides = [1, 1, 1]} : vector<2x8x32xbf16> to vector<2x8x8xbf16>
    "tpu.trace_start"() <{level = 10 : i32, message = "bqk,bkd->bqd"}> : () -> ()
    %cst_28 = arith.constant dense<0.000000e+00> : vector<2x8x8xf32>
    %88 = tpu.matmul %86, %87, %cst_28 {dimension_numbers = #tpu.dot_dimension_numbers<[2], [1], [1], [2], [0, 0, 0, 1, 1, 2], [0], [0]>} : vector<2x8x8xbf16>, vector<2x8x8xbf16>, vector<2x8x8xf32> -> vector<2x8x8xf32>
    "tpu.trace_stop"() : () -> ()
    %89 = arith.truncf %88 : vector<2x8x8xf32> to vector<2x8x8xbf16>
    %90 = vector.shape_cast %89 : vector<2x8x8xbf16> to vector<16x8xbf16>
    %c0_29 = arith.constant 0 : index
    %c24 = arith.constant 24 : index
    %91 = vector.load %arg22[%c0_29, %c24] : memref<16x32xbf16, #tpu.memory_space<vmem>>, vector<16x8xbf16>
    tpu.vector_store %arg22[%c0_29, %c24], %90 {strides = array<i32>} : memref<16x32xbf16, #tpu.memory_space<vmem>>, vector<16x8xbf16>,
    %c0_30 = arith.constant 0 : index
    %c0_31 = arith.constant 0 : index
    %92 = vector.load %arg22[%c0_30, %c0_31] : memref<16x32xbf16, #tpu.memory_space<vmem>>, vector<16x32xbf16>
    %c0_32 = arith.constant 0 : index
    %c0_33 = arith.constant 0 : index
    %93 = vector.load %arg5[%c0_32, %c0_33] : memref<32x32xbf16, #tpu.memory_space<vmem>>, vector<32x32xbf16>
    %cst_34 = arith.constant dense<0.000000e+00> : vector<16x32xf32>
    %94 = tpu.matmul %92, %93, %cst_34 {dimension_numbers = #tpu.dot_dimension_numbers<[1], [0], [0], [1], [0, 0, 1, 1], [], []>} : vector<16x32xbf16>, vector<32x32xbf16>, vector<16x32xf32> -> vector<16x32xf32>
    %c0_35 = arith.constant 0 : index
    %c0_36 = arith.constant 0 : index
    %95 = vector.load %arg6[%c0_35, %c0_36] : memref<1x32xf32, #tpu.memory_space<vmem>>, vector<1x32xf32>
    %96 = vector.broadcast %95 : vector<1x32xf32> to vector<16x32xf32>
    %97 = arith.addf %94, %96 : vector<16x32xf32>
    %98 = vector.shape_cast %97 : vector<16x32xf32> to vector<2x8x32xf32>
    %99 = arith.addf %0, %98 : vector<2x8x32xf32>
    %100 = vector.shape_cast %99 : vector<2x8x32xf32> to vector<16x32xf32>
    %101 = arith.truncf %100 : vector<16x32xf32> to vector<16x32xbf16>
    %102 = vector.shape_cast %1 : vector<2x8x32xf32> to vector<16x32xf32>
    %103 = arith.truncf %102 : vector<16x32xf32> to vector<16x32xbf16>
    %c0_37 = arith.constant 0 : index
    %c0_38 = arith.constant 0 : index
    %104 = vector.load %arg7[%c0_37, %c0_38] : memref<32x32xbf16, #tpu.memory_space<vmem>>, vector<32x32xbf16>
    %cst_39 = arith.constant dense<0.000000e+00> : vector<16x32xf32>
    %105 = tpu.matmul %101, %104, %cst_39 {dimension_numbers = #tpu.dot_dimension_numbers<[1], [0], [0], [1], [0, 0, 1, 1], [], []>} : vector<16x32xbf16>, vector<32x32xbf16>, vector<16x32xf32> -> vector<16x32xf32>
    %c0_40 = arith.constant 0 : index
    %c0_41 = arith.constant 0 : index
    %106 = vector.load %arg8[%c0_40, %c0_41] : memref<1x32xf32, #tpu.memory_space<vmem>>, vector<1x32xf32>
    %107 = vector.broadcast %106 : vector<1x32xf32> to vector<16x32xf32>
    %108 = arith.addf %105, %107 : vector<16x32xf32>
    %109 = arith.truncf %108 : vector<16x32xf32> to vector<16x32xbf16>
    %110 = vector.shape_cast %109 : vector<16x32xbf16> to vector<2x8x32xbf16>
    %c0_42 = arith.constant 0 : index
    %c0_43 = arith.constant 0 : index
    %111 = vector.load %arg9[%c0_42, %c0_43] : memref<32x64xbf16, #tpu.memory_space<vmem>>, vector<32x64xbf16>
    %cst_44 = arith.constant dense<0.000000e+00> : vector<16x64xf32>
    %112 = tpu.matmul %103, %111, %cst_44 {dimension_numbers = #tpu.dot_dimension_numbers<[1], [0], [0], [1], [0, 0, 1, 1], [], []>} : vector<16x32xbf16>, vector<32x64xbf16>, vector<16x64xf32> -> vector<16x64xf32>
    %c0_45 = arith.constant 0 : index
    %c0_46 = arith.constant 0 : index
    %113 = vector.load %arg10[%c0_45, %c0_46] : memref<1x64xf32, #tpu.memory_space<vmem>>, vector<1x64xf32>
    %114 = vector.broadcast %113 : vector<1x64xf32> to vector<16x64xf32>
    %115 = arith.addf %112, %114 : vector<16x64xf32>
    %116 = arith.truncf %115 : vector<16x64xf32> to vector<16x64xbf16>
    %117 = vector.extract_strided_slice %116 {offsets = [0, 0], sizes = [16, 32], strides = [1, 1]} : vector<16x64xbf16> to vector<16x32xbf16>
    %118 = vector.shape_cast %117 : vector<16x32xbf16> to vector<2x8x32xbf16>
    %119 = vector.extract_strided_slice %116 {offsets = [0, 32], sizes = [16, 32], strides = [1, 1]} : vector<16x64xbf16> to vector<16x32xbf16>
    %120 = vector.shape_cast %119 : vector<16x32xbf16> to vector<2x8x32xbf16>
    %121 = vector.extract_strided_slice %110 {offsets = [0, 0, 0], sizes = [2, 8, 8], strides = [1, 1, 1]} : vector<2x8x32xbf16> to vector<2x8x8xbf16>
    %122 = vector.extract_strided_slice %118 {offsets = [0, 0, 0], sizes = [2, 8, 8], strides = [1, 1, 1]} : vector<2x8x32xbf16> to vector<2x8x8xbf16>
    "tpu.trace_start"() <{level = 10 : i32, message = "bqd,bkd->bqk"}> : () -> ()
    %cst_47 = arith.constant dense<0.000000e+00> : vector<2x8x8xf32>
    %123 = tpu.matmul %121, %122, %cst_47 {dimension_numbers = #tpu.dot_dimension_numbers<[2], [2], [1], [1], [0, 0, 0, 1, 1, 1], [0], [0]>} : vector<2x8x8xbf16>, vector<2x8x8xbf16>, vector<2x8x8xf32> -> vector<2x8x8xf32>
    "tpu.trace_stop"() : () -> ()
    %cst_48 = arith.constant dense<0xFF800000> : vector<2x8xf32>
    %124 = vector.multi_reduction <maximumf>, %123, %cst_48 [2] : vector<2x8x8xf32> to vector<2x8xf32>
    %125 = vector.shape_cast %124 : vector<2x8xf32> to vector<2x8x1xf32>
    %126 = vector.broadcast %125 : vector<2x8x1xf32> to vector<2x8x8xf32>
    %127 = arith.subf %123, %126 : vector<2x8x8xf32>
    %128 = math.exp %127 : vector<2x8x8xf32>
    %cst_49 = arith.constant dense<0.000000e+00> : vector<2x8xf32>
    %129 = vector.multi_reduction <add>, %128, %cst_49 [2] : vector<2x8x8xf32> to vector<2x8xf32>
    %130 = vector.shape_cast %129 : vector<2x8xf32> to vector<2x8x1xf32>
    %131 = tpu.reciprocal %130 {approx = true} : vector<2x8x1xf32> -> vector<2x8x1xf32>
    %132 = vector.broadcast %131 : vector<2x8x1xf32> to vector<2x8x8xf32>
    %133 = arith.mulf %128, %132 : vector<2x8x8xf32>
    %134 = arith.truncf %133 : vector<2x8x8xf32> to vector<2x8x8xbf16>
    %135 = vector.extract_strided_slice %120 {offsets = [0, 0, 0], sizes = [2, 8, 8], strides = [1, 1, 1]} : vector<2x8x32xbf16> to vector<2x8x8xbf16>
    "tpu.trace_start"() <{level = 10 : i32, message = "bqk,bkd->bqd"}> : () -> ()
    %cst_50 = arith.constant dense<0.000000e+00> : vector<2x8x8xf32>
    %136 = tpu.matmul %134, %135, %cst_50 {dimension_numbers = #tpu.dot_dimension_numbers<[2], [1], [1], [2], [0, 0, 0, 1, 1, 2], [0], [0]>} : vector<2x8x8xbf16>, vector<2x8x8xbf16>, vector<2x8x8xf32> -> vector<2x8x8xf32>
    "tpu.trace_stop"() : () -> ()
    %137 = arith.truncf %136 : vector<2x8x8xf32> to vector<2x8x8xbf16>
    %138 = vector.shape_cast %137 : vector<2x8x8xbf16> to vector<16x8xbf16>
    %c0_51 = arith.constant 0 : index
    %c0_52 = arith.constant 0 : index
    %139 = vector.load %arg22[%c0_51, %c0_52] : memref<16x32xbf16, #tpu.memory_space<vmem>>, vector<16x8xbf16>
    tpu.vector_store %arg22[%c0_51, %c0_52], %138 {strides = array<i32>} : memref<16x32xbf16, #tpu.memory_space<vmem>>, vector<16x8xbf16>,
    %140 = vector.extract_strided_slice %110 {offsets = [0, 0, 8], sizes = [2, 8, 8], strides = [1, 1, 1]} : vector<2x8x32xbf16> to vector<2x8x8xbf16>
    %141 = vector.extract_strided_slice %118 {offsets = [0, 0, 8], sizes = [2, 8, 8], strides = [1, 1, 1]} : vector<2x8x32xbf16> to vector<2x8x8xbf16>
    "tpu.trace_start"() <{level = 10 : i32, message = "bqd,bkd->bqk"}> : () -> ()
    %cst_53 = arith.constant dense<0.000000e+00> : vector<2x8x8xf32>
    %142 = tpu.matmul %140, %141, %cst_53 {dimension_numbers = #tpu.dot_dimension_numbers<[2], [2], [1], [1], [0, 0, 0, 1, 1, 1], [0], [0]>} : vector<2x8x8xbf16>, vector<2x8x8xbf16>, vector<2x8x8xf32> -> vector<2x8x8xf32>
    "tpu.trace_stop"() : () -> ()
    %cst_54 = arith.constant dense<0xFF800000> : vector<2x8xf32>
    %143 = vector.multi_reduction <maximumf>, %142, %cst_54 [2] : vector<2x8x8xf32> to vector<2x8xf32>
    %144 = vector.shape_cast %143 : vector<2x8xf32> to vector<2x8x1xf32>
    %145 = vector.broadcast %144 : vector<2x8x1xf32> to vector<2x8x8xf32>
    %146 = arith.subf %142, %145 : vector<2x8x8xf32>
    %147 = math.exp %146 : vector<2x8x8xf32>
    %cst_55 = arith.constant dense<0.000000e+00> : vector<2x8xf32>
    %148 = vector.multi_reduction <add>, %147, %cst_55 [2] : vector<2x8x8xf32> to vector<2x8xf32>
    %149 = vector.shape_cast %148 : vector<2x8xf32> to vector<2x8x1xf32>
    %150 = tpu.reciprocal %149 {approx = true} : vector<2x8x1xf32> -> vector<2x8x1xf32>
    %151 = vector.broadcast %150 : vector<2x8x1xf32> to vector<2x8x8xf32>
    %152 = arith.mulf %147, %151 : vector<2x8x8xf32>
    %153 = arith.truncf %152 : vector<2x8x8xf32> to vector<2x8x8xbf16>
    %154 = vector.extract_strided_slice %120 {offsets = [0, 0, 8], sizes = [2, 8, 8], strides = [1, 1, 1]} : vector<2x8x32xbf16> to vector<2x8x8xbf16>
    "tpu.trace_start"() <{level = 10 : i32, message = "bqk,bkd->bqd"}> : () -> ()
    %cst_56 = arith.constant dense<0.000000e+00> : vector<2x8x8xf32>
    %155 = tpu.matmul %153, %154, %cst_56 {dimension_numbers = #tpu.dot_dimension_numbers<[2], [1], [1], [2], [0, 0, 0, 1, 1, 2], [0], [0]>} : vector<2x8x8xbf16>, vector<2x8x8xbf16>, vector<2x8x8xf32> -> vector<2x8x8xf32>
    "tpu.trace_stop"() : () -> ()
    %156 = arith.truncf %155 : vector<2x8x8xf32> to vector<2x8x8xbf16>
    %157 = vector.shape_cast %156 : vector<2x8x8xbf16> to vector<16x8xbf16>
    %c0_57 = arith.constant 0 : index
    %c8_58 = arith.constant 8 : index
    %158 = vector.load %arg22[%c0_57, %c8_58] : memref<16x32xbf16, #tpu.memory_space<vmem>>, vector<16x8xbf16>
    tpu.vector_store %arg22[%c0_57, %c8_58], %157 {strides = array<i32>} : memref<16x32xbf16, #tpu.memory_space<vmem>>, vector<16x8xbf16>,
    %159 = vector.extract_strided_slice %110 {offsets = [0, 0, 16], sizes = [2, 8, 8], strides = [1, 1, 1]} : vector<2x8x32xbf16> to vector<2x8x8xbf16>
    %160 = vector.extract_strided_slice %118 {offsets = [0, 0, 16], sizes = [2, 8, 8], strides = [1, 1, 1]} : vector<2x8x32xbf16> to vector<2x8x8xbf16>
    "tpu.trace_start"() <{level = 10 : i32, message = "bqd,bkd->bqk"}> : () -> ()
    %cst_59 = arith.constant dense<0.000000e+00> : vector<2x8x8xf32>
    %161 = tpu.matmul %159, %160, %cst_59 {dimension_numbers = #tpu.dot_dimension_numbers<[2], [2], [1], [1], [0, 0, 0, 1, 1, 1], [0], [0]>} : vector<2x8x8xbf16>, vector<2x8x8xbf16>, vector<2x8x8xf32> -> vector<2x8x8xf32>
    "tpu.trace_stop"() : () -> ()
    %cst_60 = arith.constant dense<0xFF800000> : vector<2x8xf32>
    %162 = vector.multi_reduction <maximumf>, %161, %cst_60 [2] : vector<2x8x8xf32> to vector<2x8xf32>
    %163 = vector.shape_cast %162 : vector<2x8xf32> to vector<2x8x1xf32>
    %164 = vector.broadcast %163 : vector<2x8x1xf32> to vector<2x8x8xf32>
    %165 = arith.subf %161, %164 : vector<2x8x8xf32>
    %166 = math.exp %165 : vector<2x8x8xf32>
    %cst_61 = arith.constant dense<0.000000e+00> : vector<2x8xf32>
    %167 = vector.multi_reduction <add>, %166, %cst_61 [2] : vector<2x8x8xf32> to vector<2x8xf32>
    %168 = vector.shape_cast %167 : vector<2x8xf32> to vector<2x8x1xf32>
    %169 = tpu.reciprocal %168 {approx = true} : vector<2x8x1xf32> -> vector<2x8x1xf32>
    %170 = vector.broadcast %169 : vector<2x8x1xf32> to vector<2x8x8xf32>
    %171 = arith.mulf %166, %170 : vector<2x8x8xf32>
    %172 = arith.truncf %171 : vector<2x8x8xf32> to vector<2x8x8xbf16>
    %173 = vector.extract_strided_slice %120 {offsets = [0, 0, 16], sizes = [2, 8, 8], strides = [1, 1, 1]} : vector<2x8x32xbf16> to vector<2x8x8xbf16>
    "tpu.trace_start"() <{level = 10 : i32, message = "bqk,bkd->bqd"}> : () -> ()
    %cst_62 = arith.constant dense<0.000000e+00> : vector<2x8x8xf32>
    %174 = tpu.matmul %172, %173, %cst_62 {dimension_numbers = #tpu.dot_dimension_numbers<[2], [1], [1], [2], [0, 0, 0, 1, 1, 2], [0], [0]>} : vector<2x8x8xbf16>, vector<2x8x8xbf16>, vector<2x8x8xf32> -> vector<2x8x8xf32>
    "tpu.trace_stop"() : () -> ()
    %175 = arith.truncf %174 : vector<2x8x8xf32> to vector<2x8x8xbf16>
    %176 = vector.shape_cast %175 : vector<2x8x8xbf16> to vector<16x8xbf16>
    %c0_63 = arith.constant 0 : index
    %c16_64 = arith.constant 16 : index
    %177 = vector.load %arg22[%c0_63, %c16_64] : memref<16x32xbf16, #tpu.memory_space<vmem>>, vector<16x8xbf16>
    tpu.vector_store %arg22[%c0_63, %c16_64], %176 {strides = array<i32>} : memref<16x32xbf16, #tpu.memory_space<vmem>>, vector<16x8xbf16>,
    %178 = vector.extract_strided_slice %110 {offsets = [0, 0, 24], sizes = [2, 8, 8], strides = [1, 1, 1]} : vector<2x8x32xbf16> to vector<2x8x8xbf16>
    %179 = vector.extract_strided_slice %118 {offsets = [0, 0, 24], sizes = [2, 8, 8], strides = [1, 1, 1]} : vector<2x8x32xbf16> to vector<2x8x8xbf16>
    "tpu.trace_start"() <{level = 10 : i32, message = "bqd,bkd->bqk"}> : () -> ()
    %cst_65 = arith.constant dense<0.000000e+00> : vector<2x8x8xf32>
    %180 = tpu.matmul %178, %179, %cst_65 {dimension_numbers = #tpu.dot_dimension_numbers<[2], [2], [1], [1], [0, 0, 0, 1, 1, 1], [0], [0]>} : vector<2x8x8xbf16>, vector<2x8x8xbf16>, vector<2x8x8xf32> -> vector<2x8x8xf32>
    "tpu.trace_stop"() : () -> ()
    %cst_66 = arith.constant dense<0xFF800000> : vector<2x8xf32>
    %181 = vector.multi_reduction <maximumf>, %180, %cst_66 [2] : vector<2x8x8xf32> to vector<2x8xf32>
    %182 = vector.shape_cast %181 : vector<2x8xf32> to vector<2x8x1xf32>
    %183 = vector.broadcast %182 : vector<2x8x1xf32> to vector<2x8x8xf32>
    %184 = arith.subf %180, %183 : vector<2x8x8xf32>
    %185 = math.exp %184 : vector<2x8x8xf32>
    %cst_67 = arith.constant dense<0.000000e+00> : vector<2x8xf32>
    %186 = vector.multi_reduction <add>, %185, %cst_67 [2] : vector<2x8x8xf32> to vector<2x8xf32>
    %187 = vector.shape_cast %186 : vector<2x8xf32> to vector<2x8x1xf32>
    %188 = tpu.reciprocal %187 {approx = true} : vector<2x8x1xf32> -> vector<2x8x1xf32>
    %189 = vector.broadcast %188 : vector<2x8x1xf32> to vector<2x8x8xf32>
    %190 = arith.mulf %185, %189 : vector<2x8x8xf32>
    %191 = arith.truncf %190 : vector<2x8x8xf32> to vector<2x8x8xbf16>
    %192 = vector.extract_strided_slice %120 {offsets = [0, 0, 24], sizes = [2, 8, 8], strides = [1, 1, 1]} : vector<2x8x32xbf16> to vector<2x8x8xbf16>
    "tpu.trace_start"() <{level = 10 : i32, message = "bqk,bkd->bqd"}> : () -> ()
    %cst_68 = arith.constant dense<0.000000e+00> : vector<2x8x8xf32>
    %193 = tpu.matmul %191, %192, %cst_68 {dimension_numbers = #tpu.dot_dimension_numbers<[2], [1], [1], [2], [0, 0, 0, 1, 1, 2], [0], [0]>} : vector<2x8x8xbf16>, vector<2x8x8xbf16>, vector<2x8x8xf32> -> vector<2x8x8xf32>
    "tpu.trace_stop"() : () -> ()
    %194 = arith.truncf %193 : vector<2x8x8xf32> to vector<2x8x8xbf16>
    %195 = vector.shape_cast %194 : vector<2x8x8xbf16> to vector<16x8xbf16>
    %c0_69 = arith.constant 0 : index
    %c24_70 = arith.constant 24 : index
    %196 = vector.load %arg22[%c0_69, %c24_70] : memref<16x32xbf16, #tpu.memory_space<vmem>>, vector<16x8xbf16>
    tpu.vector_store %arg22[%c0_69, %c24_70], %195 {strides = array<i32>} : memref<16x32xbf16, #tpu.memory_space<vmem>>, vector<16x8xbf16>,
    %c0_71 = arith.constant 0 : index
    %c0_72 = arith.constant 0 : index
    %197 = vector.load %arg22[%c0_71, %c0_72] : memref<16x32xbf16, #tpu.memory_space<vmem>>, vector<16x32xbf16>
    %c0_73 = arith.constant 0 : index
    %c0_74 = arith.constant 0 : index
    %198 = vector.load %arg11[%c0_73, %c0_74] : memref<32x32xbf16, #tpu.memory_space<vmem>>, vector<32x32xbf16>
    %cst_75 = arith.constant dense<0.000000e+00> : vector<16x32xf32>
    %199 = tpu.matmul %197, %198, %cst_75 {dimension_numbers = #tpu.dot_dimension_numbers<[1], [0], [0], [1], [0, 0, 1, 1], [], []>} : vector<16x32xbf16>, vector<32x32xbf16>, vector<16x32xf32> -> vector<16x32xf32>
    %c0_76 = arith.constant 0 : index
    %c0_77 = arith.constant 0 : index
    %200 = vector.load %arg12[%c0_76, %c0_77] : memref<1x32xf32, #tpu.memory_space<vmem>>, vector<1x32xf32>
    %201 = vector.broadcast %200 : vector<1x32xf32> to vector<16x32xf32>
    %202 = arith.addf %199, %201 : vector<16x32xf32>
    %203 = vector.shape_cast %202 : vector<16x32xf32> to vector<2x8x32xf32>
    %204 = arith.addf %99, %203 : vector<2x8x32xf32>
    %205 = vector.shape_cast %204 : vector<2x8x32xf32> to vector<16x32xf32>
    %c0_78 = arith.constant 0 : index
    %c0_79 = arith.constant 0 : index
    %206 = vector.load %arg17[%c0_78, %c0_79] : memref<1x32xf32, #tpu.memory_space<vmem>>, vector<1x32xf32>
    %c0_80 = arith.constant 0 : index
    %c0_81 = arith.constant 0 : index
    %207 = vector.load %arg18[%c0_80, %c0_81] : memref<1x32xf32, #tpu.memory_space<vmem>>, vector<1x32xf32>
    %cst_82 = arith.constant dense<0.000000e+00> : vector<16xf32>
    %208 = vector.multi_reduction <add>, %205, %cst_82 [1] : vector<16x32xf32> to vector<16xf32>
    %209 = vector.shape_cast %208 : vector<16xf32> to vector<16x1xf32>
    %cst_83 = arith.constant 3.200000e+01 : f32
    %210 = vector.broadcast %cst_83 : f32 to vector<16x1xf32>
    %211 = arith.divf %209, %210 : vector<16x1xf32>
    %212 = vector.broadcast %211 : vector<16x1xf32> to vector<16x32xf32>
    %213 = arith.subf %205, %212 : vector<16x32xf32>
    %214 = arith.mulf %213, %213 : vector<16x32xf32>
    %cst_84 = arith.constant dense<0.000000e+00> : vector<16xf32>
    %215 = vector.multi_reduction <add>, %214, %cst_84 [1] : vector<16x32xf32> to vector<16xf32>
    %216 = vector.shape_cast %215 : vector<16xf32> to vector<16x1xf32>
    %cst_85 = arith.constant 3.200000e+01 : f32
    %217 = vector.broadcast %cst_85 : f32 to vector<16x1xf32>
    %218 = arith.divf %216, %217 : vector<16x1xf32>
    %219 = vector.broadcast %211 : vector<16x1xf32> to vector<16x32xf32>
    %220 = arith.subf %205, %219 : vector<16x32xf32>
    %cst_86 = arith.constant 9.99999974E-6 : f32
    %221 = vector.broadcast %cst_86 : f32 to vector<16x1xf32>
    %222 = arith.addf %218, %221 : vector<16x1xf32>
    %223 = math.rsqrt %222 : vector<16x1xf32>
    %224 = vector.broadcast %223 : vector<16x1xf32> to vector<16x32xf32>
    %225 = arith.mulf %220, %224 : vector<16x32xf32>
    %226 = vector.broadcast %206 : vector<1x32xf32> to vector<16x32xf32>
    %227 = arith.mulf %225, %226 : vector<16x32xf32>
    %228 = vector.broadcast %207 : vector<1x32xf32> to vector<16x32xf32>
    %229 = arith.addf %227, %228 : vector<16x32xf32>
    %230 = arith.truncf %229 : vector<16x32xf32> to vector<16x32xbf16>
    %c0_87 = arith.constant 0 : index
    %c0_88 = arith.constant 0 : index
    %231 = vector.load %arg13[%c0_87, %c0_88] : memref<32x32xbf16, #tpu.memory_space<vmem>>, vector<32x32xbf16>
    %cst_89 = arith.constant dense<0.000000e+00> : vector<16x32xf32>
    %232 = tpu.matmul %230, %231, %cst_89 {dimension_numbers = #tpu.dot_dimension_numbers<[1], [0], [0], [1], [0, 0, 1, 1], [], []>} : vector<16x32xbf16>, vector<32x32xbf16>, vector<16x32xf32> -> vector<16x32xf32>
    %c0_90 = arith.constant 0 : index
    %c0_91 = arith.constant 0 : index
    %233 = vector.load %arg14[%c0_90, %c0_91] : memref<1x32xf32, #tpu.memory_space<vmem>>, vector<1x32xf32>
    %234 = vector.broadcast %233 : vector<1x32xf32> to vector<16x32xf32>
    %235 = arith.addf %232, %234 : vector<16x32xf32>
    %236 = arith.truncf %235 : vector<16x32xf32> to vector<16x32xbf16>
    %c0_92 = arith.constant 0 : index
    %c0_93 = arith.constant 0 : index
    %237 = vector.load %arg15[%c0_92, %c0_93] : memref<32x32xbf16, #tpu.memory_space<vmem>>, vector<32x32xbf16>
    %cst_94 = arith.constant dense<0.000000e+00> : vector<16x32xf32>
    %238 = tpu.matmul %236, %237, %cst_94 {dimension_numbers = #tpu.dot_dimension_numbers<[1], [0], [0], [1], [0, 0, 1, 1], [], []>} : vector<16x32xbf16>, vector<32x32xbf16>, vector<16x32xf32> -> vector<16x32xf32>
    %c0_95 = arith.constant 0 : index
    %c0_96 = arith.constant 0 : index
    %239 = vector.load %arg16[%c0_95, %c0_96] : memref<1x32xf32, #tpu.memory_space<vmem>>, vector<1x32xf32>
    %240 = vector.broadcast %239 : vector<1x32xf32> to vector<16x32xf32>
    %241 = arith.addf %238, %240 : vector<16x32xf32>
    %242 = arith.addf %229, %241 : vector<16x32xf32>
    %243 = arith.addf %242, %229 : vector<16x32xf32>
    %c0_97 = arith.constant 0 : index
    %c0_98 = arith.constant 0 : index
    %244 = vector.load %arg19[%c0_97, %c0_98] : memref<1x32xf32, #tpu.memory_space<vmem>>, vector<1x32xf32>
    %c0_99 = arith.constant 0 : index
    %c0_100 = arith.constant 0 : index
    %245 = vector.load %arg20[%c0_99, %c0_100] : memref<1x32xf32, #tpu.memory_space<vmem>>, vector<1x32xf32>
    %cst_101 = arith.constant dense<0.000000e+00> : vector<16xf32>
    %246 = vector.multi_reduction <add>, %243, %cst_101 [1] : vector<16x32xf32> to vector<16xf32>
    %247 = vector.shape_cast %246 : vector<16xf32> to vector<16x1xf32>
    %cst_102 = arith.constant 3.200000e+01 : f32
    %248 = vector.broadcast %cst_102 : f32 to vector<16x1xf32>
    %249 = arith.divf %247, %248 : vector<16x1xf32>
    %250 = vector.broadcast %249 : vector<16x1xf32> to vector<16x32xf32>
    %251 = arith.subf %243, %250 : vector<16x32xf32>
    %252 = arith.mulf %251, %251 : vector<16x32xf32>
    %cst_103 = arith.constant dense<0.000000e+00> : vector<16xf32>
    %253 = vector.multi_reduction <add>, %252, %cst_103 [1] : vector<16x32xf32> to vector<16xf32>
    %254 = vector.shape_cast %253 : vector<16xf32> to vector<16x1xf32>
    %cst_104 = arith.constant 3.200000e+01 : f32
    %255 = vector.broadcast %cst_104 : f32 to vector<16x1xf32>
    %256 = arith.divf %254, %255 : vector<16x1xf32>
    %257 = vector.broadcast %249 : vector<16x1xf32> to vector<16x32xf32>
    %258 = arith.subf %243, %257 : vector<16x32xf32>
    %cst_105 = arith.constant 9.99999974E-6 : f32
    %259 = vector.broadcast %cst_105 : f32 to vector<16x1xf32>
    %260 = arith.addf %256, %259 : vector<16x1xf32>
    %261 = math.rsqrt %260 : vector<16x1xf32>
    %262 = vector.broadcast %261 : vector<16x1xf32> to vector<16x32xf32>
    %263 = arith.mulf %258, %262 : vector<16x32xf32>
    %264 = vector.broadcast %244 : vector<1x32xf32> to vector<16x32xf32>
    %265 = arith.mulf %263, %264 : vector<16x32xf32>
    %266 = vector.broadcast %245 : vector<1x32xf32> to vector<16x32xf32>
    %267 = arith.addf %265, %266 : vector<16x32xf32>
    %268 = vector.shape_cast %267 : vector<16x32xf32> to vector<2x8x32xf32>
    %c0_106 = arith.constant 0 : index
    %c0_107 = arith.constant 0 : index
    %c0_108 = arith.constant 0 : index
    %269 = vector.load %arg21[%c0_106, %c0_107, %c0_108] : memref<2x8x32xf32, #tpu.memory_space<vmem>>, vector<2x8x32xf32>
    tpu.vector_store %arg21[%c0_106, %c0_107, %c0_108], %268 {strides = array<i32>} : memref<2x8x32xf32, #tpu.memory_space<vmem>>, vector<2x8x32xf32>,
    return
  }
  func.func @transform_0(%arg0: i32) -> (i32, i32, i32) {
    %c0_i32 = arith.constant 0 : i32
    %c0_i32_0 = arith.constant 0 : i32
    %c0_i32_1 = arith.constant 0 : i32
    return %arg0, %c0_i32, %c0_i32_0 : i32, i32, i32
  }
  func.func @transform_1(%arg0: i32) -> (i32, i32, i32) {
    %c0_i32 = arith.constant 0 : i32
    %c0_i32_0 = arith.constant 0 : i32
    %c0_i32_1 = arith.constant 0 : i32
    return %arg0, %c0_i32, %c0_i32_0 : i32, i32, i32
  }
  func.func @transform_2(%arg0: i32) -> (i32, i32) {
    %c0_i32 = arith.constant 0 : i32
    %c0_i32_0 = arith.constant 0 : i32
    %c0_i32_1 = arith.constant 0 : i32
    return %c0_i32, %c0_i32_0 : i32, i32
  }
  func.func @transform_3(%arg0: i32) -> (i32, i32) {
    %c0_i32 = arith.constant 0 : i32
    %c0_i32_0 = arith.constant 0 : i32
    %c0_i32_1 = arith.constant 0 : i32
    return %c0_i32, %c0_i32_0 : i32, i32
  }
  func.func @transform_4(%arg0: i32) -> (i32, i32) {
    %c0_i32 = arith.constant 0 : i32
    %c0_i32_0 = arith.constant 0 : i32
    %c0_i32_1 = arith.constant 0 : i32
    return %c0_i32, %c0_i32_0 : i32, i32
  }
  func.func @transform_5(%arg0: i32) -> (i32, i32) {
    %c0_i32 = arith.constant 0 : i32
    %c0_i32_0 = arith.constant 0 : i32
    %c0_i32_1 = arith.constant 0 : i32
    return %c0_i32, %c0_i32_0 : i32, i32
  }
  func.func @transform_6(%arg0: i32) -> (i32, i32) {
    %c0_i32 = arith.constant 0 : i32
    %c0_i32_0 = arith.constant 0 : i32
    %c0_i32_1 = arith.constant 0 : i32
    return %c0_i32, %c0_i32_0 : i32, i32
  }
  func.func @transform_7(%arg0: i32) -> (i32, i32) {
    %c0_i32 = arith.constant 0 : i32
    %c0_i32_0 = arith.constant 0 : i32
    %c0_i32_1 = arith.constant 0 : i32
    return %c0_i32, %c0_i32_0 : i32, i32
  }
  func.func @transform_8(%arg0: i32) -> (i32, i32) {
    %c0_i32 = arith.constant 0 : i32
    %c0_i32_0 = arith.constant 0 : i32
    %c0_i32_1 = arith.constant 0 : i32
    return %c0_i32, %c0_i32_0 : i32, i32
  }
  func.func @transform_9(%arg0: i32) -> (i32, i32) {
    %c0_i32 = arith.constant 0 : i32
    %c0_i32_0 = arith.constant 0 : i32
    %c0_i32_1 = arith.constant 0 : i32
    return %c0_i32, %c0_i32_0 : i32, i32
  }
  func.func @transform_10(%arg0: i32) -> (i32, i32) {
    %c0_i32 = arith.constant 0 : i32
    %c0_i32_0 = arith.constant 0 : i32
    %c0_i32_1 = arith.constant 0 : i32
    return %c0_i32, %c0_i32_0 : i32, i32
  }
  func.func @transform_11(%arg0: i32) -> (i32, i32) {
    %c0_i32 = arith.constant 0 : i32
    %c0_i32_0 = arith.constant 0 : i32
    %c0_i32_1 = arith.constant 0 : i32
    return %c0_i32, %c0_i32_0 : i32, i32
  }
  func.func @transform_12(%arg0: i32) -> (i32, i32) {
    %c0_i32 = arith.constant 0 : i32
    %c0_i32_0 = arith.constant 0 : i32
    %c0_i32_1 = arith.constant 0 : i32
    return %c0_i32, %c0_i32_0 : i32, i32
  }
  func.func @transform_13(%arg0: i32) -> (i32, i32) {
    %c0_i32 = arith.constant 0 : i32
    %c0_i32_0 = arith.constant 0 : i32
    %c0_i32_1 = arith.constant 0 : i32
    return %c0_i32, %c0_i32_0 : i32, i32
  }
  func.func @transform_14(%arg0: i32) -> (i32, i32) {
    %c0_i32 = arith.constant 0 : i32
    %c0_i32_0 = arith.constant 0 : i32
    %c0_i32_1 = arith.constant 0 : i32
    return %c0_i32, %c0_i32_0 : i32, i32
  }
  func.func @transform_15(%arg0: i32) -> (i32, i32) {
    %c0_i32 = arith.constant 0 : i32
    %c0_i32_0 = arith.constant 0 : i32
    %c0_i32_1 = arith.constant 0 : i32
    return %c0_i32, %c0_i32_0 : i32, i32
  }
  func.func @transform_16(%arg0: i32) -> (i32, i32) {
    %c0_i32 = arith.constant 0 : i32
    %c0_i32_0 = arith.constant 0 : i32
    %c0_i32_1 = arith.constant 0 : i32
    return %c0_i32, %c0_i32_0 : i32, i32
  }
  func.func @transform_17(%arg0: i32) -> (i32, i32) {
    %c0_i32 = arith.constant 0 : i32
    %c0_i32_0 = arith.constant 0 : i32
    %c0_i32_1 = arith.constant 0 : i32
    return %c0_i32, %c0_i32_0 : i32, i32
  }
  func.func @transform_18(%arg0: i32) -> (i32, i32) {
    %c0_i32 = arith.constant 0 : i32
    %c0_i32_0 = arith.constant 0 : i32
    %c0_i32_1 = arith.constant 0 : i32
    return %c0_i32, %c0_i32_0 : i32, i32
  }
  func.func @transform_19(%arg0: i32) -> (i32, i32) {
    %c0_i32 = arith.constant 0 : i32
    %c0_i32_0 = arith.constant 0 : i32
    %c0_i32_1 = arith.constant 0 : i32
    return %c0_i32, %c0_i32_0 : i32, i32
  }
  func.func @transform_20(%arg0: i32) -> (i32, i32, i32) {
    %c0_i32 = arith.constant 0 : i32
    %c0_i32_0 = arith.constant 0 : i32
    %c0_i32_1 = arith.constant 0 : i32
    return %arg0, %c0_i32, %c0_i32_0 : i32, i32, i32
  }
}

</mosaic_0001>

<llo_original>
// kernel: tpu_custom_call.1
$region0: #{tpu_custom_call.1}
  #allocation0 [shape = 'u32[]', space=smem, size = 0x4, offset = 0x4, fixed_abs, tag = 'smem constant byte address 0x4 - core index']
  #allocation1 [shape = 'u32[144,128]{1,0:T(1,128)}', space=vmem, size = 0x12000, scoped, tag = 'internal scratch']
  #allocation2 [shape = 'bf16[16,32]{1,0:T(16,128)(2,1)}', space=vmem, size = 0x1000, scoped, tag = 'scratch operand']
  %s0 = inlined_call_operand.hbm [shape: f32[2,8,32], index: 0, kind: input, shape index: {}]
  %s1 = inlined_call_operand.hbm [shape: f32[2,8,32], index: 1, kind: input, shape index: {}]
  %s2 = inlined_call_operand.hbm [shape: bf16[32,96], index: 2, kind: input, shape index: {}]
  %s3 = inlined_call_operand.hbm [shape: f32[1,96], index: 3, kind: input, shape index: {}]
  %s4 = inlined_call_operand.hbm [shape: bf16[32,32], index: 4, kind: input, shape index: {}]
  %s5 = inlined_call_operand.hbm [shape: f32[1,32], index: 5, kind: input, shape index: {}]
  %s6 = inlined_call_operand.hbm [shape: bf16[32,32], index: 6, kind: input, shape index: {}]
  %s7 = inlined_call_operand.hbm [shape: f32[1,32], index: 7, kind: input, shape index: {}]
  %s8 = inlined_call_operand.hbm [shape: bf16[32,64], index: 8, kind: input, shape index: {}]
  %s9 = inlined_call_operand.hbm [shape: f32[1,64], index: 9, kind: input, shape index: {}]
  %s10 = inlined_call_operand.hbm [shape: bf16[32,32], index: 10, kind: input, shape index: {}]
  %s11 = inlined_call_operand.hbm [shape: f32[1,32], index: 11, kind: input, shape index: {}]
  %s12 = inlined_call_operand.hbm [shape: bf16[32,32], index: 12, kind: input, shape index: {}]
  %s13 = inlined_call_operand.hbm [shape: f32[1,32], index: 13, kind: input, shape index: {}]
  %s14 = inlined_call_operand.hbm [shape: bf16[32,32], index: 14, kind: input, shape index: {}]
  %s15 = inlined_call_operand.hbm [shape: f32[1,32], index: 15, kind: input, shape index: {}]
  %s16 = inlined_call_operand.hbm [shape: f32[1,32], index: 16, kind: input, shape index: {}]
  %s17 = inlined_call_operand.hbm [shape: f32[1,32], index: 17, kind: input, shape index: {}]
  %s18 = inlined_call_operand.hbm [shape: f32[1,32], index: 18, kind: input, shape index: {}]
  %s19 = inlined_call_operand.hbm [shape: f32[1,32], index: 19, kind: input, shape index: {}]
  %s20 = inlined_call_operand.hbm [shape: f32[2,8,32], index: 20, kind: output, shape index: {}]
  %s21 = sld [smem:[#allocation0]]
  $region170: #{tpu_custom_call.1} parent=0
    _
  %s23 = ssub.s32 1, %s21
  %s24 = scalar_select 0, %s23, %s21
  $region1: #{tpu_custom_call.1} parent=0
    #allocation3 [shape = 'u8[8192]{0}', space=vmem, size = 0x2000, scoped, tag = 'input window, operand 0, single buffered']
    #allocation4 [shape = 's32[1]{0}', space=sflag, size = 0x4, scoped, tag = 'scoped memory for tpu_custom_call.1']
    #allocation5 [shape = 's32[1]{0}', space=sflag, size = 0x4, scoped, tag = 'scoped memory for tpu_custom_call.1']
    #allocation6 [shape = 'u8[8192]{0}', space=vmem, size = 0x2000, scoped, tag = 'input window, operand 1, single buffered']
    #allocation7 [shape = 's32[1]{0}', space=sflag, size = 0x4, scoped, tag = 'scoped memory for tpu_custom_call.1']
    #allocation8 [shape = 'u8[8192]{0}', space=vmem, size = 0x2000, scoped, tag = 'input window, operand 2, single buffered']
    #allocation9 [shape = 'u8[512]{0}', space=vmem, size = 0x400, scoped, tag = 'input window, operand 3, single buffered']
    #allocation10 [shape = 's32[1]{0}', space=sflag, size = 0x4, scoped, tag = 'scoped memory for tpu_custom_call.1']
    #allocation11 [shape = 'u8[8192]{0}', space=vmem, size = 0x2000, scoped, tag = 'input window, operand 4, single buffered']
    #allocation12 [shape = 'u8[512]{0}', space=vmem, size = 0x400, scoped, tag = 'input window, operand 5, single buffered']
    #allocation13 [shape = 's32[1]{0}', space=sflag, size = 0x4, scoped, tag = 'scoped memory for tpu_custom_call.1']
    #allocation14 [shape = 'u8[8192]{0}', space=vmem, size = 0x2000, scoped, tag = 'input window, operand 6, single buffered']
    #allocation15 [shape = 'u8[512]{0}', space=vmem, size = 0x400, scoped, tag = 'input window, operand 7, single buffered']
    #allocation16 [shape = 's32[1]{0}', space=sflag, size = 0x4, scoped, tag = 'scoped memory for tpu_custom_call.1']
    #allocation17 [shape = 'u8[8192]{0}', space=vmem, size = 0x2000, scoped, tag = 'input window, operand 8, single buffered']
    #allocation18 [shape = 'u8[512]{0}', space=vmem, size = 0x400, scoped, tag = 'input window, operand 9, single buffered']
    #allocation19 [shape = 's32[1]{0}', space=sflag, size = 0x4, scoped, tag = 'scoped memory for tpu_custom_call.1']
    #allocation20 [shape = 'u8[8192]{0}', space=vmem, size = 0x2000, scoped, tag = 'input window, operand 10, single buffered']
    #allocation21 [shape = 'u8[512]{0}', space=vmem, size = 0x400, scoped, tag = 'input window, operand 11, single buffered']
    #allocation22 [shape = 's32[1]{0}', space=sflag, size = 0x4, scoped, tag = 'scoped memory for tpu_custom_call.1']
    #allocation23 [shape = 'u8[8192]{0}', space=vmem, size = 0x2000, scoped, tag = 'input window, operand 12, single buffered']
    #allocation24 [shape = 'u8[512]{0}', space=vmem, size = 0x400, scoped, tag = 'input window, operand 13, single buffered']
    #allocation25 [shape = 's32[1]{0}', space=sflag, size = 0x4, scoped, tag = 'scoped memory for tpu_custom_call.1']
    #allocation26 [shape = 'u8[8192]{0}', space=vmem, size = 0x2000, scoped, tag = 'input window, operand 14, single buffered']
    #allocation27 [shape = 'u8[512]{0}', space=vmem, size = 0x400, scoped, tag = 'input window, operand 15, single buffered']
    #allocation28 [shape = 's32[1]{0}', space=sflag, size = 0x4, scoped, tag = 'scoped memory for tpu_custom_call.1']
    #allocation29 [shape = 'u8[512]{0}', space=vmem, size = 0x400, scoped, tag = 'input window, operand 16, single buffered']
    #allocation30 [shape = 'u8[512]{0}', space=vmem, size = 0x400, scoped, tag = 'input window, operand 17, single buffered']
    #allocation31 [shape = 's32[1]{0}', space=sflag, size = 0x4, scoped, tag = 'scoped memory for tpu_custom_call.1']
    #allocation32 [shape = 'u8[512]{0}', space=vmem, size = 0x400, scoped, tag = 'input window, operand 18, single buffered']
    #allocation33 [shape = 'u8[512]{0}', space=vmem, size = 0x400, scoped, tag = 'input window, operand 19, single buffered']
    #allocation34 [shape = 's32[1]{0}', space=sflag, size = 0x4, scoped, tag = 'scoped memory for tpu_custom_call.1']
    #allocation35 [shape = 'u8[8192]{0}', space=vmem, size = 0x2000, scoped, tag = 'output window, operand 0, single buffered']
    %25 = vsyncpa [#allocation4], 0
    %26 = vsyncpa [#allocation7], 0
    %27 = vsyncpa [#allocation10], 0
    %28 = vsyncpa [#allocation13], 0
    %29 = vsyncpa [#allocation16], 0
    %30 = vsyncpa [#allocation19], 0
    %31 = vsyncpa [#allocation22], 0
    %32 = vsyncpa [#allocation25], 0
    %33 = vsyncpa [#allocation28], 0
    %34 = vsyncpa [#allocation31], 0
    %35 = vsyncpa [#allocation34], 0
    %36 = vsyncpa [#allocation5], 0
    // Predicated region
    $region2: #{tpu_custom_call.1} parent=1 // pred_check
      _
    $region3: #{tpu_custom_call.1} parent=1 // pred_check_branch
      %38 = sbr.rel (0) target = $region5
    $region4: #{tpu_custom_call.1} parent=1 // pred_region
      %s40 = ssub.s32 256, 256
      %41 = vsyncadd [#allocation4], %s40
      %s42 = sshll.u32 [#allocation3], 4
      %s43 = int_to_ptr.vmem [resolvable:$true] %s42
      %48 = dma.hbm_to_vmem [thread:$0]  %s0, 256, %s43, [#allocation4], 128, 128, 8
    $region5: #{tpu_custom_call.1} parent=1 // pred_fallthru
      _
    // Predicated region
    $region6: #{tpu_custom_call.1} parent=1 // pred_check
      _
    $region7: #{tpu_custom_call.1} parent=1 // pred_check_branch
      %50 = sbr.rel (0) target = $region9
    $region8: #{tpu_custom_call.1} parent=1 // pred_region
      %s52 = ssub.s32 256, 256
      %53 = vsyncadd [#allocation7], %s52
      %s54 = sshll.u32 [#allocation6], 4
      %s55 = int_to_ptr.vmem [resolvable:$true] %s54
      %60 = dma.hbm_to_vmem [thread:$0]  %s1, 256, %s55, [#allocation7], 128, 128, 8
    $region9: #{tpu_custom_call.1} parent=1 // pred_fallthru
      _
    // Predicated region
    $region10: #{tpu_custom_call.1} parent=1 // pred_check
      _
    $region11: #{tpu_custom_call.1} parent=1 // pred_check_branch
      %62 = sbr.rel (0) target = $region13
    $region12: #{tpu_custom_call.1} parent=1 // pred_region
      %s64 = ssub.s32 256, 256
      %65 = vsyncadd [#allocation7], %s64
      %s66 = sshll.u32 [#allocation8], 4
      %s67 = int_to_ptr.vmem [resolvable:$true] %s66
      %72 = dma.hbm_to_vmem [thread:$0]  %s2, 256, %s67, [#allocation7], 64, 64, 4
    $region13: #{tpu_custom_call.1} parent=1 // pred_fallthru
      _
    // Predicated region
    $region14: #{tpu_custom_call.1} parent=1 // pred_check
      _
    $region15: #{tpu_custom_call.1} parent=1 // pred_check_branch
      %74 = sbr.rel (0) target = $region17
    $region16: #{tpu_custom_call.1} parent=1 // pred_region
      %s76 = ssub.s32 16, 16
      %77 = vsyncadd [#allocation10], %s76
      %s79 = sshll.u32 [#allocation9], 4
      %s80 = int_to_ptr.vmem [resolvable:$true] %s79
      %82 = dma.hbm_to_vmem [thread:$0]  %s3, 16, %s80, [#allocation10]
    $region17: #{tpu_custom_call.1} parent=1 // pred_fallthru
      _
    // Predicated region
    $region18: #{tpu_custom_call.1} parent=1 // pred_check
      _
    $region19: #{tpu_custom_call.1} parent=1 // pred_check_branch
      %84 = sbr.rel (0) target = $region21
    $region20: #{tpu_custom_call.1} parent=1 // pred_region
      %s86 = ssub.s32 256, 256
      %87 = vsyncadd [#allocation10], %s86
      %s88 = sshll.u32 [#allocation11], 4
      %s89 = int_to_ptr.vmem [resolvable:$true] %s88
      %94 = dma.hbm_to_vmem [thread:$0]  %s4, 256, %s89, [#allocation10], 64, 64, 4
    $region21: #{tpu_custom_call.1} parent=1 // pred_fallthru
      _
    // Predicated region
    $region22: #{tpu_custom_call.1} parent=1 // pred_check
      _
    $region23: #{tpu_custom_call.1} parent=1 // pred_check_branch
      %96 = sbr.rel (0) target = $region25
    $region24: #{tpu_custom_call.1} parent=1 // pred_region
      %s98 = ssub.s32 16, 16
      %99 = vsyncadd [#allocation13], %s98
      %s101 = sshll.u32 [#allocation12], 4
      %s102 = int_to_ptr.vmem [resolvable:$true] %s101
      %104 = dma.hbm_to_vmem [thread:$0]  %s5, 16, %s102, [#allocation13]
    $region25: #{tpu_custom_call.1} parent=1 // pred_fallthru
      _
    // Predicated region
    $region26: #{tpu_custom_call.1} parent=1 // pred_check
      _
    $region27: #{tpu_custom_call.1} parent=1 // pred_check_branch
      %106 = sbr.rel (0) target = $region29
    $region28: #{tpu_custom_call.1} parent=1 // pred_region
      %s108 = ssub.s32 256, 256
      %109 = vsyncadd [#allocation13], %s108
      %s110 = sshll.u32 [#allocation14], 4
      %s111 = int_to_ptr.vmem [resolvable:$true] %s110
      %116 = dma.hbm_to_vmem [thread:$0]  %s6, 256, %s111, [#allocation13], 64, 64, 4
    $region29: #{tpu_custom_call.1} parent=1 // pred_fallthru
      _
    // Predicated region
    $region30: #{tpu_custom_call.1} parent=1 // pred_check
      _
    $region31: #{tpu_custom_call.1} parent=1 // pred_check_branch
      %118 = sbr.rel (0) target = $region33
    $region32: #{tpu_custom_call.1} parent=1 // pred_region
      %s120 = ssub.s32 16, 16
      %121 = vsyncadd [#allocation16], %s120
      %s123 = sshll.u32 [#allocation15], 4
      %s124 = int_to_ptr.vmem [resolvable:$true] %s123
      %126 = dma.hbm_to_vmem [thread:$0]  %s7, 16, %s124, [#allocation16]
    $region33: #{tpu_custom_call.1} parent=1 // pred_fallthru
      _
    // Predicated region
    $region34: #{tpu_custom_call.1} parent=1 // pred_check
      _
    $region35: #{tpu_custom_call.1} parent=1 // pred_check_branch
      %128 = sbr.rel (0) target = $region37
    $region36: #{tpu_custom_call.1} parent=1 // pred_region
      %s130 = ssub.s32 256, 256
      %131 = vsyncadd [#allocation16], %s130
      %s132 = sshll.u32 [#allocation17], 4
      %s133 = int_to_ptr.vmem [resolvable:$true] %s132
      %138 = dma.hbm_to_vmem [thread:$0]  %s8, 256, %s133, [#allocation16], 64, 64, 4
    $region37: #{tpu_custom_call.1} parent=1 // pred_fallthru
      _
    // Predicated region
    $region38: #{tpu_custom_call.1} parent=1 // pred_check
      _
    $region39: #{tpu_custom_call.1} parent=1 // pred_check_branch
      %140 = sbr.rel (0) target = $region41
    $region40: #{tpu_custom_call.1} parent=1 // pred_region
      %s142 = ssub.s32 16, 16
      %143 = vsyncadd [#allocation19], %s142
      %s145 = sshll.u32 [#allocation18], 4
      %s146 = int_to_ptr.vmem [resolvable:$true] %s145
      %148 = dma.hbm_to_vmem [thread:$0]  %s9, 16, %s146, [#allocation19]
    $region41: #{tpu_custom_call.1} parent=1 // pred_fallthru
      _
    // Predicated region
    $region42: #{tpu_custom_call.1} parent=1 // pred_check
      _
    $region43: #{tpu_custom_call.1} parent=1 // pred_check_branch
      %150 = sbr.rel (0) target = $region45
    $region44: #{tpu_custom_call.1} parent=1 // pred_region
      %s152 = ssub.s32 256, 256
      %153 = vsyncadd [#allocation19], %s152
      %s154 = sshll.u32 [#allocation20], 4
      %s155 = int_to_ptr.vmem [resolvable:$true] %s154
      %160 = dma.hbm_to_vmem [thread:$0]  %s10, 256, %s155, [#allocation19], 64, 64, 4
    $region45: #{tpu_custom_call.1} parent=1 // pred_fallthru
      _
    // Predicated region
    $region46: #{tpu_custom_call.1} parent=1 // pred_check
      _
    $region47: #{tpu_custom_call.1} parent=1 // pred_check_branch
      %162 = sbr.rel (0) target = $region49
    $region48: #{tpu_custom_call.1} parent=1 // pred_region
      %s164 = ssub.s32 16, 16
      %165 = vsyncadd [#allocation22], %s164
      %s167 = sshll.u32 [#allocation21], 4
      %s168 = int_to_ptr.vmem [resolvable:$true] %s167
      %170 = dma.hbm_to_vmem [thread:$0]  %s11, 16, %s168, [#allocation22]
    $region49: #{tpu_custom_call.1} parent=1 // pred_fallthru
      _
    // Predicated region
    $region50: #{tpu_custom_call.1} parent=1 // pred_check
      _
    $region51: #{tpu_custom_call.1} parent=1 // pred_check_branch
      %172 = sbr.rel (0) target = $region53
    $region52: #{tpu_custom_call.1} parent=1 // pred_region
      %s174 = ssub.s32 256, 256
      %175 = vsyncadd [#allocation22], %s174
      %s176 = sshll.u32 [#allocation23], 4
      %s177 = int_to_ptr.vmem [resolvable:$true] %s176
      %182 = dma.hbm_to_vmem [thread:$0]  %s12, 256, %s177, [#allocation22], 64, 64, 4
    $region53: #{tpu_custom_call.1} parent=1 // pred_fallthru
      _
    // Predicated region
    $region54: #{tpu_custom_call.1} parent=1 // pred_check
      _
    $region55: #{tpu_custom_call.1} parent=1 // pred_check_branch
      %184 = sbr.rel (0) target = $region57
    $region56: #{tpu_custom_call.1} parent=1 // pred_region
      %s186 = ssub.s32 16, 16
      %187 = vsyncadd [#allocation25], %s186
      %s189 = sshll.u32 [#allocation24], 4
      %s190 = int_to_ptr.vmem [resolvable:$true] %s189
      %192 = dma.hbm_to_vmem [thread:$0]  %s13, 16, %s190, [#allocation25]
    $region57: #{tpu_custom_call.1} parent=1 // pred_fallthru
      _
    // Predicated region
    $region58: #{tpu_custom_call.1} parent=1 // pred_check
      _
    $region59: #{tpu_custom_call.1} parent=1 // pred_check_branch
      %194 = sbr.rel (0) target = $region61
    $region60: #{tpu_custom_call.1} parent=1 // pred_region
      %s196 = ssub.s32 256, 256
      %197 = vsyncadd [#allocation25], %s196
      %s198 = sshll.u32 [#allocation26], 4
      %s199 = int_to_ptr.vmem [resolvable:$true] %s198
      %204 = dma.hbm_to_vmem [thread:$0]  %s14, 256, %s199, [#allocation25], 64, 64, 4
    $region61: #{tpu_custom_call.1} parent=1 // pred_fallthru
      _
    // Predicated region
    $region62: #{tpu_custom_call.1} parent=1 // pred_check
      _
    $region63: #{tpu_custom_call.1} parent=1 // pred_check_branch
      %206 = sbr.rel (0) target = $region65
    $region64: #{tpu_custom_call.1} parent=1 // pred_region
      %s208 = ssub.s32 16, 16
      %209 = vsyncadd [#allocation28], %s208
      %s211 = sshll.u32 [#allocation27], 4
      %s212 = int_to_ptr.vmem [resolvable:$true] %s211
      %214 = dma.hbm_to_vmem [thread:$0]  %s15, 16, %s212, [#allocation28]
    $region65: #{tpu_custom_call.1} parent=1 // pred_fallthru
      _
    // Predicated region
    $region66: #{tpu_custom_call.1} parent=1 // pred_check
      _
    $region67: #{tpu_custom_call.1} parent=1 // pred_check_branch
      %216 = sbr.rel (0) target = $region69
    $region68: #{tpu_custom_call.1} parent=1 // pred_region
      %s218 = ssub.s32 16, 16
      %219 = vsyncadd [#allocation28], %s218
      %s221 = sshll.u32 [#allocation29], 4
      %s222 = int_to_ptr.vmem [resolvable:$true] %s221
      %224 = dma.hbm_to_vmem [thread:$0]  %s16, 16, %s222, [#allocation28]
    $region69: #{tpu_custom_call.1} parent=1 // pred_fallthru
      _
    // Predicated region
    $region70: #{tpu_custom_call.1} parent=1 // pred_check
      _
    $region71: #{tpu_custom_call.1} parent=1 // pred_check_branch
      %226 = sbr.rel (0) target = $region73
    $region72: #{tpu_custom_call.1} parent=1 // pred_region
      %s228 = ssub.s32 16, 16
      %229 = vsyncadd [#allocation31], %s228
      %s231 = sshll.u32 [#allocation30], 4
      %s232 = int_to_ptr.vmem [resolvable:$true] %s231
      %234 = dma.hbm_to_vmem [thread:$0]  %s17, 16, %s232, [#allocation31]
    $region73: #{tpu_custom_call.1} parent=1 // pred_fallthru
      _
    // Predicated region
    $region74: #{tpu_custom_call.1} parent=1 // pred_check
      _
    $region75: #{tpu_custom_call.1} parent=1 // pred_check_branch
      %236 = sbr.rel (0) target = $region77
    $region76: #{tpu_custom_call.1} parent=1 // pred_region
      %s238 = ssub.s32 16, 16
      %239 = vsyncadd [#allocation31], %s238
      %s241 = sshll.u32 [#allocation32], 4
      %s242 = int_to_ptr.vmem [resolvable:$true] %s241
      %244 = dma.hbm_to_vmem [thread:$0]  %s18, 16, %s242, [#allocation31]
    $region77: #{tpu_custom_call.1} parent=1 // pred_fallthru
      _
    // Predicated region
    $region78: #{tpu_custom_call.1} parent=1 // pred_check
      _
    $region79: #{tpu_custom_call.1} parent=1 // pred_check_branch
      %246 = sbr.rel (0) target = $region81
    $region80: #{tpu_custom_call.1} parent=1 // pred_region
      %s248 = ssub.s32 16, 16
      %249 = vsyncadd [#allocation34], %s248
      %s251 = sshll.u32 [#allocation33], 4
      %s252 = int_to_ptr.vmem [resolvable:$true] %s251
      %254 = dma.hbm_to_vmem [thread:$0]  %s19, 16, %s252, [#allocation34]
    $region81: #{tpu_custom_call.1} parent=1 // pred_fallthru
      _
    // Predicated region
    $region82: #{tpu_custom_call.1} parent=1 // pred_check
      _
    $region83: #{tpu_custom_call.1} parent=1 // pred_check_branch
      %256 = sbr.rel (0) target = $region85
    $region84: #{tpu_custom_call.1} parent=1 // pred_region
      %257 = dma.done [#allocation4], 256
    $region85: #{tpu_custom_call.1} parent=1 // pred_fallthru
      _
    // Predicated region
    $region86: #{tpu_custom_call.1} parent=1 // pred_check
      _
    $region87: #{tpu_custom_call.1} parent=1 // pred_check_branch
      %259 = sbr.rel (0) target = $region89
    $region88: #{tpu_custom_call.1} parent=1 // pred_region
      %260 = dma.done [#allocation7], 256
    $region89: #{tpu_custom_call.1} parent=1 // pred_fallthru
      _
    // Predicated region
    $region90: #{tpu_custom_call.1} parent=1 // pred_check
      _
    $region91: #{tpu_custom_call.1} parent=1 // pred_check_branch
      %262 = sbr.rel (0) target = $region93
    $region92: #{tpu_custom_call.1} parent=1 // pred_region
      %263 = dma.done [#allocation7], 256
    $region93: #{tpu_custom_call.1} parent=1 // pred_fallthru
      _
    // Predicated region
    $region94: #{tpu_custom_call.1} parent=1 // pred_check
      _
    $region95: #{tpu_custom_call.1} parent=1 // pred_check_branch
      %265 = sbr.rel (0) target = $region97
    $region96: #{tpu_custom_call.1} parent=1 // pred_region
      %266 = dma.done [#allocation10], 16
    $region97: #{tpu_custom_call.1} parent=1 // pred_fallthru
      _
    // Predicated region
    $region98: #{tpu_custom_call.1} parent=1 // pred_check
      _
    $region99: #{tpu_custom_call.1} parent=1 // pred_check_branch
      %268 = sbr.rel (0) target = $region101
    $region100: #{tpu_custom_call.1} parent=1 // pred_region
      %269 = dma.done [#allocation10], 256
    $region101: #{tpu_custom_call.1} parent=1 // pred_fallthru
      _
    // Predicated region
    $region102: #{tpu_custom_call.1} parent=1 // pred_check
      _
    $region103: #{tpu_custom_call.1} parent=1 // pred_check_branch
      %271 = sbr.rel (0) target = $region105
    $region104: #{tpu_custom_call.1} parent=1 // pred_region
      %272 = dma.done [#allocation13], 16
    $region105: #{tpu_custom_call.1} parent=1 // pred_fallthru
      _
    // Predicated region
    $region106: #{tpu_custom_call.1} parent=1 // pred_check
      _
    $region107: #{tpu_custom_call.1} parent=1 // pred_check_branch
      %274 = sbr.rel (0) target = $region109
    $region108: #{tpu_custom_call.1} parent=1 // pred_region
      %275 = dma.done [#allocation13], 256
    $region109: #{tpu_custom_call.1} parent=1 // pred_fallthru
      _
    // Predicated region
    $region110: #{tpu_custom_call.1} parent=1 // pred_check
      _
    $region111: #{tpu_custom_call.1} parent=1 // pred_check_branch
      %277 = sbr.rel (0) target = $region113
    $region112: #{tpu_custom_call.1} parent=1 // pred_region
      %278 = dma.done [#allocation16], 16
    $region113: #{tpu_custom_call.1} parent=1 // pred_fallthru
      _
    // Predicated region
    $region114: #{tpu_custom_call.1} parent=1 // pred_check
      _
    $region115: #{tpu_custom_call.1} parent=1 // pred_check_branch
      %280 = sbr.rel (0) target = $region117
    $region116: #{tpu_custom_call.1} parent=1 // pred_region
      %281 = dma.done [#allocation16], 256
    $region117: #{tpu_custom_call.1} parent=1 // pred_fallthru
      _
    // Predicated region
    $region118: #{tpu_custom_call.1} parent=1 // pred_check
      _
    $region119: #{tpu_custom_call.1} parent=1 // pred_check_branch
      %283 = sbr.rel (0) target = $region121
    $region120: #{tpu_custom_call.1} parent=1 // pred_region
      %284 = dma.done [#allocation19], 16
    $region121: #{tpu_custom_call.1} parent=1 // pred_fallthru
      _
    // Predicated region
    $region122: #{tpu_custom_call.1} parent=1 // pred_check
      _
    $region123: #{tpu_custom_call.1} parent=1 // pred_check_branch
      %286 = sbr.rel (0) target = $region125
    $region124: #{tpu_custom_call.1} parent=1 // pred_region
      %287 = dma.done [#allocation19], 256
    $region125: #{tpu_custom_call.1} parent=1 // pred_fallthru
      _
    // Predicated region
    $region126: #{tpu_custom_call.1} parent=1 // pred_check
      _
    $region127: #{tpu_custom_call.1} parent=1 // pred_check_branch
      %289 = sbr.rel (0) target = $region129
    $region128: #{tpu_custom_call.1} parent=1 // pred_region
      %290 = dma.done [#allocation22], 16
    $region129: #{tpu_custom_call.1} parent=1 // pred_fallthru
      _
    // Predicated region
    $region130: #{tpu_custom_call.1} parent=1 // pred_check
      _
    $region131: #{tpu_custom_call.1} parent=1 // pred_check_branch
      %292 = sbr.rel (0) target = $region133
    $region132: #{tpu_custom_call.1} parent=1 // pred_region
      %293 = dma.done [#allocation22], 256
    $region133: #{tpu_custom_call.1} parent=1 // pred_fallthru
      _
    // Predicated region
    $region134: #{tpu_custom_call.1} parent=1 // pred_check
      _
    $region135: #{tpu_custom_call.1} parent=1 // pred_check_branch
      %295 = sbr.rel (0) target = $region137
    $region136: #{tpu_custom_call.1} parent=1 // pred_region
      %296 = dma.done [#allocation25], 16
    $region137: #{tpu_custom_call.1} parent=1 // pred_fallthru
      _
    // Predicated region
    $region138: #{tpu_custom_call.1} parent=1 // pred_check
      _
    $region139: #{tpu_custom_call.1} parent=1 // pred_check_branch
      %298 = sbr.rel (0) target = $region141
    $region140: #{tpu_custom_call.1} parent=1 // pred_region
      %299 = dma.done [#allocation25], 256
    $region141: #{tpu_custom_call.1} parent=1 // pred_fallthru
      _
    // Predicated region
    $region142: #{tpu_custom_call.1} parent=1 // pred_check
      _
    $region143: #{tpu_custom_call.1} parent=1 // pred_check_branch
      %301 = sbr.rel (0) target = $region145
    $region144: #{tpu_custom_call.1} parent=1 // pred_region
      %302 = dma.done [#allocation28], 16
    $region145: #{tpu_custom_call.1} parent=1 // pred_fallthru
      _
    // Predicated region
    $region146: #{tpu_custom_call.1} parent=1 // pred_check
      _
    $region147: #{tpu_custom_call.1} parent=1 // pred_check_branch
      %304 = sbr.rel (0) target = $region149
    $region148: #{tpu_custom_call.1} parent=1 // pred_region
      %305 = dma.done [#allocation28], 16
    $region149: #{tpu_custom_call.1} parent=1 // pred_fallthru
      _
    // Predicated region
    $region150: #{tpu_custom_call.1} parent=1 // pred_check
      _
    $region151: #{tpu_custom_call.1} parent=1 // pred_check_branch
      %307 = sbr.rel (0) target = $region153
    $region152: #{tpu_custom_call.1} parent=1 // pred_region
      %308 = dma.done [#allocation31], 16
    $region153: #{tpu_custom_call.1} parent=1 // pred_fallthru
      _
    // Predicated region
    $region154: #{tpu_custom_call.1} parent=1 // pred_check
      _
    $region155: #{tpu_custom_call.1} parent=1 // pred_check_branch
      %310 = sbr.rel (0) target = $region157
    $region156: #{tpu_custom_call.1} parent=1 // pred_region
      %311 = dma.done [#allocation31], 16
    $region157: #{tpu_custom_call.1} parent=1 // pred_fallthru
      _
    // Predicated region
    $region158: #{tpu_custom_call.1} parent=1 // pred_check
      _
    $region159: #{tpu_custom_call.1} parent=1 // pred_check_branch
      %313 = sbr.rel (0) target = $region161
    $region160: #{tpu_custom_call.1} parent=1 // pred_region
      %314 = dma.done [#allocation34], 16
    $region161: #{tpu_custom_call.1} parent=1 // pred_fallthru
      _
    %v316 = vld [vmem:[#allocation3] sm:$0xff]
    %v317 = vld [vmem:[#allocation3 + $0x8] sm:$0xff]
    %v318 = vld [vmem:[#allocation6] sm:$0xff]
    %v319 = vld [vmem:[#allocation6 + $0x8] sm:$0xff]
    %v320 = vpack.c.bf16 %v317, %v316
    %v321 = vld [vmem:[#allocation8] sm:$0xf]
    %v322 = vld [vmem:[#allocation8 + $0x4] sm:$0xf]
    %v323 = vld [vmem:[#allocation8 + $0x8] sm:$0xf]
    %v324 = vld [vmem:[#allocation8 + $0xc] sm:$0xf]
    %v325 = vld [vmem:[#allocation9] sm:$0x1]
    %v327 = vlaneseq
    %v328 = vshrl.u32 %v327, 7
    %v329 = vsub.s32 0, %v328
    %v330 = vrot.slane %v325, %v329
    %v336 = vunpack.c.l.b16 %v321
    %v337 = vunpack.c.l.b16 %v322
    %v338 = vunpack.c.l.b16 %v323
    %v339 = vunpack.c.l.b16 %v324
    %v340 = vpack.c.b16 %v337, %v336
    %v341 = vpack.c.b16 %v339, %v338
    %vm344 = vcmask 261120
    %v346 = vsel %vm344, %v320, 0
    %348 = vmatprep.subr.bf16.mxu0 0
    %349 = vmatpush1.bf16.msra.mxu0 %v340
    %350 = vmatprep.subr.bf16.mxu0 0
    %351 = vmatpush1.bf16.msra.mxu0 %v341
    %352 = vmatprep.subr.bf16.mxu0 0
    %353 = vmatpush1.bf16.msra.mxu0 0
    %354 = vmatprep.subr.bf16.mxu0 0
    %355 = vmatpush1.bf16.msra.mxu0 0
    %356 = vmatprep.subr.bf16.mxu0 0
    %357 = vmatpush1.bf16.msra.mxu0 0
    %358 = vmatprep.subr.bf16.mxu0 0
    %359 = vmatpush1.bf16.msra.mxu0 0
    %360 = vmatprep.subr.bf16.mxu0 0
    %361 = vmatpush1.bf16.msra.mxu0 0
    %362 = vmatprep.subr.bf16.mxu0 0
    %363 = vmatpush1.bf16.msra.mxu0 0
    %364 = vmatprep.subr.bf16.mxu0 0
    %365 = vmatpush1.bf16.msra.mxu0 0
    %366 = vmatprep.subr.bf16.mxu0 0
    %367 = vmatpush1.bf16.msra.mxu0 0
    %368 = vmatprep.subr.bf16.mxu0 0
    %369 = vmatpush1.bf16.msra.mxu0 0
    %370 = vmatprep.subr.bf16.mxu0 0
    %371 = vmatpush1.bf16.msra.mxu0 0
    %372 = vmatprep.subr.bf16.mxu0 0
    %373 = vmatpush1.bf16.msra.mxu0 0
    %374 = vmatprep.subr.bf16.mxu0 0
    %375 = vmatpush1.bf16.msra.mxu0 0
    %376 = vmatprep.subr.bf16.mxu0 0
    %377 = vmatpush1.bf16.msra.mxu0 0
    %378 = vmatprep.subr.bf16.mxu0 0
    %379 = vmatpush1.bf16.msra.mxu0 0
    %380 = vmatprep.mubr.bf16.mxu0 0
    %381 = vmatmul.mubr.bf16.gmra.mrb[0].mxu0 %v346
    %v382 = vpop.f32.mrb[0].mxu0
    %v383 = vadd.f32 %v330, %v382
    %v384 = vpop.f32.mrb[0].mxu0
    %v385 = vpop.f32.mrb[0].mxu0
    %v386 = vadd.f32 %v330, %v385
    %v387 = vpop.f32.mrb[0].mxu0
    %388 = vdwg.mxu0
    %v389 = vpack.c.bf16 %v386, %v383
    %v391 = vunpack.c.l.b16 %v389
    %v392 = vunpack.c.h.b16 %v389
    %v393 = vpack.c.b16 %v391, %v391
    %v394 = vpack.c.b16 %v392, %v392
    %395 = vrot.lane.b32.xlu0 %v393, 96
    %v396 = vpop.permute.xlu0 %395
    %vm397 = vcmask 64512
    %v399 = vsel %vm397, %v393, 0
    %v402 = vsel %vm397, %v396, 0
    %404 = vmatprep.subr.bf16.mxu0 0
    %405 = vmatpush1.bf16.xpose.msra.mxu0 %v402
    %406 = vmatprep.subr.bf16.mxu0 0
    %407 = vmatpush1.bf16.xpose.msra.mxu0 0
    %408 = vmatprep.subr.bf16.mxu0 0
    %409 = vmatpush1.bf16.xpose.msra.mxu0 0
    %410 = vmatprep.subr.bf16.mxu0 0
    %411 = vmatpush1.bf16.xpose.msra.mxu0 0
    %412 = vmatprep.subr.bf16.mxu0 0
    %413 = vmatpush1.bf16.xpose.msra.mxu0 0
    %414 = vmatprep.subr.bf16.mxu0 0
    %415 = vmatpush1.bf16.xpose.msra.mxu0 0
    %416 = vmatprep.subr.bf16.mxu0 0
    %417 = vmatpush1.bf16.xpose.msra.mxu0 0
    %418 = vmatprep.subr.bf16.mxu0 0
    %419 = vmatpush1.bf16.xpose.msra.mxu0 0
    %420 = vmatprep.subr.bf16.mxu0 0
    %421 = vmatpush1.bf16.xpose.msra.mxu0 0
    %422 = vmatprep.subr.bf16.mxu0 0
    %423 = vmatpush1.bf16.xpose.msra.mxu0 0
    %424 = vmatprep.subr.bf16.mxu0 0
    %425 = vmatpush1.bf16.xpose.msra.mxu0 0
    %426 = vmatprep.subr.bf16.mxu0 0
    %427 = vmatpush1.bf16.xpose.msra.mxu0 0
    %428 = vmatprep.subr.bf16.mxu0 0
    %429 = vmatpush1.bf16.xpose.msra.mxu0 0
    %430 = vmatprep.subr.bf16.mxu0 0
    %431 = vmatpush1.bf16.xpose.msra.mxu0 0
    %432 = vmatprep.subr.bf16.mxu0 0
    %433 = vmatpush1.bf16.xpose.msra.mxu0 0
    %434 = vmatprep.subr.bf16.mxu0 0
    %435 = vmatpush1.bf16.xpose.msra.mxu0 0
    %436 = vmatprep.mubr.bf16.mxu0 0
    %437 = vmatmul.mubr.bf16.gmra.mrb[0].mxu0 %v399
    %v438 = vpop.f32.mrb[0].mxu0
    %v439 = vadd.f32 0.0, %v438
    %v440 = vpop.f32.mrb[0].mxu0
    %v441 = vpop.f32.mrb[0].mxu0
    %v442 = vpop.f32.mrb[0].mxu0
    %443 = vdwg.mxu0
    %444 = vrot.lane.b32.xlu0 %v394, 96
    %v445 = vpop.permute.xlu0 %444
    %v447 = vsel %vm397, %v394, 0
    %v450 = vsel %vm397, %v445, 0
    %452 = vmatprep.subr.bf16.mxu0 0
    %453 = vmatpush1.bf16.xpose.msra.mxu0 %v450
    %454 = vmatprep.subr.bf16.mxu0 0
    %455 = vmatpush1.bf16.xpose.msra.mxu0 0
    %456 = vmatprep.subr.bf16.mxu0 0
    %457 = vmatpush1.bf16.xpose.msra.mxu0 0
    %458 = vmatprep.subr.bf16.mxu0 0
    %459 = vmatpush1.bf16.xpose.msra.mxu0 0
    %460 = vmatprep.subr.bf16.mxu0 0
    %461 = vmatpush1.bf16.xpose.msra.mxu0 0
    %462 = vmatprep.subr.bf16.mxu0 0
    %463 = vmatpush1.bf16.xpose.msra.mxu0 0
    %464 = vmatprep.subr.bf16.mxu0 0
    %465 = vmatpush1.bf16.xpose.msra.mxu0 0
    %466 = vmatprep.subr.bf16.mxu0 0
    %467 = vmatpush1.bf16.xpose.msra.mxu0 0
    %468 = vmatprep.subr.bf16.mxu0 0
    %469 = vmatpush1.bf16.xpose.msra.mxu0 0
    %470 = vmatprep.subr.bf16.mxu0 0
    %471 = vmatpush1.bf16.xpose.msra.mxu0 0
    %472 = vmatprep.subr.bf16.mxu0 0
    %473 = vmatpush1.bf16.xpose.msra.mxu0 0
    %474 = vmatprep.subr.bf16.mxu0 0
    %475 = vmatpush1.bf16.xpose.msra.mxu0 0
    %476 = vmatprep.subr.bf16.mxu0 0
    %477 = vmatpush1.bf16.xpose.msra.mxu0 0
    %478 = vmatprep.subr.bf16.mxu0 0
    %479 = vmatpush1.bf16.xpose.msra.mxu0 0
    %480 = vmatprep.subr.bf16.mxu0 0
    %481 = vmatpush1.bf16.xpose.msra.mxu0 0
    %482 = vmatprep.subr.bf16.mxu0 0
    %483 = vmatpush1.bf16.xpose.msra.mxu0 0
    %484 = vmatprep.mubr.bf16.mxu0 0
    %485 = vmatmul.mubr.bf16.gmra.mrb[0].mxu0 %v447
    %v486 = vpop.f32.mrb[0].mxu0
    %v487 = vadd.f32 0.0, %v486
    %v488 = vpop.f32.mrb[0].mxu0
    %v489 = vpop.f32.mrb[0].mxu0
    %v490 = vpop.f32.mrb[0].mxu0
    %491 = vdwg.mxu0
    %v492 = vsel %vm397, %v439, -inf
    %493 = vmax.xlane.f32.xlu0 %v492
    %v494 = vpop.xlane.xlu0 %493
    %v495 = vsel %vm397, %v487, -inf
    %496 = vmax.xlane.f32.xlu0 %v495
    %v497 = vpop.xlane.xlu0 %496
    %v498 = vsub.f32 %v439, %v494
    %v499 = vsub.f32 %v487, %v497
    %v500 = vmul.f32 %v498, 1.442695
    %v501 = vpow.pop %v500
    %v502 = vmul.f32 %v499, 1.442695
    %v503 = vpow.pop %v502
    %v504 = vsel %vm397, %v501, 0.0
    %505 = vadd.xlane.f32.xlu0 %v504
    %v506 = vpop.xlane.xlu0 %505
    %v507 = vsel %vm397, %v503, 0.0
    %508 = vadd.xlane.f32.xlu0 %v507
    %v509 = vpop.xlane.xlu0 %508
    %v510 = vrcp.pop %v506
    %v511 = vrcp.pop %v509
    %v512 = vmul.f32 %v501, %v510
    %v513 = vmul.f32 %v503, %v511
    %v514 = vpack.c.bf16 %v512, %v512
    %v515 = vpack.c.bf16 %v513, %v513
    %516 = vrot.lane.b32.xlu0 %v393, 64
    %v517 = vpop.permute.xlu0 %516
    %v519 = vsel %vm397, %v514, 0
    %vm521 = vcmask 1043456
    %v523 = vsel %vm521, %v517, 0
    %525 = vmatprep.subr.bf16.mxu0 0
    %526 = vmatpush1.bf16.msra.mxu0 %v523
    %527 = vmatprep.subr.bf16.mxu0 0
    %528 = vmatpush1.bf16.msra.mxu0 0
    %529 = vmatprep.subr.bf16.mxu0 0
    %530 = vmatpush1.bf16.msra.mxu0 0
    %531 = vmatprep.subr.bf16.mxu0 0
    %532 = vmatpush1.bf16.msra.mxu0 0
    %533 = vmatprep.subr.bf16.mxu0 0
    %534 = vmatpush1.bf16.msra.mxu0 0
    %535 = vmatprep.subr.bf16.mxu0 0
    %536 = vmatpush1.bf16.msra.mxu0 0
    %537 = vmatprep.subr.bf16.mxu0 0
    %538 = vmatpush1.bf16.msra.mxu0 0
    %539 = vmatprep.subr.bf16.mxu0 0
    %540 = vmatpush1.bf16.msra.mxu0 0
    %541 = vmatprep.subr.bf16.mxu0 0
    %542 = vmatpush1.bf16.msra.mxu0 0
    %543 = vmatprep.subr.bf16.mxu0 0
    %544 = vmatpush1.bf16.msra.mxu0 0
    %545 = vmatprep.subr.bf16.mxu0 0
    %546 = vmatpush1.bf16.msra.mxu0 0
    %547 = vmatprep.subr.bf16.mxu0 0
    %548 = vmatpush1.bf16.msra.mxu0 0
    %549 = vmatprep.subr.bf16.mxu0 0
    %550 = vmatpush1.bf16.msra.mxu0 0
    %551 = vmatprep.subr.bf16.mxu0 0
    %552 = vmatpush1.bf16.msra.mxu0 0
    %553 = vmatprep.subr.bf16.mxu0 0
    %554 = vmatpush1.bf16.msra.mxu0 0
    %555 = vmatprep.subr.bf16.mxu0 0
    %556 = vmatpush1.bf16.msra.mxu0 0
    %557 = vmatprep.mubr.bf16.mxu0 0
    %558 = vmatmul.mubr.bf16.gmra.mrb[0].mxu0 %v519
    %v559 = vpop.f32.mrb[0].mxu0
    %v560 = vadd.f32 0.0, %v559
    %v561 = vpop.f32.mrb[0].mxu0
    %v562 = vpop.f32.mrb[0].mxu0
    %v563 = vpop.f32.mrb[0].mxu0
    %564 = vdwg.mxu0
    %565 = vrot.lane.b32.xlu0 %v394, 64
    %v566 = vpop.permute.xlu0 %565
    %v568 = vsel %vm397, %v515, 0
    %v571 = vsel %vm521, %v566, 0
    %573 = vmatprep.subr.bf16.mxu0 0
    %574 = vmatpush1.bf16.msra.mxu0 %v571
    %575 = vmatprep.subr.bf16.mxu0 0
    %576 = vmatpush1.bf16.msra.mxu0 0
    %577 = vmatprep.subr.bf16.mxu0 0
    %578 = vmatpush1.bf16.msra.mxu0 0
    %579 = vmatprep.subr.bf16.mxu0 0
    %580 = vmatpush1.bf16.msra.mxu0 0
    %581 = vmatprep.subr.bf16.mxu0 0
    %582 = vmatpush1.bf16.msra.mxu0 0
    %583 = vmatprep.subr.bf16.mxu0 0
    %584 = vmatpush1.bf16.msra.mxu0 0
    %585 = vmatprep.subr.bf16.mxu0 0
    %586 = vmatpush1.bf16.msra.mxu0 0
    %587 = vmatprep.subr.bf16.mxu0 0
    %588 = vmatpush1.bf16.msra.mxu0 0
    %589 = vmatprep.subr.bf16.mxu0 0
    %590 = vmatpush1.bf16.msra.mxu0 0
    %591 = vmatprep.subr.bf16.mxu0 0
    %592 = vmatpush1.bf16.msra.mxu0 0
    %593 = vmatprep.subr.bf16.mxu0 0
    %594 = vmatpush1.bf16.msra.mxu0 0
    %595 = vmatprep.subr.bf16.mxu0 0
    %596 = vmatpush1.bf16.msra.mxu0 0
    %597 = vmatprep.subr.bf16.mxu0 0
    %598 = vmatpush1.bf16.msra.mxu0 0
    %599 = vmatprep.subr.bf16.mxu0 0
    %600 = vmatpush1.bf16.msra.mxu0 0
    %601 = vmatprep.subr.bf16.mxu0 0
    %602 = vmatpush1.bf16.msra.mxu0 0
    %603 = vmatprep.subr.bf16.mxu0 0
    %604 = vmatpush1.bf16.msra.mxu0 0
    %605 = vmatprep.mubr.bf16.mxu0 0
    %606 = vmatmul.mubr.bf16.gmra.mrb[0].mxu0 %v568
    %v607 = vpop.f32.mrb[0].mxu0
    %v608 = vadd.f32 0.0, %v607
    %v609 = vpop.f32.mrb[0].mxu0
    %v610 = vpop.f32.mrb[0].mxu0
    %v611 = vpop.f32.mrb[0].mxu0
    %612 = vdwg.mxu0
    %v613 = vpack.c.bf16 %v560, %v560
    %v614 = vpack.c.bf16 %v608, %v608
    %v617 = vunpack.c.l.b16 %v613
    %v618 = vunpack.c.l.b16 %v614
    %v619 = vpack.c.b16 %v618, %v617
    %621 = vst.msk [vmem:[#allocation2] sm:$0xff] %vm397, %v619
    %622 = vrot.lane.b32.xlu0 %v393, 120
    %v623 = vpop.permute.xlu0 %622
    %624 = vrot.lane.b32.xlu0 %v393, 88
    %v625 = vpop.permute.xlu0 %624
    %v627 = vsel %vm397, %v623, 0
    %v630 = vsel %vm397, %v625, 0
    %632 = vmatprep.subr.bf16.mxu0 0
    %633 = vmatpush1.bf16.xpose.msra.mxu0 %v630
    %634 = vmatprep.subr.bf16.mxu0 0
    %635 = vmatpush1.bf16.xpose.msra.mxu0 0
    %636 = vmatprep.subr.bf16.mxu0 0
    %637 = vmatpush1.bf16.xpose.msra.mxu0 0
    %638 = vmatprep.subr.bf16.mxu0 0
    %639 = vmatpush1.bf16.xpose.msra.mxu0 0
    %640 = vmatprep.subr.bf16.mxu0 0
    %641 = vmatpush1.bf16.xpose.msra.mxu0 0
    %642 = vmatprep.subr.bf16.mxu0 0
    %643 = vmatpush1.bf16.xpose.msra.mxu0 0
    %644 = vmatprep.subr.bf16.mxu0 0
    %645 = vmatpush1.bf16.xpose.msra.mxu0 0
    %646 = vmatprep.subr.bf16.mxu0 0
    %647 = vmatpush1.bf16.xpose.msra.mxu0 0
    %648 = vmatprep.subr.bf16.mxu0 0
    %649 = vmatpush1.bf16.xpose.msra.mxu0 0
    %650 = vmatprep.subr.bf16.mxu0 0
    %651 = vmatpush1.bf16.xpose.msra.mxu0 0
    %652 = vmatprep.subr.bf16.mxu0 0
    %653 = vmatpush1.bf16.xpose.msra.mxu0 0
    %654 = vmatprep.subr.bf16.mxu0 0
    %655 = vmatpush1.bf16.xpose.msra.mxu0 0
    %656 = vmatprep.subr.bf16.mxu0 0
    %657 = vmatpush1.bf16.xpose.msra.mxu0 0
    %658 = vmatprep.subr.bf16.mxu0 0
    %659 = vmatpush1.bf16.xpose.msra.mxu0 0
    %660 = vmatprep.subr.bf16.mxu0 0
    %661 = vmatpush1.bf16.xpose.msra.mxu0 0
    %662 = vmatprep.subr.bf16.mxu0 0
    %663 = vmatpush1.bf16.xpose.msra.mxu0 0
    %664 = vmatprep.mubr.bf16.mxu0 0
    %665 = vmatmul.mubr.bf16.gmra.mrb[0].mxu0 %v627
    %v666 = vpop.f32.mrb[0].mxu0
    %v667 = vadd.f32 0.0, %v666
    %v668 = vpop.f32.mrb[0].mxu0
    %v669 = vpop.f32.mrb[0].mxu0
    %v670 = vpop.f32.mrb[0].mxu0
    %671 = vdwg.mxu0
    %672 = vrot.lane.b32.xlu0 %v394, 120
    %v673 = vpop.permute.xlu0 %672
    %674 = vrot.lane.b32.xlu0 %v394, 88
    %v675 = vpop.permute.xlu0 %674
    %v677 = vsel %vm397, %v673, 0
    %v680 = vsel %vm397, %v675, 0
    %682 = vmatprep.subr.bf16.mxu0 0
    %683 = vmatpush1.bf16.xpose.msra.mxu0 %v680
    %684 = vmatprep.subr.bf16.mxu0 0
    %685 = vmatpush1.bf16.xpose.msra.mxu0 0
    %686 = vmatprep.subr.bf16.mxu0 0
    %687 = vmatpush1.bf16.xpose.msra.mxu0 0
    %688 = vmatprep.subr.bf16.mxu0 0
    %689 = vmatpush1.bf16.xpose.msra.mxu0 0
    %690 = vmatprep.subr.bf16.mxu0 0
    %691 = vmatpush1.bf16.xpose.msra.mxu0 0
    %692 = vmatprep.subr.bf16.mxu0 0
    %693 = vmatpush1.bf16.xpose.msra.mxu0 0
    %694 = vmatprep.subr.bf16.mxu0 0
    %695 = vmatpush1.bf16.xpose.msra.mxu0 0
    %696 = vmatprep.subr.bf16.mxu0 0
    %697 = vmatpush1.bf16.xpose.msra.mxu0 0
    %698 = vmatprep.subr.bf16.mxu0 0
    %699 = vmatpush1.bf16.xpose.msra.mxu0 0
    %700 = vmatprep.subr.bf16.mxu0 0
    %701 = vmatpush1.bf16.xpose.msra.mxu0 0
    %702 = vmatprep.subr.bf16.mxu0 0
    %703 = vmatpush1.bf16.xpose.msra.mxu0 0
    %704 = vmatprep.subr.bf16.mxu0 0
    %705 = vmatpush1.bf16.xpose.msra.mxu0 0
    %706 = vmatprep.subr.bf16.mxu0 0
    %707 = vmatpush1.bf16.xpose.msra.mxu0 0
    %708 = vmatprep.subr.bf16.mxu0 0
    %709 = vmatpush1.bf16.xpose.msra.mxu0 0
    %710 = vmatprep.subr.bf16.mxu0 0
    %711 = vmatpush1.bf16.xpose.msra.mxu0 0
    %712 = vmatprep.subr.bf16.mxu0 0
    %713 = vmatpush1.bf16.xpose.msra.mxu0 0
    %714 = vmatprep.mubr.bf16.mxu0 0
    %715 = vmatmul.mubr.bf16.gmra.mrb[0].mxu0 %v677
    %v716 = vpop.f32.mrb[0].mxu0
    %v717 = vadd.f32 0.0, %v716
    %v718 = vpop.f32.mrb[0].mxu0
    %v719 = vpop.f32.mrb[0].mxu0
    %v720 = vpop.f32.mrb[0].mxu0
    %721 = vdwg.mxu0
    %v722 = vsel %vm397, %v667, -inf
    %723 = vmax.xlane.f32.xlu0 %v722
    %v724 = vpop.xlane.xlu0 %723
    %v725 = vsel %vm397, %v717, -inf
    %726 = vmax.xlane.f32.xlu0 %v725
    %v727 = vpop.xlane.xlu0 %726
    %v728 = vsub.f32 %v667, %v724
    %v729 = vsub.f32 %v717, %v727
    %v730 = vmul.f32 %v728, 1.442695
    %v731 = vpow.pop %v730
    %v732 = vmul.f32 %v729, 1.442695
    %v733 = vpow.pop %v732
    %v734 = vsel %vm397, %v731, 0.0
    %735 = vadd.xlane.f32.xlu0 %v734
    %v736 = vpop.xlane.xlu0 %735
    %v737 = vsel %vm397, %v733, 0.0
    %738 = vadd.xlane.f32.xlu0 %v737
    %v739 = vpop.xlane.xlu0 %738
    %v740 = vrcp.pop %v736
    %v741 = vrcp.pop %v739
    %v742 = vmul.f32 %v731, %v740
    %v743 = vmul.f32 %v733, %v741
    %v744 = vpack.c.bf16 %v742, %v742
    %v745 = vpack.c.bf16 %v743, %v743
    %746 = vrot.lane.b32.xlu0 %v393, 56
    %v747 = vpop.permute.xlu0 %746
    %v749 = vsel %vm397, %v744, 0
    %v752 = vsel %vm521, %v747, 0
    %754 = vmatprep.subr.bf16.mxu0 0
    %755 = vmatpush1.bf16.msra.mxu0 %v752
    %756 = vmatprep.subr.bf16.mxu0 0
    %757 = vmatpush1.bf16.msra.mxu0 0
    %758 = vmatprep.subr.bf16.mxu0 0
    %759 = vmatpush1.bf16.msra.mxu0 0
    %760 = vmatprep.subr.bf16.mxu0 0
    %761 = vmatpush1.bf16.msra.mxu0 0
    %762 = vmatprep.subr.bf16.mxu0 0
    %763 = vmatpush1.bf16.msra.mxu0 0
    %764 = vmatprep.subr.bf16.mxu0 0
    %765 = vmatpush1.bf16.msra.mxu0 0
    %766 = vmatprep.subr.bf16.mxu0 0
    %767 = vmatpush1.bf16.msra.mxu0 0
    %768 = vmatprep.subr.bf16.mxu0 0
    %769 = vmatpush1.bf16.msra.mxu0 0
    %770 = vmatprep.subr.bf16.mxu0 0
    %771 = vmatpush1.bf16.msra.mxu0 0
    %772 = vmatprep.subr.bf16.mxu0 0
    %773 = vmatpush1.bf16.msra.mxu0 0
    %774 = vmatprep.subr.bf16.mxu0 0
    %775 = vmatpush1.bf16.msra.mxu0 0
    %776 = vmatprep.subr.bf16.mxu0 0
    %777 = vmatpush1.bf16.msra.mxu0 0
    %778 = vmatprep.subr.bf16.mxu0 0
    %779 = vmatpush1.bf16.msra.mxu0 0
    %780 = vmatprep.subr.bf16.mxu0 0
    %781 = vmatpush1.bf16.msra.mxu0 0
    %782 = vmatprep.subr.bf16.mxu0 0
    %783 = vmatpush1.bf16.msra.mxu0 0
    %784 = vmatprep.subr.bf16.mxu0 0
    %785 = vmatpush1.bf16.msra.mxu0 0
    %786 = vmatprep.mubr.bf16.mxu0 0
    %787 = vmatmul.mubr.bf16.gmra.mrb[0].mxu0 %v749
    %v788 = vpop.f32.mrb[0].mxu0
    %v789 = vadd.f32 0.0, %v788
    %v790 = vpop.f32.mrb[0].mxu0
    %v791 = vpop.f32.mrb[0].mxu0
    %v792 = vpop.f32.mrb[0].mxu0
    %793 = vdwg.mxu0
    %794 = vrot.lane.b32.xlu0 %v394, 56
    %v795 = vpop.permute.xlu0 %794
    %v797 = vsel %vm397, %v745, 0
    %v800 = vsel %vm521, %v795, 0
    %802 = vmatprep.subr.bf16.mxu0 0
    %803 = vmatpush1.bf16.msra.mxu0 %v800
    %804 = vmatprep.subr.bf16.mxu0 0
    %805 = vmatpush1.bf16.msra.mxu0 0
    %806 = vmatprep.subr.bf16.mxu0 0
    %807 = vmatpush1.bf16.msra.mxu0 0
    %808 = vmatprep.subr.bf16.mxu0 0
    %809 = vmatpush1.bf16.msra.mxu0 0
    %810 = vmatprep.subr.bf16.mxu0 0
    %811 = vmatpush1.bf16.msra.mxu0 0
    %812 = vmatprep.subr.bf16.mxu0 0
    %813 = vmatpush1.bf16.msra.mxu0 0
    %814 = vmatprep.subr.bf16.mxu0 0
    %815 = vmatpush1.bf16.msra.mxu0 0
    %816 = vmatprep.subr.bf16.mxu0 0
    %817 = vmatpush1.bf16.msra.mxu0 0
    %818 = vmatprep.subr.bf16.mxu0 0
    %819 = vmatpush1.bf16.msra.mxu0 0
    %820 = vmatprep.subr.bf16.mxu0 0
    %821 = vmatpush1.bf16.msra.mxu0 0
    %822 = vmatprep.subr.bf16.mxu0 0
    %823 = vmatpush1.bf16.msra.mxu0 0
    %824 = vmatprep.subr.bf16.mxu0 0
    %825 = vmatpush1.bf16.msra.mxu0 0
    %826 = vmatprep.subr.bf16.mxu0 0
    %827 = vmatpush1.bf16.msra.mxu0 0
    %828 = vmatprep.subr.bf16.mxu0 0
    %829 = vmatpush1.bf16.msra.mxu0 0
    %830 = vmatprep.subr.bf16.mxu0 0
    %831 = vmatpush1.bf16.msra.mxu0 0
    %832 = vmatprep.subr.bf16.mxu0 0
    %833 = vmatpush1.bf16.msra.mxu0 0
    %834 = vmatprep.mubr.bf16.mxu0 0
    %835 = vmatmul.mubr.bf16.gmra.mrb[0].mxu0 %v797
    %v836 = vpop.f32.mrb[0].mxu0
    %v837 = vadd.f32 0.0, %v836
    %v838 = vpop.f32.mrb[0].mxu0
    %v839 = vpop.f32.mrb[0].mxu0
    %v840 = vpop.f32.mrb[0].mxu0
    %841 = vdwg.mxu0
    %v842 = vpack.c.bf16 %v789, %v789
    %v843 = vpack.c.bf16 %v837, %v837
    %v846 = vunpack.c.l.b16 %v842
    %v847 = vunpack.c.l.b16 %v843
    %v848 = vpack.c.b16 %v847, %v846
    %849 = vrot.lane.b32.xlu0 %v848, 8
    %v850 = vpop.permute.xlu0 %849
    %vm852 = vcmask 130112
    %853 = vst.msk [vmem:[#allocation2] sm:$0xff] %vm852, %v850
    %854 = vrot.lane.b32.xlu0 %v393, 112
    %v855 = vpop.permute.xlu0 %854
    %856 = vrot.lane.b32.xlu0 %v393, 80
    %v857 = vpop.permute.xlu0 %856
    %v859 = vsel %vm397, %v855, 0
    %v862 = vsel %vm397, %v857, 0
    %864 = vmatprep.subr.bf16.mxu0 0
    %865 = vmatpush1.bf16.xpose.msra.mxu0 %v862
    %866 = vmatprep.subr.bf16.mxu0 0
    %867 = vmatpush1.bf16.xpose.msra.mxu0 0
    %868 = vmatprep.subr.bf16.mxu0 0
    %869 = vmatpush1.bf16.xpose.msra.mxu0 0
    %870 = vmatprep.subr.bf16.mxu0 0
    %871 = vmatpush1.bf16.xpose.msra.mxu0 0
    %872 = vmatprep.subr.bf16.mxu0 0
    %873 = vmatpush1.bf16.xpose.msra.mxu0 0
    %874 = vmatprep.subr.bf16.mxu0 0
    %875 = vmatpush1.bf16.xpose.msra.mxu0 0
    %876 = vmatprep.subr.bf16.mxu0 0
    %877 = vmatpush1.bf16.xpose.msra.mxu0 0
    %878 = vmatprep.subr.bf16.mxu0 0
    %879 = vmatpush1.bf16.xpose.msra.mxu0 0
    %880 = vmatprep.subr.bf16.mxu0 0
    %881 = vmatpush1.bf16.xpose.msra.mxu0 0
    %882 = vmatprep.subr.bf16.mxu0 0
    %883 = vmatpush1.bf16.xpose.msra.mxu0 0
    %884 = vmatprep.subr.bf16.mxu0 0
    %885 = vmatpush1.bf16.xpose.msra.mxu0 0
    %886 = vmatprep.subr.bf16.mxu0 0
    %887 = vmatpush1.bf16.xpose.msra.mxu0 0
    %888 = vmatprep.subr.bf16.mxu0 0
    %889 = vmatpush1.bf16.xpose.msra.mxu0 0
    %890 = vmatprep.subr.bf16.mxu0 0
    %891 = vmatpush1.bf16.xpose.msra.mxu0 0
    %892 = vmatprep.subr.bf16.mxu0 0
    %893 = vmatpush1.bf16.xpose.msra.mxu0 0
    %894 = vmatprep.subr.bf16.mxu0 0
    %895 = vmatpush1.bf16.xpose.msra.mxu0 0
    %896 = vmatprep.mubr.bf16.mxu0 0
    %897 = vmatmul.mubr.bf16.gmra.mrb[0].mxu0 %v859
    %v898 = vpop.f32.mrb[0].mxu0
    %v899 = vadd.f32 0.0, %v898
    %v900 = vpop.f32.mrb[0].mxu0
    %v901 = vpop.f32.mrb[0].mxu0
    %v902 = vpop.f32.mrb[0].mxu0
    %903 = vdwg.mxu0
    %904 = vrot.lane.b32.xlu0 %v394, 112
    %v905 = vpop.permute.xlu0 %904
    %906 = vrot.lane.b32.xlu0 %v394, 80
    %v907 = vpop.permute.xlu0 %906
    %v909 = vsel %vm397, %v905, 0
    %v912 = vsel %vm397, %v907, 0
    %914 = vmatprep.subr.bf16.mxu0 0
    %915 = vmatpush1.bf16.xpose.msra.mxu0 %v912
    %916 = vmatprep.subr.bf16.mxu0 0
    %917 = vmatpush1.bf16.xpose.msra.mxu0 0
    %918 = vmatprep.subr.bf16.mxu0 0
    %919 = vmatpush1.bf16.xpose.msra.mxu0 0
    %920 = vmatprep.subr.bf16.mxu0 0
    %921 = vmatpush1.bf16.xpose.msra.mxu0 0
    %922 = vmatprep.subr.bf16.mxu0 0
    %923 = vmatpush1.bf16.xpose.msra.mxu0 0
    %924 = vmatprep.subr.bf16.mxu0 0
    %925 = vmatpush1.bf16.xpose.msra.mxu0 0
    %926 = vmatprep.subr.bf16.mxu0 0
    %927 = vmatpush1.bf16.xpose.msra.mxu0 0
    %928 = vmatprep.subr.bf16.mxu0 0
    %929 = vmatpush1.bf16.xpose.msra.mxu0 0
    %930 = vmatprep.subr.bf16.mxu0 0
    %931 = vmatpush1.bf16.xpose.msra.mxu0 0
    %932 = vmatprep.subr.bf16.mxu0 0
    %933 = vmatpush1.bf16.xpose.msra.mxu0 0
    %934 = vmatprep.subr.bf16.mxu0 0
    %935 = vmatpush1.bf16.xpose.msra.mxu0 0
    %936 = vmatprep.subr.bf16.mxu0 0
    %937 = vmatpush1.bf16.xpose.msra.mxu0 0
    %938 = vmatprep.subr.bf16.mxu0 0
    %939 = vmatpush1.bf16.xpose.msra.mxu0 0
    %940 = vmatprep.subr.bf16.mxu0 0
    %941 = vmatpush1.bf16.xpose.msra.mxu0 0
    %942 = vmatprep.subr.bf16.mxu0 0
    %943 = vmatpush1.bf16.xpose.msra.mxu0 0
    %944 = vmatprep.subr.bf16.mxu0 0
    %945 = vmatpush1.bf16.xpose.msra.mxu0 0
    %946 = vmatprep.mubr.bf16.mxu0 0
    %947 = vmatmul.mubr.bf16.gmra.mrb[0].mxu0 %v909
    %v948 = vpop.f32.mrb[0].mxu0
    %v949 = vadd.f32 0.0, %v948
    %v950 = vpop.f32.mrb[0].mxu0
    %v951 = vpop.f32.mrb[0].mxu0
    %v952 = vpop.f32.mrb[0].mxu0
    %953 = vdwg.mxu0
    %v954 = vsel %vm397, %v899, -inf
    %955 = vmax.xlane.f32.xlu0 %v954
    %v956 = vpop.xlane.xlu0 %955
    %v957 = vsel %vm397, %v949, -inf
    %958 = vmax.xlane.f32.xlu0 %v957
    %v959 = vpop.xlane.xlu0 %958
    %v960 = vsub.f32 %v899, %v956
    %v961 = vsub.f32 %v949, %v959
    %v962 = vmul.f32 %v960, 1.442695
    %v963 = vpow.pop %v962
    %v964 = vmul.f32 %v961, 1.442695
    %v965 = vpow.pop %v964
    %v966 = vsel %vm397, %v963, 0.0
    %967 = vadd.xlane.f32.xlu0 %v966
    %v968 = vpop.xlane.xlu0 %967
    %v969 = vsel %vm397, %v965, 0.0
    %970 = vadd.xlane.f32.xlu0 %v969
    %v971 = vpop.xlane.xlu0 %970
    %v972 = vrcp.pop %v968
    %v973 = vrcp.pop %v971
    %v974 = vmul.f32 %v963, %v972
    %v975 = vmul.f32 %v965, %v973
    %v976 = vpack.c.bf16 %v974, %v974
    %v977 = vpack.c.bf16 %v975, %v975
    %978 = vrot.lane.b32.xlu0 %v393, 48
    %v979 = vpop.permute.xlu0 %978
    %v981 = vsel %vm397, %v976, 0
    %v984 = vsel %vm521, %v979, 0
    %986 = vmatprep.subr.bf16.mxu0 0
    %987 = vmatpush1.bf16.msra.mxu0 %v984
    %988 = vmatprep.subr.bf16.mxu0 0
    %989 = vmatpush1.bf16.msra.mxu0 0
    %990 = vmatprep.subr.bf16.mxu0 0
    %991 = vmatpush1.bf16.msra.mxu0 0
    %992 = vmatprep.subr.bf16.mxu0 0
    %993 = vmatpush1.bf16.msra.mxu0 0
    %994 = vmatprep.subr.bf16.mxu0 0
    %995 = vmatpush1.bf16.msra.mxu0 0
    %996 = vmatprep.subr.bf16.mxu0 0
    %997 = vmatpush1.bf16.msra.mxu0 0
    %998 = vmatprep.subr.bf16.mxu0 0
    %999 = vmatpush1.bf16.msra.mxu0 0
    %1000 = vmatprep.subr.bf16.mxu0 0
    %1001 = vmatpush1.bf16.msra.mxu0 0
    %1002 = vmatprep.subr.bf16.mxu0 0
    %1003 = vmatpush1.bf16.msra.mxu0 0
    %1004 = vmatprep.subr.bf16.mxu0 0
    %1005 = vmatpush1.bf16.msra.mxu0 0
    %1006 = vmatprep.subr.bf16.mxu0 0
    %1007 = vmatpush1.bf16.msra.mxu0 0
    %1008 = vmatprep.subr.bf16.mxu0 0
    %1009 = vmatpush1.bf16.msra.mxu0 0
    %1010 = vmatprep.subr.bf16.mxu0 0
    %1011 = vmatpush1.bf16.msra.mxu0 0
    %1012 = vmatprep.subr.bf16.mxu0 0
    %1013 = vmatpush1.bf16.msra.mxu0 0
    %1014 = vmatprep.subr.bf16.mxu0 0
    %1015 = vmatpush1.bf16.msra.mxu0 0
    %1016 = vmatprep.subr.bf16.mxu0 0
    %1017 = vmatpush1.bf16.msra.mxu0 0
    %1018 = vmatprep.mubr.bf16.mxu0 0
    %1019 = vmatmul.mubr.bf16.gmra.mrb[0].mxu0 %v981
    %v1020 = vpop.f32.mrb[0].mxu0
    %v1021 = vadd.f32 0.0, %v1020
    %v1022 = vpop.f32.mrb[0].mxu0
    %v1023 = vpop.f32.mrb[0].mxu0
    %v1024 = vpop.f32.mrb[0].mxu0
    %1025 = vdwg.mxu0
    %1026 = vrot.lane.b32.xlu0 %v394, 48
    %v1027 = vpop.permute.xlu0 %1026
    %v1029 = vsel %vm397, %v977, 0
    %v1032 = vsel %vm521, %v1027, 0
    %1034 = vmatprep.subr.bf16.mxu0 0
    %1035 = vmatpush1.bf16.msra.mxu0 %v1032
    %1036 = vmatprep.subr.bf16.mxu0 0
    %1037 = vmatpush1.bf16.msra.mxu0 0
    %1038 = vmatprep.subr.bf16.mxu0 0
    %1039 = vmatpush1.bf16.msra.mxu0 0
    %1040 = vmatprep.subr.bf16.mxu0 0
    %1041 = vmatpush1.bf16.msra.mxu0 0
    %1042 = vmatprep.subr.bf16.mxu0 0
    %1043 = vmatpush1.bf16.msra.mxu0 0
    %1044 = vmatprep.subr.bf16.mxu0 0
    %1045 = vmatpush1.bf16.msra.mxu0 0
    %1046 = vmatprep.subr.bf16.mxu0 0
    %1047 = vmatpush1.bf16.msra.mxu0 0
    %1048 = vmatprep.subr.bf16.mxu0 0
    %1049 = vmatpush1.bf16.msra.mxu0 0
    %1050 = vmatprep.subr.bf16.mxu0 0
    %1051 = vmatpush1.bf16.msra.mxu0 0
    %1052 = vmatprep.subr.bf16.mxu0 0
    %1053 = vmatpush1.bf16.msra.mxu0 0
    %1054 = vmatprep.subr.bf16.mxu0 0
    %1055 = vmatpush1.bf16.msra.mxu0 0
    %1056 = vmatprep.subr.bf16.mxu0 0
    %1057 = vmatpush1.bf16.msra.mxu0 0
    %1058 = vmatprep.subr.bf16.mxu0 0
    %1059 = vmatpush1.bf16.msra.mxu0 0
    %1060 = vmatprep.subr.bf16.mxu0 0
    %1061 = vmatpush1.bf16.msra.mxu0 0
    %1062 = vmatprep.subr.bf16.mxu0 0
    %1063 = vmatpush1.bf16.msra.mxu0 0
    %1064 = vmatprep.subr.bf16.mxu0 0
    %1065 = vmatpush1.bf16.msra.mxu0 0
    %1066 = vmatprep.mubr.bf16.mxu0 0
    %1067 = vmatmul.mubr.bf16.gmra.mrb[0].mxu0 %v1029
    %v1068 = vpop.f32.mrb[0].mxu0
    %v1069 = vadd.f32 0.0, %v1068
    %v1070 = vpop.f32.mrb[0].mxu0
    %v1071 = vpop.f32.mrb[0].mxu0
    %v1072 = vpop.f32.mrb[0].mxu0
    %1073 = vdwg.mxu0
    %v1074 = vpack.c.bf16 %v1021, %v1021
    %v1075 = vpack.c.bf16 %v1069, %v1069
    %v1078 = vunpack.c.l.b16 %v1074
    %v1079 = vunpack.c.l.b16 %v1075
    %v1080 = vpack.c.b16 %v1079, %v1078
    %1081 = vrot.lane.b32.xlu0 %v1080, 16
    %v1082 = vpop.permute.xlu0 %1081
    %vm1084 = vcmask 195712
    %1085 = vst.msk [vmem:[#allocation2] sm:$0xff] %vm1084, %v1082
    %1086 = vrot.lane.b32.xlu0 %v393, 104
    %v1087 = vpop.permute.xlu0 %1086
    %1088 = vrot.lane.b32.xlu0 %v393, 72
    %v1089 = vpop.permute.xlu0 %1088
    %v1091 = vsel %vm397, %v1087, 0
    %v1094 = vsel %vm397, %v1089, 0
    %1096 = vmatprep.subr.bf16.mxu0 0
    %1097 = vmatpush1.bf16.xpose.msra.mxu0 %v1094
    %1098 = vmatprep.subr.bf16.mxu0 0
    %1099 = vmatpush1.bf16.xpose.msra.mxu0 0
    %1100 = vmatprep.subr.bf16.mxu0 0
    %1101 = vmatpush1.bf16.xpose.msra.mxu0 0
    %1102 = vmatprep.subr.bf16.mxu0 0
    %1103 = vmatpush1.bf16.xpose.msra.mxu0 0
    %1104 = vmatprep.subr.bf16.mxu0 0
    %1105 = vmatpush1.bf16.xpose.msra.mxu0 0
    %1106 = vmatprep.subr.bf16.mxu0 0
    %1107 = vmatpush1.bf16.xpose.msra.mxu0 0
    %1108 = vmatprep.subr.bf16.mxu0 0
    %1109 = vmatpush1.bf16.xpose.msra.mxu0 0
    %1110 = vmatprep.subr.bf16.mxu0 0
    %1111 = vmatpush1.bf16.xpose.msra.mxu0 0
    %1112 = vmatprep.subr.bf16.mxu0 0
    %1113 = vmatpush1.bf16.xpose.msra.mxu0 0
    %1114 = vmatprep.subr.bf16.mxu0 0
    %1115 = vmatpush1.bf16.xpose.msra.mxu0 0
    %1116 = vmatprep.subr.bf16.mxu0 0
    %1117 = vmatpush1.bf16.xpose.msra.mxu0 0
    %1118 = vmatprep.subr.bf16.mxu0 0
    %1119 = vmatpush1.bf16.xpose.msra.mxu0 0
    %1120 = vmatprep.subr.bf16.mxu0 0
    %1121 = vmatpush1.bf16.xpose.msra.mxu0 0
    %1122 = vmatprep.subr.bf16.mxu0 0
    %1123 = vmatpush1.bf16.xpose.msra.mxu0 0
    %1124 = vmatprep.subr.bf16.mxu0 0
    %1125 = vmatpush1.bf16.xpose.msra.mxu0 0
    %1126 = vmatprep.subr.bf16.mxu0 0
    %1127 = vmatpush1.bf16.xpose.msra.mxu0 0
    %1128 = vmatprep.mubr.bf16.mxu0 0
    %1129 = vmatmul.mubr.bf16.gmra.mrb[0].mxu0 %v1091
    %v1130 = vpop.f32.mrb[0].mxu0
    %v1131 = vadd.f32 0.0, %v1130
    %v1132 = vpop.f32.mrb[0].mxu0
    %v1133 = vpop.f32.mrb[0].mxu0
    %v1134 = vpop.f32.mrb[0].mxu0
    %1135 = vdwg.mxu0
    %1136 = vrot.lane.b32.xlu0 %v394, 104
    %v1137 = vpop.permute.xlu0 %1136
    %1138 = vrot.lane.b32.xlu0 %v394, 72
    %v1139 = vpop.permute.xlu0 %1138
    %v1141 = vsel %vm397, %v1137, 0
    %v1144 = vsel %vm397, %v1139, 0
    %1146 = vmatprep.subr.bf16.mxu0 0
    %1147 = vmatpush1.bf16.xpose.msra.mxu0 %v1144
    %1148 = vmatprep.subr.bf16.mxu0 0
    %1149 = vmatpush1.bf16.xpose.msra.mxu0 0
    %1150 = vmatprep.subr.bf16.mxu0 0
    %1151 = vmatpush1.bf16.xpose.msra.mxu0 0
    %1152 = vmatprep.subr.bf16.mxu0 0
    %1153 = vmatpush1.bf16.xpose.msra.mxu0 0
    %1154 = vmatprep.subr.bf16.mxu0 0
    %1155 = vmatpush1.bf16.xpose.msra.mxu0 0
    %1156 = vmatprep.subr.bf16.mxu0 0
    %1157 = vmatpush1.bf16.xpose.msra.mxu0 0
    %1158 = vmatprep.subr.bf16.mxu0 0
    %1159 = vmatpush1.bf16.xpose.msra.mxu0 0
    %1160 = vmatprep.subr.bf16.mxu0 0
    %1161 = vmatpush1.bf16.xpose.msra.mxu0 0
    %1162 = vmatprep.subr.bf16.mxu0 0
    %1163 = vmatpush1.bf16.xpose.msra.mxu0 0
    %1164 = vmatprep.subr.bf16.mxu0 0
    %1165 = vmatpush1.bf16.xpose.msra.mxu0 0
    %1166 = vmatprep.subr.bf16.mxu0 0
    %1167 = vmatpush1.bf16.xpose.msra.mxu0 0
    %1168 = vmatprep.subr.bf16.mxu0 0
    %1169 = vmatpush1.bf16.xpose.msra.mxu0 0
    %1170 = vmatprep.subr.bf16.mxu0 0
    %1171 = vmatpush1.bf16.xpose.msra.mxu0 0
    %1172 = vmatprep.subr.bf16.mxu0 0
    %1173 = vmatpush1.bf16.xpose.msra.mxu0 0
    %1174 = vmatprep.subr.bf16.mxu0 0
    %1175 = vmatpush1.bf16.xpose.msra.mxu0 0
    %1176 = vmatprep.subr.bf16.mxu0 0
    %1177 = vmatpush1.bf16.xpose.msra.mxu0 0
    %1178 = vmatprep.mubr.bf16.mxu0 0
    %1179 = vmatmul.mubr.bf16.gmra.mrb[0].mxu0 %v1141
    %v1180 = vpop.f32.mrb[0].mxu0
    %v1181 = vadd.f32 0.0, %v1180
    %v1182 = vpop.f32.mrb[0].mxu0
    %v1183 = vpop.f32.mrb[0].mxu0
    %v1184 = vpop.f32.mrb[0].mxu0
    %1185 = vdwg.mxu0
    %v1186 = vsel %vm397, %v1131, -inf
    %1187 = vmax.xlane.f32.xlu0 %v1186
    %v1188 = vpop.xlane.xlu0 %1187
    %v1189 = vsel %vm397, %v1181, -inf
    %1190 = vmax.xlane.f32.xlu0 %v1189
    %v1191 = vpop.xlane.xlu0 %1190
    %v1192 = vsub.f32 %v1131, %v1188
    %v1193 = vsub.f32 %v1181, %v1191
    %v1194 = vmul.f32 %v1192, 1.442695
    %v1195 = vpow.pop %v1194
    %v1196 = vmul.f32 %v1193, 1.442695
    %v1197 = vpow.pop %v1196
    %v1198 = vsel %vm397, %v1195, 0.0
    %1199 = vadd.xlane.f32.xlu0 %v1198
    %v1200 = vpop.xlane.xlu0 %1199
    %v1201 = vsel %vm397, %v1197, 0.0
    %1202 = vadd.xlane.f32.xlu0 %v1201
    %v1203 = vpop.xlane.xlu0 %1202
    %v1204 = vrcp.pop %v1200
    %v1205 = vrcp.pop %v1203
    %v1206 = vmul.f32 %v1195, %v1204
    %v1207 = vmul.f32 %v1197, %v1205
    %v1208 = vpack.c.bf16 %v1206, %v1206
    %v1209 = vpack.c.bf16 %v1207, %v1207
    %1210 = vrot.lane.b32.xlu0 %v393, 40
    %v1211 = vpop.permute.xlu0 %1210
    %v1213 = vsel %vm397, %v1208, 0
    %v1216 = vsel %vm521, %v1211, 0
    %1218 = vmatprep.subr.bf16.mxu0 0
    %1219 = vmatpush1.bf16.msra.mxu0 %v1216
    %1220 = vmatprep.subr.bf16.mxu0 0
    %1221 = vmatpush1.bf16.msra.mxu0 0
    %1222 = vmatprep.subr.bf16.mxu0 0
    %1223 = vmatpush1.bf16.msra.mxu0 0
    %1224 = vmatprep.subr.bf16.mxu0 0
    %1225 = vmatpush1.bf16.msra.mxu0 0
    %1226 = vmatprep.subr.bf16.mxu0 0
    %1227 = vmatpush1.bf16.msra.mxu0 0
    %1228 = vmatprep.subr.bf16.mxu0 0
    %1229 = vmatpush1.bf16.msra.mxu0 0
    %1230 = vmatprep.subr.bf16.mxu0 0
    %1231 = vmatpush1.bf16.msra.mxu0 0
    %1232 = vmatprep.subr.bf16.mxu0 0
    %1233 = vmatpush1.bf16.msra.mxu0 0
    %1234 = vmatprep.subr.bf16.mxu0 0
    %1235 = vmatpush1.bf16.msra.mxu0 0
    %1236 = vmatprep.subr.bf16.mxu0 0
    %1237 = vmatpush1.bf16.msra.mxu0 0
    %1238 = vmatprep.subr.bf16.mxu0 0
    %1239 = vmatpush1.bf16.msra.mxu0 0
    %1240 = vmatprep.subr.bf16.mxu0 0
    %1241 = vmatpush1.bf16.msra.mxu0 0
    %1242 = vmatprep.subr.bf16.mxu0 0
    %1243 = vmatpush1.bf16.msra.mxu0 0
    %1244 = vmatprep.subr.bf16.mxu0 0
    %1245 = vmatpush1.bf16.msra.mxu0 0
    %1246 = vmatprep.subr.bf16.mxu0 0
    %1247 = vmatpush1.bf16.msra.mxu0 0
    %1248 = vmatprep.subr.bf16.mxu0 0
    %1249 = vmatpush1.bf16.msra.mxu0 0
    %1250 = vmatprep.mubr.bf16.mxu0 0
    %1251 = vmatmul.mubr.bf16.gmra.mrb[0].mxu0 %v1213
    %v1252 = vpop.f32.mrb[0].mxu0
    %v1253 = vadd.f32 0.0, %v1252
    %v1254 = vpop.f32.mrb[0].mxu0
    %v1255 = vpop.f32.mrb[0].mxu0
    %v1256 = vpop.f32.mrb[0].mxu0
    %1257 = vdwg.mxu0
    %1258 = vrot.lane.b32.xlu0 %v394, 40
    %v1259 = vpop.permute.xlu0 %1258
    %v1261 = vsel %vm397, %v1209, 0
    %v1264 = vsel %vm521, %v1259, 0
    %1266 = vmatprep.subr.bf16.mxu0 0
    %1267 = vmatpush1.bf16.msra.mxu0 %v1264
    %1268 = vmatprep.subr.bf16.mxu0 0
    %1269 = vmatpush1.bf16.msra.mxu0 0
    %1270 = vmatprep.subr.bf16.mxu0 0
    %1271 = vmatpush1.bf16.msra.mxu0 0
    %1272 = vmatprep.subr.bf16.mxu0 0
    %1273 = vmatpush1.bf16.msra.mxu0 0
    %1274 = vmatprep.subr.bf16.mxu0 0
    %1275 = vmatpush1.bf16.msra.mxu0 0
    %1276 = vmatprep.subr.bf16.mxu0 0
    %1277 = vmatpush1.bf16.msra.mxu0 0
    %1278 = vmatprep.subr.bf16.mxu0 0
    %1279 = vmatpush1.bf16.msra.mxu0 0
    %1280 = vmatprep.subr.bf16.mxu0 0
    %1281 = vmatpush1.bf16.msra.mxu0 0
    %1282 = vmatprep.subr.bf16.mxu0 0
    %1283 = vmatpush1.bf16.msra.mxu0 0
    %1284 = vmatprep.subr.bf16.mxu0 0
    %1285 = vmatpush1.bf16.msra.mxu0 0
    %1286 = vmatprep.subr.bf16.mxu0 0
    %1287 = vmatpush1.bf16.msra.mxu0 0
    %1288 = vmatprep.subr.bf16.mxu0 0
    %1289 = vmatpush1.bf16.msra.mxu0 0
    %1290 = vmatprep.subr.bf16.mxu0 0
    %1291 = vmatpush1.bf16.msra.mxu0 0
    %1292 = vmatprep.subr.bf16.mxu0 0
    %1293 = vmatpush1.bf16.msra.mxu0 0
    %1294 = vmatprep.subr.bf16.mxu0 0
    %1295 = vmatpush1.bf16.msra.mxu0 0
    %1296 = vmatprep.subr.bf16.mxu0 0
    %1297 = vmatpush1.bf16.msra.mxu0 0
    %1298 = vmatprep.mubr.bf16.mxu0 0
    %1299 = vmatmul.mubr.bf16.gmra.mrb[0].mxu0 %v1261
    %v1300 = vpop.f32.mrb[0].mxu0
    %v1301 = vadd.f32 0.0, %v1300
    %v1302 = vpop.f32.mrb[0].mxu0
    %v1303 = vpop.f32.mrb[0].mxu0
    %v1304 = vpop.f32.mrb[0].mxu0
    %1305 = vdwg.mxu0
    %v1306 = vpack.c.bf16 %v1253, %v1253
    %v1307 = vpack.c.bf16 %v1301, %v1301
    %v1310 = vunpack.c.l.b16 %v1306
    %v1311 = vunpack.c.l.b16 %v1307
    %v1312 = vpack.c.b16 %v1311, %v1310
    %1313 = vrot.lane.b32.xlu0 %v1312, 24
    %v1314 = vpop.permute.xlu0 %1313
    %vm1316 = vcmask 261312
    %1317 = vst.msk [vmem:[#allocation2] sm:$0xff] %vm1316, %v1314
    %v1318 = vld [vmem:[#allocation2] sm:$0xff]
    %v1319 = vld [vmem:[#allocation11] sm:$0xf]
    %v1320 = vld [vmem:[#allocation11 + $0x4] sm:$0xf]
    %v1321 = vld [vmem:[#allocation11 + $0x8] sm:$0xf]
    %v1322 = vld [vmem:[#allocation11 + $0xc] sm:$0xf]
    %v1323 = vld [vmem:[#allocation12] sm:$0x1]
    %v1325 = vlaneseq
    %v1326 = vshrl.u32 %v1325, 7
    %v1327 = vsub.s32 0, %v1326
    %v1328 = vrot.slane %v1323, %v1327
    %v1334 = vunpack.c.l.b16 %v1319
    %v1335 = vunpack.c.l.b16 %v1320
    %v1336 = vunpack.c.l.b16 %v1321
    %v1337 = vunpack.c.l.b16 %v1322
    %v1338 = vpack.c.b16 %v1335, %v1334
    %v1339 = vpack.c.b16 %v1337, %v1336
    %v1343 = vsel %vm344, %v1318, 0
    %1345 = vmatprep.subr.bf16.mxu0 0
    %1346 = vmatpush1.bf16.msra.mxu0 %v1338
    %1347 = vmatprep.subr.bf16.mxu0 0
    %1348 = vmatpush1.bf16.msra.mxu0 %v1339
    %1349 = vmatprep.subr.bf16.mxu0 0
    %1350 = vmatpush1.bf16.msra.mxu0 0
    %1351 = vmatprep.subr.bf16.mxu0 0
    %1352 = vmatpush1.bf16.msra.mxu0 0
    %1353 = vmatprep.subr.bf16.mxu0 0
    %1354 = vmatpush1.bf16.msra.mxu0 0
    %1355 = vmatprep.subr.bf16.mxu0 0
    %1356 = vmatpush1.bf16.msra.mxu0 0
    %1357 = vmatprep.subr.bf16.mxu0 0
    %1358 = vmatpush1.bf16.msra.mxu0 0
    %1359 = vmatprep.subr.bf16.mxu0 0
    %1360 = vmatpush1.bf16.msra.mxu0 0
    %1361 = vmatprep.subr.bf16.mxu0 0
    %1362 = vmatpush1.bf16.msra.mxu0 0
    %1363 = vmatprep.subr.bf16.mxu0 0
    %1364 = vmatpush1.bf16.msra.mxu0 0
    %1365 = vmatprep.subr.bf16.mxu0 0
    %1366 = vmatpush1.bf16.msra.mxu0 0
    %1367 = vmatprep.subr.bf16.mxu0 0
    %1368 = vmatpush1.bf16.msra.mxu0 0
    %1369 = vmatprep.subr.bf16.mxu0 0
    %1370 = vmatpush1.bf16.msra.mxu0 0
    %1371 = vmatprep.subr.bf16.mxu0 0
    %1372 = vmatpush1.bf16.msra.mxu0 0
    %1373 = vmatprep.subr.bf16.mxu0 0
    %1374 = vmatpush1.bf16.msra.mxu0 0
    %1375 = vmatprep.subr.bf16.mxu0 0
    %1376 = vmatpush1.bf16.msra.mxu0 0
    %1377 = vmatprep.mubr.bf16.mxu0 0
    %1378 = vmatmul.mubr.bf16.gmra.mrb[0].mxu0 %v1343
    %v1379 = vpop.f32.mrb[0].mxu0
    %v1380 = vadd.f32 %v1328, %v1379
    %v1381 = vpop.f32.mrb[0].mxu0
    %v1382 = vpop.f32.mrb[0].mxu0
    %v1383 = vadd.f32 %v1328, %v1382
    %v1384 = vpop.f32.mrb[0].mxu0
    %1385 = vdwg.mxu0
    %v1386 = vadd.f32 %v316, %v1380
    %v1387 = vadd.f32 %v317, %v1383
    %v1388 = vpack.c.bf16 %v1387, %v1386
    %v1389 = vpack.c.bf16 %v319, %v318
    %v1390 = vld [vmem:[#allocation14] sm:$0xf]
    %v1391 = vld [vmem:[#allocation14 + $0x4] sm:$0xf]
    %v1392 = vld [vmem:[#allocation14 + $0x8] sm:$0xf]
    %v1393 = vld [vmem:[#allocation14 + $0xc] sm:$0xf]
    %v1394 = vld [vmem:[#allocation15] sm:$0x1]
    %v1396 = vlaneseq
    %v1397 = vshrl.u32 %v1396, 7
    %v1398 = vsub.s32 0, %v1397
    %v1399 = vrot.slane %v1394, %v1398
    %v1405 = vunpack.c.l.b16 %v1390
    %v1406 = vunpack.c.l.b16 %v1391
    %v1407 = vunpack.c.l.b16 %v1392
    %v1408 = vunpack.c.l.b16 %v1393
    %v1409 = vpack.c.b16 %v1406, %v1405
    %v1410 = vpack.c.b16 %v1408, %v1407
    %v1414 = vsel %vm344, %v1388, 0
    %1416 = vmatprep.subr.bf16.mxu0 0
    %1417 = vmatpush1.bf16.msra.mxu0 %v1409
    %1418 = vmatprep.subr.bf16.mxu0 0
    %1419 = vmatpush1.bf16.msra.mxu0 %v1410
    %1420 = vmatprep.subr.bf16.mxu0 0
    %1421 = vmatpush1.bf16.msra.mxu0 0
    %1422 = vmatprep.subr.bf16.mxu0 0
    %1423 = vmatpush1.bf16.msra.mxu0 0
    %1424 = vmatprep.subr.bf16.mxu0 0
    %1425 = vmatpush1.bf16.msra.mxu0 0
    %1426 = vmatprep.subr.bf16.mxu0 0
    %1427 = vmatpush1.bf16.msra.mxu0 0
    %1428 = vmatprep.subr.bf16.mxu0 0
    %1429 = vmatpush1.bf16.msra.mxu0 0
    %1430 = vmatprep.subr.bf16.mxu0 0
    %1431 = vmatpush1.bf16.msra.mxu0 0
    %1432 = vmatprep.subr.bf16.mxu0 0
    %1433 = vmatpush1.bf16.msra.mxu0 0
    %1434 = vmatprep.subr.bf16.mxu0 0
    %1435 = vmatpush1.bf16.msra.mxu0 0
    %1436 = vmatprep.subr.bf16.mxu0 0
    %1437 = vmatpush1.bf16.msra.mxu0 0
    %1438 = vmatprep.subr.bf16.mxu0 0
    %1439 = vmatpush1.bf16.msra.mxu0 0
    %1440 = vmatprep.subr.bf16.mxu0 0
    %1441 = vmatpush1.bf16.msra.mxu0 0
    %1442 = vmatprep.subr.bf16.mxu0 0
    %1443 = vmatpush1.bf16.msra.mxu0 0
    %1444 = vmatprep.subr.bf16.mxu0 0
    %1445 = vmatpush1.bf16.msra.mxu0 0
    %1446 = vmatprep.subr.bf16.mxu0 0
    %1447 = vmatpush1.bf16.msra.mxu0 0
    %1448 = vmatprep.mubr.bf16.mxu0 0
    %1449 = vmatmul.mubr.bf16.gmra.mrb[0].mxu0 %v1414
    %v1450 = vpop.f32.mrb[0].mxu0
    %v1451 = vadd.f32 %v1399, %v1450
    %v1452 = vpop.f32.mrb[0].mxu0
    %v1453 = vpop.f32.mrb[0].mxu0
    %v1454 = vadd.f32 %v1399, %v1453
    %v1455 = vpop.f32.mrb[0].mxu0
    %1456 = vdwg.mxu0
    %v1457 = vpack.c.bf16 %v1454, %v1451
    %v1459 = vunpack.c.l.b16 %v1457
    %v1460 = vunpack.c.h.b16 %v1457
    %v1461 = vpack.c.b16 %v1459, %v1459
    %v1462 = vpack.c.b16 %v1460, %v1460
    %v1463 = vld [vmem:[#allocation17] sm:$0xf]
    %v1464 = vld [vmem:[#allocation17 + $0x4] sm:$0xf]
    %v1465 = vld [vmem:[#allocation17 + $0x8] sm:$0xf]
    %v1466 = vld [vmem:[#allocation17 + $0xc] sm:$0xf]
    %v1467 = vld [vmem:[#allocation18] sm:$0x1]
    %v1469 = vlaneseq
    %v1470 = vshrl.u32 %v1469, 7
    %v1471 = vsub.s32 0, %v1470
    %v1472 = vrot.slane %v1467, %v1471
    %v1478 = vunpack.c.l.b16 %v1463
    %v1479 = vunpack.c.l.b16 %v1464
    %v1480 = vunpack.c.l.b16 %v1465
    %v1481 = vunpack.c.l.b16 %v1466
    %v1482 = vpack.c.b16 %v1479, %v1478
    %v1483 = vpack.c.b16 %v1481, %v1480
    %v1487 = vsel %vm344, %v1389, 0
    %1489 = vmatprep.subr.bf16.mxu0 0
    %1490 = vmatpush1.bf16.msra.mxu0 %v1482
    %1491 = vmatprep.subr.bf16.mxu0 0
    %1492 = vmatpush1.bf16.msra.mxu0 %v1483
    %1493 = vmatprep.subr.bf16.mxu0 0
    %1494 = vmatpush1.bf16.msra.mxu0 0
    %1495 = vmatprep.subr.bf16.mxu0 0
    %1496 = vmatpush1.bf16.msra.mxu0 0
    %1497 = vmatprep.subr.bf16.mxu0 0
    %1498 = vmatpush1.bf16.msra.mxu0 0
    %1499 = vmatprep.subr.bf16.mxu0 0
    %1500 = vmatpush1.bf16.msra.mxu0 0
    %1501 = vmatprep.subr.bf16.mxu0 0
    %1502 = vmatpush1.bf16.msra.mxu0 0
    %1503 = vmatprep.subr.bf16.mxu0 0
    %1504 = vmatpush1.bf16.msra.mxu0 0
    %1505 = vmatprep.subr.bf16.mxu0 0
    %1506 = vmatpush1.bf16.msra.mxu0 0
    %1507 = vmatprep.subr.bf16.mxu0 0
    %1508 = vmatpush1.bf16.msra.mxu0 0
    %1509 = vmatprep.subr.bf16.mxu0 0
    %1510 = vmatpush1.bf16.msra.mxu0 0
    %1511 = vmatprep.subr.bf16.mxu0 0
    %1512 = vmatpush1.bf16.msra.mxu0 0
    %1513 = vmatprep.subr.bf16.mxu0 0
    %1514 = vmatpush1.bf16.msra.mxu0 0
    %1515 = vmatprep.subr.bf16.mxu0 0
    %1516 = vmatpush1.bf16.msra.mxu0 0
    %1517 = vmatprep.subr.bf16.mxu0 0
    %1518 = vmatpush1.bf16.msra.mxu0 0
    %1519 = vmatprep.subr.bf16.mxu0 0
    %1520 = vmatpush1.bf16.msra.mxu0 0
    %1521 = vmatprep.mubr.bf16.mxu0 0
    %1522 = vmatmul.mubr.bf16.gmra.mrb[0].mxu0 %v1487
    %v1523 = vpop.f32.mrb[0].mxu0
    %v1524 = vadd.f32 %v1472, %v1523
    %v1525 = vpop.f32.mrb[0].mxu0
    %v1526 = vpop.f32.mrb[0].mxu0
    %v1527 = vadd.f32 %v1472, %v1526
    %v1528 = vpop.f32.mrb[0].mxu0
    %1529 = vdwg.mxu0
    %v1530 = vpack.c.bf16 %v1527, %v1524
    %v1532 = vunpack.c.l.b16 %v1530
    %v1533 = vunpack.c.h.b16 %v1530
    %v1534 = vpack.c.b16 %v1532, %v1532
    %v1535 = vpack.c.b16 %v1533, %v1533
    %v1537 = vsel %vm397, %v1461, 0
    %v1540 = vsel %vm397, %v1534, 0
    %1542 = vmatprep.subr.bf16.mxu0 0
    %1543 = vmatpush1.bf16.xpose.msra.mxu0 %v1540
    %1544 = vmatprep.subr.bf16.mxu0 0
    %1545 = vmatpush1.bf16.xpose.msra.mxu0 0
    %1546 = vmatprep.subr.bf16.mxu0 0
    %1547 = vmatpush1.bf16.xpose.msra.mxu0 0
    %1548 = vmatprep.subr.bf16.mxu0 0
    %1549 = vmatpush1.bf16.xpose.msra.mxu0 0
    %1550 = vmatprep.subr.bf16.mxu0 0
    %1551 = vmatpush1.bf16.xpose.msra.mxu0 0
    %1552 = vmatprep.subr.bf16.mxu0 0
    %1553 = vmatpush1.bf16.xpose.msra.mxu0 0
    %1554 = vmatprep.subr.bf16.mxu0 0
    %1555 = vmatpush1.bf16.xpose.msra.mxu0 0
    %1556 = vmatprep.subr.bf16.mxu0 0
    %1557 = vmatpush1.bf16.xpose.msra.mxu0 0
    %1558 = vmatprep.subr.bf16.mxu0 0
    %1559 = vmatpush1.bf16.xpose.msra.mxu0 0
    %1560 = vmatprep.subr.bf16.mxu0 0
    %1561 = vmatpush1.bf16.xpose.msra.mxu0 0
    %1562 = vmatprep.subr.bf16.mxu0 0
    %1563 = vmatpush1.bf16.xpose.msra.mxu0 0
    %1564 = vmatprep.subr.bf16.mxu0 0
    %1565 = vmatpush1.bf16.xpose.msra.mxu0 0
    %1566 = vmatprep.subr.bf16.mxu0 0
    %1567 = vmatpush1.bf16.xpose.msra.mxu0 0
    %1568 = vmatprep.subr.bf16.mxu0 0
    %1569 = vmatpush1.bf16.xpose.msra.mxu0 0
    %1570 = vmatprep.subr.bf16.mxu0 0
    %1571 = vmatpush1.bf16.xpose.msra.mxu0 0
    %1572 = vmatprep.subr.bf16.mxu0 0
    %1573 = vmatpush1.bf16.xpose.msra.mxu0 0
    %1574 = vmatprep.mubr.bf16.mxu0 0
    %1575 = vmatmul.mubr.bf16.gmra.mrb[0].mxu0 %v1537
    %v1576 = vpop.f32.mrb[0].mxu0
    %v1577 = vadd.f32 0.0, %v1576
    %v1578 = vpop.f32.mrb[0].mxu0
    %v1579 = vpop.f32.mrb[0].mxu0
    %v1580 = vpop.f32.mrb[0].mxu0
    %1581 = vdwg.mxu0
    %v1583 = vsel %vm397, %v1462, 0
    %v1586 = vsel %vm397, %v1535, 0
    %1588 = vmatprep.subr.bf16.mxu0 0
    %1589 = vmatpush1.bf16.xpose.msra.mxu0 %v1586
    %1590 = vmatprep.subr.bf16.mxu0 0
    %1591 = vmatpush1.bf16.xpose.msra.mxu0 0
    %1592 = vmatprep.subr.bf16.mxu0 0
    %1593 = vmatpush1.bf16.xpose.msra.mxu0 0
    %1594 = vmatprep.subr.bf16.mxu0 0
    %1595 = vmatpush1.bf16.xpose.msra.mxu0 0
    %1596 = vmatprep.subr.bf16.mxu0 0
    %1597 = vmatpush1.bf16.xpose.msra.mxu0 0
    %1598 = vmatprep.subr.bf16.mxu0 0
    %1599 = vmatpush1.bf16.xpose.msra.mxu0 0
    %1600 = vmatprep.subr.bf16.mxu0 0
    %1601 = vmatpush1.bf16.xpose.msra.mxu0 0
    %1602 = vmatprep.subr.bf16.mxu0 0
    %1603 = vmatpush1.bf16.xpose.msra.mxu0 0
    %1604 = vmatprep.subr.bf16.mxu0 0
    %1605 = vmatpush1.bf16.xpose.msra.mxu0 0
    %1606 = vmatprep.subr.bf16.mxu0 0
    %1607 = vmatpush1.bf16.xpose.msra.mxu0 0
    %1608 = vmatprep.subr.bf16.mxu0 0
    %1609 = vmatpush1.bf16.xpose.msra.mxu0 0
    %1610 = vmatprep.subr.bf16.mxu0 0
    %1611 = vmatpush1.bf16.xpose.msra.mxu0 0
    %1612 = vmatprep.subr.bf16.mxu0 0
    %1613 = vmatpush1.bf16.xpose.msra.mxu0 0
    %1614 = vmatprep.subr.bf16.mxu0 0
    %1615 = vmatpush1.bf16.xpose.msra.mxu0 0
    %1616 = vmatprep.subr.bf16.mxu0 0
    %1617 = vmatpush1.bf16.xpose.msra.mxu0 0
    %1618 = vmatprep.subr.bf16.mxu0 0
    %1619 = vmatpush1.bf16.xpose.msra.mxu0 0
    %1620 = vmatprep.mubr.bf16.mxu0 0
    %1621 = vmatmul.mubr.bf16.gmra.mrb[0].mxu0 %v1583
    %v1622 = vpop.f32.mrb[0].mxu0
    %v1623 = vadd.f32 0.0, %v1622
    %v1624 = vpop.f32.mrb[0].mxu0
    %v1625 = vpop.f32.mrb[0].mxu0
    %v1626 = vpop.f32.mrb[0].mxu0
    %1627 = vdwg.mxu0
    %v1628 = vsel %vm397, %v1577, -inf
    %1629 = vmax.xlane.f32.xlu0 %v1628
    %v1630 = vpop.xlane.xlu0 %1629
    %v1631 = vsel %vm397, %v1623, -inf
    %1632 = vmax.xlane.f32.xlu0 %v1631
    %v1633 = vpop.xlane.xlu0 %1632
    %v1634 = vsub.f32 %v1577, %v1630
    %v1635 = vsub.f32 %v1623, %v1633
    %v1636 = vmul.f32 %v1634, 1.442695
    %v1637 = vpow.pop %v1636
    %v1638 = vmul.f32 %v1635, 1.442695
    %v1639 = vpow.pop %v1638
    %v1640 = vsel %vm397, %v1637, 0.0
    %1641 = vadd.xlane.f32.xlu0 %v1640
    %v1642 = vpop.xlane.xlu0 %1641
    %v1643 = vsel %vm397, %v1639, 0.0
    %1644 = vadd.xlane.f32.xlu0 %v1643
    %v1645 = vpop.xlane.xlu0 %1644
    %v1646 = vrcp.pop %v1642
    %v1647 = vrcp.pop %v1645
    %v1648 = vmul.f32 %v1637, %v1646
    %v1649 = vmul.f32 %v1639, %v1647
    %v1650 = vpack.c.bf16 %v1648, %v1648
    %v1651 = vpack.c.bf16 %v1649, %v1649
    %1652 = vrot.lane.b32.xlu0 %v1534, 96
    %v1653 = vpop.permute.xlu0 %1652
    %v1655 = vsel %vm397, %v1650, 0
    %v1658 = vsel %vm521, %v1653, 0
    %1660 = vmatprep.subr.bf16.mxu0 0
    %1661 = vmatpush1.bf16.msra.mxu0 %v1658
    %1662 = vmatprep.subr.bf16.mxu0 0
    %1663 = vmatpush1.bf16.msra.mxu0 0
    %1664 = vmatprep.subr.bf16.mxu0 0
    %1665 = vmatpush1.bf16.msra.mxu0 0
    %1666 = vmatprep.subr.bf16.mxu0 0
    %1667 = vmatpush1.bf16.msra.mxu0 0
    %1668 = vmatprep.subr.bf16.mxu0 0
    %1669 = vmatpush1.bf16.msra.mxu0 0
    %1670 = vmatprep.subr.bf16.mxu0 0
    %1671 = vmatpush1.bf16.msra.mxu0 0
    %1672 = vmatprep.subr.bf16.mxu0 0
    %1673 = vmatpush1.bf16.msra.mxu0 0
    %1674 = vmatprep.subr.bf16.mxu0 0
    %1675 = vmatpush1.bf16.msra.mxu0 0
    %1676 = vmatprep.subr.bf16.mxu0 0
    %1677 = vmatpush1.bf16.msra.mxu0 0
    %1678 = vmatprep.subr.bf16.mxu0 0
    %1679 = vmatpush1.bf16.msra.mxu0 0
    %1680 = vmatprep.subr.bf16.mxu0 0
    %1681 = vmatpush1.bf16.msra.mxu0 0
    %1682 = vmatprep.subr.bf16.mxu0 0
    %1683 = vmatpush1.bf16.msra.mxu0 0
    %1684 = vmatprep.subr.bf16.mxu0 0
    %1685 = vmatpush1.bf16.msra.mxu0 0
    %1686 = vmatprep.subr.bf16.mxu0 0
    %1687 = vmatpush1.bf16.msra.mxu0 0
    %1688 = vmatprep.subr.bf16.mxu0 0
    %1689 = vmatpush1.bf16.msra.mxu0 0
    %1690 = vmatprep.subr.bf16.mxu0 0
    %1691 = vmatpush1.bf16.msra.mxu0 0
    %1692 = vmatprep.mubr.bf16.mxu0 0
    %1693 = vmatmul.mubr.bf16.gmra.mrb[0].mxu0 %v1655
    %v1694 = vpop.f32.mrb[0].mxu0
    %v1695 = vadd.f32 0.0, %v1694
    %v1696 = vpop.f32.mrb[0].mxu0
    %v1697 = vpop.f32.mrb[0].mxu0
    %v1698 = vpop.f32.mrb[0].mxu0
    %1699 = vdwg.mxu0
    %1700 = vrot.lane.b32.xlu0 %v1535, 96
    %v1701 = vpop.permute.xlu0 %1700
    %v1703 = vsel %vm397, %v1651, 0
    %v1706 = vsel %vm521, %v1701, 0
    %1708 = vmatprep.subr.bf16.mxu0 0
    %1709 = vmatpush1.bf16.msra.mxu0 %v1706
    %1710 = vmatprep.subr.bf16.mxu0 0
    %1711 = vmatpush1.bf16.msra.mxu0 0
    %1712 = vmatprep.subr.bf16.mxu0 0
    %1713 = vmatpush1.bf16.msra.mxu0 0
    %1714 = vmatprep.subr.bf16.mxu0 0
    %1715 = vmatpush1.bf16.msra.mxu0 0
    %1716 = vmatprep.subr.bf16.mxu0 0
    %1717 = vmatpush1.bf16.msra.mxu0 0
    %1718 = vmatprep.subr.bf16.mxu0 0
    %1719 = vmatpush1.bf16.msra.mxu0 0
    %1720 = vmatprep.subr.bf16.mxu0 0
    %1721 = vmatpush1.bf16.msra.mxu0 0
    %1722 = vmatprep.subr.bf16.mxu0 0
    %1723 = vmatpush1.bf16.msra.mxu0 0
    %1724 = vmatprep.subr.bf16.mxu0 0
    %1725 = vmatpush1.bf16.msra.mxu0 0
    %1726 = vmatprep.subr.bf16.mxu0 0
    %1727 = vmatpush1.bf16.msra.mxu0 0
    %1728 = vmatprep.subr.bf16.mxu0 0
    %1729 = vmatpush1.bf16.msra.mxu0 0
    %1730 = vmatprep.subr.bf16.mxu0 0
    %1731 = vmatpush1.bf16.msra.mxu0 0
    %1732 = vmatprep.subr.bf16.mxu0 0
    %1733 = vmatpush1.bf16.msra.mxu0 0
    %1734 = vmatprep.subr.bf16.mxu0 0
    %1735 = vmatpush1.bf16.msra.mxu0 0
    %1736 = vmatprep.subr.bf16.mxu0 0
    %1737 = vmatpush1.bf16.msra.mxu0 0
    %1738 = vmatprep.subr.bf16.mxu0 0
    %1739 = vmatpush1.bf16.msra.mxu0 0
    %1740 = vmatprep.mubr.bf16.mxu0 0
    %1741 = vmatmul.mubr.bf16.gmra.mrb[0].mxu0 %v1703
    %v1742 = vpop.f32.mrb[0].mxu0
    %v1743 = vadd.f32 0.0, %v1742
    %v1744 = vpop.f32.mrb[0].mxu0
    %v1745 = vpop.f32.mrb[0].mxu0
    %v1746 = vpop.f32.mrb[0].mxu0
    %1747 = vdwg.mxu0
    %v1748 = vpack.c.bf16 %v1695, %v1695
    %v1749 = vpack.c.bf16 %v1743, %v1743
    %v1752 = vunpack.c.l.b16 %v1748
    %v1753 = vunpack.c.l.b16 %v1749
    %v1754 = vpack.c.b16 %v1753, %v1752
    %1756 = vst.msk [vmem:[#allocation2] sm:$0xff] %vm397, %v1754
    %1757 = vrot.lane.b32.xlu0 %v1461, 120
    %v1758 = vpop.permute.xlu0 %1757
    %1759 = vrot.lane.b32.xlu0 %v1534, 120
    %v1760 = vpop.permute.xlu0 %1759
    %v1762 = vsel %vm397, %v1758, 0
    %v1765 = vsel %vm397, %v1760, 0
    %1767 = vmatprep.subr.bf16.mxu0 0
    %1768 = vmatpush1.bf16.xpose.msra.mxu0 %v1765
    %1769 = vmatprep.subr.bf16.mxu0 0
    %1770 = vmatpush1.bf16.xpose.msra.mxu0 0
    %1771 = vmatprep.subr.bf16.mxu0 0
    %1772 = vmatpush1.bf16.xpose.msra.mxu0 0
    %1773 = vmatprep.subr.bf16.mxu0 0
    %1774 = vmatpush1.bf16.xpose.msra.mxu0 0
    %1775 = vmatprep.subr.bf16.mxu0 0
    %1776 = vmatpush1.bf16.xpose.msra.mxu0 0
    %1777 = vmatprep.subr.bf16.mxu0 0
    %1778 = vmatpush1.bf16.xpose.msra.mxu0 0
    %1779 = vmatprep.subr.bf16.mxu0 0
    %1780 = vmatpush1.bf16.xpose.msra.mxu0 0
    %1781 = vmatprep.subr.bf16.mxu0 0
    %1782 = vmatpush1.bf16.xpose.msra.mxu0 0
    %1783 = vmatprep.subr.bf16.mxu0 0
    %1784 = vmatpush1.bf16.xpose.msra.mxu0 0
    %1785 = vmatprep.subr.bf16.mxu0 0
    %1786 = vmatpush1.bf16.xpose.msra.mxu0 0
    %1787 = vmatprep.subr.bf16.mxu0 0
    %1788 = vmatpush1.bf16.xpose.msra.mxu0 0
    %1789 = vmatprep.subr.bf16.mxu0 0
    %1790 = vmatpush1.bf16.xpose.msra.mxu0 0
    %1791 = vmatprep.subr.bf16.mxu0 0
    %1792 = vmatpush1.bf16.xpose.msra.mxu0 0
    %1793 = vmatprep.subr.bf16.mxu0 0
    %1794 = vmatpush1.bf16.xpose.msra.mxu0 0
    %1795 = vmatprep.subr.bf16.mxu0 0
    %1796 = vmatpush1.bf16.xpose.msra.mxu0 0
    %1797 = vmatprep.subr.bf16.mxu0 0
    %1798 = vmatpush1.bf16.xpose.msra.mxu0 0
    %1799 = vmatprep.mubr.bf16.mxu0 0
    %1800 = vmatmul.mubr.bf16.gmra.mrb[0].mxu0 %v1762
    %v1801 = vpop.f32.mrb[0].mxu0
    %v1802 = vadd.f32 0.0, %v1801
    %v1803 = vpop.f32.mrb[0].mxu0
    %v1804 = vpop.f32.mrb[0].mxu0
    %v1805 = vpop.f32.mrb[0].mxu0
    %1806 = vdwg.mxu0
    %1807 = vrot.lane.b32.xlu0 %v1462, 120
    %v1808 = vpop.permute.xlu0 %1807
    %1809 = vrot.lane.b32.xlu0 %v1535, 120
    %v1810 = vpop.permute.xlu0 %1809
    %v1812 = vsel %vm397, %v1808, 0
    %v1815 = vsel %vm397, %v1810, 0
    %1817 = vmatprep.subr.bf16.mxu0 0
    %1818 = vmatpush1.bf16.xpose.msra.mxu0 %v1815
    %1819 = vmatprep.subr.bf16.mxu0 0
    %1820 = vmatpush1.bf16.xpose.msra.mxu0 0
    %1821 = vmatprep.subr.bf16.mxu0 0
    %1822 = vmatpush1.bf16.xpose.msra.mxu0 0
    %1823 = vmatprep.subr.bf16.mxu0 0
    %1824 = vmatpush1.bf16.xpose.msra.mxu0 0
    %1825 = vmatprep.subr.bf16.mxu0 0
    %1826 = vmatpush1.bf16.xpose.msra.mxu0 0
    %1827 = vmatprep.subr.bf16.mxu0 0
    %1828 = vmatpush1.bf16.xpose.msra.mxu0 0
    %1829 = vmatprep.subr.bf16.mxu0 0
    %1830 = vmatpush1.bf16.xpose.msra.mxu0 0
    %1831 = vmatprep.subr.bf16.mxu0 0
    %1832 = vmatpush1.bf16.xpose.msra.mxu0 0
    %1833 = vmatprep.subr.bf16.mxu0 0
    %1834 = vmatpush1.bf16.xpose.msra.mxu0 0
    %1835 = vmatprep.subr.bf16.mxu0 0
    %1836 = vmatpush1.bf16.xpose.msra.mxu0 0
    %1837 = vmatprep.subr.bf16.mxu0 0
    %1838 = vmatpush1.bf16.xpose.msra.mxu0 0
    %1839 = vmatprep.subr.bf16.mxu0 0
    %1840 = vmatpush1.bf16.xpose.msra.mxu0 0
    %1841 = vmatprep.subr.bf16.mxu0 0
    %1842 = vmatpush1.bf16.xpose.msra.mxu0 0
    %1843 = vmatprep.subr.bf16.mxu0 0
    %1844 = vmatpush1.bf16.xpose.msra.mxu0 0
    %1845 = vmatprep.subr.bf16.mxu0 0
    %1846 = vmatpush1.bf16.xpose.msra.mxu0 0
    %1847 = vmatprep.subr.bf16.mxu0 0
    %1848 = vmatpush1.bf16.xpose.msra.mxu0 0
    %1849 = vmatprep.mubr.bf16.mxu0 0
    %1850 = vmatmul.mubr.bf16.gmra.mrb[0].mxu0 %v1812
    %v1851 = vpop.f32.mrb[0].mxu0
    %v1852 = vadd.f32 0.0, %v1851
    %v1853 = vpop.f32.mrb[0].mxu0
    %v1854 = vpop.f32.mrb[0].mxu0
    %v1855 = vpop.f32.mrb[0].mxu0
    %1856 = vdwg.mxu0
    %v1857 = vsel %vm397, %v1802, -inf
    %1858 = vmax.xlane.f32.xlu0 %v1857
    %v1859 = vpop.xlane.xlu0 %1858
    %v1860 = vsel %vm397, %v1852, -inf
    %1861 = vmax.xlane.f32.xlu0 %v1860
    %v1862 = vpop.xlane.xlu0 %1861
    %v1863 = vsub.f32 %v1802, %v1859
    %v1864 = vsub.f32 %v1852, %v1862
    %v1865 = vmul.f32 %v1863, 1.442695
    %v1866 = vpow.pop %v1865
    %v1867 = vmul.f32 %v1864, 1.442695
    %v1868 = vpow.pop %v1867
    %v1869 = vsel %vm397, %v1866, 0.0
    %1870 = vadd.xlane.f32.xlu0 %v1869
    %v1871 = vpop.xlane.xlu0 %1870
    %v1872 = vsel %vm397, %v1868, 0.0
    %1873 = vadd.xlane.f32.xlu0 %v1872
    %v1874 = vpop.xlane.xlu0 %1873
    %v1875 = vrcp.pop %v1871
    %v1876 = vrcp.pop %v1874
    %v1877 = vmul.f32 %v1866, %v1875
    %v1878 = vmul.f32 %v1868, %v1876
    %v1879 = vpack.c.bf16 %v1877, %v1877
    %v1880 = vpack.c.bf16 %v1878, %v1878
    %1881 = vrot.lane.b32.xlu0 %v1534, 88
    %v1882 = vpop.permute.xlu0 %1881
    %v1884 = vsel %vm397, %v1879, 0
    %v1887 = vsel %vm521, %v1882, 0
    %1889 = vmatprep.subr.bf16.mxu0 0
    %1890 = vmatpush1.bf16.msra.mxu0 %v1887
    %1891 = vmatprep.subr.bf16.mxu0 0
    %1892 = vmatpush1.bf16.msra.mxu0 0
    %1893 = vmatprep.subr.bf16.mxu0 0
    %1894 = vmatpush1.bf16.msra.mxu0 0
    %1895 = vmatprep.subr.bf16.mxu0 0
    %1896 = vmatpush1.bf16.msra.mxu0 0
    %1897 = vmatprep.subr.bf16.mxu0 0
    %1898 = vmatpush1.bf16.msra.mxu0 0
    %1899 = vmatprep.subr.bf16.mxu0 0
    %1900 = vmatpush1.bf16.msra.mxu0 0
    %1901 = vmatprep.subr.bf16.mxu0 0
    %1902 = vmatpush1.bf16.msra.mxu0 0
    %1903 = vmatprep.subr.bf16.mxu0 0
    %1904 = vmatpush1.bf16.msra.mxu0 0
    %1905 = vmatprep.subr.bf16.mxu0 0
    %1906 = vmatpush1.bf16.msra.mxu0 0
    %1907 = vmatprep.subr.bf16.mxu0 0
    %1908 = vmatpush1.bf16.msra.mxu0 0
    %1909 = vmatprep.subr.bf16.mxu0 0
    %1910 = vmatpush1.bf16.msra.mxu0 0
    %1911 = vmatprep.subr.bf16.mxu0 0
    %1912 = vmatpush1.bf16.msra.mxu0 0
    %1913 = vmatprep.subr.bf16.mxu0 0
    %1914 = vmatpush1.bf16.msra.mxu0 0
    %1915 = vmatprep.subr.bf16.mxu0 0
    %1916 = vmatpush1.bf16.msra.mxu0 0
    %1917 = vmatprep.subr.bf16.mxu0 0
    %1918 = vmatpush1.bf16.msra.mxu0 0
    %1919 = vmatprep.subr.bf16.mxu0 0
    %1920 = vmatpush1.bf16.msra.mxu0 0
    %1921 = vmatprep.mubr.bf16.mxu0 0
    %1922 = vmatmul.mubr.bf16.gmra.mrb[0].mxu0 %v1884
    %v1923 = vpop.f32.mrb[0].mxu0
    %v1924 = vadd.f32 0.0, %v1923
    %v1925 = vpop.f32.mrb[0].mxu0
    %v1926 = vpop.f32.mrb[0].mxu0
    %v1927 = vpop.f32.mrb[0].mxu0
    %1928 = vdwg.mxu0
    %1929 = vrot.lane.b32.xlu0 %v1535, 88
    %v1930 = vpop.permute.xlu0 %1929
    %v1932 = vsel %vm397, %v1880, 0
    %v1935 = vsel %vm521, %v1930, 0
    %1937 = vmatprep.subr.bf16.mxu0 0
    %1938 = vmatpush1.bf16.msra.mxu0 %v1935
    %1939 = vmatprep.subr.bf16.mxu0 0
    %1940 = vmatpush1.bf16.msra.mxu0 0
    %1941 = vmatprep.subr.bf16.mxu0 0
    %1942 = vmatpush1.bf16.msra.mxu0 0
    %1943 = vmatprep.subr.bf16.mxu0 0
    %1944 = vmatpush1.bf16.msra.mxu0 0
    %1945 = vmatprep.subr.bf16.mxu0 0
    %1946 = vmatpush1.bf16.msra.mxu0 0
    %1947 = vmatprep.subr.bf16.mxu0 0
    %1948 = vmatpush1.bf16.msra.mxu0 0
    %1949 = vmatprep.subr.bf16.mxu0 0
    %1950 = vmatpush1.bf16.msra.mxu0 0
    %1951 = vmatprep.subr.bf16.mxu0 0
    %1952 = vmatpush1.bf16.msra.mxu0 0
    %1953 = vmatprep.subr.bf16.mxu0 0
    %1954 = vmatpush1.bf16.msra.mxu0 0
    %1955 = vmatprep.subr.bf16.mxu0 0
    %1956 = vmatpush1.bf16.msra.mxu0 0
    %1957 = vmatprep.subr.bf16.mxu0 0
    %1958 = vmatpush1.bf16.msra.mxu0 0
    %1959 = vmatprep.subr.bf16.mxu0 0
    %1960 = vmatpush1.bf16.msra.mxu0 0
    %1961 = vmatprep.subr.bf16.mxu0 0
    %1962 = vmatpush1.bf16.msra.mxu0 0
    %1963 = vmatprep.subr.bf16.mxu0 0
    %1964 = vmatpush1.bf16.msra.mxu0 0
    %1965 = vmatprep.subr.bf16.mxu0 0
    %1966 = vmatpush1.bf16.msra.mxu0 0
    %1967 = vmatprep.subr.bf16.mxu0 0
    %1968 = vmatpush1.bf16.msra.mxu0 0
    %1969 = vmatprep.mubr.bf16.mxu0 0
    %1970 = vmatmul.mubr.bf16.gmra.mrb[0].mxu0 %v1932
    %v1971 = vpop.f32.mrb[0].mxu0
    %v1972 = vadd.f32 0.0, %v1971
    %v1973 = vpop.f32.mrb[0].mxu0
    %v1974 = vpop.f32.mrb[0].mxu0
    %v1975 = vpop.f32.mrb[0].mxu0
    %1976 = vdwg.mxu0
    %v1977 = vpack.c.bf16 %v1924, %v1924
    %v1978 = vpack.c.bf16 %v1972, %v1972
    %v1981 = vunpack.c.l.b16 %v1977
    %v1982 = vunpack.c.l.b16 %v1978
    %v1983 = vpack.c.b16 %v1982, %v1981
    %1984 = vrot.lane.b32.xlu0 %v1983, 8
    %v1985 = vpop.permute.xlu0 %1984
    %1987 = vst.msk [vmem:[#allocation2] sm:$0xff] %vm852, %v1985
    %1988 = vrot.lane.b32.xlu0 %v1461, 112
    %v1989 = vpop.permute.xlu0 %1988
    %1990 = vrot.lane.b32.xlu0 %v1534, 112
    %v1991 = vpop.permute.xlu0 %1990
    %v1993 = vsel %vm397, %v1989, 0
    %v1996 = vsel %vm397, %v1991, 0
    %1998 = vmatprep.subr.bf16.mxu0 0
    %1999 = vmatpush1.bf16.xpose.msra.mxu0 %v1996
    %2000 = vmatprep.subr.bf16.mxu0 0
    %2001 = vmatpush1.bf16.xpose.msra.mxu0 0
    %2002 = vmatprep.subr.bf16.mxu0 0
    %2003 = vmatpush1.bf16.xpose.msra.mxu0 0
    %2004 = vmatprep.subr.bf16.mxu0 0
    %2005 = vmatpush1.bf16.xpose.msra.mxu0 0
    %2006 = vmatprep.subr.bf16.mxu0 0
    %2007 = vmatpush1.bf16.xpose.msra.mxu0 0
    %2008 = vmatprep.subr.bf16.mxu0 0
    %2009 = vmatpush1.bf16.xpose.msra.mxu0 0
    %2010 = vmatprep.subr.bf16.mxu0 0
    %2011 = vmatpush1.bf16.xpose.msra.mxu0 0
    %2012 = vmatprep.subr.bf16.mxu0 0
    %2013 = vmatpush1.bf16.xpose.msra.mxu0 0
    %2014 = vmatprep.subr.bf16.mxu0 0
    %2015 = vmatpush1.bf16.xpose.msra.mxu0 0
    %2016 = vmatprep.subr.bf16.mxu0 0
    %2017 = vmatpush1.bf16.xpose.msra.mxu0 0
    %2018 = vmatprep.subr.bf16.mxu0 0
    %2019 = vmatpush1.bf16.xpose.msra.mxu0 0
    %2020 = vmatprep.subr.bf16.mxu0 0
    %2021 = vmatpush1.bf16.xpose.msra.mxu0 0
    %2022 = vmatprep.subr.bf16.mxu0 0
    %2023 = vmatpush1.bf16.xpose.msra.mxu0 0
    %2024 = vmatprep.subr.bf16.mxu0 0
    %2025 = vmatpush1.bf16.xpose.msra.mxu0 0
    %2026 = vmatprep.subr.bf16.mxu0 0
    %2027 = vmatpush1.bf16.xpose.msra.mxu0 0
    %2028 = vmatprep.subr.bf16.mxu0 0
    %2029 = vmatpush1.bf16.xpose.msra.mxu0 0
    %2030 = vmatprep.mubr.bf16.mxu0 0
    %2031 = vmatmul.mubr.bf16.gmra.mrb[0].mxu0 %v1993
    %v2032 = vpop.f32.mrb[0].mxu0
    %v2033 = vadd.f32 0.0, %v2032
    %v2034 = vpop.f32.mrb[0].mxu0
    %v2035 = vpop.f32.mrb[0].mxu0
    %v2036 = vpop.f32.mrb[0].mxu0
    %2037 = vdwg.mxu0
    %2038 = vrot.lane.b32.xlu0 %v1462, 112
    %v2039 = vpop.permute.xlu0 %2038
    %2040 = vrot.lane.b32.xlu0 %v1535, 112
    %v2041 = vpop.permute.xlu0 %2040
    %v2043 = vsel %vm397, %v2039, 0
    %v2046 = vsel %vm397, %v2041, 0
    %2048 = vmatprep.subr.bf16.mxu0 0
    %2049 = vmatpush1.bf16.xpose.msra.mxu0 %v2046
    %2050 = vmatprep.subr.bf16.mxu0 0
    %2051 = vmatpush1.bf16.xpose.msra.mxu0 0
    %2052 = vmatprep.subr.bf16.mxu0 0
    %2053 = vmatpush1.bf16.xpose.msra.mxu0 0
    %2054 = vmatprep.subr.bf16.mxu0 0
    %2055 = vmatpush1.bf16.xpose.msra.mxu0 0
    %2056 = vmatprep.subr.bf16.mxu0 0
    %2057 = vmatpush1.bf16.xpose.msra.mxu0 0
    %2058 = vmatprep.subr.bf16.mxu0 0
    %2059 = vmatpush1.bf16.xpose.msra.mxu0 0
    %2060 = vmatprep.subr.bf16.mxu0 0
    %2061 = vmatpush1.bf16.xpose.msra.mxu0 0
    %2062 = vmatprep.subr.bf16.mxu0 0
    %2063 = vmatpush1.bf16.xpose.msra.mxu0 0
    %2064 = vmatprep.subr.bf16.mxu0 0
    %2065 = vmatpush1.bf16.xpose.msra.mxu0 0
    %2066 = vmatprep.subr.bf16.mxu0 0
    %2067 = vmatpush1.bf16.xpose.msra.mxu0 0
    %2068 = vmatprep.subr.bf16.mxu0 0
    %2069 = vmatpush1.bf16.xpose.msra.mxu0 0
    %2070 = vmatprep.subr.bf16.mxu0 0
    %2071 = vmatpush1.bf16.xpose.msra.mxu0 0
    %2072 = vmatprep.subr.bf16.mxu0 0
    %2073 = vmatpush1.bf16.xpose.msra.mxu0 0
    %2074 = vmatprep.subr.bf16.mxu0 0
    %2075 = vmatpush1.bf16.xpose.msra.mxu0 0
    %2076 = vmatprep.subr.bf16.mxu0 0
    %2077 = vmatpush1.bf16.xpose.msra.mxu0 0
    %2078 = vmatprep.subr.bf16.mxu0 0
    %2079 = vmatpush1.bf16.xpose.msra.mxu0 0
    %2080 = vmatprep.mubr.bf16.mxu0 0
    %2081 = vmatmul.mubr.bf16.gmra.mrb[0].mxu0 %v2043
    %v2082 = vpop.f32.mrb[0].mxu0
    %v2083 = vadd.f32 0.0, %v2082
    %v2084 = vpop.f32.mrb[0].mxu0
    %v2085 = vpop.f32.mrb[0].mxu0
    %v2086 = vpop.f32.mrb[0].mxu0
    %2087 = vdwg.mxu0
    %v2088 = vsel %vm397, %v2033, -inf
    %2089 = vmax.xlane.f32.xlu0 %v2088
    %v2090 = vpop.xlane.xlu0 %2089
    %v2091 = vsel %vm397, %v2083, -inf
    %2092 = vmax.xlane.f32.xlu0 %v2091
    %v2093 = vpop.xlane.xlu0 %2092
    %v2094 = vsub.f32 %v2033, %v2090
    %v2095 = vsub.f32 %v2083, %v2093
    %v2096 = vmul.f32 %v2094, 1.442695
    %v2097 = vpow.pop %v2096
    %v2098 = vmul.f32 %v2095, 1.442695
    %v2099 = vpow.pop %v2098
    %v2100 = vsel %vm397, %v2097, 0.0
    %2101 = vadd.xlane.f32.xlu0 %v2100
    %v2102 = vpop.xlane.xlu0 %2101
    %v2103 = vsel %vm397, %v2099, 0.0
    %2104 = vadd.xlane.f32.xlu0 %v2103
    %v2105 = vpop.xlane.xlu0 %2104
    %v2106 = vrcp.pop %v2102
    %v2107 = vrcp.pop %v2105
    %v2108 = vmul.f32 %v2097, %v2106
    %v2109 = vmul.f32 %v2099, %v2107
    %v2110 = vpack.c.bf16 %v2108, %v2108
    %v2111 = vpack.c.bf16 %v2109, %v2109
    %2112 = vrot.lane.b32.xlu0 %v1534, 80
    %v2113 = vpop.permute.xlu0 %2112
    %v2115 = vsel %vm397, %v2110, 0
    %v2118 = vsel %vm521, %v2113, 0
    %2120 = vmatprep.subr.bf16.mxu0 0
    %2121 = vmatpush1.bf16.msra.mxu0 %v2118
    %2122 = vmatprep.subr.bf16.mxu0 0
    %2123 = vmatpush1.bf16.msra.mxu0 0
    %2124 = vmatprep.subr.bf16.mxu0 0
    %2125 = vmatpush1.bf16.msra.mxu0 0
    %2126 = vmatprep.subr.bf16.mxu0 0
    %2127 = vmatpush1.bf16.msra.mxu0 0
    %2128 = vmatprep.subr.bf16.mxu0 0
    %2129 = vmatpush1.bf16.msra.mxu0 0
    %2130 = vmatprep.subr.bf16.mxu0 0
    %2131 = vmatpush1.bf16.msra.mxu0 0
    %2132 = vmatprep.subr.bf16.mxu0 0
    %2133 = vmatpush1.bf16.msra.mxu0 0
    %2134 = vmatprep.subr.bf16.mxu0 0
    %2135 = vmatpush1.bf16.msra.mxu0 0
    %2136 = vmatprep.subr.bf16.mxu0 0
    %2137 = vmatpush1.bf16.msra.mxu0 0
    %2138 = vmatprep.subr.bf16.mxu0 0
    %2139 = vmatpush1.bf16.msra.mxu0 0
    %2140 = vmatprep.subr.bf16.mxu0 0
    %2141 = vmatpush1.bf16.msra.mxu0 0
    %2142 = vmatprep.subr.bf16.mxu0 0
    %2143 = vmatpush1.bf16.msra.mxu0 0
    %2144 = vmatprep.subr.bf16.mxu0 0
    %2145 = vmatpush1.bf16.msra.mxu0 0
    %2146 = vmatprep.subr.bf16.mxu0 0
    %2147 = vmatpush1.bf16.msra.mxu0 0
    %2148 = vmatprep.subr.bf16.mxu0 0
    %2149 = vmatpush1.bf16.msra.mxu0 0
    %2150 = vmatprep.subr.bf16.mxu0 0
    %2151 = vmatpush1.bf16.msra.mxu0 0
    %2152 = vmatprep.mubr.bf16.mxu0 0
    %2153 = vmatmul.mubr.bf16.gmra.mrb[0].mxu0 %v2115
    %v2154 = vpop.f32.mrb[0].mxu0
    %v2155 = vadd.f32 0.0, %v2154
    %v2156 = vpop.f32.mrb[0].mxu0
    %v2157 = vpop.f32.mrb[0].mxu0
    %v2158 = vpop.f32.mrb[0].mxu0
    %2159 = vdwg.mxu0
    %2160 = vrot.lane.b32.xlu0 %v1535, 80
    %v2161 = vpop.permute.xlu0 %2160
    %v2163 = vsel %vm397, %v2111, 0
    %v2166 = vsel %vm521, %v2161, 0
    %2168 = vmatprep.subr.bf16.mxu0 0
    %2169 = vmatpush1.bf16.msra.mxu0 %v2166
    %2170 = vmatprep.subr.bf16.mxu0 0
    %2171 = vmatpush1.bf16.msra.mxu0 0
    %2172 = vmatprep.subr.bf16.mxu0 0
    %2173 = vmatpush1.bf16.msra.mxu0 0
    %2174 = vmatprep.subr.bf16.mxu0 0
    %2175 = vmatpush1.bf16.msra.mxu0 0
    %2176 = vmatprep.subr.bf16.mxu0 0
    %2177 = vmatpush1.bf16.msra.mxu0 0
    %2178 = vmatprep.subr.bf16.mxu0 0
    %2179 = vmatpush1.bf16.msra.mxu0 0
    %2180 = vmatprep.subr.bf16.mxu0 0
    %2181 = vmatpush1.bf16.msra.mxu0 0
    %2182 = vmatprep.subr.bf16.mxu0 0
    %2183 = vmatpush1.bf16.msra.mxu0 0
    %2184 = vmatprep.subr.bf16.mxu0 0
    %2185 = vmatpush1.bf16.msra.mxu0 0
    %2186 = vmatprep.subr.bf16.mxu0 0
    %2187 = vmatpush1.bf16.msra.mxu0 0
    %2188 = vmatprep.subr.bf16.mxu0 0
    %2189 = vmatpush1.bf16.msra.mxu0 0
    %2190 = vmatprep.subr.bf16.mxu0 0
    %2191 = vmatpush1.bf16.msra.mxu0 0
    %2192 = vmatprep.subr.bf16.mxu0 0
    %2193 = vmatpush1.bf16.msra.mxu0 0
    %2194 = vmatprep.subr.bf16.mxu0 0
    %2195 = vmatpush1.bf16.msra.mxu0 0
    %2196 = vmatprep.subr.bf16.mxu0 0
    %2197 = vmatpush1.bf16.msra.mxu0 0
    %2198 = vmatprep.subr.bf16.mxu0 0
    %2199 = vmatpush1.bf16.msra.mxu0 0
    %2200 = vmatprep.mubr.bf16.mxu0 0
    %2201 = vmatmul.mubr.bf16.gmra.mrb[0].mxu0 %v2163
    %v2202 = vpop.f32.mrb[0].mxu0
    %v2203 = vadd.f32 0.0, %v2202
    %v2204 = vpop.f32.mrb[0].mxu0
    %v2205 = vpop.f32.mrb[0].mxu0
    %v2206 = vpop.f32.mrb[0].mxu0
    %2207 = vdwg.mxu0
    %v2208 = vpack.c.bf16 %v2155, %v2155
    %v2209 = vpack.c.bf16 %v2203, %v2203
    %v2212 = vunpack.c.l.b16 %v2208
    %v2213 = vunpack.c.l.b16 %v2209
    %v2214 = vpack.c.b16 %v2213, %v2212
    %2215 = vrot.lane.b32.xlu0 %v2214, 16
    %v2216 = vpop.permute.xlu0 %2215
    %2218 = vst.msk [vmem:[#allocation2] sm:$0xff] %vm1084, %v2216
    %2219 = vrot.lane.b32.xlu0 %v1461, 104
    %v2220 = vpop.permute.xlu0 %2219
    %2221 = vrot.lane.b32.xlu0 %v1534, 104
    %v2222 = vpop.permute.xlu0 %2221
    %v2224 = vsel %vm397, %v2220, 0
    %v2227 = vsel %vm397, %v2222, 0
    %2229 = vmatprep.subr.bf16.mxu0 0
    %2230 = vmatpush1.bf16.xpose.msra.mxu0 %v2227
    %2231 = vmatprep.subr.bf16.mxu0 0
    %2232 = vmatpush1.bf16.xpose.msra.mxu0 0
    %2233 = vmatprep.subr.bf16.mxu0 0
    %2234 = vmatpush1.bf16.xpose.msra.mxu0 0
    %2235 = vmatprep.subr.bf16.mxu0 0
    %2236 = vmatpush1.bf16.xpose.msra.mxu0 0
    %2237 = vmatprep.subr.bf16.mxu0 0
    %2238 = vmatpush1.bf16.xpose.msra.mxu0 0
    %2239 = vmatprep.subr.bf16.mxu0 0
    %2240 = vmatpush1.bf16.xpose.msra.mxu0 0
    %2241 = vmatprep.subr.bf16.mxu0 0
    %2242 = vmatpush1.bf16.xpose.msra.mxu0 0
    %2243 = vmatprep.subr.bf16.mxu0 0
    %2244 = vmatpush1.bf16.xpose.msra.mxu0 0
    %2245 = vmatprep.subr.bf16.mxu0 0
    %2246 = vmatpush1.bf16.xpose.msra.mxu0 0
    %2247 = vmatprep.subr.bf16.mxu0 0
    %2248 = vmatpush1.bf16.xpose.msra.mxu0 0
    %2249 = vmatprep.subr.bf16.mxu0 0
    %2250 = vmatpush1.bf16.xpose.msra.mxu0 0
    %2251 = vmatprep.subr.bf16.mxu0 0
    %2252 = vmatpush1.bf16.xpose.msra.mxu0 0
    %2253 = vmatprep.subr.bf16.mxu0 0
    %2254 = vmatpush1.bf16.xpose.msra.mxu0 0
    %2255 = vmatprep.subr.bf16.mxu0 0
    %2256 = vmatpush1.bf16.xpose.msra.mxu0 0
    %2257 = vmatprep.subr.bf16.mxu0 0
    %2258 = vmatpush1.bf16.xpose.msra.mxu0 0
    %2259 = vmatprep.subr.bf16.mxu0 0
    %2260 = vmatpush1.bf16.xpose.msra.mxu0 0
    %2261 = vmatprep.mubr.bf16.mxu0 0
    %2262 = vmatmul.mubr.bf16.gmra.mrb[0].mxu0 %v2224
    %v2263 = vpop.f32.mrb[0].mxu0
    %v2264 = vadd.f32 0.0, %v2263
    %v2265 = vpop.f32.mrb[0].mxu0
    %v2266 = vpop.f32.mrb[0].mxu0
    %v2267 = vpop.f32.mrb[0].mxu0
    %2268 = vdwg.mxu0
    %2269 = vrot.lane.b32.xlu0 %v1462, 104
    %v2270 = vpop.permute.xlu0 %2269
    %2271 = vrot.lane.b32.xlu0 %v1535, 104
    %v2272 = vpop.permute.xlu0 %2271
    %v2274 = vsel %vm397, %v2270, 0
    %v2277 = vsel %vm397, %v2272, 0
    %2279 = vmatprep.subr.bf16.mxu0 0
    %2280 = vmatpush1.bf16.xpose.msra.mxu0 %v2277
    %2281 = vmatprep.subr.bf16.mxu0 0
    %2282 = vmatpush1.bf16.xpose.msra.mxu0 0
    %2283 = vmatprep.subr.bf16.mxu0 0
    %2284 = vmatpush1.bf16.xpose.msra.mxu0 0
    %2285 = vmatprep.subr.bf16.mxu0 0
    %2286 = vmatpush1.bf16.xpose.msra.mxu0 0
    %2287 = vmatprep.subr.bf16.mxu0 0
    %2288 = vmatpush1.bf16.xpose.msra.mxu0 0
    %2289 = vmatprep.subr.bf16.mxu0 0
    %2290 = vmatpush1.bf16.xpose.msra.mxu0 0
    %2291 = vmatprep.subr.bf16.mxu0 0
    %2292 = vmatpush1.bf16.xpose.msra.mxu0 0
    %2293 = vmatprep.subr.bf16.mxu0 0
    %2294 = vmatpush1.bf16.xpose.msra.mxu0 0
    %2295 = vmatprep.subr.bf16.mxu0 0
    %2296 = vmatpush1.bf16.xpose.msra.mxu0 0
    %2297 = vmatprep.subr.bf16.mxu0 0
    %2298 = vmatpush1.bf16.xpose.msra.mxu0 0
    %2299 = vmatprep.subr.bf16.mxu0 0
    %2300 = vmatpush1.bf16.xpose.msra.mxu0 0
    %2301 = vmatprep.subr.bf16.mxu0 0
    %2302 = vmatpush1.bf16.xpose.msra.mxu0 0
    %2303 = vmatprep.subr.bf16.mxu0 0
    %2304 = vmatpush1.bf16.xpose.msra.mxu0 0
    %2305 = vmatprep.subr.bf16.mxu0 0
    %2306 = vmatpush1.bf16.xpose.msra.mxu0 0
    %2307 = vmatprep.subr.bf16.mxu0 0
    %2308 = vmatpush1.bf16.xpose.msra.mxu0 0
    %2309 = vmatprep.subr.bf16.mxu0 0
    %2310 = vmatpush1.bf16.xpose.msra.mxu0 0
    %2311 = vmatprep.mubr.bf16.mxu0 0
    %2312 = vmatmul.mubr.bf16.gmra.mrb[0].mxu0 %v2274
    %v2313 = vpop.f32.mrb[0].mxu0
    %v2314 = vadd.f32 0.0, %v2313
    %v2315 = vpop.f32.mrb[0].mxu0
    %v2316 = vpop.f32.mrb[0].mxu0
    %v2317 = vpop.f32.mrb[0].mxu0
    %2318 = vdwg.mxu0
    %v2319 = vsel %vm397, %v2264, -inf
    %2320 = vmax.xlane.f32.xlu0 %v2319
    %v2321 = vpop.xlane.xlu0 %2320
    %v2322 = vsel %vm397, %v2314, -inf
    %2323 = vmax.xlane.f32.xlu0 %v2322
    %v2324 = vpop.xlane.xlu0 %2323
    %v2325 = vsub.f32 %v2264, %v2321
    %v2326 = vsub.f32 %v2314, %v2324
    %v2327 = vmul.f32 %v2325, 1.442695
    %v2328 = vpow.pop %v2327
    %v2329 = vmul.f32 %v2326, 1.442695
    %v2330 = vpow.pop %v2329
    %v2331 = vsel %vm397, %v2328, 0.0
    %2332 = vadd.xlane.f32.xlu0 %v2331
    %v2333 = vpop.xlane.xlu0 %2332
    %v2334 = vsel %vm397, %v2330, 0.0
    %2335 = vadd.xlane.f32.xlu0 %v2334
    %v2336 = vpop.xlane.xlu0 %2335
    %v2337 = vrcp.pop %v2333
    %v2338 = vrcp.pop %v2336
    %v2339 = vmul.f32 %v2328, %v2337
    %v2340 = vmul.f32 %v2330, %v2338
    %v2341 = vpack.c.bf16 %v2339, %v2339
    %v2342 = vpack.c.bf16 %v2340, %v2340
    %2343 = vrot.lane.b32.xlu0 %v1534, 72
    %v2344 = vpop.permute.xlu0 %2343
    %v2346 = vsel %vm397, %v2341, 0
    %v2349 = vsel %vm521, %v2344, 0
    %2351 = vmatprep.subr.bf16.mxu0 0
    %2352 = vmatpush1.bf16.msra.mxu0 %v2349
    %2353 = vmatprep.subr.bf16.mxu0 0
    %2354 = vmatpush1.bf16.msra.mxu0 0
    %2355 = vmatprep.subr.bf16.mxu0 0
    %2356 = vmatpush1.bf16.msra.mxu0 0
    %2357 = vmatprep.subr.bf16.mxu0 0
    %2358 = vmatpush1.bf16.msra.mxu0 0
    %2359 = vmatprep.subr.bf16.mxu0 0
    %2360 = vmatpush1.bf16.msra.mxu0 0
    %2361 = vmatprep.subr.bf16.mxu0 0
    %2362 = vmatpush1.bf16.msra.mxu0 0
    %2363 = vmatprep.subr.bf16.mxu0 0
    %2364 = vmatpush1.bf16.msra.mxu0 0
    %2365 = vmatprep.subr.bf16.mxu0 0
    %2366 = vmatpush1.bf16.msra.mxu0 0
    %2367 = vmatprep.subr.bf16.mxu0 0
    %2368 = vmatpush1.bf16.msra.mxu0 0
    %2369 = vmatprep.subr.bf16.mxu0 0
    %2370 = vmatpush1.bf16.msra.mxu0 0
    %2371 = vmatprep.subr.bf16.mxu0 0
    %2372 = vmatpush1.bf16.msra.mxu0 0
    %2373 = vmatprep.subr.bf16.mxu0 0
    %2374 = vmatpush1.bf16.msra.mxu0 0
    %2375 = vmatprep.subr.bf16.mxu0 0
    %2376 = vmatpush1.bf16.msra.mxu0 0
    %2377 = vmatprep.subr.bf16.mxu0 0
    %2378 = vmatpush1.bf16.msra.mxu0 0
    %2379 = vmatprep.subr.bf16.mxu0 0
    %2380 = vmatpush1.bf16.msra.mxu0 0
    %2381 = vmatprep.subr.bf16.mxu0 0
    %2382 = vmatpush1.bf16.msra.mxu0 0
    %2383 = vmatprep.mubr.bf16.mxu0 0
    %2384 = vmatmul.mubr.bf16.gmra.mrb[0].mxu0 %v2346
    %v2385 = vpop.f32.mrb[0].mxu0
    %v2386 = vadd.f32 0.0, %v2385
    %v2387 = vpop.f32.mrb[0].mxu0
    %v2388 = vpop.f32.mrb[0].mxu0
    %v2389 = vpop.f32.mrb[0].mxu0
    %2390 = vdwg.mxu0
    %2391 = vrot.lane.b32.xlu0 %v1535, 72
    %v2392 = vpop.permute.xlu0 %2391
    %v2394 = vsel %vm397, %v2342, 0
    %v2397 = vsel %vm521, %v2392, 0
    %2399 = vmatprep.subr.bf16.mxu0 0
    %2400 = vmatpush1.bf16.msra.mxu0 %v2397
    %2401 = vmatprep.subr.bf16.mxu0 0
    %2402 = vmatpush1.bf16.msra.mxu0 0
    %2403 = vmatprep.subr.bf16.mxu0 0
    %2404 = vmatpush1.bf16.msra.mxu0 0
    %2405 = vmatprep.subr.bf16.mxu0 0
    %2406 = vmatpush1.bf16.msra.mxu0 0
    %2407 = vmatprep.subr.bf16.mxu0 0
    %2408 = vmatpush1.bf16.msra.mxu0 0
    %2409 = vmatprep.subr.bf16.mxu0 0
    %2410 = vmatpush1.bf16.msra.mxu0 0
    %2411 = vmatprep.subr.bf16.mxu0 0
    %2412 = vmatpush1.bf16.msra.mxu0 0
    %2413 = vmatprep.subr.bf16.mxu0 0
    %2414 = vmatpush1.bf16.msra.mxu0 0
    %2415 = vmatprep.subr.bf16.mxu0 0
    %2416 = vmatpush1.bf16.msra.mxu0 0
    %2417 = vmatprep.subr.bf16.mxu0 0
    %2418 = vmatpush1.bf16.msra.mxu0 0
    %2419 = vmatprep.subr.bf16.mxu0 0
    %2420 = vmatpush1.bf16.msra.mxu0 0
    %2421 = vmatprep.subr.bf16.mxu0 0
    %2422 = vmatpush1.bf16.msra.mxu0 0
    %2423 = vmatprep.subr.bf16.mxu0 0
    %2424 = vmatpush1.bf16.msra.mxu0 0
    %2425 = vmatprep.subr.bf16.mxu0 0
    %2426 = vmatpush1.bf16.msra.mxu0 0
    %2427 = vmatprep.subr.bf16.mxu0 0
    %2428 = vmatpush1.bf16.msra.mxu0 0
    %2429 = vmatprep.subr.bf16.mxu0 0
    %2430 = vmatpush1.bf16.msra.mxu0 0
    %2431 = vmatprep.mubr.bf16.mxu0 0
    %2432 = vmatmul.mubr.bf16.gmra.mrb[0].mxu0 %v2394
    %v2433 = vpop.f32.mrb[0].mxu0
    %v2434 = vadd.f32 0.0, %v2433
    %v2435 = vpop.f32.mrb[0].mxu0
    %v2436 = vpop.f32.mrb[0].mxu0
    %v2437 = vpop.f32.mrb[0].mxu0
    %2438 = vdwg.mxu0
    %v2439 = vpack.c.bf16 %v2386, %v2386
    %v2440 = vpack.c.bf16 %v2434, %v2434
    %v2443 = vunpack.c.l.b16 %v2439
    %v2444 = vunpack.c.l.b16 %v2440
    %v2445 = vpack.c.b16 %v2444, %v2443
    %2446 = vrot.lane.b32.xlu0 %v2445, 24
    %v2447 = vpop.permute.xlu0 %2446
    %2449 = vst.msk [vmem:[#allocation2] sm:$0xff] %vm1316, %v2447
    %v2450 = vld [vmem:[#allocation2] sm:$0xff]
    %v2451 = vld [vmem:[#allocation20] sm:$0xf]
    %v2452 = vld [vmem:[#allocation20 + $0x4] sm:$0xf]
    %v2453 = vld [vmem:[#allocation20 + $0x8] sm:$0xf]
    %v2454 = vld [vmem:[#allocation20 + $0xc] sm:$0xf]
    %v2455 = vld [vmem:[#allocation21] sm:$0x1]
    %v2457 = vlaneseq
    %v2458 = vshrl.u32 %v2457, 7
    %v2459 = vsub.s32 0, %v2458
    %v2460 = vrot.slane %v2455, %v2459
    %v2466 = vunpack.c.l.b16 %v2451
    %v2467 = vunpack.c.l.b16 %v2452
    %v2468 = vunpack.c.l.b16 %v2453
    %v2469 = vunpack.c.l.b16 %v2454
    %v2470 = vpack.c.b16 %v2467, %v2466
    %v2471 = vpack.c.b16 %v2469, %v2468
    %v2475 = vsel %vm344, %v2450, 0
    %2477 = vmatprep.subr.bf16.mxu0 0
    %2478 = vmatpush1.bf16.msra.mxu0 %v2470
    %2479 = vmatprep.subr.bf16.mxu0 0
    %2480 = vmatpush1.bf16.msra.mxu0 %v2471
    %2481 = vmatprep.subr.bf16.mxu0 0
    %2482 = vmatpush1.bf16.msra.mxu0 0
    %2483 = vmatprep.subr.bf16.mxu0 0
    %2484 = vmatpush1.bf16.msra.mxu0 0
    %2485 = vmatprep.subr.bf16.mxu0 0
    %2486 = vmatpush1.bf16.msra.mxu0 0
    %2487 = vmatprep.subr.bf16.mxu0 0
    %2488 = vmatpush1.bf16.msra.mxu0 0
    %2489 = vmatprep.subr.bf16.mxu0 0
    %2490 = vmatpush1.bf16.msra.mxu0 0
    %2491 = vmatprep.subr.bf16.mxu0 0
    %2492 = vmatpush1.bf16.msra.mxu0 0
    %2493 = vmatprep.subr.bf16.mxu0 0
    %2494 = vmatpush1.bf16.msra.mxu0 0
    %2495 = vmatprep.subr.bf16.mxu0 0
    %2496 = vmatpush1.bf16.msra.mxu0 0
    %2497 = vmatprep.subr.bf16.mxu0 0
    %2498 = vmatpush1.bf16.msra.mxu0 0
    %2499 = vmatprep.subr.bf16.mxu0 0
    %2500 = vmatpush1.bf16.msra.mxu0 0
    %2501 = vmatprep.subr.bf16.mxu0 0
    %2502 = vmatpush1.bf16.msra.mxu0 0
    %2503 = vmatprep.subr.bf16.mxu0 0
    %2504 = vmatpush1.bf16.msra.mxu0 0
    %2505 = vmatprep.subr.bf16.mxu0 0
    %2506 = vmatpush1.bf16.msra.mxu0 0
    %2507 = vmatprep.subr.bf16.mxu0 0
    %2508 = vmatpush1.bf16.msra.mxu0 0
    %2509 = vmatprep.mubr.bf16.mxu0 0
    %2510 = vmatmul.mubr.bf16.gmra.mrb[0].mxu0 %v2475
    %v2511 = vpop.f32.mrb[0].mxu0
    %v2512 = vadd.f32 %v2460, %v2511
    %v2513 = vpop.f32.mrb[0].mxu0
    %v2514 = vpop.f32.mrb[0].mxu0
    %v2515 = vadd.f32 %v2460, %v2514
    %v2516 = vpop.f32.mrb[0].mxu0
    %2517 = vdwg.mxu0
    %v2518 = vadd.f32 %v1386, %v2512
    %v2519 = vadd.f32 %v1387, %v2515
    %v2520 = vld [vmem:[#allocation29] sm:$0x1]
    %v2521 = vld [vmem:[#allocation30] sm:$0x1]
    %v2522 = vsel %vm344, %v2518, 0.0
    %2523 = vadd.xlane.f32.xlu0 %v2522
    %v2524 = vpop.xlane.xlu0 %2523
    %v2525 = vsel %vm344, %v2519, 0.0
    %2526 = vadd.xlane.f32.xlu0 %v2525
    %v2527 = vpop.xlane.xlu0 %2526
    %v2528 = vrcp.pop 32.0
    %v2529 = vmul.f32 %v2524, %v2528
    %v2530 = vmul.f32 %v2527, %v2528
    %v2531 = vsub.f32 %v2518, %v2529
    %v2532 = vsub.f32 %v2519, %v2530
    %v2533 = vmul.f32 %v2531, %v2531
    %v2534 = vmul.f32 %v2532, %v2532
    %v2535 = vsel %vm344, %v2533, 0.0
    %2536 = vadd.xlane.f32.xlu0 %v2535
    %v2537 = vpop.xlane.xlu0 %2536
    %v2538 = vsel %vm344, %v2534, 0.0
    %2539 = vadd.xlane.f32.xlu0 %v2538
    %v2540 = vpop.xlane.xlu0 %2539
    %v2541 = vmul.f32 %v2537, %v2528
    %v2542 = vmul.f32 %v2540, %v2528
    %v2543 = vadd.f32 %v2541, 1e-05
    %v2544 = vadd.f32 %v2542, 1e-05
    %v2545 = vrsqrt.pop %v2543
    %v2546 = vrsqrt.pop %v2544
    %v2547 = vmul.f32 %v2531, %v2545
    %v2548 = vmul.f32 %v2532, %v2546
    %v2550 = vlaneseq
    %v2551 = vshrl.u32 %v2550, 7
    %v2552 = vsub.s32 0, %v2551
    %v2553 = vrot.slane %v2520, %v2552
    %v2555 = vmul.f32 %v2547, %v2553
    %v2556 = vmul.f32 %v2548, %v2553
    %v2558 = vlaneseq
    %v2559 = vshrl.u32 %v2558, 7
    %v2560 = vsub.s32 0, %v2559
    %v2561 = vrot.slane %v2521, %v2560
    %v2563 = vadd.f32 %v2555, %v2561
    %v2564 = vadd.f32 %v2556, %v2561
    %v2565 = vpack.c.bf16 %v2564, %v2563
    %v2566 = vld [vmem:[#allocation23] sm:$0xf]
    %v2567 = vld [vmem:[#allocation23 + $0x4] sm:$0xf]
    %v2568 = vld [vmem:[#allocation23 + $0x8] sm:$0xf]
    %v2569 = vld [vmem:[#allocation23 + $0xc] sm:$0xf]
    %v2570 = vld [vmem:[#allocation24] sm:$0x1]
    %v2572 = vlaneseq
    %v2573 = vshrl.u32 %v2572, 7
    %v2574 = vsub.s32 0, %v2573
    %v2575 = vrot.slane %v2570, %v2574
    %v2581 = vunpack.c.l.b16 %v2566
    %v2582 = vunpack.c.l.b16 %v2567
    %v2583 = vunpack.c.l.b16 %v2568
    %v2584 = vunpack.c.l.b16 %v2569
    %v2585 = vpack.c.b16 %v2582, %v2581
    %v2586 = vpack.c.b16 %v2584, %v2583
    %v2590 = vsel %vm344, %v2565, 0
    %2592 = vmatprep.subr.bf16.mxu0 0
    %2593 = vmatpush1.bf16.msra.mxu0 %v2585
    %2594 = vmatprep.subr.bf16.mxu0 0
    %2595 = vmatpush1.bf16.msra.mxu0 %v2586
    %2596 = vmatprep.subr.bf16.mxu0 0
    %2597 = vmatpush1.bf16.msra.mxu0 0
    %2598 = vmatprep.subr.bf16.mxu0 0
    %2599 = vmatpush1.bf16.msra.mxu0 0
    %2600 = vmatprep.subr.bf16.mxu0 0
    %2601 = vmatpush1.bf16.msra.mxu0 0
    %2602 = vmatprep.subr.bf16.mxu0 0
    %2603 = vmatpush1.bf16.msra.mxu0 0
    %2604 = vmatprep.subr.bf16.mxu0 0
    %2605 = vmatpush1.bf16.msra.mxu0 0
    %2606 = vmatprep.subr.bf16.mxu0 0
    %2607 = vmatpush1.bf16.msra.mxu0 0
    %2608 = vmatprep.subr.bf16.mxu0 0
    %2609 = vmatpush1.bf16.msra.mxu0 0
    %2610 = vmatprep.subr.bf16.mxu0 0
    %2611 = vmatpush1.bf16.msra.mxu0 0
    %2612 = vmatprep.subr.bf16.mxu0 0
    %2613 = vmatpush1.bf16.msra.mxu0 0
    %2614 = vmatprep.subr.bf16.mxu0 0
    %2615 = vmatpush1.bf16.msra.mxu0 0
    %2616 = vmatprep.subr.bf16.mxu0 0
    %2617 = vmatpush1.bf16.msra.mxu0 0
    %2618 = vmatprep.subr.bf16.mxu0 0
    %2619 = vmatpush1.bf16.msra.mxu0 0
    %2620 = vmatprep.subr.bf16.mxu0 0
    %2621 = vmatpush1.bf16.msra.mxu0 0
    %2622 = vmatprep.subr.bf16.mxu0 0
    %2623 = vmatpush1.bf16.msra.mxu0 0
    %2624 = vmatprep.mubr.bf16.mxu0 0
    %2625 = vmatmul.mubr.bf16.gmra.mrb[0].mxu0 %v2590
    %v2626 = vpop.f32.mrb[0].mxu0
    %v2627 = vadd.f32 %v2575, %v2626
    %v2628 = vpop.f32.mrb[0].mxu0
    %v2629 = vpop.f32.mrb[0].mxu0
    %v2630 = vadd.f32 %v2575, %v2629
    %v2631 = vpop.f32.mrb[0].mxu0
    %2632 = vdwg.mxu0
    %v2633 = vpack.c.bf16 %v2630, %v2627
    %v2634 = vld [vmem:[#allocation26] sm:$0xf]
    %v2635 = vld [vmem:[#allocation26 + $0x4] sm:$0xf]
    %v2636 = vld [vmem:[#allocation26 + $0x8] sm:$0xf]
    %v2637 = vld [vmem:[#allocation26 + $0xc] sm:$0xf]
    %v2638 = vld [vmem:[#allocation27] sm:$0x1]
    %v2640 = vlaneseq
    %v2641 = vshrl.u32 %v2640, 7
    %v2642 = vsub.s32 0, %v2641
    %v2643 = vrot.slane %v2638, %v2642
    %v2649 = vunpack.c.l.b16 %v2634
    %v2650 = vunpack.c.l.b16 %v2635
    %v2651 = vunpack.c.l.b16 %v2636
    %v2652 = vunpack.c.l.b16 %v2637
    %v2653 = vpack.c.b16 %v2650, %v2649
    %v2654 = vpack.c.b16 %v2652, %v2651
    %v2658 = vsel %vm344, %v2633, 0
    %2660 = vmatprep.subr.bf16.mxu0 0
    %2661 = vmatpush1.bf16.msra.mxu0 %v2653
    %2662 = vmatprep.subr.bf16.mxu0 0
    %2663 = vmatpush1.bf16.msra.mxu0 %v2654
    %2664 = vmatprep.subr.bf16.mxu0 0
    %2665 = vmatpush1.bf16.msra.mxu0 0
    %2666 = vmatprep.subr.bf16.mxu0 0
    %2667 = vmatpush1.bf16.msra.mxu0 0
    %2668 = vmatprep.subr.bf16.mxu0 0
    %2669 = vmatpush1.bf16.msra.mxu0 0
    %2670 = vmatprep.subr.bf16.mxu0 0
    %2671 = vmatpush1.bf16.msra.mxu0 0
    %2672 = vmatprep.subr.bf16.mxu0 0
    %2673 = vmatpush1.bf16.msra.mxu0 0
    %2674 = vmatprep.subr.bf16.mxu0 0
    %2675 = vmatpush1.bf16.msra.mxu0 0
    %2676 = vmatprep.subr.bf16.mxu0 0
    %2677 = vmatpush1.bf16.msra.mxu0 0
    %2678 = vmatprep.subr.bf16.mxu0 0
    %2679 = vmatpush1.bf16.msra.mxu0 0
    %2680 = vmatprep.subr.bf16.mxu0 0
    %2681 = vmatpush1.bf16.msra.mxu0 0
    %2682 = vmatprep.subr.bf16.mxu0 0
    %2683 = vmatpush1.bf16.msra.mxu0 0
    %2684 = vmatprep.subr.bf16.mxu0 0
    %2685 = vmatpush1.bf16.msra.mxu0 0
    %2686 = vmatprep.subr.bf16.mxu0 0
    %2687 = vmatpush1.bf16.msra.mxu0 0
    %2688 = vmatprep.subr.bf16.mxu0 0
    %2689 = vmatpush1.bf16.msra.mxu0 0
    %2690 = vmatprep.subr.bf16.mxu0 0
    %2691 = vmatpush1.bf16.msra.mxu0 0
    %2692 = vmatprep.mubr.bf16.mxu0 0
    %2693 = vmatmul.mubr.bf16.gmra.mrb[0].mxu0 %v2658
    %v2694 = vpop.f32.mrb[0].mxu0
    %v2695 = vadd.f32 %v2643, %v2694
    %v2696 = vpop.f32.mrb[0].mxu0
    %v2697 = vpop.f32.mrb[0].mxu0
    %v2698 = vadd.f32 %v2643, %v2697
    %v2699 = vpop.f32.mrb[0].mxu0
    %2700 = vdwg.mxu0
    %v2701 = vadd.f32 %v2563, %v2695
    %v2702 = vadd.f32 %v2564, %v2698
    %v2703 = vadd.f32 %v2701, %v2563
    %v2704 = vadd.f32 %v2702, %v2564
    %v2705 = vld [vmem:[#allocation32] sm:$0x1]
    %v2706 = vld [vmem:[#allocation33] sm:$0x1]
    %v2707 = vsel %vm344, %v2703, 0.0
    %2708 = vadd.xlane.f32.xlu0 %v2707
    %v2709 = vpop.xlane.xlu0 %2708
    %v2710 = vsel %vm344, %v2704, 0.0
    %2711 = vadd.xlane.f32.xlu0 %v2710
    %v2712 = vpop.xlane.xlu0 %2711
    %v2713 = vmul.f32 %v2709, %v2528
    %v2714 = vmul.f32 %v2712, %v2528
    %v2715 = vsub.f32 %v2703, %v2713
    %v2716 = vsub.f32 %v2704, %v2714
    %v2717 = vmul.f32 %v2715, %v2715
    %v2718 = vmul.f32 %v2716, %v2716
    %v2719 = vsel %vm344, %v2717, 0.0
    %2720 = vadd.xlane.f32.xlu0 %v2719
    %v2721 = vpop.xlane.xlu0 %2720
    %v2722 = vsel %vm344, %v2718, 0.0
    %2723 = vadd.xlane.f32.xlu0 %v2722
    %v2724 = vpop.xlane.xlu0 %2723
    %v2725 = vmul.f32 %v2721, %v2528
    %v2726 = vmul.f32 %v2724, %v2528
    %v2727 = vadd.f32 %v2725, 1e-05
    %v2728 = vadd.f32 %v2726, 1e-05
    %v2729 = vrsqrt.pop %v2727
    %v2730 = vrsqrt.pop %v2728
    %v2731 = vmul.f32 %v2715, %v2729
    %v2732 = vmul.f32 %v2716, %v2730
    %v2734 = vlaneseq
    %v2735 = vshrl.u32 %v2734, 7
    %v2736 = vsub.s32 0, %v2735
    %v2737 = vrot.slane %v2705, %v2736
    %v2739 = vmul.f32 %v2731, %v2737
    %v2740 = vmul.f32 %v2732, %v2737
    %v2742 = vlaneseq
    %v2743 = vshrl.u32 %v2742, 7
    %v2744 = vsub.s32 0, %v2743
    %v2745 = vrot.slane %v2706, %v2744
    %v2747 = vadd.f32 %v2739, %v2745
    %v2748 = vadd.f32 %v2740, %v2745
    %2749 = vst.msk [vmem:[#allocation35] sm:$0xff] %vm344, %v2747
    %2750 = vst.msk [vmem:[#allocation35 + $0x8] sm:$0xff] %vm344, %v2748
    // Predicated region
    $region162: #{tpu_custom_call.1} parent=1 // pred_check
      _
    $region163: #{tpu_custom_call.1} parent=1 // pred_check_branch
      %2752 = sbr.rel (0) target = $region165
    $region164: #{tpu_custom_call.1} parent=1 // pred_region
      %s2754 = ssub.s32 256, 256
      %2755 = vsyncadd [#allocation5], %s2754
      %s2756 = sshll.u32 [#allocation35], 4
      %s2757 = int_to_ptr.vmem [resolvable:$true] %s2756
      %2762 = dma.vmem_to_hbm [thread:$0]  %s2757, 256, %s20, [#allocation5], 128, 128, 8
    $region165: #{tpu_custom_call.1} parent=1 // pred_fallthru
      _
    // Predicated region
    $region166: #{tpu_custom_call.1} parent=1 // pred_check
      _
    $region167: #{tpu_custom_call.1} parent=1 // pred_check_branch
      %2764 = sbr.rel (0) target = $region169
    $region168: #{tpu_custom_call.1} parent=1 // pred_region
      %2765 = dma.done [#allocation5], 256
    $region169: #{tpu_custom_call.1} parent=1 // pred_fallthru
      _
    %2766 = vsyncpa [#allocation4], 1
    %2767 = vsyncpa [#allocation7], 1
    %2768 = vsyncpa [#allocation10], 1
    %2769 = vsyncpa [#allocation13], 1
    %2770 = vsyncpa [#allocation16], 1
    %2771 = vsyncpa [#allocation19], 1
    %2772 = vsyncpa [#allocation22], 1
    %2773 = vsyncpa [#allocation25], 1
    %2774 = vsyncpa [#allocation28], 1
    %2775 = vsyncpa [#allocation31], 1
    %2776 = vsyncpa [#allocation34], 1
    %2777 = vsyncpa [#allocation5], 1

// kernel: tpu_custom_call.1
$region0: #{tpu_custom_call.1}
  #allocation0 [shape = 'u32[]', space=smem, size = 0x4, offset = 0x4, fixed_abs, tag = 'smem constant byte address 0x4 - core index']
  #allocation1 [shape = 'u32[144,128]{1,0:T(1,128)}', space=vmem, size = 0x12000, scoped, tag = 'internal scratch']
  #allocation2 [shape = 'bf16[16,32]{1,0:T(16,128)(2,1)}', space=vmem, size = 0x1000, scoped, tag = 'scratch operand']
  %s0 = inlined_call_operand.hbm [shape: f32[2,8,32], index: 0, kind: input, shape index: {}]
  %s1 = inlined_call_operand.hbm [shape: f32[2,8,32], index: 1, kind: input, shape index: {}]
  %s2 = inlined_call_operand.hbm [shape: bf16[32,96], index: 2, kind: input, shape index: {}]
  %s3 = inlined_call_operand.hbm [shape: f32[1,96], index: 3, kind: input, shape index: {}]
  %s4 = inlined_call_operand.hbm [shape: bf16[32,32], index: 4, kind: input, shape index: {}]
  %s5 = inlined_call_operand.hbm [shape: f32[1,32], index: 5, kind: input, shape index: {}]
  %s6 = inlined_call_operand.hbm [shape: bf16[32,32], index: 6, kind: input, shape index: {}]
  %s7 = inlined_call_operand.hbm [shape: f32[1,32], index: 7, kind: input, shape index: {}]
  %s8 = inlined_call_operand.hbm [shape: bf16[32,64], index: 8, kind: input, shape index: {}]
  %s9 = inlined_call_operand.hbm [shape: f32[1,64], index: 9, kind: input, shape index: {}]
  %s10 = inlined_call_operand.hbm [shape: bf16[32,32], index: 10, kind: input, shape index: {}]
  %s11 = inlined_call_operand.hbm [shape: f32[1,32], index: 11, kind: input, shape index: {}]
  %s12 = inlined_call_operand.hbm [shape: bf16[32,32], index: 12, kind: input, shape index: {}]
  %s13 = inlined_call_operand.hbm [shape: f32[1,32], index: 13, kind: input, shape index: {}]
  %s14 = inlined_call_operand.hbm [shape: bf16[32,32], index: 14, kind: input, shape index: {}]
  %s15 = inlined_call_operand.hbm [shape: f32[1,32], index: 15, kind: input, shape index: {}]
  %s16 = inlined_call_operand.hbm [shape: f32[1,32], index: 16, kind: input, shape index: {}]
  %s17 = inlined_call_operand.hbm [shape: f32[1,32], index: 17, kind: input, shape index: {}]
  %s18 = inlined_call_operand.hbm [shape: f32[1,32], index: 18, kind: input, shape index: {}]
  %s19 = inlined_call_operand.hbm [shape: f32[1,32], index: 19, kind: input, shape index: {}]
  %s20 = inlined_call_operand.hbm [shape: f32[2,8,32], index: 20, kind: output, shape index: {}]
  %s21 = sld [smem:[#allocation0]]
  $region170: #{tpu_custom_call.1} parent=0
    _
  %s23 = ssub.s32 1, %s21
  %s24 = scalar_select 0, %s23, %s21
  $region1: #{tpu_custom_call.1} parent=0
    #allocation3 [shape = 'u8[8192]{0}', space=vmem, size = 0x2000, scoped, tag = 'input window, operand 0, single buffered']
    #allocation4 [shape = 's32[1]{0}', space=sflag, size = 0x4, scoped, tag = 'scoped memory for tpu_custom_call.1']
    #allocation5 [shape = 's32[1]{0}', space=sflag, size = 0x4, scoped, tag = 'scoped memory for tpu_custom_call.1']
    #allocation6 [shape = 'u8[8192]{0}', space=vmem, size = 0x2000, scoped, tag = 'input window, operand 1, single buffered']
    #allocation7 [shape = 's32[1]{0}', space=sflag, size = 0x4, scoped, tag = 'scoped memory for tpu_custom_call.1']
    #allocation8 [shape = 'u8[8192]{0}', space=vmem, size = 0x2000, scoped, tag = 'input window, operand 2, single buffered']
    #allocation9 [shape = 'u8[512]{0}', space=vmem, size = 0x400, scoped, tag = 'input window, operand 3, single buffered']
    #allocation10 [shape = 's32[1]{0}', space=sflag, size = 0x4, scoped, tag = 'scoped memory for tpu_custom_call.1']
    #allocation11 [shape = 'u8[8192]{0}', space=vmem, size = 0x2000, scoped, tag = 'input window, operand 4, single buffered']
    #allocation12 [shape = 'u8[512]{0}', space=vmem, size = 0x400, scoped, tag = 'input window, operand 5, single buffered']
    #allocation13 [shape = 's32[1]{0}', space=sflag, size = 0x4, scoped, tag = 'scoped memory for tpu_custom_call.1']
    #allocation14 [shape = 'u8[8192]{0}', space=vmem, size = 0x2000, scoped, tag = 'input window, operand 6, single buffered']
    #allocation15 [shape = 'u8[512]{0}', space=vmem, size = 0x400, scoped, tag = 'input window, operand 7, single buffered']
    #allocation16 [shape = 's32[1]{0}', space=sflag, size = 0x4, scoped, tag = 'scoped memory for tpu_custom_call.1']
    #allocation17 [shape = 'u8[8192]{0}', space=vmem, size = 0x2000, scoped, tag = 'input window, operand 8, single buffered']
    #allocation18 [shape = 'u8[512]{0}', space=vmem, size = 0x400, scoped, tag = 'input window, operand 9, single buffered']
    #allocation19 [shape = 's32[1]{0}', space=sflag, size = 0x4, scoped, tag = 'scoped memory for tpu_custom_call.1']
    #allocation20 [shape = 'u8[8192]{0}', space=vmem, size = 0x2000, scoped, tag = 'input window, operand 10, single buffered']
    #allocation21 [shape = 'u8[512]{0}', space=vmem, size = 0x400, scoped, tag = 'input window, operand 11, single buffered']
    #allocation22 [shape = 's32[1]{0}', space=sflag, size = 0x4, scoped, tag = 'scoped memory for tpu_custom_call.1']
    #allocation23 [shape = 'u8[8192]{0}', space=vmem, size = 0x2000, scoped, tag = 'input window, operand 12, single buffered']
    #allocation24 [shape = 'u8[512]{0}', space=vmem, size = 0x400, scoped, tag = 'input window, operand 13, single buffered']
    #allocation25 [shape = 's32[1]{0}', space=sflag, size = 0x4, scoped, tag = 'scoped memory for tpu_custom_call.1']
    #allocation26 [shape = 'u8[8192]{0}', space=vmem, size = 0x2000, scoped, tag = 'input window, operand 14, single buffered']
    #allocation27 [shape = 'u8[512]{0}', space=vmem, size = 0x400, scoped, tag = 'input window, operand 15, single buffered']
    #allocation28 [shape = 's32[1]{0}', space=sflag, size = 0x4, scoped, tag = 'scoped memory for tpu_custom_call.1']
    #allocation29 [shape = 'u8[512]{0}', space=vmem, size = 0x400, scoped, tag = 'input window, operand 16, single buffered']
    #allocation30 [shape = 'u8[512]{0}', space=vmem, size = 0x400, scoped, tag = 'input window, operand 17, single buffered']
    #allocation31 [shape = 's32[1]{0}', space=sflag, size = 0x4, scoped, tag = 'scoped memory for tpu_custom_call.1']
    #allocation32 [shape = 'u8[512]{0}', space=vmem, size = 0x400, scoped, tag = 'input window, operand 18, single buffered']
    #allocation33 [shape = 'u8[512]{0}', space=vmem, size = 0x400, scoped, tag = 'input window, operand 19, single buffered']
    #allocation34 [shape = 's32[1]{0}', space=sflag, size = 0x4, scoped, tag = 'scoped memory for tpu_custom_call.1']
    #allocation35 [shape = 'u8[8192]{0}', space=vmem, size = 0x2000, scoped, tag = 'output window, operand 0, single buffered']
    %25 = vsyncpa [#allocation4], 0
    %26 = vsyncpa [#allocation7], 0
    %27 = vsyncpa [#allocation10], 0
    %28 = vsyncpa [#allocation13], 0
    %29 = vsyncpa [#allocation16], 0
    %30 = vsyncpa [#allocation19], 0
    %31 = vsyncpa [#allocation22], 0
    %32 = vsyncpa [#allocation25], 0
    %33 = vsyncpa [#allocation28], 0
    %34 = vsyncpa [#allocation31], 0
    %35 = vsyncpa [#allocation34], 0
    %36 = vsyncpa [#allocation5], 0
    // Predicated region
    $region2: #{tpu_custom_call.1} parent=1 // pred_check
      _
    $region3: #{tpu_custom_call.1} parent=1 // pred_check_branch
      %38 = sbr.rel (0) target = $region5
    $region4: #{tpu_custom_call.1} parent=1 // pred_region
      %s40 = ssub.s32 256, 256
      %41 = vsyncadd [#allocation4], %s40
      %s42 = sshll.u32 [#allocation3], 4
      %s43 = int_to_ptr.vmem [resolvable:$true] %s42
      %48 = dma.hbm_to_vmem [thread:$0]  %s0, 256, %s43, [#allocation4], 128, 128, 8
    $region5: #{tpu_custom_call.1} parent=1 // pred_fallthru
      _
    // Predicated region
    $region6: #{tpu_custom_call.1} parent=1 // pred_check
      _
    $region7: #{tpu_custom_call.1} parent=1 // pred_check_branch
      %50 = sbr.rel (0) target = $region9
    $region8: #{tpu_custom_call.1} parent=1 // pred_region
      %s52 = ssub.s32 256, 256
      %53 = vsyncadd [#allocation7], %s52
      %s54 = sshll.u32 [#allocation6], 4
      %s55 = int_to_ptr.vmem [resolvable:$true] %s54
      %60 = dma.hbm_to_vmem [thread:$0]  %s1, 256, %s55, [#allocation7], 128, 128, 8
    $region9: #{tpu_custom_call.1} parent=1 // pred_fallthru
      _
    // Predicated region
    $region10: #{tpu_custom_call.1} parent=1 // pred_check
      _
    $region11: #{tpu_custom_call.1} parent=1 // pred_check_branch
      %62 = sbr.rel (0) target = $region13
    $region12: #{tpu_custom_call.1} parent=1 // pred_region
      %s64 = ssub.s32 256, 256
      %65 = vsyncadd [#allocation7], %s64
      %s66 = sshll.u32 [#allocation8], 4
      %s67 = int_to_ptr.vmem [resolvable:$true] %s66
      %72 = dma.hbm_to_vmem [thread:$0]  %s2, 256, %s67, [#allocation7], 64, 64, 4
    $region13: #{tpu_custom_call.1} parent=1 // pred_fallthru
      _
    // Predicated region
    $region14: #{tpu_custom_call.1} parent=1 // pred_check
      _
    $region15: #{tpu_custom_call.1} parent=1 // pred_check_branch
      %74 = sbr.rel (0) target = $region17
    $region16: #{tpu_custom_call.1} parent=1 // pred_region
      %s76 = ssub.s32 16, 16
      %77 = vsyncadd [#allocation10], %s76
      %s79 = sshll.u32 [#allocation9], 4
      %s80 = int_to_ptr.vmem [resolvable:$true] %s79
      %82 = dma.hbm_to_vmem [thread:$0]  %s3, 16, %s80, [#allocation10]
    $region17: #{tpu_custom_call.1} parent=1 // pred_fallthru
      _
    // Predicated region
    $region18: #{tpu_custom_call.1} parent=1 // pred_check
      _
    $region19: #{tpu_custom_call.1} parent=1 // pred_check_branch
      %84 = sbr.rel (0) target = $region21
    $region20: #{tpu_custom_call.1} parent=1 // pred_region
      %s86 = ssub.s32 256, 256
      %87 = vsyncadd [#allocation10], %s86
      %s88 = sshll.u32 [#allocation11], 4
      %s89 = int_to_ptr.vmem [resolvable:$true] %s88
      %94 = dma.hbm_to_vmem [thread:$0]  %s4, 256, %s89, [#allocation10], 64, 64, 4
    $region21: #{tpu_custom_call.1} parent=1 // pred_fallthru
      _
    // Predicated region
    $region22: #{tpu_custom_call.1} parent=1 // pred_check
      _
    $region23: #{tpu_custom_call.1} parent=1 // pred_check_branch
      %96 = sbr.rel (0) target = $region25
    $region24: #{tpu_custom_call.1} parent=1 // pred_region
      %s98 = ssub.s32 16, 16
      %99 = vsyncadd [#allocation13], %s98
      %s101 = sshll.u32 [#allocation12], 4
      %s102 = int_to_ptr.vmem [resolvable:$true] %s101
      %104 = dma.hbm_to_vmem [thread:$0]  %s5, 16, %s102, [#allocation13]
    $region25: #{tpu_custom_call.1} parent=1 // pred_fallthru
      _
    // Predicated region
    $region26: #{tpu_custom_call.1} parent=1 // pred_check
      _
    $region27: #{tpu_custom_call.1} parent=1 // pred_check_branch
      %106 = sbr.rel (0) target = $region29
    $region28: #{tpu_custom_call.1} parent=1 // pred_region
      %s108 = ssub.s32 256, 256
      %109 = vsyncadd [#allocation13], %s108
      %s110 = sshll.u32 [#allocation14], 4
      %s111 = int_to_ptr.vmem [resolvable:$true] %s110
      %116 = dma.hbm_to_vmem [thread:$0]  %s6, 256, %s111, [#allocation13], 64, 64, 4
    $region29: #{tpu_custom_call.1} parent=1 // pred_fallthru
      _
    // Predicated region
    $region30: #{tpu_custom_call.1} parent=1 // pred_check
      _
    $region31: #{tpu_custom_call.1} parent=1 // pred_check_branch
      %118 = sbr.rel (0) target = $region33
    $region32: #{tpu_custom_call.1} parent=1 // pred_region
      %s120 = ssub.s32 16, 16
      %121 = vsyncadd [#allocation16], %s120
      %s123 = sshll.u32 [#allocation15], 4
      %s124 = int_to_ptr.vmem [resolvable:$true] %s123
      %126 = dma.hbm_to_vmem [thread:$0]  %s7, 16, %s124, [#allocation16]
    $region33: #{tpu_custom_call.1} parent=1 // pred_fallthru
      _
    // Predicated region
    $region34: #{tpu_custom_call.1} parent=1 // pred_check
      _
    $region35: #{tpu_custom_call.1} parent=1 // pred_check_branch
      %128 = sbr.rel (0) target = $region37
    $region36: #{tpu_custom_call.1} parent=1 // pred_region
      %s130 = ssub.s32 256, 256
      %131 = vsyncadd [#allocation16], %s130
      %s132 = sshll.u32 [#allocation17], 4
      %s133 = int_to_ptr.vmem [resolvable:$true] %s132
      %138 = dma.hbm_to_vmem [thread:$0]  %s8, 256, %s133, [#allocation16], 64, 64, 4
    $region37: #{tpu_custom_call.1} parent=1 // pred_fallthru
      _
    // Predicated region
    $region38: #{tpu_custom_call.1} parent=1 // pred_check
      _
    $region39: #{tpu_custom_call.1} parent=1 // pred_check_branch
      %140 = sbr.rel (0) target = $region41
    $region40: #{tpu_custom_call.1} parent=1 // pred_region
      %s142 = ssub.s32 16, 16
      %143 = vsyncadd [#allocation19], %s142
      %s145 = sshll.u32 [#allocation18], 4
      %s146 = int_to_ptr.vmem [resolvable:$true] %s145
      %148 = dma.hbm_to_vmem [thread:$0]  %s9, 16, %s146, [#allocation19]
    $region41: #{tpu_custom_call.1} parent=1 // pred_fallthru
      _
    // Predicated region
    $region42: #{tpu_custom_call.1} parent=1 // pred_check
      _
    $region43: #{tpu_custom_call.1} parent=1 // pred_check_branch
      %150 = sbr.rel (0) target = $region45
    $region44: #{tpu_custom_call.1} parent=1 // pred_region
      %s152 = ssub.s32 256, 256
      %153 = vsyncadd [#allocation19], %s152
      %s154 = sshll.u32 [#allocation20], 4
      %s155 = int_to_ptr.vmem [resolvable:$true] %s154
      %160 = dma.hbm_to_vmem [thread:$0]  %s10, 256, %s155, [#allocation19], 64, 64, 4
    $region45: #{tpu_custom_call.1} parent=1 // pred_fallthru
      _
    // Predicated region
    $region46: #{tpu_custom_call.1} parent=1 // pred_check
      _
    $region47: #{tpu_custom_call.1} parent=1 // pred_check_branch
      %162 = sbr.rel (0) target = $region49
    $region48: #{tpu_custom_call.1} parent=1 // pred_region
      %s164 = ssub.s32 16, 16
      %165 = vsyncadd [#allocation22], %s164
      %s167 = sshll.u32 [#allocation21], 4
      %s168 = int_to_ptr.vmem [resolvable:$true] %s167
      %170 = dma.hbm_to_vmem [thread:$0]  %s11, 16, %s168, [#allocation22]
    $region49: #{tpu_custom_call.1} parent=1 // pred_fallthru
      _
    // Predicated region
    $region50: #{tpu_custom_call.1} parent=1 // pred_check
      _
    $region51: #{tpu_custom_call.1} parent=1 // pred_check_branch
      %172 = sbr.rel (0) target = $region53
    $region52: #{tpu_custom_call.1} parent=1 // pred_region
      %s174 = ssub.s32 256, 256
      %175 = vsyncadd [#allocation22], %s174
      %s176 = sshll.u32 [#allocation23], 4
      %s177 = int_to_ptr.vmem [resolvable:$true] %s176
      %182 = dma.hbm_to_vmem [thread:$0]  %s12, 256, %s177, [#allocation22], 64, 64, 4
    $region53: #{tpu_custom_call.1} parent=1 // pred_fallthru
      _
    // Predicated region
    $region54: #{tpu_custom_call.1} parent=1 // pred_check
      _
    $region55: #{tpu_custom_call.1} parent=1 // pred_check_branch
      %184 = sbr.rel (0) target = $region57
    $region56: #{tpu_custom_call.1} parent=1 // pred_region
      %s186 = ssub.s32 16, 16
      %187 = vsyncadd [#allocation25], %s186
      %s189 = sshll.u32 [#allocation24], 4
      %s190 = int_to_ptr.vmem [resolvable:$true] %s189
      %192 = dma.hbm_to_vmem [thread:$0]  %s13, 16, %s190, [#allocation25]
    $region57: #{tpu_custom_call.1} parent=1 // pred_fallthru
      _
    // Predicated region
    $region58: #{tpu_custom_call.1} parent=1 // pred_check
      _
    $region59: #{tpu_custom_call.1} parent=1 // pred_check_branch
      %194 = sbr.rel (0) target = $region61
    $region60: #{tpu_custom_call.1} parent=1 // pred_region
      %s196 = ssub.s32 256, 256
      %197 = vsyncadd [#allocation25], %s196
      %s198 = sshll.u32 [#allocation26], 4
      %s199 = int_to_ptr.vmem [resolvable:$true] %s198
      %204 = dma.hbm_to_vmem [thread:$0]  %s14, 256, %s199, [#allocation25], 64, 64, 4
    $region61: #{tpu_custom_call.1} parent=1 // pred_fallthru
      _
    // Predicated region
    $region62: #{tpu_custom_call.1} parent=1 // pred_check
      _
    $region63: #{tpu_custom_call.1} parent=1 // pred_check_branch
      %206 = sbr.rel (0) target = $region65
    $region64: #{tpu_custom_call.1} parent=1 // pred_region
      %s208 = ssub.s32 16, 16
      %209 = vsyncadd [#allocation28], %s208
      %s211 = sshll.u32 [#allocation27], 4
      %s212 = int_to_ptr.vmem [resolvable:$true] %s211
      %214 = dma.hbm_to_vmem [thread:$0]  %s15, 16, %s212, [#allocation28]
    $region65: #{tpu_custom_call.1} parent=1 // pred_fallthru
      _
    // Predicated region
    $region66: #{tpu_custom_call.1} parent=1 // pred_check
      _
    $region67: #{tpu_custom_call.1} parent=1 // pred_check_branch
      %216 = sbr.rel (0) target = $region69
    $region68: #{tpu_custom_call.1} parent=1 // pred_region
      %s218 = ssub.s32 16, 16
      %219 = vsyncadd [#allocation28], %s218
      %s221 = sshll.u32 [#allocation29], 4
      %s222 = int_to_ptr.vmem [resolvable:$true] %s221
      %224 = dma.hbm_to_vmem [thread:$0]  %s16, 16, %s222, [#allocation28]
    $region69: #{tpu_custom_call.1} parent=1 // pred_fallthru
      _
    // Predicated region
    $region70: #{tpu_custom_call.1} parent=1 // pred_check
      _
    $region71: #{tpu_custom_call.1} parent=1 // pred_check_branch
      %226 = sbr.rel (0) target = $region73
    $region72: #{tpu_custom_call.1} parent=1 // pred_region
      %s228 = ssub.s32 16, 16
      %229 = vsyncadd [#allocation31], %s228
      %s231 = sshll.u32 [#allocation30], 4
      %s232 = int_to_ptr.vmem [resolvable:$true] %s231
      %234 = dma.hbm_to_vmem [thread:$0]  %s17, 16, %s232, [#allocation31]
    $region73: #{tpu_custom_call.1} parent=1 // pred_fallthru
      _
    // Predicated region
    $region74: #{tpu_custom_call.1} parent=1 // pred_check
      _
    $region75: #{tpu_custom_call.1} parent=1 // pred_check_branch
      %236 = sbr.rel (0) target = $region77
    $region76: #{tpu_custom_call.1} parent=1 // pred_region
      %s238 = ssub.s32 16, 16
      %239 = vsyncadd [#allocation31], %s238
      %s241 = sshll.u32 [#allocation32], 4
      %s242 = int_to_ptr.vmem [resolvable:$true] %s241
      %244 = dma.hbm_to_vmem [thread:$0]  %s18, 16, %s242, [#allocation31]
    $region77: #{tpu_custom_call.1} parent=1 // pred_fallthru
      _
    // Predicated region
    $region78: #{tpu_custom_call.1} parent=1 // pred_check
      _
    $region79: #{tpu_custom_call.1} parent=1 // pred_check_branch
      %246 = sbr.rel (0) target = $region81
    $region80: #{tpu_custom_call.1} parent=1 // pred_region
      %s248 = ssub.s32 16, 16
      %249 = vsyncadd [#allocation34], %s248
      %s251 = sshll.u32 [#allocation33], 4
      %s252 = int_to_ptr.vmem [resolvable:$true] %s251
      %254 = dma.hbm_to_vmem [thread:$0]  %s19, 16, %s252, [#allocation34]
    $region81: #{tpu_custom_call.1} parent=1 // pred_fallthru
      _
    // Predicated region
    $region82: #{tpu_custom_call.1} parent=1 // pred_check
      _
    $region83: #{tpu_custom_call.1} parent=1 // pred_check_branch
      %256 = sbr.rel (0) target = $region85
    $region84: #{tpu_custom_call.1} parent=1 // pred_region
      %257 = dma.done [#allocation4], 256
    $region85: #{tpu_custom_call.1} parent=1 // pred_fallthru
      _
    // Predicated region
    $region86: #{tpu_custom_call.1} parent=1 // pred_check
      _
    $region87: #{tpu_custom_call.1} parent=1 // pred_check_branch
      %259 = sbr.rel (0) target = $region89
    $region88: #{tpu_custom_call.1} parent=1 // pred_region
      %260 = dma.done [#allocation7], 256
    $region89: #{tpu_custom_call.1} parent=1 // pred_fallthru
      _
    // Predicated region
    $region90: #{tpu_custom_call.1} parent=1 // pred_check
      _
    $region91: #{tpu_custom_call.1} parent=1 // pred_check_branch
      %262 = sbr.rel (0) target = $region93
    $region92: #{tpu_custom_call.1} parent=1 // pred_region
      %263 = dma.done [#allocation7], 256
    $region93: #{tpu_custom_call.1} parent=1 // pred_fallthru
      _
    // Predicated region
    $region94: #{tpu_custom_call.1} parent=1 // pred_check
      _
    $region95: #{tpu_custom_call.1} parent=1 // pred_check_branch
      %265 = sbr.rel (0) target = $region97
    $region96: #{tpu_custom_call.1} parent=1 // pred_region
      %266 = dma.done [#allocation10], 16
    $region97: #{tpu_custom_call.1} parent=1 // pred_fallthru
      _
    // Predicated region
    $region98: #{tpu_custom_call.1} parent=1 // pred_check
      _
    $region99: #{tpu_custom_call.1} parent=1 // pred_check_branch
      %268 = sbr.rel (0) target = $region101
    $region100: #{tpu_custom_call.1} parent=1 // pred_region
      %269 = dma.done [#allocation10], 256
    $region101: #{tpu_custom_call.1} parent=1 // pred_fallthru
      _
    // Predicated region
    $region102: #{tpu_custom_call.1} parent=1 // pred_check
      _
    $region103: #{tpu_custom_call.1} parent=1 // pred_check_branch
      %271 = sbr.rel (0) target = $region105
    $region104: #{tpu_custom_call.1} parent=1 // pred_region
      %272 = dma.done [#allocation13], 16
    $region105: #{tpu_custom_call.1} parent=1 // pred_fallthru
      _
    // Predicated region
    $region106: #{tpu_custom_call.1} parent=1 // pred_check
      _
    $region107: #{tpu_custom_call.1} parent=1 // pred_check_branch
      %274 = sbr.rel (0) target = $region109
    $region108: #{tpu_custom_call.1} parent=1 // pred_region
      %275 = dma.done [#allocation13], 256
    $region109: #{tpu_custom_call.1} parent=1 // pred_fallthru
      _
    // Predicated region
    $region110: #{tpu_custom_call.1} parent=1 // pred_check
      _
    $region111: #{tpu_custom_call.1} parent=1 // pred_check_branch
      %277 = sbr.rel (0) target = $region113
    $region112: #{tpu_custom_call.1} parent=1 // pred_region
      %278 = dma.done [#allocation16], 16
    $region113: #{tpu_custom_call.1} parent=1 // pred_fallthru
      _
    // Predicated region
    $region114: #{tpu_custom_call.1} parent=1 // pred_check
      _
    $region115: #{tpu_custom_call.1} parent=1 // pred_check_branch
      %280 = sbr.rel (0) target = $region117
    $region116: #{tpu_custom_call.1} parent=1 // pred_region
      %281 = dma.done [#allocation16], 256
    $region117: #{tpu_custom_call.1} parent=1 // pred_fallthru
      _
    // Predicated region
    $region118: #{tpu_custom_call.1} parent=1 // pred_check
      _
    $region119: #{tpu_custom_call.1} parent=1 // pred_check_branch
      %283 = sbr.rel (0) target = $region121
    $region120: #{tpu_custom_call.1} parent=1 // pred_region
      %284 = dma.done [#allocation19], 16
    $region121: #{tpu_custom_call.1} parent=1 // pred_fallthru
      _
    // Predicated region
    $region122: #{tpu_custom_call.1} parent=1 // pred_check
      _
    $region123: #{tpu_custom_call.1} parent=1 // pred_check_branch
      %286 = sbr.rel (0) target = $region125
    $region124: #{tpu_custom_call.1} parent=1 // pred_region
      %287 = dma.done [#allocation19], 256
    $region125: #{tpu_custom_call.1} parent=1 // pred_fallthru
      _
    // Predicated region
    $region126: #{tpu_custom_call.1} parent=1 // pred_check
      _
    $region127: #{tpu_custom_call.1} parent=1 // pred_check_branch
      %289 = sbr.rel (0) target = $region129
    $region128: #{tpu_custom_call.1} parent=1 // pred_region
      %290 = dma.done [#allocation22], 16
    $region129: #{tpu_custom_call.1} parent=1 // pred_fallthru
      _
    // Predicated region
    $region130: #{tpu_custom_call.1} parent=1 // pred_check
      _
    $region131: #{tpu_custom_call.1} parent=1 // pred_check_branch
      %292 = sbr.rel (0) target = $region133
    $region132: #{tpu_custom_call.1} parent=1 // pred_region
      %293 = dma.done [#allocation22], 256
    $region133: #{tpu_custom_call.1} parent=1 // pred_fallthru
      _
    // Predicated region
    $region134: #{tpu_custom_call.1} parent=1 // pred_check
      _
    $region135: #{tpu_custom_call.1} parent=1 // pred_check_branch
      %295 = sbr.rel (0) target = $region137
    $region136: #{tpu_custom_call.1} parent=1 // pred_region
      %296 = dma.done [#allocation25], 16
    $region137: #{tpu_custom_call.1} parent=1 // pred_fallthru
      _
    // Predicated region
    $region138: #{tpu_custom_call.1} parent=1 // pred_check
      _
    $region139: #{tpu_custom_call.1} parent=1 // pred_check_branch
      %298 = sbr.rel (0) target = $region141
    $region140: #{tpu_custom_call.1} parent=1 // pred_region
      %299 = dma.done [#allocation25], 256
    $region141: #{tpu_custom_call.1} parent=1 // pred_fallthru
      _
    // Predicated region
    $region142: #{tpu_custom_call.1} parent=1 // pred_check
      _
    $region143: #{tpu_custom_call.1} parent=1 // pred_check_branch
      %301 = sbr.rel (0) target = $region145
    $region144: #{tpu_custom_call.1} parent=1 // pred_region
      %302 = dma.done [#allocation28], 16
    $region145: #{tpu_custom_call.1} parent=1 // pred_fallthru
      _
    // Predicated region
    $region146: #{tpu_custom_call.1} parent=1 // pred_check
      _
    $region147: #{tpu_custom_call.1} parent=1 // pred_check_branch
      %304 = sbr.rel (0) target = $region149
    $region148: #{tpu_custom_call.1} parent=1 // pred_region
      %305 = dma.done [#allocation28], 16
    $region149: #{tpu_custom_call.1} parent=1 // pred_fallthru
      _
    // Predicated region
    $region150: #{tpu_custom_call.1} parent=1 // pred_check
      _
    $region151: #{tpu_custom_call.1} parent=1 // pred_check_branch
      %307 = sbr.rel (0) target = $region153
    $region152: #{tpu_custom_call.1} parent=1 // pred_region
      %308 = dma.done [#allocation31], 16
    $region153: #{tpu_custom_call.1} parent=1 // pred_fallthru
      _
    // Predicated region
    $region154: #{tpu_custom_call.1} parent=1 // pred_check
      _
    $region155: #{tpu_custom_call.1} parent=1 // pred_check_branch
      %310 = sbr.rel (0) target = $region157
    $region156: #{tpu_custom_call.1} parent=1 // pred_region
      %311 = dma.done [#allocation31], 16
    $region157: #{tpu_custom_call.1} parent=1 // pred_fallthru
      _
    // Predicated region
    $region158: #{tpu_custom_call.1} parent=1 // pred_check
      _
    $region159: #{tpu_custom_call.1} parent=1 // pred_check_branch
      %313 = sbr.rel (0) target = $region161
    $region160: #{tpu_custom_call.1} parent=1 // pred_region
      %314 = dma.done [#allocation34], 16
    $region161: #{tpu_custom_call.1} parent=1 // pred_fallthru
      _
    %v316 = vld [vmem:[#allocation3] sm:$0xff]
    %v317 = vld [vmem:[#allocation3 + $0x8] sm:$0xff]
    %v318 = vld [vmem:[#allocation6] sm:$0xff]
    %v319 = vld [vmem:[#allocation6 + $0x8] sm:$0xff]
    %v320 = vpack.c.bf16 %v317, %v316
    %v321 = vld [vmem:[#allocation8] sm:$0xf]
    %v322 = vld [vmem:[#allocation8 + $0x4] sm:$0xf]
    %v323 = vld [vmem:[#allocation8 + $0x8] sm:$0xf]
    %v324 = vld [vmem:[#allocation8 + $0xc] sm:$0xf]
    %v325 = vld [vmem:[#allocation9] sm:$0x1]
    %v327 = vlaneseq
    %v328 = vshrl.u32 %v327, 7
    %v329 = vsub.s32 0, %v328
    %v330 = vrot.slane %v325, %v329
    %v336 = vunpack.c.l.b16 %v321
    %v337 = vunpack.c.l.b16 %v322
    %v338 = vunpack.c.l.b16 %v323
    %v339 = vunpack.c.l.b16 %v324
    %v340 = vpack.c.b16 %v337, %v336
    %v341 = vpack.c.b16 %v339, %v338
    %vm344 = vcmask 261120
    %v346 = vsel %vm344, %v320, 0
    %348 = vmatprep.subr.bf16.mxu0 0
    %349 = vmatpush1.bf16.msra.mxu0 %v340
    %350 = vmatprep.subr.bf16.mxu0 0
    %351 = vmatpush1.bf16.msra.mxu0 %v341
    %352 = vmatprep.subr.bf16.mxu0 0
    %353 = vmatpush1.bf16.msra.mxu0 0
    %354 = vmatprep.subr.bf16.mxu0 0
    %355 = vmatpush1.bf16.msra.mxu0 0
    %356 = vmatprep.subr.bf16.mxu0 0
    %357 = vmatpush1.bf16.msra.mxu0 0
    %358 = vmatprep.subr.bf16.mxu0 0
    %359 = vmatpush1.bf16.msra.mxu0 0
    %360 = vmatprep.subr.bf16.mxu0 0
    %361 = vmatpush1.bf16.msra.mxu0 0
    %362 = vmatprep.subr.bf16.mxu0 0
    %363 = vmatpush1.bf16.msra.mxu0 0
    %364 = vmatprep.subr.bf16.mxu0 0
    %365 = vmatpush1.bf16.msra.mxu0 0
    %366 = vmatprep.subr.bf16.mxu0 0
    %367 = vmatpush1.bf16.msra.mxu0 0
    %368 = vmatprep.subr.bf16.mxu0 0
    %369 = vmatpush1.bf16.msra.mxu0 0
    %370 = vmatprep.subr.bf16.mxu0 0
    %371 = vmatpush1.bf16.msra.mxu0 0
    %372 = vmatprep.subr.bf16.mxu0 0
    %373 = vmatpush1.bf16.msra.mxu0 0
    %374 = vmatprep.subr.bf16.mxu0 0
    %375 = vmatpush1.bf16.msra.mxu0 0
    %376 = vmatprep.subr.bf16.mxu0 0
    %377 = vmatpush1.bf16.msra.mxu0 0
    %378 = vmatprep.subr.bf16.mxu0 0
    %379 = vmatpush1.bf16.msra.mxu0 0
    %380 = vmatprep.mubr.bf16.mxu0 0
    %381 = vmatmul.mubr.bf16.gmra.mrb[0].mxu0 %v346
    %v382 = vpop.f32.mrb[0].mxu0
    %v383 = vadd.f32 %v330, %v382
    %v384 = vpop.f32.mrb[0].mxu0
    %v385 = vpop.f32.mrb[0].mxu0
    %v386 = vadd.f32 %v330, %v385
    %v387 = vpop.f32.mrb[0].mxu0
    %388 = vdwg.mxu0
    %v389 = vpack.c.bf16 %v386, %v383
    %v391 = vunpack.c.l.b16 %v389
    %v392 = vunpack.c.h.b16 %v389
    %v393 = vpack.c.b16 %v391, %v391
    %v394 = vpack.c.b16 %v392, %v392
    %395 = vrot.lane.b32.xlu0 %v393, 96
    %v396 = vpop.permute.xlu0 %395
    %vm397 = vcmask 64512
    %v399 = vsel %vm397, %v393, 0
    %v402 = vsel %vm397, %v396, 0
    %404 = vmatprep.subr.bf16.mxu0 0
    %405 = vmatpush1.bf16.xpose.msra.mxu0 %v402
    %406 = vmatprep.subr.bf16.mxu0 0
    %407 = vmatpush1.bf16.xpose.msra.mxu0 0
    %408 = vmatprep.subr.bf16.mxu0 0
    %409 = vmatpush1.bf16.xpose.msra.mxu0 0
    %410 = vmatprep.subr.bf16.mxu0 0
    %411 = vmatpush1.bf16.xpose.msra.mxu0 0
    %412 = vmatprep.subr.bf16.mxu0 0
    %413 = vmatpush1.bf16.xpose.msra.mxu0 0
    %414 = vmatprep.subr.bf16.mxu0 0
    %415 = vmatpush1.bf16.xpose.msra.mxu0 0
    %416 = vmatprep.subr.bf16.mxu0 0
    %417 = vmatpush1.bf16.xpose.msra.mxu0 0
    %418 = vmatprep.subr.bf16.mxu0 0
    %419 = vmatpush1.bf16.xpose.msra.mxu0 0
    %420 = vmatprep.subr.bf16.mxu0 0
    %421 = vmatpush1.bf16.xpose.msra.mxu0 0
    %422 = vmatprep.subr.bf16.mxu0 0
    %423 = vmatpush1.bf16.xpose.msra.mxu0 0
    %424 = vmatprep.subr.bf16.mxu0 0
    %425 = vmatpush1.bf16.xpose.msra.mxu0 0
    %426 = vmatprep.subr.bf16.mxu0 0
    %427 = vmatpush1.bf16.xpose.msra.mxu0 0
    %428 = vmatprep.subr.bf16.mxu0 0
    %429 = vmatpush1.bf16.xpose.msra.mxu0 0
    %430 = vmatprep.subr.bf16.mxu0 0
    %431 = vmatpush1.bf16.xpose.msra.mxu0 0
    %432 = vmatprep.subr.bf16.mxu0 0
    %433 = vmatpush1.bf16.xpose.msra.mxu0 0
    %434 = vmatprep.subr.bf16.mxu0 0
    %435 = vmatpush1.bf16.xpose.msra.mxu0 0
    %436 = vmatprep.mubr.bf16.mxu0 0
    %437 = vmatmul.mubr.bf16.gmra.mrb[0].mxu0 %v399
    %v438 = vpop.f32.mrb[0].mxu0
    %v439 = vadd.f32 0.0, %v438
    %v440 = vpop.f32.mrb[0].mxu0
    %v441 = vpop.f32.mrb[0].mxu0
    %v442 = vpop.f32.mrb[0].mxu0
    %443 = vdwg.mxu0
    %444 = vrot.lane.b32.xlu0 %v394, 96
    %v445 = vpop.permute.xlu0 %444
    %v447 = vsel %vm397, %v394, 0
    %v450 = vsel %vm397, %v445, 0
    %452 = vmatprep.subr.bf16.mxu0 0
    %453 = vmatpush1.bf16.xpose.msra.mxu0 %v450
    %454 = vmatprep.subr.bf16.mxu0 0
    %455 = vmatpush1.bf16.xpose.msra.mxu0 0
    %456 = vmatprep.subr.bf16.mxu0 0
    %457 = vmatpush1.bf16.xpose.msra.mxu0 0
    %458 = vmatprep.subr.bf16.mxu0 0
    %459 = vmatpush1.bf16.xpose.msra.mxu0 0
    %460 = vmatprep.subr.bf16.mxu0 0
    %461 = vmatpush1.bf16.xpose.msra.mxu0 0
    %462 = vmatprep.subr.bf16.mxu0 0
    %463 = vmatpush1.bf16.xpose.msra.mxu0 0
    %464 = vmatprep.subr.bf16.mxu0 0
    %465 = vmatpush1.bf16.xpose.msra.mxu0 0
    %466 = vmatprep.subr.bf16.mxu0 0
    %467 = vmatpush1.bf16.xpose.msra.mxu0 0
    %468 = vmatprep.subr.bf16.mxu0 0
    %469 = vmatpush1.bf16.xpose.msra.mxu0 0
    %470 = vmatprep.subr.bf16.mxu0 0
    %471 = vmatpush1.bf16.xpose.msra.mxu0 0
    %472 = vmatprep.subr.bf16.mxu0 0
    %473 = vmatpush1.bf16.xpose.msra.mxu0 0
    %474 = vmatprep.subr.bf16.mxu0 0
    %475 = vmatpush1.bf16.xpose.msra.mxu0 0
    %476 = vmatprep.subr.bf16.mxu0 0
    %477 = vmatpush1.bf16.xpose.msra.mxu0 0
    %478 = vmatprep.subr.bf16.mxu0 0
    %479 = vmatpush1.bf16.xpose.msra.mxu0 0
    %480 = vmatprep.subr.bf16.mxu0 0
    %481 = vmatpush1.bf16.xpose.msra.mxu0 0
    %482 = vmatprep.subr.bf16.mxu0 0
    %483 = vmatpush1.bf16.xpose.msra.mxu0 0
    %484 = vmatprep.mubr.bf16.mxu0 0
    %485 = vmatmul.mubr.bf16.gmra.mrb[0].mxu0 %v447
    %v486 = vpop.f32.mrb[0].mxu0
    %v487 = vadd.f32 0.0, %v486
    %v488 = vpop.f32.mrb[0].mxu0
    %v489 = vpop.f32.mrb[0].mxu0
    %v490 = vpop.f32.mrb[0].mxu0
    %491 = vdwg.mxu0
    %v492 = vsel %vm397, %v439, -inf
    %493 = vmax.xlane.f32.xlu0 %v492
    %v494 = vpop.xlane.xlu0 %493
    %v495 = vsel %vm397, %v487, -inf
    %496 = vmax.xlane.f32.xlu0 %v495
    %v497 = vpop.xlane.xlu0 %496
    %v498 = vsub.f32 %v439, %v494
    %v499 = vsub.f32 %v487, %v497
    %v500 = vmul.f32 %v498, 1.442695
    %v501 = vpow.pop %v500
    %v502 = vmul.f32 %v499, 1.442695
    %v503 = vpow.pop %v502
    %v504 = vsel %vm397, %v501, 0.0
    %505 = vadd.xlane.f32.xlu0 %v504
    %v506 = vpop.xlane.xlu0 %505
    %v507 = vsel %vm397, %v503, 0.0
    %508 = vadd.xlane.f32.xlu0 %v507
    %v509 = vpop.xlane.xlu0 %508
    %v510 = vrcp.pop %v506
    %v511 = vrcp.pop %v509
    %v512 = vmul.f32 %v501, %v510
    %v513 = vmul.f32 %v503, %v511
    %v514 = vpack.c.bf16 %v512, %v512
    %v515 = vpack.c.bf16 %v513, %v513
    %516 = vrot.lane.b32.xlu0 %v393, 64
    %v517 = vpop.permute.xlu0 %516
    %v519 = vsel %vm397, %v514, 0
    %vm521 = vcmask 1043456
    %v523 = vsel %vm521, %v517, 0
    %525 = vmatprep.subr.bf16.mxu0 0
    %526 = vmatpush1.bf16.msra.mxu0 %v523
    %527 = vmatprep.subr.bf16.mxu0 0
    %528 = vmatpush1.bf16.msra.mxu0 0
    %529 = vmatprep.subr.bf16.mxu0 0
    %530 = vmatpush1.bf16.msra.mxu0 0
    %531 = vmatprep.subr.bf16.mxu0 0
    %532 = vmatpush1.bf16.msra.mxu0 0
    %533 = vmatprep.subr.bf16.mxu0 0
    %534 = vmatpush1.bf16.msra.mxu0 0
    %535 = vmatprep.subr.bf16.mxu0 0
    %536 = vmatpush1.bf16.msra.mxu0 0
    %537 = vmatprep.subr.bf16.mxu0 0
    %538 = vmatpush1.bf16.msra.mxu0 0
    %539 = vmatprep.subr.bf16.mxu0 0
    %540 = vmatpush1.bf16.msra.mxu0 0
    %541 = vmatprep.subr.bf16.mxu0 0
    %542 = vmatpush1.bf16.msra.mxu0 0
    %543 = vmatprep.subr.bf16.mxu0 0
    %544 = vmatpush1.bf16.msra.mxu0 0
    %545 = vmatprep.subr.bf16.mxu0 0
    %546 = vmatpush1.bf16.msra.mxu0 0
    %547 = vmatprep.subr.bf16.mxu0 0
    %548 = vmatpush1.bf16.msra.mxu0 0
    %549 = vmatprep.subr.bf16.mxu0 0
    %550 = vmatpush1.bf16.msra.mxu0 0
    %551 = vmatprep.subr.bf16.mxu0 0
    %552 = vmatpush1.bf16.msra.mxu0 0
    %553 = vmatprep.subr.bf16.mxu0 0
    %554 = vmatpush1.bf16.msra.mxu0 0
    %555 = vmatprep.subr.bf16.mxu0 0
    %556 = vmatpush1.bf16.msra.mxu0 0
    %557 = vmatprep.mubr.bf16.mxu0 0
    %558 = vmatmul.mubr.bf16.gmra.mrb[0].mxu0 %v519
    %v559 = vpop.f32.mrb[0].mxu0
    %v560 = vadd.f32 0.0, %v559
    %v561 = vpop.f32.mrb[0].mxu0
    %v562 = vpop.f32.mrb[0].mxu0
    %v563 = vpop.f32.mrb[0].mxu0
    %564 = vdwg.mxu0
    %565 = vrot.lane.b32.xlu0 %v394, 64
    %v566 = vpop.permute.xlu0 %565
    %v568 = vsel %vm397, %v515, 0
    %v571 = vsel %vm521, %v566, 0
    %573 = vmatprep.subr.bf16.mxu0 0
    %574 = vmatpush1.bf16.msra.mxu0 %v571
    %575 = vmatprep.subr.bf16.mxu0 0
    %576 = vmatpush1.bf16.msra.mxu0 0
    %577 = vmatprep.subr.bf16.mxu0 0
    %578 = vmatpush1.bf16.msra.mxu0 0
    %579 = vmatprep.subr.bf16.mxu0 0
    %580 = vmatpush1.bf16.msra.mxu0 0
    %581 = vmatprep.subr.bf16.mxu0 0
    %582 = vmatpush1.bf16.msra.mxu0 0
    %583 = vmatprep.subr.bf16.mxu0 0
    %584 = vmatpush1.bf16.msra.mxu0 0
    %585 = vmatprep.subr.bf16.mxu0 0
    %586 = vmatpush1.bf16.msra.mxu0 0
    %587 = vmatprep.subr.bf16.mxu0 0
    %588 = vmatpush1.bf16.msra.mxu0 0
    %589 = vmatprep.subr.bf16.mxu0 0
    %590 = vmatpush1.bf16.msra.mxu0 0
    %591 = vmatprep.subr.bf16.mxu0 0
    %592 = vmatpush1.bf16.msra.mxu0 0
    %593 = vmatprep.subr.bf16.mxu0 0
    %594 = vmatpush1.bf16.msra.mxu0 0
    %595 = vmatprep.subr.bf16.mxu0 0
    %596 = vmatpush1.bf16.msra.mxu0 0
    %597 = vmatprep.subr.bf16.mxu0 0
    %598 = vmatpush1.bf16.msra.mxu0 0
    %599 = vmatprep.subr.bf16.mxu0 0
    %600 = vmatpush1.bf16.msra.mxu0 0
    %601 = vmatprep.subr.bf16.mxu0 0
    %602 = vmatpush1.bf16.msra.mxu0 0
    %603 = vmatprep.subr.bf16.mxu0 0
    %604 = vmatpush1.bf16.msra.mxu0 0
    %605 = vmatprep.mubr.bf16.mxu0 0
    %606 = vmatmul.mubr.bf16.gmra.mrb[0].mxu0 %v568
    %v607 = vpop.f32.mrb[0].mxu0
    %v608 = vadd.f32 0.0, %v607
    %v609 = vpop.f32.mrb[0].mxu0
    %v610 = vpop.f32.mrb[0].mxu0
    %v611 = vpop.f32.mrb[0].mxu0
    %612 = vdwg.mxu0
    %v613 = vpack.c.bf16 %v560, %v560
    %v614 = vpack.c.bf16 %v608, %v608
    %v617 = vunpack.c.l.b16 %v613
    %v618 = vunpack.c.l.b16 %v614
    %v619 = vpack.c.b16 %v618, %v617
    %621 = vst.msk [vmem:[#allocation2] sm:$0xff] %vm397, %v619
    %622 = vrot.lane.b32.xlu0 %v393, 120
    %v623 = vpop.permute.xlu0 %622
    %624 = vrot.lane.b32.xlu0 %v393, 88
    %v625 = vpop.permute.xlu0 %624
    %v627 = vsel %vm397, %v623, 0
    %v630 = vsel %vm397, %v625, 0
    %632 = vmatprep.subr.bf16.mxu0 0
    %633 = vmatpush1.bf16.xpose.msra.mxu0 %v630
    %634 = vmatprep.subr.bf16.mxu0 0
    %635 = vmatpush1.bf16.xpose.msra.mxu0 0
    %636 = vmatprep.subr.bf16.mxu0 0
    %637 = vmatpush1.bf16.xpose.msra.mxu0 0
    %638 = vmatprep.subr.bf16.mxu0 0
    %639 = vmatpush1.bf16.xpose.msra.mxu0 0
    %640 = vmatprep.subr.bf16.mxu0 0
    %641 = vmatpush1.bf16.xpose.msra.mxu0 0
    %642 = vmatprep.subr.bf16.mxu0 0
    %643 = vmatpush1.bf16.xpose.msra.mxu0 0
    %644 = vmatprep.subr.bf16.mxu0 0
    %645 = vmatpush1.bf16.xpose.msra.mxu0 0
    %646 = vmatprep.subr.bf16.mxu0 0
    %647 = vmatpush1.bf16.xpose.msra.mxu0 0
    %648 = vmatprep.subr.bf16.mxu0 0
    %649 = vmatpush1.bf16.xpose.msra.mxu0 0
    %650 = vmatprep.subr.bf16.mxu0 0
    %651 = vmatpush1.bf16.xpose.msra.mxu0 0
    %652 = vmatprep.subr.bf16.mxu0 0
    %653 = vmatpush1.bf16.xpose.msra.mxu0 0
    %654 = vmatprep.subr.bf16.mxu0 0
    %655 = vmatpush1.bf16.xpose.msra.mxu0 0
    %656 = vmatprep.subr.bf16.mxu0 0
    %657 = vmatpush1.bf16.xpose.msra.mxu0 0
    %658 = vmatprep.subr.bf16.mxu0 0
    %659 = vmatpush1.bf16.xpose.msra.mxu0 0
    %660 = vmatprep.subr.bf16.mxu0 0
    %661 = vmatpush1.bf16.xpose.msra.mxu0 0
    %662 = vmatprep.subr.bf16.mxu0 0
    %663 = vmatpush1.bf16.xpose.msra.mxu0 0
    %664 = vmatprep.mubr.bf16.mxu0 0
    %665 = vmatmul.mubr.bf16.gmra.mrb[0].mxu0 %v627
    %v666 = vpop.f32.mrb[0].mxu0
    %v667 = vadd.f32 0.0, %v666
    %v668 = vpop.f32.mrb[0].mxu0
    %v669 = vpop.f32.mrb[0].mxu0
    %v670 = vpop.f32.mrb[0].mxu0
    %671 = vdwg.mxu0
    %672 = vrot.lane.b32.xlu0 %v394, 120
    %v673 = vpop.permute.xlu0 %672
    %674 = vrot.lane.b32.xlu0 %v394, 88
    %v675 = vpop.permute.xlu0 %674
    %v677 = vsel %vm397, %v673, 0
    %v680 = vsel %vm397, %v675, 0
    %682 = vmatprep.subr.bf16.mxu0 0
    %683 = vmatpush1.bf16.xpose.msra.mxu0 %v680
    %684 = vmatprep.subr.bf16.mxu0 0
    %685 = vmatpush1.bf16.xpose.msra.mxu0 0
    %686 = vmatprep.subr.bf16.mxu0 0
    %687 = vmatpush1.bf16.xpose.msra.mxu0 0
    %688 = vmatprep.subr.bf16.mxu0 0
    %689 = vmatpush1.bf16.xpose.msra.mxu0 0
    %690 = vmatprep.subr.bf16.mxu0 0
    %691 = vmatpush1.bf16.xpose.msra.mxu0 0
    %692 = vmatprep.subr.bf16.mxu0 0
    %693 = vmatpush1.bf16.xpose.msra.mxu0 0
    %694 = vmatprep.subr.bf16.mxu0 0
    %695 = vmatpush1.bf16.xpose.msra.mxu0 0
    %696 = vmatprep.subr.bf16.mxu0 0
    %697 = vmatpush1.bf16.xpose.msra.mxu0 0
    %698 = vmatprep.subr.bf16.mxu0 0
    %699 = vmatpush1.bf16.xpose.msra.mxu0 0
    %700 = vmatprep.subr.bf16.mxu0 0
    %701 = vmatpush1.bf16.xpose.msra.mxu0 0
    %702 = vmatprep.subr.bf16.mxu0 0
    %703 = vmatpush1.bf16.xpose.msra.mxu0 0
    %704 = vmatprep.subr.bf16.mxu0 0
    %705 = vmatpush1.bf16.xpose.msra.mxu0 0
    %706 = vmatprep.subr.bf16.mxu0 0
    %707 = vmatpush1.bf16.xpose.msra.mxu0 0
    %708 = vmatprep.subr.bf16.mxu0 0
    %709 = vmatpush1.bf16.xpose.msra.mxu0 0
    %710 = vmatprep.subr.bf16.mxu0 0
    %711 = vmatpush1.bf16.xpose.msra.mxu0 0
    %712 = vmatprep.subr.bf16.mxu0 0
    %713 = vmatpush1.bf16.xpose.msra.mxu0 0
    %714 = vmatprep.mubr.bf16.mxu0 0
    %715 = vmatmul.mubr.bf16.gmra.mrb[0].mxu0 %v677
    %v716 = vpop.f32.mrb[0].mxu0
    %v717 = vadd.f32 0.0, %v716
    %v718 = vpop.f32.mrb[0].mxu0
    %v719 = vpop.f32.mrb[0].mxu0
    %v720 = vpop.f32.mrb[0].mxu0
    %721 = vdwg.mxu0
    %v722 = vsel %vm397, %v667, -inf
    %723 = vmax.xlane.f32.xlu0 %v722
    %v724 = vpop.xlane.xlu0 %723
    %v725 = vsel %vm397, %v717, -inf
    %726 = vmax.xlane.f32.xlu0 %v725
    %v727 = vpop.xlane.xlu0 %726
    %v728 = vsub.f32 %v667, %v724
    %v729 = vsub.f32 %v717, %v727
    %v730 = vmul.f32 %v728, 1.442695
    %v731 = vpow.pop %v730
    %v732 = vmul.f32 %v729, 1.442695
    %v733 = vpow.pop %v732
    %v734 = vsel %vm397, %v731, 0.0
    %735 = vadd.xlane.f32.xlu0 %v734
    %v736 = vpop.xlane.xlu0 %735
    %v737 = vsel %vm397, %v733, 0.0
    %738 = vadd.xlane.f32.xlu0 %v737
    %v739 = vpop.xlane.xlu0 %738
    %v740 = vrcp.pop %v736
    %v741 = vrcp.pop %v739
    %v742 = vmul.f32 %v731, %v740
    %v743 = vmul.f32 %v733, %v741
    %v744 = vpack.c.bf16 %v742, %v742
    %v745 = vpack.c.bf16 %v743, %v743
    %746 = vrot.lane.b32.xlu0 %v393, 56
    %v747 = vpop.permute.xlu0 %746
    %v749 = vsel %vm397, %v744, 0
    %v752 = vsel %vm521, %v747, 0
    %754 = vmatprep.subr.bf16.mxu0 0
    %755 = vmatpush1.bf16.msra.mxu0 %v752
    %756 = vmatprep.subr.bf16.mxu0 0
    %757 = vmatpush1.bf16.msra.mxu0 0
    %758 = vmatprep.subr.bf16.mxu0 0
    %759 = vmatpush1.bf16.msra.mxu0 0
    %760 = vmatprep.subr.bf16.mxu0 0
    %761 = vmatpush1.bf16.msra.mxu0 0
    %762 = vmatprep.subr.bf16.mxu0 0
    %763 = vmatpush1.bf16.msra.mxu0 0
    %764 = vmatprep.subr.bf16.mxu0 0
    %765 = vmatpush1.bf16.msra.mxu0 0
    %766 = vmatprep.subr.bf16.mxu0 0
    %767 = vmatpush1.bf16.msra.mxu0 0
    %768 = vmatprep.subr.bf16.mxu0 0
    %769 = vmatpush1.bf16.msra.mxu0 0
    %770 = vmatprep.subr.bf16.mxu0 0
    %771 = vmatpush1.bf16.msra.mxu0 0
    %772 = vmatprep.subr.bf16.mxu0 0
    %773 = vmatpush1.bf16.msra.mxu0 0
    %774 = vmatprep.subr.bf16.mxu0 0
    %775 = vmatpush1.bf16.msra.mxu0 0
    %776 = vmatprep.subr.bf16.mxu0 0
    %777 = vmatpush1.bf16.msra.mxu0 0
    %778 = vmatprep.subr.bf16.mxu0 0
    %779 = vmatpush1.bf16.msra.mxu0 0
    %780 = vmatprep.subr.bf16.mxu0 0
    %781 = vmatpush1.bf16.msra.mxu0 0
    %782 = vmatprep.subr.bf16.mxu0 0
    %783 = vmatpush1.bf16.msra.mxu0 0
    %784 = vmatprep.subr.bf16.mxu0 0
    %785 = vmatpush1.bf16.msra.mxu0 0
    %786 = vmatprep.mubr.bf16.mxu0 0
    %787 = vmatmul.mubr.bf16.gmra.mrb[0].mxu0 %v749
    %v788 = vpop.f32.mrb[0].mxu0
    %v789 = vadd.f32 0.0, %v788
    %v790 = vpop.f32.mrb[0].mxu0
    %v791 = vpop.f32.mrb[0].mxu0
    %v792 = vpop.f32.mrb[0].mxu0
    %793 = vdwg.mxu0
    %794 = vrot.lane.b32.xlu0 %v394, 56
    %v795 = vpop.permute.xlu0 %794
    %v797 = vsel %vm397, %v745, 0
    %v800 = vsel %vm521, %v795, 0
    %802 = vmatprep.subr.bf16.mxu0 0
    %803 = vmatpush1.bf16.msra.mxu0 %v800
    %804 = vmatprep.subr.bf16.mxu0 0
    %805 = vmatpush1.bf16.msra.mxu0 0
    %806 = vmatprep.subr.bf16.mxu0 0
    %807 = vmatpush1.bf16.msra.mxu0 0
    %808 = vmatprep.subr.bf16.mxu0 0
    %809 = vmatpush1.bf16.msra.mxu0 0
    %810 = vmatprep.subr.bf16.mxu0 0
    %811 = vmatpush1.bf16.msra.mxu0 0
    %812 = vmatprep.subr.bf16.mxu0 0
    %813 = vmatpush1.bf16.msra.mxu0 0
    %814 = vmatprep.subr.bf16.mxu0 0
    %815 = vmatpush1.bf16.msra.mxu0 0
    %816 = vmatprep.subr.bf16.mxu0 0
    %817 = vmatpush1.bf16.msra.mxu0 0
    %818 = vmatprep.subr.bf16.mxu0 0
    %819 = vmatpush1.bf16.msra.mxu0 0
    %820 = vmatprep.subr.bf16.mxu0 0
    %821 = vmatpush1.bf16.msra.mxu0 0
    %822 = vmatprep.subr.bf16.mxu0 0
    %823 = vmatpush1.bf16.msra.mxu0 0
    %824 = vmatprep.subr.bf16.mxu0 0
    %825 = vmatpush1.bf16.msra.mxu0 0
    %826 = vmatprep.subr.bf16.mxu0 0
    %827 = vmatpush1.bf16.msra.mxu0 0
    %828 = vmatprep.subr.bf16.mxu0 0
    %829 = vmatpush1.bf16.msra.mxu0 0
    %830 = vmatprep.subr.bf16.mxu0 0
    %831 = vmatpush1.bf16.msra.mxu0 0
    %832 = vmatprep.subr.bf16.mxu0 0
    %833 = vmatpush1.bf16.msra.mxu0 0
    %834 = vmatprep.mubr.bf16.mxu0 0
    %835 = vmatmul.mubr.bf16.gmra.mrb[0].mxu0 %v797
    %v836 = vpop.f32.mrb[0].mxu0
    %v837 = vadd.f32 0.0, %v836
    %v838 = vpop.f32.mrb[0].mxu0
    %v839 = vpop.f32.mrb[0].mxu0
    %v840 = vpop.f32.mrb[0].mxu0
    %841 = vdwg.mxu0
    %v842 = vpack.c.bf16 %v789, %v789
    %v843 = vpack.c.bf16 %v837, %v837
    %v846 = vunpack.c.l.b16 %v842
    %v847 = vunpack.c.l.b16 %v843
    %v848 = vpack.c.b16 %v847, %v846
    %849 = vrot.lane.b32.xlu0 %v848, 8
    %v850 = vpop.permute.xlu0 %849
    %vm852 = vcmask 130112
    %853 = vst.msk [vmem:[#allocation2] sm:$0xff] %vm852, %v850
    %854 = vrot.lane.b32.xlu0 %v393, 112
    %v855 = vpop.permute.xlu0 %854
    %856 = vrot.lane.b32.xlu0 %v393, 80
    %v857 = vpop.permute.xlu0 %856
    %v859 = vsel %vm397, %v855, 0
    %v862 = vsel %vm397, %v857, 0
    %864 = vmatprep.subr.bf16.mxu0 0
    %865 = vmatpush1.bf16.xpose.msra.mxu0 %v862
    %866 = vmatprep.subr.bf16.mxu0 0
    %867 = vmatpush1.bf16.xpose.msra.mxu0 0
    %868 = vmatprep.subr.bf16.mxu0 0
    %869 = vmatpush1.bf16.xpose.msra.mxu0 0
    %870 = vmatprep.subr.bf16.mxu0 0
    %871 = vmatpush1.bf16.xpose.msra.mxu0 0
    %872 = vmatprep.subr.bf16.mxu0 0
    %873 = vmatpush1.bf16.xpose.msra.mxu0 0
    %874 = vmatprep.subr.bf16.mxu0 0
    %875 = vmatpush1.bf16.xpose.msra.mxu0 0
    %876 = vmatprep.subr.bf16.mxu0 0
    %877 = vmatpush1.bf16.xpose.msra.mxu0 0
    %878 = vmatprep.subr.bf16.mxu0 0
    %879 = vmatpush1.bf16.xpose.msra.mxu0 0
    %880 = vmatprep.subr.bf16.mxu0 0
    %881 = vmatpush1.bf16.xpose.msra.mxu0 0
    %882 = vmatprep.subr.bf16.mxu0 0
    %883 = vmatpush1.bf16.xpose.msra.mxu0 0
    %884 = vmatprep.subr.bf16.mxu0 0
    %885 = vmatpush1.bf16.xpose.msra.mxu0 0
    %886 = vmatprep.subr.bf16.mxu0 0
    %887 = vmatpush1.bf16.xpose.msra.mxu0 0
    %888 = vmatprep.subr.bf16.mxu0 0
    %889 = vmatpush1.bf16.xpose.msra.mxu0 0
    %890 = vmatprep.subr.bf16.mxu0 0
    %891 = vmatpush1.bf16.xpose.msra.mxu0 0
    %892 = vmatprep.subr.bf16.mxu0 0
    %893 = vmatpush1.bf16.xpose.msra.mxu0 0
    %894 = vmatprep.subr.bf16.mxu0 0
    %895 = vmatpush1.bf16.xpose.msra.mxu0 0
    %896 = vmatprep.mubr.bf16.mxu0 0
    %897 = vmatmul.mubr.bf16.gmra.mrb[0].mxu0 %v859
    %v898 = vpop.f32.mrb[0].mxu0
    %v899 = vadd.f32 0.0, %v898
    %v900 = vpop.f32.mrb[0].mxu0
    %v901 = vpop.f32.mrb[0].mxu0
    %v902 = vpop.f32.mrb[0].mxu0
    %903 = vdwg.mxu0
    %904 = vrot.lane.b32.xlu0 %v394, 112
    %v905 = vpop.permute.xlu0 %904
    %906 = vrot.lane.b32.xlu0 %v394, 80
    %v907 = vpop.permute.xlu0 %906
    %v909 = vsel %vm397, %v905, 0
    %v912 = vsel %vm397, %v907, 0
    %914 = vmatprep.subr.bf16.mxu0 0
    %915 = vmatpush1.bf16.xpose.msra.mxu0 %v912
    %916 = vmatprep.subr.bf16.mxu0 0
    %917 = vmatpush1.bf16.xpose.msra.mxu0 0
    %918 = vmatprep.subr.bf16.mxu0 0
    %919 = vmatpush1.bf16.xpose.msra.mxu0 0
    %920 = vmatprep.subr.bf16.mxu0 0
    %921 = vmatpush1.bf16.xpose.msra.mxu0 0
    %922 = vmatprep.subr.bf16.mxu0 0
    %923 = vmatpush1.bf16.xpose.msra.mxu0 0
    %924 = vmatprep.subr.bf16.mxu0 0
    %925 = vmatpush1.bf16.xpose.msra.mxu0 0
    %926 = vmatprep.subr.bf16.mxu0 0
    %927 = vmatpush1.bf16.xpose.msra.mxu0 0
    %928 = vmatprep.subr.bf16.mxu0 0
    %929 = vmatpush1.bf16.xpose.msra.mxu0 0
    %930 = vmatprep.subr.bf16.mxu0 0
    %931 = vmatpush1.bf16.xpose.msra.mxu0 0
    %932 = vmatprep.subr.bf16.mxu0 0
    %933 = vmatpush1.bf16.xpose.msra.mxu0 0
    %934 = vmatprep.subr.bf16.mxu0 0
    %935 = vmatpush1.bf16.xpose.msra.mxu0 0
    %936 = vmatprep.subr.bf16.mxu0 0
    %937 = vmatpush1.bf16.xpose.msra.mxu0 0
    %938 = vmatprep.subr.bf16.mxu0 0
    %939 = vmatpush1.bf16.xpose.msra.mxu0 0
    %940 = vmatprep.subr.bf16.mxu0 0
    %941 = vmatpush1.bf16.xpose.msra.mxu0 0
    %942 = vmatprep.subr.bf16.mxu0 0
    %943 = vmatpush1.bf16.xpose.msra.mxu0 0
    %944 = vmatprep.subr.bf16.mxu0 0
    %945 = vmatpush1.bf16.xpose.msra.mxu0 0
    %946 = vmatprep.mubr.bf16.mxu0 0
    %947 = vmatmul.mubr.bf16.gmra.mrb[0].mxu0 %v909
    %v948 = vpop.f32.mrb[0].mxu0
    %v949 = vadd.f32 0.0, %v948
    %v950 = vpop.f32.mrb[0].mxu0
    %v951 = vpop.f32.mrb[0].mxu0
    %v952 = vpop.f32.mrb[0].mxu0
    %953 = vdwg.mxu0
    %v954 = vsel %vm397, %v899, -inf
    %955 = vmax.xlane.f32.xlu0 %v954
    %v956 = vpop.xlane.xlu0 %955
    %v957 = vsel %vm397, %v949, -inf
    %958 = vmax.xlane.f32.xlu0 %v957
    %v959 = vpop.xlane.xlu0 %958
    %v960 = vsub.f32 %v899, %v956
    %v961 = vsub.f32 %v949, %v959
    %v962 = vmul.f32 %v960, 1.442695
    %v963 = vpow.pop %v962
    %v964 = vmul.f32 %v961, 1.442695
    %v965 = vpow.pop %v964
    %v966 = vsel %vm397, %v963, 0.0
    %967 = vadd.xlane.f32.xlu0 %v966
    %v968 = vpop.xlane.xlu0 %967
    %v969 = vsel %vm397, %v965, 0.0
    %970 = vadd.xlane.f32.xlu0 %v969
    %v971 = vpop.xlane.xlu0 %970
    %v972 = vrcp.pop %v968
    %v973 = vrcp.pop %v971
    %v974 = vmul.f32 %v963, %v972
    %v975 = vmul.f32 %v965, %v973
    %v976 = vpack.c.bf16 %v974, %v974
    %v977 = vpack.c.bf16 %v975, %v975
    %978 = vrot.lane.b32.xlu0 %v393, 48
    %v979 = vpop.permute.xlu0 %978
    %v981 = vsel %vm397, %v976, 0
    %v984 = vsel %vm521, %v979, 0
    %986 = vmatprep.subr.bf16.mxu0 0
    %987 = vmatpush1.bf16.msra.mxu0 %v984
    %988 = vmatprep.subr.bf16.mxu0 0
    %989 = vmatpush1.bf16.msra.mxu0 0
    %990 = vmatprep.subr.bf16.mxu0 0
    %991 = vmatpush1.bf16.msra.mxu0 0
    %992 = vmatprep.subr.bf16.mxu0 0
    %993 = vmatpush1.bf16.msra.mxu0 0
    %994 = vmatprep.subr.bf16.mxu0 0
    %995 = vmatpush1.bf16.msra.mxu0 0
    %996 = vmatprep.subr.bf16.mxu0 0
    %997 = vmatpush1.bf16.msra.mxu0 0
    %998 = vmatprep.subr.bf16.mxu0 0
    %999 = vmatpush1.bf16.msra.mxu0 0
    %1000 = vmatprep.subr.bf16.mxu0 0
    %1001 = vmatpush1.bf16.msra.mxu0 0
    %1002 = vmatprep.subr.bf16.mxu0 0
    %1003 = vmatpush1.bf16.msra.mxu0 0
    %1004 = vmatprep.subr.bf16.mxu0 0
    %1005 = vmatpush1.bf16.msra.mxu0 0
    %1006 = vmatprep.subr.bf16.mxu0 0
    %1007 = vmatpush1.bf16.msra.mxu0 0
    %1008 = vmatprep.subr.bf16.mxu0 0
    %1009 = vmatpush1.bf16.msra.mxu0 0
    %1010 = vmatprep.subr.bf16.mxu0 0
    %1011 = vmatpush1.bf16.msra.mxu0 0
    %1012 = vmatprep.subr.bf16.mxu0 0
    %1013 = vmatpush1.bf16.msra.mxu0 0
    %1014 = vmatprep.subr.bf16.mxu0 0
    %1015 = vmatpush1.bf16.msra.mxu0 0
    %1016 = vmatprep.subr.bf16.mxu0 0
    %1017 = vmatpush1.bf16.msra.mxu0 0
    %1018 = vmatprep.mubr.bf16.mxu0 0
    %1019 = vmatmul.mubr.bf16.gmra.mrb[0].mxu0 %v981
    %v1020 = vpop.f32.mrb[0].mxu0
    %v1021 = vadd.f32 0.0, %v1020
    %v1022 = vpop.f32.mrb[0].mxu0
    %v1023 = vpop.f32.mrb[0].mxu0
    %v1024 = vpop.f32.mrb[0].mxu0
    %1025 = vdwg.mxu0
    %1026 = vrot.lane.b32.xlu0 %v394, 48
    %v1027 = vpop.permute.xlu0 %1026
    %v1029 = vsel %vm397, %v977, 0
    %v1032 = vsel %vm521, %v1027, 0
    %1034 = vmatprep.subr.bf16.mxu0 0
    %1035 = vmatpush1.bf16.msra.mxu0 %v1032
    %1036 = vmatprep.subr.bf16.mxu0 0
    %1037 = vmatpush1.bf16.msra.mxu0 0
    %1038 = vmatprep.subr.bf16.mxu0 0
    %1039 = vmatpush1.bf16.msra.mxu0 0
    %1040 = vmatprep.subr.bf16.mxu0 0
    %1041 = vmatpush1.bf16.msra.mxu0 0
    %1042 = vmatprep.subr.bf16.mxu0 0
    %1043 = vmatpush1.bf16.msra.mxu0 0
    %1044 = vmatprep.subr.bf16.mxu0 0
    %1045 = vmatpush1.bf16.msra.mxu0 0
    %1046 = vmatprep.subr.bf16.mxu0 0
    %1047 = vmatpush1.bf16.msra.mxu0 0
    %1048 = vmatprep.subr.bf16.mxu0 0
    %1049 = vmatpush1.bf16.msra.mxu0 0
    %1050 = vmatprep.subr.bf16.mxu0 0
    %1051 = vmatpush1.bf16.msra.mxu0 0
    %1052 = vmatprep.subr.bf16.mxu0 0
    %1053 = vmatpush1.bf16.msra.mxu0 0
    %1054 = vmatprep.subr.bf16.mxu0 0
    %1055 = vmatpush1.bf16.msra.mxu0 0
    %1056 = vmatprep.subr.bf16.mxu0 0
    %1057 = vmatpush1.bf16.msra.mxu0 0
    %1058 = vmatprep.subr.bf16.mxu0 0
    %1059 = vmatpush1.bf16.msra.mxu0 0
    %1060 = vmatprep.subr.bf16.mxu0 0
    %1061 = vmatpush1.bf16.msra.mxu0 0
    %1062 = vmatprep.subr.bf16.mxu0 0
    %1063 = vmatpush1.bf16.msra.mxu0 0
    %1064 = vmatprep.subr.bf16.mxu0 0
    %1065 = vmatpush1.bf16.msra.mxu0 0
    %1066 = vmatprep.mubr.bf16.mxu0 0
    %1067 = vmatmul.mubr.bf16.gmra.mrb[0].mxu0 %v1029
    %v1068 = vpop.f32.mrb[0].mxu0
    %v1069 = vadd.f32 0.0, %v1068
    %v1070 = vpop.f32.mrb[0].mxu0
    %v1071 = vpop.f32.mrb[0].mxu0
    %v1072 = vpop.f32.mrb[0].mxu0
    %1073 = vdwg.mxu0
    %v1074 = vpack.c.bf16 %v1021, %v1021
    %v1075 = vpack.c.bf16 %v1069, %v1069
    %v1078 = vunpack.c.l.b16 %v1074
    %v1079 = vunpack.c.l.b16 %v1075
    %v1080 = vpack.c.b16 %v1079, %v1078
    %1081 = vrot.lane.b32.xlu0 %v1080, 16
    %v1082 = vpop.permute.xlu0 %1081
    %vm1084 = vcmask 195712
    %1085 = vst.msk [vmem:[#allocation2] sm:$0xff] %vm1084, %v1082
    %1086 = vrot.lane.b32.xlu0 %v393, 104
    %v1087 = vpop.permute.xlu0 %1086
    %1088 = vrot.lane.b32.xlu0 %v393, 72
    %v1089 = vpop.permute.xlu0 %1088
    %v1091 = vsel %vm397, %v1087, 0
    %v1094 = vsel %vm397, %v1089, 0
    %1096 = vmatprep.subr.bf16.mxu0 0
    %1097 = vmatpush1.bf16.xpose.msra.mxu0 %v1094
    %1098 = vmatprep.subr.bf16.mxu0 0
    %1099 = vmatpush1.bf16.xpose.msra.mxu0 0
    %1100 = vmatprep.subr.bf16.mxu0 0
    %1101 = vmatpush1.bf16.xpose.msra.mxu0 0
    %1102 = vmatprep.subr.bf16.mxu0 0
    %1103 = vmatpush1.bf16.xpose.msra.mxu0 0
    %1104 = vmatprep.subr.bf16.mxu0 0
    %1105 = vmatpush1.bf16.xpose.msra.mxu0 0
    %1106 = vmatprep.subr.bf16.mxu0 0
    %1107 = vmatpush1.bf16.xpose.msra.mxu0 0
    %1108 = vmatprep.subr.bf16.mxu0 0
    %1109 = vmatpush1.bf16.xpose.msra.mxu0 0
    %1110 = vmatprep.subr.bf16.mxu0 0
    %1111 = vmatpush1.bf16.xpose.msra.mxu0 0
    %1112 = vmatprep.subr.bf16.mxu0 0
    %1113 = vmatpush1.bf16.xpose.msra.mxu0 0
    %1114 = vmatprep.subr.bf16.mxu0 0
    %1115 = vmatpush1.bf16.xpose.msra.mxu0 0
    %1116 = vmatprep.subr.bf16.mxu0 0
    %1117 = vmatpush1.bf16.xpose.msra.mxu0 0
    %1118 = vmatprep.subr.bf16.mxu0 0
    %1119 = vmatpush1.bf16.xpose.msra.mxu0 0
    %1120 = vmatprep.subr.bf16.mxu0 0
    %1121 = vmatpush1.bf16.xpose.msra.mxu0 0
    %1122 = vmatprep.subr.bf16.mxu0 0
    %1123 = vmatpush1.bf16.xpose.msra.mxu0 0
    %1124 = vmatprep.subr.bf16.mxu0 0
    %1125 = vmatpush1.bf16.xpose.msra.mxu0 0
    %1126 = vmatprep.subr.bf16.mxu0 0
    %1127 = vmatpush1.bf16.xpose.msra.mxu0 0
    %1128 = vmatprep.mubr.bf16.mxu0 0
    %1129 = vmatmul.mubr.bf16.gmra.mrb[0].mxu0 %v1091
    %v1130 = vpop.f32.mrb[0].mxu0
    %v1131 = vadd.f32 0.0, %v1130
    %v1132 = vpop.f32.mrb[0].mxu0
    %v1133 = vpop.f32.mrb[0].mxu0
    %v1134 = vpop.f32.mrb[0].mxu0
    %1135 = vdwg.mxu0
    %1136 = vrot.lane.b32.xlu0 %v394, 104
    %v1137 = vpop.permute.xlu0 %1136
    %1138 = vrot.lane.b32.xlu0 %v394, 72
    %v1139 = vpop.permute.xlu0 %1138
    %v1141 = vsel %vm397, %v1137, 0
    %v1144 = vsel %vm397, %v1139, 0
    %1146 = vmatprep.subr.bf16.mxu0 0
    %1147 = vmatpush1.bf16.xpose.msra.mxu0 %v1144
    %1148 = vmatprep.subr.bf16.mxu0 0
    %1149 = vmatpush1.bf16.xpose.msra.mxu0 0
    %1150 = vmatprep.subr.bf16.mxu0 0
    %1151 = vmatpush1.bf16.xpose.msra.mxu0 0
    %1152 = vmatprep.subr.bf16.mxu0 0
    %1153 = vmatpush1.bf16.xpose.msra.mxu0 0
    %1154 = vmatprep.subr.bf16.mxu0 0
    %1155 = vmatpush1.bf16.xpose.msra.mxu0 0
    %1156 = vmatprep.subr.bf16.mxu0 0
    %1157 = vmatpush1.bf16.xpose.msra.mxu0 0
    %1158 = vmatprep.subr.bf16.mxu0 0
    %1159 = vmatpush1.bf16.xpose.msra.mxu0 0
    %1160 = vmatprep.subr.bf16.mxu0 0
    %1161 = vmatpush1.bf16.xpose.msra.mxu0 0
    %1162 = vmatprep.subr.bf16.mxu0 0
    %1163 = vmatpush1.bf16.xpose.msra.mxu0 0
    %1164 = vmatprep.subr.bf16.mxu0 0
    %1165 = vmatpush1.bf16.xpose.msra.mxu0 0
    %1166 = vmatprep.subr.bf16.mxu0 0
    %1167 = vmatpush1.bf16.xpose.msra.mxu0 0
    %1168 = vmatprep.subr.bf16.mxu0 0
    %1169 = vmatpush1.bf16.xpose.msra.mxu0 0
    %1170 = vmatprep.subr.bf16.mxu0 0
    %1171 = vmatpush1.bf16.xpose.msra.mxu0 0
    %1172 = vmatprep.subr.bf16.mxu0 0
    %1173 = vmatpush1.bf16.xpose.msra.mxu0 0
    %1174 = vmatprep.subr.bf16.mxu0 0
    %1175 = vmatpush1.bf16.xpose.msra.mxu0 0
    %1176 = vmatprep.subr.bf16.mxu0 0
    %1177 = vmatpush1.bf16.xpose.msra.mxu0 0
    %1178 = vmatprep.mubr.bf16.mxu0 0
    %1179 = vmatmul.mubr.bf16.gmra.mrb[0].mxu0 %v1141
    %v1180 = vpop.f32.mrb[0].mxu0
    %v1181 = vadd.f32 0.0, %v1180
    %v1182 = vpop.f32.mrb[0].mxu0
    %v1183 = vpop.f32.mrb[0].mxu0
    %v1184 = vpop.f32.mrb[0].mxu0
    %1185 = vdwg.mxu0
    %v1186 = vsel %vm397, %v1131, -inf
    %1187 = vmax.xlane.f32.xlu0 %v1186
    %v1188 = vpop.xlane.xlu0 %1187
    %v1189 = vsel %vm397, %v1181, -inf
    %1190 = vmax.xlane.f32.xlu0 %v1189
    %v1191 = vpop.xlane.xlu0 %1190
    %v1192 = vsub.f32 %v1131, %v1188
    %v1193 = vsub.f32 %v1181, %v1191
    %v1194 = vmul.f32 %v1192, 1.442695
    %v1195 = vpow.pop %v1194
    %v1196 = vmul.f32 %v1193, 1.442695
    %v1197 = vpow.pop %v1196
    %v1198 = vsel %vm397, %v1195, 0.0
    %1199 = vadd.xlane.f32.xlu0 %v1198
    %v1200 = vpop.xlane.xlu0 %1199
    %v1201 = vsel %vm397, %v1197, 0.0
    %1202 = vadd.xlane.f32.xlu0 %v1201
    %v1203 = vpop.xlane.xlu0 %1202
    %v1204 = vrcp.pop %v1200
    %v1205 = vrcp.pop %v1203
    %v1206 = vmul.f32 %v1195, %v1204
    %v1207 = vmul.f32 %v1197, %v1205
    %v1208 = vpack.c.bf16 %v1206, %v1206
    %v1209 = vpack.c.bf16 %v1207, %v1207
    %1210 = vrot.lane.b32.xlu0 %v393, 40
    %v1211 = vpop.permute.xlu0 %1210
    %v1213 = vsel %vm397, %v1208, 0
    %v1216 = vsel %vm521, %v1211, 0
    %1218 = vmatprep.subr.bf16.mxu0 0
    %1219 = vmatpush1.bf16.msra.mxu0 %v1216
    %1220 = vmatprep.subr.bf16.mxu0 0
    %1221 = vmatpush1.bf16.msra.mxu0 0
    %1222 = vmatprep.subr.bf16.mxu0 0
    %1223 = vmatpush1.bf16.msra.mxu0 0
    %1224 = vmatprep.subr.bf16.mxu0 0
    %1225 = vmatpush1.bf16.msra.mxu0 0
    %1226 = vmatprep.subr.bf16.mxu0 0
    %1227 = vmatpush1.bf16.msra.mxu0 0
    %1228 = vmatprep.subr.bf16.mxu0 0
    %1229 = vmatpush1.bf16.msra.mxu0 0
    %1230 = vmatprep.subr.bf16.mxu0 0
    %1231 = vmatpush1.bf16.msra.mxu0 0
    %1232 = vmatprep.subr.bf16.mxu0 0
    %1233 = vmatpush1.bf16.msra.mxu0 0
    %1234 = vmatprep.subr.bf16.mxu0 0
    %1235 = vmatpush1.bf16.msra.mxu0 0
    %1236 = vmatprep.subr.bf16.mxu0 0
    %1237 = vmatpush1.bf16.msra.mxu0 0
    %1238 = vmatprep.subr.bf16.mxu0 0
    %1239 = vmatpush1.bf16.msra.mxu0 0
    %1240 = vmatprep.subr.bf16.mxu0 0
    %1241 = vmatpush1.bf16.msra.mxu0 0
    %1242 = vmatprep.subr.bf16.mxu0 0
    %1243 = vmatpush1.bf16.msra.mxu0 0
    %1244 = vmatprep.subr.bf16.mxu0 0
    %1245 = vmatpush1.bf16.msra.mxu0 0
    %1246 = vmatprep.subr.bf16.mxu0 0
    %1247 = vmatpush1.bf16.msra.mxu0 0
    %1248 = vmatprep.subr.bf16.mxu0 0
    %1249 = vmatpush1.bf16.msra.mxu0 0
    %1250 = vmatprep.mubr.bf16.mxu0 0
    %1251 = vmatmul.mubr.bf16.gmra.mrb[0].mxu0 %v1213
    %v1252 = vpop.f32.mrb[0].mxu0
    %v1253 = vadd.f32 0.0, %v1252
    %v1254 = vpop.f32.mrb[0].mxu0
    %v1255 = vpop.f32.mrb[0].mxu0
    %v1256 = vpop.f32.mrb[0].mxu0
    %1257 = vdwg.mxu0
    %1258 = vrot.lane.b32.xlu0 %v394, 40
    %v1259 = vpop.permute.xlu0 %1258
    %v1261 = vsel %vm397, %v1209, 0
    %v1264 = vsel %vm521, %v1259, 0
    %1266 = vmatprep.subr.bf16.mxu0 0
    %1267 = vmatpush1.bf16.msra.mxu0 %v1264
    %1268 = vmatprep.subr.bf16.mxu0 0
    %1269 = vmatpush1.bf16.msra.mxu0 0
    %1270 = vmatprep.subr.bf16.mxu0 0
    %1271 = vmatpush1.bf16.msra.mxu0 0
    %1272 = vmatprep.subr.bf16.mxu0 0
    %1273 = vmatpush1.bf16.msra.mxu0 0
    %1274 = vmatprep.subr.bf16.mxu0 0
    %1275 = vmatpush1.bf16.msra.mxu0 0
    %1276 = vmatprep.subr.bf16.mxu0 0
    %1277 = vmatpush1.bf16.msra.mxu0 0
    %1278 = vmatprep.subr.bf16.mxu0 0
    %1279 = vmatpush1.bf16.msra.mxu0 0
    %1280 = vmatprep.subr.bf16.mxu0 0
    %1281 = vmatpush1.bf16.msra.mxu0 0
    %1282 = vmatprep.subr.bf16.mxu0 0
    %1283 = vmatpush1.bf16.msra.mxu0 0
    %1284 = vmatprep.subr.bf16.mxu0 0
    %1285 = vmatpush1.bf16.msra.mxu0 0
    %1286 = vmatprep.subr.bf16.mxu0 0
    %1287 = vmatpush1.bf16.msra.mxu0 0
    %1288 = vmatprep.subr.bf16.mxu0 0
    %1289 = vmatpush1.bf16.msra.mxu0 0
    %1290 = vmatprep.subr.bf16.mxu0 0
    %1291 = vmatpush1.bf16.msra.mxu0 0
    %1292 = vmatprep.subr.bf16.mxu0 0
    %1293 = vmatpush1.bf16.msra.mxu0 0
    %1294 = vmatprep.subr.bf16.mxu0 0
    %1295 = vmatpush1.bf16.msra.mxu0 0
    %1296 = vmatprep.subr.bf16.mxu0 0
    %1297 = vmatpush1.bf16.msra.mxu0 0
    %1298 = vmatprep.mubr.bf16.mxu0 0
    %1299 = vmatmul.mubr.bf16.gmra.mrb[0].mxu0 %v1261
    %v1300 = vpop.f32.mrb[0].mxu0
    %v1301 = vadd.f32 0.0, %v1300
    %v1302 = vpop.f32.mrb[0].mxu0
    %v1303 = vpop.f32.mrb[0].mxu0
    %v1304 = vpop.f32.mrb[0].mxu0
    %1305 = vdwg.mxu0
    %v1306 = vpack.c.bf16 %v1253, %v1253
    %v1307 = vpack.c.bf16 %v1301, %v1301
    %v1310 = vunpack.c.l.b16 %v1306
    %v1311 = vunpack.c.l.b16 %v1307
    %v1312 = vpack.c.b16 %v1311, %v1310
    %1313 = vrot.lane.b32.xlu0 %v1312, 24
    %v1314 = vpop.permute.xlu0 %1313
    %vm1316 = vcmask 261312
    %1317 = vst.msk [vmem:[#allocation2] sm:$0xff] %vm1316, %v1314
    %v1318 = vld [vmem:[#allocation2] sm:$0xff]
    %v1319 = vld [vmem:[#allocation11] sm:$0xf]
    %v1320 = vld [vmem:[#allocation11 + $0x4] sm:$0xf]
    %v1321 = vld [vmem:[#allocation11 + $0x8] sm:$0xf]
    %v1322 = vld [vmem:[#allocation11 + $0xc] sm:$0xf]
    %v1323 = vld [vmem:[#allocation12] sm:$0x1]
    %v1325 = vlaneseq
    %v1326 = vshrl.u32 %v1325, 7
    %v1327 = vsub.s32 0, %v1326
    %v1328 = vrot.slane %v1323, %v1327
    %v1334 = vunpack.c.l.b16 %v1319
    %v1335 = vunpack.c.l.b16 %v1320
    %v1336 = vunpack.c.l.b16 %v1321
    %v1337 = vunpack.c.l.b16 %v1322
    %v1338 = vpack.c.b16 %v1335, %v1334
    %v1339 = vpack.c.b16 %v1337, %v1336
    %v1343 = vsel %vm344, %v1318, 0
    %1345 = vmatprep.subr.bf16.mxu0 0
    %1346 = vmatpush1.bf16.msra.mxu0 %v1338
    %1347 = vmatprep.subr.bf16.mxu0 0
    %1348 = vmatpush1.bf16.msra.mxu0 %v1339
    %1349 = vmatprep.subr.bf16.mxu0 0
    %1350 = vmatpush1.bf16.msra.mxu0 0
    %1351 = vmatprep.subr.bf16.mxu0 0
    %1352 = vmatpush1.bf16.msra.mxu0 0
    %1353 = vmatprep.subr.bf16.mxu0 0
    %1354 = vmatpush1.bf16.msra.mxu0 0
    %1355 = vmatprep.subr.bf16.mxu0 0
    %1356 = vmatpush1.bf16.msra.mxu0 0
    %1357 = vmatprep.subr.bf16.mxu0 0
    %1358 = vmatpush1.bf16.msra.mxu0 0
    %1359 = vmatprep.subr.bf16.mxu0 0
    %1360 = vmatpush1.bf16.msra.mxu0 0
    %1361 = vmatprep.subr.bf16.mxu0 0
    %1362 = vmatpush1.bf16.msra.mxu0 0
    %1363 = vmatprep.subr.bf16.mxu0 0
    %1364 = vmatpush1.bf16.msra.mxu0 0
    %1365 = vmatprep.subr.bf16.mxu0 0
    %1366 = vmatpush1.bf16.msra.mxu0 0
    %1367 = vmatprep.subr.bf16.mxu0 0
    %1368 = vmatpush1.bf16.msra.mxu0 0
    %1369 = vmatprep.subr.bf16.mxu0 0
    %1370 = vmatpush1.bf16.msra.mxu0 0
    %1371 = vmatprep.subr.bf16.mxu0 0
    %1372 = vmatpush1.bf16.msra.mxu0 0
    %1373 = vmatprep.subr.bf16.mxu0 0
    %1374 = vmatpush1.bf16.msra.mxu0 0
    %1375 = vmatprep.subr.bf16.mxu0 0
    %1376 = vmatpush1.bf16.msra.mxu0 0
    %1377 = vmatprep.mubr.bf16.mxu0 0
    %1378 = vmatmul.mubr.bf16.gmra.mrb[0].mxu0 %v1343
    %v1379 = vpop.f32.mrb[0].mxu0
    %v1380 = vadd.f32 %v1328, %v1379
    %v1381 = vpop.f32.mrb[0].mxu0
    %v1382 = vpop.f32.mrb[0].mxu0
    %v1383 = vadd.f32 %v1328, %v1382
    %v1384 = vpop.f32.mrb[0].mxu0
    %1385 = vdwg.mxu0
    %v1386 = vadd.f32 %v316, %v1380
    %v1387 = vadd.f32 %v317, %v1383
    %v1388 = vpack.c.bf16 %v1387, %v1386
    %v1389 = vpack.c.bf16 %v319, %v318
    %v1390 = vld [vmem:[#allocation14] sm:$0xf]
    %v1391 = vld [vmem:[#allocation14 + $0x4] sm:$0xf]
    %v1392 = vld [vmem:[#allocation14 + $0x8] sm:$0xf]
    %v1393 = vld [vmem:[#allocation14 + $0xc] sm:$0xf]
    %v1394 = vld [vmem:[#allocation15] sm:$0x1]
    %v1396 = vlaneseq
    %v1397 = vshrl.u32 %v1396, 7
    %v1398 = vsub.s32 0, %v1397
    %v1399 = vrot.slane %v1394, %v1398
    %v1405 = vunpack.c.l.b16 %v1390
    %v1406 = vunpack.c.l.b16 %v1391
    %v1407 = vunpack.c.l.b16 %v1392
    %v1408 = vunpack.c.l.b16 %v1393
    %v1409 = vpack.c.b16 %v1406, %v1405
    %v1410 = vpack.c.b16 %v1408, %v1407
    %v1414 = vsel %vm344, %v1388, 0
    %1416 = vmatprep.subr.bf16.mxu0 0
    %1417 = vmatpush1.bf16.msra.mxu0 %v1409
    %1418 = vmatprep.subr.bf16.mxu0 0
    %1419 = vmatpush1.bf16.msra.mxu0 %v1410
    %1420 = vmatprep.subr.bf16.mxu0 0
    %1421 = vmatpush1.bf16.msra.mxu0 0
    %1422 = vmatprep.subr.bf16.mxu0 0
    %1423 = vmatpush1.bf16.msra.mxu0 0
    %1424 = vmatprep.subr.bf16.mxu0 0
    %1425 = vmatpush1.bf16.msra.mxu0 0
    %1426 = vmatprep.subr.bf16.mxu0 0
    %1427 = vmatpush1.bf16.msra.mxu0 0
    %1428 = vmatprep.subr.bf16.mxu0 0
    %1429 = vmatpush1.bf16.msra.mxu0 0
    %1430 = vmatprep.subr.bf16.mxu0 0
    %1431 = vmatpush1.bf16.msra.mxu0 0
    %1432 = vmatprep.subr.bf16.mxu0 0
    %1433 = vmatpush1.bf16.msra.mxu0 0
    %1434 = vmatprep.subr.bf16.mxu0 0
    %1435 = vmatpush1.bf16.msra.mxu0 0
    %1436 = vmatprep.subr.bf16.mxu0 0
    %1437 = vmatpush1.bf16.msra.mxu0 0
    %1438 = vmatprep.subr.bf16.mxu0 0
    %1439 = vmatpush1.bf16.msra.mxu0 0
    %1440 = vmatprep.subr.bf16.mxu0 0
    %1441 = vmatpush1.bf16.msra.mxu0 0
    %1442 = vmatprep.subr.bf16.mxu0 0
    %1443 = vmatpush1.bf16.msra.mxu0 0
    %1444 = vmatprep.subr.bf16.mxu0 0
    %1445 = vmatpush1.bf16.msra.mxu0 0
    %1446 = vmatprep.subr.bf16.mxu0 0
    %1447 = vmatpush1.bf16.msra.mxu0 0
    %1448 = vmatprep.mubr.bf16.mxu0 0
    %1449 = vmatmul.mubr.bf16.gmra.mrb[0].mxu0 %v1414
    %v1450 = vpop.f32.mrb[0].mxu0
    %v1451 = vadd.f32 %v1399, %v1450
    %v1452 = vpop.f32.mrb[0].mxu0
    %v1453 = vpop.f32.mrb[0].mxu0
    %v1454 = vadd.f32 %v1399, %v1453
    %v1455 = vpop.f32.mrb[0].mxu0
    %1456 = vdwg.mxu0
    %v1457 = vpack.c.bf16 %v1454, %v1451
    %v1459 = vunpack.c.l.b16 %v1457
    %v1460 = vunpack.c.h.b16 %v1457
    %v1461 = vpack.c.b16 %v1459, %v1459
    %v1462 = vpack.c.b16 %v1460, %v1460
    %v1463 = vld [vmem:[#allocation17] sm:$0xf]
    %v1464 = vld [vmem:[#allocation17 + $0x4] sm:$0xf]
    %v1465 = vld [vmem:[#allocation17 + $0x8] sm:$0xf]
    %v1466 = vld [vmem:[#allocation17 + $0xc] sm:$0xf]
    %v1467 = vld [vmem:[#allocation18] sm:$0x1]
    %v1469 = vlaneseq
    %v1470 = vshrl.u32 %v1469, 7
    %v1471 = vsub.s32 0, %v1470
    %v1472 = vrot.slane %v1467, %v1471
    %v1478 = vunpack.c.l.b16 %v1463
    %v1479 = vunpack.c.l.b16 %v1464
    %v1480 = vunpack.c.l.b16 %v1465
    %v1481 = vunpack.c.l.b16 %v1466
    %v1482 = vpack.c.b16 %v1479, %v1478
    %v1483 = vpack.c.b16 %v1481, %v1480
    %v1487 = vsel %vm344, %v1389, 0
    %1489 = vmatprep.subr.bf16.mxu0 0
    %1490 = vmatpush1.bf16.msra.mxu0 %v1482
    %1491 = vmatprep.subr.bf16.mxu0 0
    %1492 = vmatpush1.bf16.msra.mxu0 %v1483
    %1493 = vmatprep.subr.bf16.mxu0 0
    %1494 = vmatpush1.bf16.msra.mxu0 0
    %1495 = vmatprep.subr.bf16.mxu0 0
    %1496 = vmatpush1.bf16.msra.mxu0 0
    %1497 = vmatprep.subr.bf16.mxu0 0
    %1498 = vmatpush1.bf16.msra.mxu0 0
    %1499 = vmatprep.subr.bf16.mxu0 0
    %1500 = vmatpush1.bf16.msra.mxu0 0
    %1501 = vmatprep.subr.bf16.mxu0 0
    %1502 = vmatpush1.bf16.msra.mxu0 0
    %1503 = vmatprep.subr.bf16.mxu0 0
    %1504 = vmatpush1.bf16.msra.mxu0 0
    %1505 = vmatprep.subr.bf16.mxu0 0
    %1506 = vmatpush1.bf16.msra.mxu0 0
    %1507 = vmatprep.subr.bf16.mxu0 0
    %1508 = vmatpush1.bf16.msra.mxu0 0
    %1509 = vmatprep.subr.bf16.mxu0 0
    %1510 = vmatpush1.bf16.msra.mxu0 0
    %1511 = vmatprep.subr.bf16.mxu0 0
    %1512 = vmatpush1.bf16.msra.mxu0 0
    %1513 = vmatprep.subr.bf16.mxu0 0
    %1514 = vmatpush1.bf16.msra.mxu0 0
    %1515 = vmatprep.subr.bf16.mxu0 0
    %1516 = vmatpush1.bf16.msra.mxu0 0
    %1517 = vmatprep.subr.bf16.mxu0 0
    %1518 = vmatpush1.bf16.msra.mxu0 0
    %1519 = vmatprep.subr.bf16.mxu0 0
    %1520 = vmatpush1.bf16.msra.mxu0 0
    %1521 = vmatprep.mubr.bf16.mxu0 0
    %1522 = vmatmul.mubr.bf16.gmra.mrb[0].mxu0 %v1487
    %v1523 = vpop.f32.mrb[0].mxu0
    %v1524 = vadd.f32 %v1472, %v1523
    %v1525 = vpop.f32.mrb[0].mxu0
    %v1526 = vpop.f32.mrb[0].mxu0
    %v1527 = vadd.f32 %v1472, %v1526
    %v1528 = vpop.f32.mrb[0].mxu0
    %1529 = vdwg.mxu0
    %v1530 = vpack.c.bf16 %v1527, %v1524
    %v1532 = vunpack.c.l.b16 %v1530
    %v1533 = vunpack.c.h.b16 %v1530
    %v1534 = vpack.c.b16 %v1532, %v1532
    %v1535 = vpack.c.b16 %v1533, %v1533
    %v1537 = vsel %vm397, %v1461, 0
    %v1540 = vsel %vm397, %v1534, 0
    %1542 = vmatprep.subr.bf16.mxu0 0
    %1543 = vmatpush1.bf16.xpose.msra.mxu0 %v1540
    %1544 = vmatprep.subr.bf16.mxu0 0
    %1545 = vmatpush1.bf16.xpose.msra.mxu0 0
    %1546 = vmatprep.subr.bf16.mxu0 0
    %1547 = vmatpush1.bf16.xpose.msra.mxu0 0
    %1548 = vmatprep.subr.bf16.mxu0 0
    %1549 = vmatpush1.bf16.xpose.msra.mxu0 0
    %1550 = vmatprep.subr.bf16.mxu0 0
    %1551 = vmatpush1.bf16.xpose.msra.mxu0 0
    %1552 = vmatprep.subr.bf16.mxu0 0
    %1553 = vmatpush1.bf16.xpose.msra.mxu0 0
    %1554 = vmatprep.subr.bf16.mxu0 0
    %1555 = vmatpush1.bf16.xpose.msra.mxu0 0
    %1556 = vmatprep.subr.bf16.mxu0 0
    %1557 = vmatpush1.bf16.xpose.msra.mxu0 0
    %1558 = vmatprep.subr.bf16.mxu0 0
    %1559 = vmatpush1.bf16.xpose.msra.mxu0 0
    %1560 = vmatprep.subr.bf16.mxu0 0
    %1561 = vmatpush1.bf16.xpose.msra.mxu0 0
    %1562 = vmatprep.subr.bf16.mxu0 0
    %1563 = vmatpush1.bf16.xpose.msra.mxu0 0
    %1564 = vmatprep.subr.bf16.mxu0 0
    %1565 = vmatpush1.bf16.xpose.msra.mxu0 0
    %1566 = vmatprep.subr.bf16.mxu0 0
    %1567 = vmatpush1.bf16.xpose.msra.mxu0 0
    %1568 = vmatprep.subr.bf16.mxu0 0
    %1569 = vmatpush1.bf16.xpose.msra.mxu0 0
    %1570 = vmatprep.subr.bf16.mxu0 0
    %1571 = vmatpush1.bf16.xpose.msra.mxu0 0
    %1572 = vmatprep.subr.bf16.mxu0 0
    %1573 = vmatpush1.bf16.xpose.msra.mxu0 0
    %1574 = vmatprep.mubr.bf16.mxu0 0
    %1575 = vmatmul.mubr.bf16.gmra.mrb[0].mxu0 %v1537
    %v1576 = vpop.f32.mrb[0].mxu0
    %v1577 = vadd.f32 0.0, %v1576
    %v1578 = vpop.f32.mrb[0].mxu0
    %v1579 = vpop.f32.mrb[0].mxu0
    %v1580 = vpop.f32.mrb[0].mxu0
    %1581 = vdwg.mxu0
    %v1583 = vsel %vm397, %v1462, 0
    %v1586 = vsel %vm397, %v1535, 0
    %1588 = vmatprep.subr.bf16.mxu0 0
    %1589 = vmatpush1.bf16.xpose.msra.mxu0 %v1586
    %1590 = vmatprep.subr.bf16.mxu0 0
    %1591 = vmatpush1.bf16.xpose.msra.mxu0 0
    %1592 = vmatprep.subr.bf16.mxu0 0
    %1593 = vmatpush1.bf16.xpose.msra.mxu0 0
    %1594 = vmatprep.subr.bf16.mxu0 0
    %1595 = vmatpush1.bf16.xpose.msra.mxu0 0
    %1596 = vmatprep.subr.bf16.mxu0 0
    %1597 = vmatpush1.bf16.xpose.msra.mxu0 0
    %1598 = vmatprep.subr.bf16.mxu0 0
    %1599 = vmatpush1.bf16.xpose.msra.mxu0 0
    %1600 = vmatprep.subr.bf16.mxu0 0
    %1601 = vmatpush1.bf16.xpose.msra.mxu0 0
    %1602 = vmatprep.subr.bf16.mxu0 0
    %1603 = vmatpush1.bf16.xpose.msra.mxu0 0
    %1604 = vmatprep.subr.bf16.mxu0 0
    %1605 = vmatpush1.bf16.xpose.msra.mxu0 0
    %1606 = vmatprep.subr.bf16.mxu0 0
    %1607 = vmatpush1.bf16.xpose.msra.mxu0 0
    %1608 = vmatprep.subr.bf16.mxu0 0
    %1609 = vmatpush1.bf16.xpose.msra.mxu0 0
    %1610 = vmatprep.subr.bf16.mxu0 0
    %1611 = vmatpush1.bf16.xpose.msra.mxu0 0
    %1612 = vmatprep.subr.bf16.mxu0 0
    %1613 = vmatpush1.bf16.xpose.msra.mxu0 0
    %1614 = vmatprep.subr.bf16.mxu0 0
    %1615 = vmatpush1.bf16.xpose.msra.mxu0 0
    %1616 = vmatprep.subr.bf16.mxu0 0
    %1617 = vmatpush1.bf16.xpose.msra.mxu0 0
    %1618 = vmatprep.subr.bf16.mxu0 0
    %1619 = vmatpush1.bf16.xpose.msra.mxu0 0
    %1620 = vmatprep.mubr.bf16.mxu0 0
    %1621 = vmatmul.mubr.bf16.gmra.mrb[0].mxu0 %v1583
    %v1622 = vpop.f32.mrb[0].mxu0
    %v1623 = vadd.f32 0.0, %v1622
    %v1624 = vpop.f32.mrb[0].mxu0
    %v1625 = vpop.f32.mrb[0].mxu0
    %v1626 = vpop.f32.mrb[0].mxu0
    %1627 = vdwg.mxu0
    %v1628 = vsel %vm397, %v1577, -inf
    %1629 = vmax.xlane.f32.xlu0 %v1628
    %v1630 = vpop.xlane.xlu0 %1629
    %v1631 = vsel %vm397, %v1623, -inf
    %1632 = vmax.xlane.f32.xlu0 %v1631
    %v1633 = vpop.xlane.xlu0 %1632
    %v1634 = vsub.f32 %v1577, %v1630
    %v1635 = vsub.f32 %v1623, %v1633
    %v1636 = vmul.f32 %v1634, 1.442695
    %v1637 = vpow.pop %v1636
    %v1638 = vmul.f32 %v1635, 1.442695
    %v1639 = vpow.pop %v1638
    %v1640 = vsel %vm397, %v1637, 0.0
    %1641 = vadd.xlane.f32.xlu0 %v1640
    %v1642 = vpop.xlane.xlu0 %1641
    %v1643 = vsel %vm397, %v1639, 0.0
    %1644 = vadd.xlane.f32.xlu0 %v1643
    %v1645 = vpop.xlane.xlu0 %1644
    %v1646 = vrcp.pop %v1642
    %v1647 = vrcp.pop %v1645
    %v1648 = vmul.f32 %v1637, %v1646
    %v1649 = vmul.f32 %v1639, %v1647
    %v1650 = vpack.c.bf16 %v1648, %v1648
    %v1651 = vpack.c.bf16 %v1649, %v1649
    %1652 = vrot.lane.b32.xlu0 %v1534, 96
    %v1653 = vpop.permute.xlu0 %1652
    %v1655 = vsel %vm397, %v1650, 0
    %v1658 = vsel %vm521, %v1653, 0
    %1660 = vmatprep.subr.bf16.mxu0 0
    %1661 = vmatpush1.bf16.msra.mxu0 %v1658
    %1662 = vmatprep.subr.bf16.mxu0 0
    %1663 = vmatpush1.bf16.msra.mxu0 0
    %1664 = vmatprep.subr.bf16.mxu0 0
    %1665 = vmatpush1.bf16.msra.mxu0 0
    %1666 = vmatprep.subr.bf16.mxu0 0
    %1667 = vmatpush1.bf16.msra.mxu0 0
    %1668 = vmatprep.subr.bf16.mxu0 0
    %1669 = vmatpush1.bf16.msra.mxu0 0
    %1670 = vmatprep.subr.bf16.mxu0 0
    %1671 = vmatpush1.bf16.msra.mxu0 0
    %1672 = vmatprep.subr.bf16.mxu0 0
    %1673 = vmatpush1.bf16.msra.mxu0 0
    %1674 = vmatprep.subr.bf16.mxu0 0
    %1675 = vmatpush1.bf16.msra.mxu0 0
    %1676 = vmatprep.subr.bf16.mxu0 0
    %1677 = vmatpush1.bf16.msra.mxu0 0
    %1678 = vmatprep.subr.bf16.mxu0 0
    %1679 = vmatpush1.bf16.msra.mxu0 0
    %1680 = vmatprep.subr.bf16.mxu0 0
    %1681 = vmatpush1.bf16.msra.mxu0 0
    %1682 = vmatprep.subr.bf16.mxu0 0
    %1683 = vmatpush1.bf16.msra.mxu0 0
    %1684 = vmatprep.subr.bf16.mxu0 0
    %1685 = vmatpush1.bf16.msra.mxu0 0
    %1686 = vmatprep.subr.bf16.mxu0 0
    %1687 = vmatpush1.bf16.msra.mxu0 0
    %1688 = vmatprep.subr.bf16.mxu0 0
    %1689 = vmatpush1.bf16.msra.mxu0 0
    %1690 = vmatprep.subr.bf16.mxu0 0
    %1691 = vmatpush1.bf16.msra.mxu0 0
    %1692 = vmatprep.mubr.bf16.mxu0 0
    %1693 = vmatmul.mubr.bf16.gmra.mrb[0].mxu0 %v1655
    %v1694 = vpop.f32.mrb[0].mxu0
    %v1695 = vadd.f32 0.0, %v1694
    %v1696 = vpop.f32.mrb[0].mxu0
    %v1697 = vpop.f32.mrb[0].mxu0
    %v1698 = vpop.f32.mrb[0].mxu0
    %1699 = vdwg.mxu0
    %1700 = vrot.lane.b32.xlu0 %v1535, 96
    %v1701 = vpop.permute.xlu0 %1700
    %v1703 = vsel %vm397, %v1651, 0
    %v1706 = vsel %vm521, %v1701, 0
    %1708 = vmatprep.subr.bf16.mxu0 0
    %1709 = vmatpush1.bf16.msra.mxu0 %v1706
    %1710 = vmatprep.subr.bf16.mxu0 0
    %1711 = vmatpush1.bf16.msra.mxu0 0
    %1712 = vmatprep.subr.bf16.mxu0 0
    %1713 = vmatpush1.bf16.msra.mxu0 0
    %1714 = vmatprep.subr.bf16.mxu0 0
    %1715 = vmatpush1.bf16.msra.mxu0 0
    %1716 = vmatprep.subr.bf16.mxu0 0
    %1717 = vmatpush1.bf16.msra.mxu0 0
    %1718 = vmatprep.subr.bf16.mxu0 0
    %1719 = vmatpush1.bf16.msra.mxu0 0
    %1720 = vmatprep.subr.bf16.mxu0 0
    %1721 = vmatpush1.bf16.msra.mxu0 0
    %1722 = vmatprep.subr.bf16.mxu0 0
    %1723 = vmatpush1.bf16.msra.mxu0 0
    %1724 = vmatprep.subr.bf16.mxu0 0
    %1725 = vmatpush1.bf16.msra.mxu0 0
    %1726 = vmatprep.subr.bf16.mxu0 0
    %1727 = vmatpush1.bf16.msra.mxu0 0
    %1728 = vmatprep.subr.bf16.mxu0 0
    %1729 = vmatpush1.bf16.msra.mxu0 0
    %1730 = vmatprep.subr.bf16.mxu0 0
    %1731 = vmatpush1.bf16.msra.mxu0 0
    %1732 = vmatprep.subr.bf16.mxu0 0
    %1733 = vmatpush1.bf16.msra.mxu0 0
    %1734 = vmatprep.subr.bf16.mxu0 0
    %1735 = vmatpush1.bf16.msra.mxu0 0
    %1736 = vmatprep.subr.bf16.mxu0 0
    %1737 = vmatpush1.bf16.msra.mxu0 0
    %1738 = vmatprep.subr.bf16.mxu0 0
    %1739 = vmatpush1.bf16.msra.mxu0 0
    %1740 = vmatprep.mubr.bf16.mxu0 0
    %1741 = vmatmul.mubr.bf16.gmra.mrb[0].mxu0 %v1703
    %v1742 = vpop.f32.mrb[0].mxu0
    %v1743 = vadd.f32 0.0, %v1742
    %v1744 = vpop.f32.mrb[0].mxu0
    %v1745 = vpop.f32.mrb[0].mxu0
    %v1746 = vpop.f32.mrb[0].mxu0
    %1747 = vdwg.mxu0
    %v1748 = vpack.c.bf16 %v1695, %v1695
    %v1749 = vpack.c.bf16 %v1743, %v1743
    %v1752 = vunpack.c.l.b16 %v1748
    %v1753 = vunpack.c.l.b16 %v1749
    %v1754 = vpack.c.b16 %v1753, %v1752
    %1756 = vst.msk [vmem:[#allocation2] sm:$0xff] %vm397, %v1754
    %1757 = vrot.lane.b32.xlu0 %v1461, 120
    %v1758 = vpop.permute.xlu0 %1757
    %1759 = vrot.lane.b32.xlu0 %v1534, 120
    %v1760 = vpop.permute.xlu0 %1759
    %v1762 = vsel %vm397, %v1758, 0
    %v1765 = vsel %vm397, %v1760, 0
    %1767 = vmatprep.subr.bf16.mxu0 0
    %1768 = vmatpush1.bf16.xpose.msra.mxu0 %v1765
    %1769 = vmatprep.subr.bf16.mxu0 0
    %1770 = vmatpush1.bf16.xpose.msra.mxu0 0
    %1771 = vmatprep.subr.bf16.mxu0 0
    %1772 = vmatpush1.bf16.xpose.msra.mxu0 0
    %1773 = vmatprep.subr.bf16.mxu0 0
    %1774 = vmatpush1.bf16.xpose.msra.mxu0 0
    %1775 = vmatprep.subr.bf16.mxu0 0
    %1776 = vmatpush1.bf16.xpose.msra.mxu0 0
    %1777 = vmatprep.subr.bf16.mxu0 0
    %1778 = vmatpush1.bf16.xpose.msra.mxu0 0
    %1779 = vmatprep.subr.bf16.mxu0 0
    %1780 = vmatpush1.bf16.xpose.msra.mxu0 0
    %1781 = vmatprep.subr.bf16.mxu0 0
    %1782 = vmatpush1.bf16.xpose.msra.mxu0 0
    %1783 = vmatprep.subr.bf16.mxu0 0
    %1784 = vmatpush1.bf16.xpose.msra.mxu0 0
    %1785 = vmatprep.subr.bf16.mxu0 0
    %1786 = vmatpush1.bf16.xpose.msra.mxu0 0
    %1787 = vmatprep.subr.bf16.mxu0 0
    %1788 = vmatpush1.bf16.xpose.msra.mxu0 0
    %1789 = vmatprep.subr.bf16.mxu0 0
    %1790 = vmatpush1.bf16.xpose.msra.mxu0 0
    %1791 = vmatprep.subr.bf16.mxu0 0
    %1792 = vmatpush1.bf16.xpose.msra.mxu0 0
    %1793 = vmatprep.subr.bf16.mxu0 0
    %1794 = vmatpush1.bf16.xpose.msra.mxu0 0
    %1795 = vmatprep.subr.bf16.mxu0 0
    %1796 = vmatpush1.bf16.xpose.msra.mxu0 0
    %1797 = vmatprep.subr.bf16.mxu0 0
    %1798 = vmatpush1.bf16.xpose.msra.mxu0 0
    %1799 = vmatprep.mubr.bf16.mxu0 0
    %1800 = vmatmul.mubr.bf16.gmra.mrb[0].mxu0 %v1762
    %v1801 = vpop.f32.mrb[0].mxu0
    %v1802 = vadd.f32 0.0, %v1801
    %v1803 = vpop.f32.mrb[0].mxu0
    %v1804 = vpop.f32.mrb[0].mxu0
    %v1805 = vpop.f32.mrb[0].mxu0
    %1806 = vdwg.mxu0
    %1807 = vrot.lane.b32.xlu0 %v1462, 120
    %v1808 = vpop.permute.xlu0 %1807
    %1809 = vrot.lane.b32.xlu0 %v1535, 120
    %v1810 = vpop.permute.xlu0 %1809
    %v1812 = vsel %vm397, %v1808, 0
    %v1815 = vsel %vm397, %v1810, 0
    %1817 = vmatprep.subr.bf16.mxu0 0
    %1818 = vmatpush1.bf16.xpose.msra.mxu0 %v1815
    %1819 = vmatprep.subr.bf16.mxu0 0
    %1820 = vmatpush1.bf16.xpose.msra.mxu0 0
    %1821 = vmatprep.subr.bf16.mxu0 0
    %1822 = vmatpush1.bf16.xpose.msra.mxu0 0
    %1823 = vmatprep.subr.bf16.mxu0 0
    %1824 = vmatpush1.bf16.xpose.msra.mxu0 0
    %1825 = vmatprep.subr.bf16.mxu0 0
    %1826 = vmatpush1.bf16.xpose.msra.mxu0 0
    %1827 = vmatprep.subr.bf16.mxu0 0
    %1828 = vmatpush1.bf16.xpose.msra.mxu0 0
    %1829 = vmatprep.subr.bf16.mxu0 0
    %1830 = vmatpush1.bf16.xpose.msra.mxu0 0
    %1831 = vmatprep.subr.bf16.mxu0 0
    %1832 = vmatpush1.bf16.xpose.msra.mxu0 0
    %1833 = vmatprep.subr.bf16.mxu0 0
    %1834 = vmatpush1.bf16.xpose.msra.mxu0 0
    %1835 = vmatprep.subr.bf16.mxu0 0
    %1836 = vmatpush1.bf16.xpose.msra.mxu0 0
    %1837 = vmatprep.subr.bf16.mxu0 0
    %1838 = vmatpush1.bf16.xpose.msra.mxu0 0
    %1839 = vmatprep.subr.bf16.mxu0 0
    %1840 = vmatpush1.bf16.xpose.msra.mxu0 0
    %1841 = vmatprep.subr.bf16.mxu0 0
    %1842 = vmatpush1.bf16.xpose.msra.mxu0 0
    %1843 = vmatprep.subr.bf16.mxu0 0
    %1844 = vmatpush1.bf16.xpose.msra.mxu0 0
    %1845 = vmatprep.subr.bf16.mxu0 0
    %1846 = vmatpush1.bf16.xpose.msra.mxu0 0
    %1847 = vmatprep.subr.bf16.mxu0 0
    %1848 = vmatpush1.bf16.xpose.msra.mxu0 0
    %1849 = vmatprep.mubr.bf16.mxu0 0
    %1850 = vmatmul.mubr.bf16.gmra.mrb[0].mxu0 %v1812
    %v1851 = vpop.f32.mrb[0].mxu0
    %v1852 = vadd.f32 0.0, %v1851
    %v1853 = vpop.f32.mrb[0].mxu0
    %v1854 = vpop.f32.mrb[0].mxu0
    %v1855 = vpop.f32.mrb[0].mxu0
    %1856 = vdwg.mxu0
    %v1857 = vsel %vm397, %v1802, -inf
    %1858 = vmax.xlane.f32.xlu0 %v1857
    %v1859 = vpop.xlane.xlu0 %1858
    %v1860 = vsel %vm397, %v1852, -inf
    %1861 = vmax.xlane.f32.xlu0 %v1860
    %v1862 = vpop.xlane.xlu0 %1861
    %v1863 = vsub.f32 %v1802, %v1859
    %v1864 = vsub.f32 %v1852, %v1862
    %v1865 = vmul.f32 %v1863, 1.442695
    %v1866 = vpow.pop %v1865
    %v1867 = vmul.f32 %v1864, 1.442695
    %v1868 = vpow.pop %v1867
    %v1869 = vsel %vm397, %v1866, 0.0
    %1870 = vadd.xlane.f32.xlu0 %v1869
    %v1871 = vpop.xlane.xlu0 %1870
    %v1872 = vsel %vm397, %v1868, 0.0
    %1873 = vadd.xlane.f32.xlu0 %v1872
    %v1874 = vpop.xlane.xlu0 %1873
    %v1875 = vrcp.pop %v1871
    %v1876 = vrcp.pop %v1874
    %v1877 = vmul.f32 %v1866, %v1875
    %v1878 = vmul.f32 %v1868, %v1876
    %v1879 = vpack.c.bf16 %v1877, %v1877
    %v1880 = vpack.c.bf16 %v1878, %v1878
    %1881 = vrot.lane.b32.xlu0 %v1534, 88
    %v1882 = vpop.permute.xlu0 %1881
    %v1884 = vsel %vm397, %v1879, 0
    %v1887 = vsel %vm521, %v1882, 0
    %1889 = vmatprep.subr.bf16.mxu0 0
    %1890 = vmatpush1.bf16.msra.mxu0 %v1887
    %1891 = vmatprep.subr.bf16.mxu0 0
    %1892 = vmatpush1.bf16.msra.mxu0 0
    %1893 = vmatprep.subr.bf16.mxu0 0
    %1894 = vmatpush1.bf16.msra.mxu0 0
    %1895 = vmatprep.subr.bf16.mxu0 0
    %1896 = vmatpush1.bf16.msra.mxu0 0
    %1897 = vmatprep.subr.bf16.mxu0 0
    %1898 = vmatpush1.bf16.msra.mxu0 0
    %1899 = vmatprep.subr.bf16.mxu0 0
    %1900 = vmatpush1.bf16.msra.mxu0 0
    %1901 = vmatprep.subr.bf16.mxu0 0
    %1902 = vmatpush1.bf16.msra.mxu0 0
    %1903 = vmatprep.subr.bf16.mxu0 0
    %1904 = vmatpush1.bf16.msra.mxu0 0
    %1905 = vmatprep.subr.bf16.mxu0 0
    %1906 = vmatpush1.bf16.msra.mxu0 0
    %1907 = vmatprep.subr.bf16.mxu0 0
    %1908 = vmatpush1.bf16.msra.mxu0 0
    %1909 = vmatprep.subr.bf16.mxu0 0
    %1910 = vmatpush1.bf16.msra.mxu0 0
    %1911 = vmatprep.subr.bf16.mxu0 0
    %1912 = vmatpush1.bf16.msra.mxu0 0
    %1913 = vmatprep.subr.bf16.mxu0 0
    %1914 = vmatpush1.bf16.msra.mxu0 0
    %1915 = vmatprep.subr.bf16.mxu0 0
    %1916 = vmatpush1.bf16.msra.mxu0 0
    %1917 = vmatprep.subr.bf16.mxu0 0
    %1918 = vmatpush1.bf16.msra.mxu0 0
    %1919 = vmatprep.subr.bf16.mxu0 0
    %1920 = vmatpush1.bf16.msra.mxu0 0
    %1921 = vmatprep.mubr.bf16.mxu0 0
    %1922 = vmatmul.mubr.bf16.gmra.mrb[0].mxu0 %v1884
    %v1923 = vpop.f32.mrb[0].mxu0
    %v1924 = vadd.f32 0.0, %v1923
    %v1925 = vpop.f32.mrb[0].mxu0
    %v1926 = vpop.f32.mrb[0].mxu0
    %v1927 = vpop.f32.mrb[0].mxu0
    %1928 = vdwg.mxu0
    %1929 = vrot.lane.b32.xlu0 %v1535, 88
    %v1930 = vpop.permute.xlu0 %1929
    %v1932 = vsel %vm397, %v1880, 0
    %v1935 = vsel %vm521, %v1930, 0
    %1937 = vmatprep.subr.bf16.mxu0 0
    %1938 = vmatpush1.bf16.msra.mxu0 %v1935
    %1939 = vmatprep.subr.bf16.mxu0 0
    %1940 = vmatpush1.bf16.msra.mxu0 0
    %1941 = vmatprep.subr.bf16.mxu0 0
    %1942 = vmatpush1.bf16.msra.mxu0 0
    %1943 = vmatprep.subr.bf16.mxu0 0
    %1944 = vmatpush1.bf16.msra.mxu0 0
    %1945 = vmatprep.subr.bf16.mxu0 0
    %1946 = vmatpush1.bf16.msra.mxu0 0
    %1947 = vmatprep.subr.bf16.mxu0 0
    %1948 = vmatpush1.bf16.msra.mxu0 0
    %1949 = vmatprep.subr.bf16.mxu0 0
    %1950 = vmatpush1.bf16.msra.mxu0 0
    %1951 = vmatprep.subr.bf16.mxu0 0
    %1952 = vmatpush1.bf16.msra.mxu0 0
    %1953 = vmatprep.subr.bf16.mxu0 0
    %1954 = vmatpush1.bf16.msra.mxu0 0
    %1955 = vmatprep.subr.bf16.mxu0 0
    %1956 = vmatpush1.bf16.msra.mxu0 0
    %1957 = vmatprep.subr.bf16.mxu0 0
    %1958 = vmatpush1.bf16.msra.mxu0 0
    %1959 = vmatprep.subr.bf16.mxu0 0
    %1960 = vmatpush1.bf16.msra.mxu0 0
    %1961 = vmatprep.subr.bf16.mxu0 0
    %1962 = vmatpush1.bf16.msra.mxu0 0
    %1963 = vmatprep.subr.bf16.mxu0 0
    %1964 = vmatpush1.bf16.msra.mxu0 0
    %1965 = vmatprep.subr.bf16.mxu0 0
    %1966 = vmatpush1.bf16.msra.mxu0 0
    %1967 = vmatprep.subr.bf16.mxu0 0
    %1968 = vmatpush1.bf16.msra.mxu0 0
    %1969 = vmatprep.mubr.bf16.mxu0 0
    %1970 = vmatmul.mubr.bf16.gmra.mrb[0].mxu0 %v1932
    %v1971 = vpop.f32.mrb[0].mxu0
    %v1972 = vadd.f32 0.0, %v1971
    %v1973 = vpop.f32.mrb[0].mxu0
    %v1974 = vpop.f32.mrb[0].mxu0
    %v1975 = vpop.f32.mrb[0].mxu0
    %1976 = vdwg.mxu0
    %v1977 = vpack.c.bf16 %v1924, %v1924
    %v1978 = vpack.c.bf16 %v1972, %v1972
    %v1981 = vunpack.c.l.b16 %v1977
    %v1982 = vunpack.c.l.b16 %v1978
    %v1983 = vpack.c.b16 %v1982, %v1981
    %1984 = vrot.lane.b32.xlu0 %v1983, 8
    %v1985 = vpop.permute.xlu0 %1984
    %1987 = vst.msk [vmem:[#allocation2] sm:$0xff] %vm852, %v1985
    %1988 = vrot.lane.b32.xlu0 %v1461, 112
    %v1989 = vpop.permute.xlu0 %1988
    %1990 = vrot.lane.b32.xlu0 %v1534, 112
    %v1991 = vpop.permute.xlu0 %1990
    %v1993 = vsel %vm397, %v1989, 0
    %v1996 = vsel %vm397, %v1991, 0
    %1998 = vmatprep.subr.bf16.mxu0 0
    %1999 = vmatpush1.bf16.xpose.msra.mxu0 %v1996
    %2000 = vmatprep.subr.bf16.mxu0 0
    %2001 = vmatpush1.bf16.xpose.msra.mxu0 0
    %2002 = vmatprep.subr.bf16.mxu0 0
    %2003 = vmatpush1.bf16.xpose.msra.mxu0 0
    %2004 = vmatprep.subr.bf16.mxu0 0
    %2005 = vmatpush1.bf16.xpose.msra.mxu0 0
    %2006 = vmatprep.subr.bf16.mxu0 0
    %2007 = vmatpush1.bf16.xpose.msra.mxu0 0
    %2008 = vmatprep.subr.bf16.mxu0 0
    %2009 = vmatpush1.bf16.xpose.msra.mxu0 0
    %2010 = vmatprep.subr.bf16.mxu0 0
    %2011 = vmatpush1.bf16.xpose.msra.mxu0 0
    %2012 = vmatprep.subr.bf16.mxu0 0
    %2013 = vmatpush1.bf16.xpose.msra.mxu0 0
    %2014 = vmatprep.subr.bf16.mxu0 0
    %2015 = vmatpush1.bf16.xpose.msra.mxu0 0
    %2016 = vmatprep.subr.bf16.mxu0 0
    %2017 = vmatpush1.bf16.xpose.msra.mxu0 0
    %2018 = vmatprep.subr.bf16.mxu0 0
    %2019 = vmatpush1.bf16.xpose.msra.mxu0 0
    %2020 = vmatprep.subr.bf16.mxu0 0
    %2021 = vmatpush1.bf16.xpose.msra.mxu0 0
    %2022 = vmatprep.subr.bf16.mxu0 0
    %2023 = vmatpush1.bf16.xpose.msra.mxu0 0
    %2024 = vmatprep.subr.bf16.mxu0 0
    %2025 = vmatpush1.bf16.xpose.msra.mxu0 0
    %2026 = vmatprep.subr.bf16.mxu0 0
    %2027 = vmatpush1.bf16.xpose.msra.mxu0 0
    %2028 = vmatprep.subr.bf16.mxu0 0
    %2029 = vmatpush1.bf16.xpose.msra.mxu0 0
    %2030 = vmatprep.mubr.bf16.mxu0 0
    %2031 = vmatmul.mubr.bf16.gmra.mrb[0].mxu0 %v1993
    %v2032 = vpop.f32.mrb[0].mxu0
    %v2033 = vadd.f32 0.0, %v2032
    %v2034 = vpop.f32.mrb[0].mxu0
    %v2035 = vpop.f32.mrb[0].mxu0
    %v2036 = vpop.f32.mrb[0].mxu0
    %2037 = vdwg.mxu0
    %2038 = vrot.lane.b32.xlu0 %v1462, 112
    %v2039 = vpop.permute.xlu0 %2038
    %2040 = vrot.lane.b32.xlu0 %v1535, 112
    %v2041 = vpop.permute.xlu0 %2040
    %v2043 = vsel %vm397, %v2039, 0
    %v2046 = vsel %vm397, %v2041, 0
    %2048 = vmatprep.subr.bf16.mxu0 0
    %2049 = vmatpush1.bf16.xpose.msra.mxu0 %v2046
    %2050 = vmatprep.subr.bf16.mxu0 0
    %2051 = vmatpush1.bf16.xpose.msra.mxu0 0
    %2052 = vmatprep.subr.bf16.mxu0 0
    %2053 = vmatpush1.bf16.xpose.msra.mxu0 0
    %2054 = vmatprep.subr.bf16.mxu0 0
    %2055 = vmatpush1.bf16.xpose.msra.mxu0 0
    %2056 = vmatprep.subr.bf16.mxu0 0
    %2057 = vmatpush1.bf16.xpose.msra.mxu0 0
    %2058 = vmatprep.subr.bf16.mxu0 0
    %2059 = vmatpush1.bf16.xpose.msra.mxu0 0
    %2060 = vmatprep.subr.bf16.mxu0 0
    %2061 = vmatpush1.bf16.xpose.msra.mxu0 0
    %2062 = vmatprep.subr.bf16.mxu0 0
    %2063 = vmatpush1.bf16.xpose.msra.mxu0 0
    %2064 = vmatprep.subr.bf16.mxu0 0
    %2065 = vmatpush1.bf16.xpose.msra.mxu0 0
    %2066 = vmatprep.subr.bf16.mxu0 0
    %2067 = vmatpush1.bf16.xpose.msra.mxu0 0
    %2068 = vmatprep.subr.bf16.mxu0 0
    %2069 = vmatpush1.bf16.xpose.msra.mxu0 0
    %2070 = vmatprep.subr.bf16.mxu0 0
    %2071 = vmatpush1.bf16.xpose.msra.mxu0 0
    %2072 = vmatprep.subr.bf16.mxu0 0
    %2073 = vmatpush1.bf16.xpose.msra.mxu0 0
    %2074 = vmatprep.subr.bf16.mxu0 0
    %2075 = vmatpush1.bf16.xpose.msra.mxu0 0
    %2076 = vmatprep.subr.bf16.mxu0 0
    %2077 = vmatpush1.bf16.xpose.msra.mxu0 0
    %2078 = vmatprep.subr.bf16.mxu0 0
    %2079 = vmatpush1.bf16.xpose.msra.mxu0 0
    %2080 = vmatprep.mubr.bf16.mxu0 0
    %2081 = vmatmul.mubr.bf16.gmra.mrb[0].mxu0 %v2043
    %v2082 = vpop.f32.mrb[0].mxu0
    %v2083 = vadd.f32 0.0, %v2082
    %v2084 = vpop.f32.mrb[0].mxu0
    %v2085 = vpop.f32.mrb[0].mxu0
    %v2086 = vpop.f32.mrb[0].mxu0
    %2087 = vdwg.mxu0
    %v2088 = vsel %vm397, %v2033, -inf
    %2089 = vmax.xlane.f32.xlu0 %v2088
    %v2090 = vpop.xlane.xlu0 %2089
    %v2091 = vsel %vm397, %v2083, -inf
    %2092 = vmax.xlane.f32.xlu0 %v2091
    %v2093 = vpop.xlane.xlu0 %2092
    %v2094 = vsub.f32 %v2033, %v2090
    %v2095 = vsub.f32 %v2083, %v2093
    %v2096 = vmul.f32 %v2094, 1.442695
    %v2097 = vpow.pop %v2096
    %v2098 = vmul.f32 %v2095, 1.442695
    %v2099 = vpow.pop %v2098
    %v2100 = vsel %vm397, %v2097, 0.0
    %2101 = vadd.xlane.f32.xlu0 %v2100
    %v2102 = vpop.xlane.xlu0 %2101
    %v2103 = vsel %vm397, %v2099, 0.0
    %2104 = vadd.xlane.f32.xlu0 %v2103
    %v2105 = vpop.xlane.xlu0 %2104
    %v2106 = vrcp.pop %v2102
    %v2107 = vrcp.pop %v2105
    %v2108 = vmul.f32 %v2097, %v2106
    %v2109 = vmul.f32 %v2099, %v2107
    %v2110 = vpack.c.bf16 %v2108, %v2108
    %v2111 = vpack.c.bf16 %v2109, %v2109
    %2112 = vrot.lane.b32.xlu0 %v1534, 80
    %v2113 = vpop.permute.xlu0 %2112
    %v2115 = vsel %vm397, %v2110, 0
    %v2118 = vsel %vm521, %v2113, 0
    %2120 = vmatprep.subr.bf16.mxu0 0
    %2121 = vmatpush1.bf16.msra.mxu0 %v2118
    %2122 = vmatprep.subr.bf16.mxu0 0
    %2123 = vmatpush1.bf16.msra.mxu0 0
    %2124 = vmatprep.subr.bf16.mxu0 0
    %2125 = vmatpush1.bf16.msra.mxu0 0
    %2126 = vmatprep.subr.bf16.mxu0 0
    %2127 = vmatpush1.bf16.msra.mxu0 0
    %2128 = vmatprep.subr.bf16.mxu0 0
    %2129 = vmatpush1.bf16.msra.mxu0 0
    %2130 = vmatprep.subr.bf16.mxu0 0
    %2131 = vmatpush1.bf16.msra.mxu0 0
    %2132 = vmatprep.subr.bf16.mxu0 0
    %2133 = vmatpush1.bf16.msra.mxu0 0
    %2134 = vmatprep.subr.bf16.mxu0 0
    %2135 = vmatpush1.bf16.msra.mxu0 0
    %2136 = vmatprep.subr.bf16.mxu0 0
    %2137 = vmatpush1.bf16.msra.mxu0 0
    %2138 = vmatprep.subr.bf16.mxu0 0
    %2139 = vmatpush1.bf16.msra.mxu0 0
    %2140 = vmatprep.subr.bf16.mxu0 0
    %2141 = vmatpush1.bf16.msra.mxu0 0
    %2142 = vmatprep.subr.bf16.mxu0 0
    %2143 = vmatpush1.bf16.msra.mxu0 0
    %2144 = vmatprep.subr.bf16.mxu0 0
    %2145 = vmatpush1.bf16.msra.mxu0 0
    %2146 = vmatprep.subr.bf16.mxu0 0
    %2147 = vmatpush1.bf16.msra.mxu0 0
    %2148 = vmatprep.subr.bf16.mxu0 0
    %2149 = vmatpush1.bf16.msra.mxu0 0
    %2150 = vmatprep.subr.bf16.mxu0 0
    %2151 = vmatpush1.bf16.msra.mxu0 0
    %2152 = vmatprep.mubr.bf16.mxu0 0
    %2153 = vmatmul.mubr.bf16.gmra.mrb[0].mxu0 %v2115
    %v2154 = vpop.f32.mrb[0].mxu0
    %v2155 = vadd.f32 0.0, %v2154
    %v2156 = vpop.f32.mrb[0].mxu0
    %v2157 = vpop.f32.mrb[0].mxu0
    %v2158 = vpop.f32.mrb[0].mxu0
    %2159 = vdwg.mxu0
    %2160 = vrot.lane.b32.xlu0 %v1535, 80
    %v2161 = vpop.permute.xlu0 %2160
    %v2163 = vsel %vm397, %v2111, 0
    %v2166 = vsel %vm521, %v2161, 0
    %2168 = vmatprep.subr.bf16.mxu0 0
    %2169 = vmatpush1.bf16.msra.mxu0 %v2166
    %2170 = vmatprep.subr.bf16.mxu0 0
    %2171 = vmatpush1.bf16.msra.mxu0 0
    %2172 = vmatprep.subr.bf16.mxu0 0
    %2173 = vmatpush1.bf16.msra.mxu0 0
    %2174 = vmatprep.subr.bf16.mxu0 0
    %2175 = vmatpush1.bf16.msra.mxu0 0
    %2176 = vmatprep.subr.bf16.mxu0 0
    %2177 = vmatpush1.bf16.msra.mxu0 0
    %2178 = vmatprep.subr.bf16.mxu0 0
    %2179 = vmatpush1.bf16.msra.mxu0 0
    %2180 = vmatprep.subr.bf16.mxu0 0
    %2181 = vmatpush1.bf16.msra.mxu0 0
    %2182 = vmatprep.subr.bf16.mxu0 0
    %2183 = vmatpush1.bf16.msra.mxu0 0
    %2184 = vmatprep.subr.bf16.mxu0 0
    %2185 = vmatpush1.bf16.msra.mxu0 0
    %2186 = vmatprep.subr.bf16.mxu0 0
    %2187 = vmatpush1.bf16.msra.mxu0 0
    %2188 = vmatprep.subr.bf16.mxu0 0
    %2189 = vmatpush1.bf16.msra.mxu0 0
    %2190 = vmatprep.subr.bf16.mxu0 0
    %2191 = vmatpush1.bf16.msra.mxu0 0
    %2192 = vmatprep.subr.bf16.mxu0 0
    %2193 = vmatpush1.bf16.msra.mxu0 0
    %2194 = vmatprep.subr.bf16.mxu0 0
    %2195 = vmatpush1.bf16.msra.mxu0 0
    %2196 = vmatprep.subr.bf16.mxu0 0
    %2197 = vmatpush1.bf16.msra.mxu0 0
    %2198 = vmatprep.subr.bf16.mxu0 0
    %2199 = vmatpush1.bf16.msra.mxu0 0
    %2200 = vmatprep.mubr.bf16.mxu0 0
    %2201 = vmatmul.mubr.bf16.gmra.mrb[0].mxu0 %v2163
    %v2202 = vpop.f32.mrb[0].mxu0
    %v2203 = vadd.f32 0.0, %v2202
    %v2204 = vpop.f32.mrb[0].mxu0
    %v2205 = vpop.f32.mrb[0].mxu0
    %v2206 = vpop.f32.mrb[0].mxu0
    %2207 = vdwg.mxu0
    %v2208 = vpack.c.bf16 %v2155, %v2155
    %v2209 = vpack.c.bf16 %v2203, %v2203
    %v2212 = vunpack.c.l.b16 %v2208
    %v2213 = vunpack.c.l.b16 %v2209
    %v2214 = vpack.c.b16 %v2213, %v2212
    %2215 = vrot.lane.b32.xlu0 %v2214, 16
    %v2216 = vpop.permute.xlu0 %2215
    %2218 = vst.msk [vmem:[#allocation2] sm:$0xff] %vm1084, %v2216
    %2219 = vrot.lane.b32.xlu0 %v1461, 104
    %v2220 = vpop.permute.xlu0 %2219
    %2221 = vrot.lane.b32.xlu0 %v1534, 104
    %v2222 = vpop.permute.xlu0 %2221
    %v2224 = vsel %vm397, %v2220, 0
    %v2227 = vsel %vm397, %v2222, 0
    %2229 = vmatprep.subr.bf16.mxu0 0
    %2230 = vmatpush1.bf16.xpose.msra.mxu0 %v2227
    %2231 = vmatprep.subr.bf16.mxu0 0
    %2232 = vmatpush1.bf16.xpose.msra.mxu0 0
    %2233 = vmatprep.subr.bf16.mxu0 0
    %2234 = vmatpush1.bf16.xpose.msra.mxu0 0
    %2235 = vmatprep.subr.bf16.mxu0 0
    %2236 = vmatpush1.bf16.xpose.msra.mxu0 0
    %2237 = vmatprep.subr.bf16.mxu0 0
    %2238 = vmatpush1.bf16.xpose.msra.mxu0 0
    %2239 = vmatprep.subr.bf16.mxu0 0
    %2240 = vmatpush1.bf16.xpose.msra.mxu0 0
    %2241 = vmatprep.subr.bf16.mxu0 0
    %2242 = vmatpush1.bf16.xpose.msra.mxu0 0
    %2243 = vmatprep.subr.bf16.mxu0 0
    %2244 = vmatpush1.bf16.xpose.msra.mxu0 0
    %2245 = vmatprep.subr.bf16.mxu0 0
    %2246 = vmatpush1.bf16.xpose.msra.mxu0 0
    %2247 = vmatprep.subr.bf16.mxu0 0
    %2248 = vmatpush1.bf16.xpose.msra.mxu0 0
    %2249 = vmatprep.subr.bf16.mxu0 0
    %2250 = vmatpush1.bf16.xpose.msra.mxu0 0
    %2251 = vmatprep.subr.bf16.mxu0 0
    %2252 = vmatpush1.bf16.xpose.msra.mxu0 0
    %2253 = vmatprep.subr.bf16.mxu0 0
    %2254 = vmatpush1.bf16.xpose.msra.mxu0 0
    %2255 = vmatprep.subr.bf16.mxu0 0
    %2256 = vmatpush1.bf16.xpose.msra.mxu0 0
    %2257 = vmatprep.subr.bf16.mxu0 0
    %2258 = vmatpush1.bf16.xpose.msra.mxu0 0
    %2259 = vmatprep.subr.bf16.mxu0 0
    %2260 = vmatpush1.bf16.xpose.msra.mxu0 0
    %2261 = vmatprep.mubr.bf16.mxu0 0
    %2262 = vmatmul.mubr.bf16.gmra.mrb[0].mxu0 %v2224
    %v2263 = vpop.f32.mrb[0].mxu0
    %v2264 = vadd.f32 0.0, %v2263
    %v2265 = vpop.f32.mrb[0].mxu0
    %v2266 = vpop.f32.mrb[0].mxu0
    %v2267 = vpop.f32.mrb[0].mxu0
    %2268 = vdwg.mxu0
    %2269 = vrot.lane.b32.xlu0 %v1462, 104
    %v2270 = vpop.permute.xlu0 %2269
    %2271 = vrot.lane.b32.xlu0 %v1535, 104
    %v2272 = vpop.permute.xlu0 %2271
    %v2274 = vsel %vm397, %v2270, 0
    %v2277 = vsel %vm397, %v2272, 0
    %2279 = vmatprep.subr.bf16.mxu0 0
    %2280 = vmatpush1.bf16.xpose.msra.mxu0 %v2277
    %2281 = vmatprep.subr.bf16.mxu0 0
    %2282 = vmatpush1.bf16.xpose.msra.mxu0 0
    %2283 = vmatprep.subr.bf16.mxu0 0
    %2284 = vmatpush1.bf16.xpose.msra.mxu0 0
    %2285 = vmatprep.subr.bf16.mxu0 0
    %2286 = vmatpush1.bf16.xpose.msra.mxu0 0
    %2287 = vmatprep.subr.bf16.mxu0 0
    %2288 = vmatpush1.bf16.xpose.msra.mxu0 0
    %2289 = vmatprep.subr.bf16.mxu0 0
    %2290 = vmatpush1.bf16.xpose.msra.mxu0 0
    %2291 = vmatprep.subr.bf16.mxu0 0
    %2292 = vmatpush1.bf16.xpose.msra.mxu0 0
    %2293 = vmatprep.subr.bf16.mxu0 0
    %2294 = vmatpush1.bf16.xpose.msra.mxu0 0
    %2295 = vmatprep.subr.bf16.mxu0 0
    %2296 = vmatpush1.bf16.xpose.msra.mxu0 0
    %2297 = vmatprep.subr.bf16.mxu0 0
    %2298 = vmatpush1.bf16.xpose.msra.mxu0 0
    %2299 = vmatprep.subr.bf16.mxu0 0
    %2300 = vmatpush1.bf16.xpose.msra.mxu0 0
    %2301 = vmatprep.subr.bf16.mxu0 0
    %2302 = vmatpush1.bf16.xpose.msra.mxu0 0
    %2303 = vmatprep.subr.bf16.mxu0 0
    %2304 = vmatpush1.bf16.xpose.msra.mxu0 0
    %2305 = vmatprep.subr.bf16.mxu0 0
    %2306 = vmatpush1.bf16.xpose.msra.mxu0 0
    %2307 = vmatprep.subr.bf16.mxu0 0
    %2308 = vmatpush1.bf16.xpose.msra.mxu0 0
    %2309 = vmatprep.subr.bf16.mxu0 0
    %2310 = vmatpush1.bf16.xpose.msra.mxu0 0
    %2311 = vmatprep.mubr.bf16.mxu0 0
    %2312 = vmatmul.mubr.bf16.gmra.mrb[0].mxu0 %v2274
    %v2313 = vpop.f32.mrb[0].mxu0
    %v2314 = vadd.f32 0.0, %v2313
    %v2315 = vpop.f32.mrb[0].mxu0
    %v2316 = vpop.f32.mrb[0].mxu0
    %v2317 = vpop.f32.mrb[0].mxu0
    %2318 = vdwg.mxu0
    %v2319 = vsel %vm397, %v2264, -inf
    %2320 = vmax.xlane.f32.xlu0 %v2319
    %v2321 = vpop.xlane.xlu0 %2320
    %v2322 = vsel %vm397, %v2314, -inf
    %2323 = vmax.xlane.f32.xlu0 %v2322
    %v2324 = vpop.xlane.xlu0 %2323
    %v2325 = vsub.f32 %v2264, %v2321
    %v2326 = vsub.f32 %v2314, %v2324
    %v2327 = vmul.f32 %v2325, 1.442695
    %v2328 = vpow.pop %v2327
    %v2329 = vmul.f32 %v2326, 1.442695
    %v2330 = vpow.pop %v2329
    %v2331 = vsel %vm397, %v2328, 0.0
    %2332 = vadd.xlane.f32.xlu0 %v2331
    %v2333 = vpop.xlane.xlu0 %2332
    %v2334 = vsel %vm397, %v2330, 0.0
    %2335 = vadd.xlane.f32.xlu0 %v2334
    %v2336 = vpop.xlane.xlu0 %2335
    %v2337 = vrcp.pop %v2333
    %v2338 = vrcp.pop %v2336
    %v2339 = vmul.f32 %v2328, %v2337
    %v2340 = vmul.f32 %v2330, %v2338
    %v2341 = vpack.c.bf16 %v2339, %v2339
    %v2342 = vpack.c.bf16 %v2340, %v2340
    %2343 = vrot.lane.b32.xlu0 %v1534, 72
    %v2344 = vpop.permute.xlu0 %2343
    %v2346 = vsel %vm397, %v2341, 0
    %v2349 = vsel %vm521, %v2344, 0
    %2351 = vmatprep.subr.bf16.mxu0 0
    %2352 = vmatpush1.bf16.msra.mxu0 %v2349
    %2353 = vmatprep.subr.bf16.mxu0 0
    %2354 = vmatpush1.bf16.msra.mxu0 0
    %2355 = vmatprep.subr.bf16.mxu0 0
    %2356 = vmatpush1.bf16.msra.mxu0 0
    %2357 = vmatprep.subr.bf16.mxu0 0
    %2358 = vmatpush1.bf16.msra.mxu0 0
    %2359 = vmatprep.subr.bf16.mxu0 0
    %2360 = vmatpush1.bf16.msra.mxu0 0
    %2361 = vmatprep.subr.bf16.mxu0 0
    %2362 = vmatpush1.bf16.msra.mxu0 0
    %2363 = vmatprep.subr.bf16.mxu0 0
    %2364 = vmatpush1.bf16.msra.mxu0 0
    %2365 = vmatprep.subr.bf16.mxu0 0
    %2366 = vmatpush1.bf16.msra.mxu0 0
    %2367 = vmatprep.subr.bf16.mxu0 0
    %2368 = vmatpush1.bf16.msra.mxu0 0
    %2369 = vmatprep.subr.bf16.mxu0 0
    %2370 = vmatpush1.bf16.msra.mxu0 0
    %2371 = vmatprep.subr.bf16.mxu0 0
    %2372 = vmatpush1.bf16.msra.mxu0 0
    %2373 = vmatprep.subr.bf16.mxu0 0
    %2374 = vmatpush1.bf16.msra.mxu0 0
    %2375 = vmatprep.subr.bf16.mxu0 0
    %2376 = vmatpush1.bf16.msra.mxu0 0
    %2377 = vmatprep.subr.bf16.mxu0 0
    %2378 = vmatpush1.bf16.msra.mxu0 0
    %2379 = vmatprep.subr.bf16.mxu0 0
    %2380 = vmatpush1.bf16.msra.mxu0 0
    %2381 = vmatprep.subr.bf16.mxu0 0
    %2382 = vmatpush1.bf16.msra.mxu0 0
    %2383 = vmatprep.mubr.bf16.mxu0 0
    %2384 = vmatmul.mubr.bf16.gmra.mrb[0].mxu0 %v2346
    %v2385 = vpop.f32.mrb[0].mxu0
    %v2386 = vadd.f32 0.0, %v2385
    %v2387 = vpop.f32.mrb[0].mxu0
    %v2388 = vpop.f32.mrb[0].mxu0
    %v2389 = vpop.f32.mrb[0].mxu0
    %2390 = vdwg.mxu0
    %2391 = vrot.lane.b32.xlu0 %v1535, 72
    %v2392 = vpop.permute.xlu0 %2391
    %v2394 = vsel %vm397, %v2342, 0
    %v2397 = vsel %vm521, %v2392, 0
    %2399 = vmatprep.subr.bf16.mxu0 0
    %2400 = vmatpush1.bf16.msra.mxu0 %v2397
    %2401 = vmatprep.subr.bf16.mxu0 0
    %2402 = vmatpush1.bf16.msra.mxu0 0
    %2403 = vmatprep.subr.bf16.mxu0 0
    %2404 = vmatpush1.bf16.msra.mxu0 0
    %2405 = vmatprep.subr.bf16.mxu0 0
    %2406 = vmatpush1.bf16.msra.mxu0 0
    %2407 = vmatprep.subr.bf16.mxu0 0
    %2408 = vmatpush1.bf16.msra.mxu0 0
    %2409 = vmatprep.subr.bf16.mxu0 0
    %2410 = vmatpush1.bf16.msra.mxu0 0
    %2411 = vmatprep.subr.bf16.mxu0 0
    %2412 = vmatpush1.bf16.msra.mxu0 0
    %2413 = vmatprep.subr.bf16.mxu0 0
    %2414 = vmatpush1.bf16.msra.mxu0 0
    %2415 = vmatprep.subr.bf16.mxu0 0
    %2416 = vmatpush1.bf16.msra.mxu0 0
    %2417 = vmatprep.subr.bf16.mxu0 0
    %2418 = vmatpush1.bf16.msra.mxu0 0
    %2419 = vmatprep.subr.bf16.mxu0 0
    %2420 = vmatpush1.bf16.msra.mxu0 0
    %2421 = vmatprep.subr.bf16.mxu0 0
    %2422 = vmatpush1.bf16.msra.mxu0 0
    %2423 = vmatprep.subr.bf16.mxu0 0
    %2424 = vmatpush1.bf16.msra.mxu0 0
    %2425 = vmatprep.subr.bf16.mxu0 0
    %2426 = vmatpush1.bf16.msra.mxu0 0
    %2427 = vmatprep.subr.bf16.mxu0 0
    %2428 = vmatpush1.bf16.msra.mxu0 0
    %2429 = vmatprep.subr.bf16.mxu0 0
    %2430 = vmatpush1.bf16.msra.mxu0 0
    %2431 = vmatprep.mubr.bf16.mxu0 0
    %2432 = vmatmul.mubr.bf16.gmra.mrb[0].mxu0 %v2394
    %v2433 = vpop.f32.mrb[0].mxu0
    %v2434 = vadd.f32 0.0, %v2433
    %v2435 = vpop.f32.mrb[0].mxu0
    %v2436 = vpop.f32.mrb[0].mxu0
    %v2437 = vpop.f32.mrb[0].mxu0
    %2438 = vdwg.mxu0
    %v2439 = vpack.c.bf16 %v2386, %v2386
    %v2440 = vpack.c.bf16 %v2434, %v2434
    %v2443 = vunpack.c.l.b16 %v2439
    %v2444 = vunpack.c.l.b16 %v2440
    %v2445 = vpack.c.b16 %v2444, %v2443
    %2446 = vrot.lane.b32.xlu0 %v2445, 24
    %v2447 = vpop.permute.xlu0 %2446
    %2449 = vst.msk [vmem:[#allocation2] sm:$0xff] %vm1316, %v2447
    %v2450 = vld [vmem:[#allocation2] sm:$0xff]
    %v2451 = vld [vmem:[#allocation20] sm:$0xf]
    %v2452 = vld [vmem:[#allocation20 + $0x4] sm:$0xf]
    %v2453 = vld [vmem:[#allocation20 + $0x8] sm:$0xf]
    %v2454 = vld [vmem:[#allocation20 + $0xc] sm:$0xf]
    %v2455 = vld [vmem:[#allocation21] sm:$0x1]
    %v2457 = vlaneseq
    %v2458 = vshrl.u32 %v2457, 7
    %v2459 = vsub.s32 0, %v2458
    %v2460 = vrot.slane %v2455, %v2459
    %v2466 = vunpack.c.l.b16 %v2451
    %v2467 = vunpack.c.l.b16 %v2452
    %v2468 = vunpack.c.l.b16 %v2453
    %v2469 = vunpack.c.l.b16 %v2454
    %v2470 = vpack.c.b16 %v2467, %v2466
    %v2471 = vpack.c.b16 %v2469, %v2468
    %v2475 = vsel %vm344, %v2450, 0
    %2477 = vmatprep.subr.bf16.mxu0 0
    %2478 = vmatpush1.bf16.msra.mxu0 %v2470
    %2479 = vmatprep.subr.bf16.mxu0 0
    %2480 = vmatpush1.bf16.msra.mxu0 %v2471
    %2481 = vmatprep.subr.bf16.mxu0 0
    %2482 = vmatpush1.bf16.msra.mxu0 0
    %2483 = vmatprep.subr.bf16.mxu0 0
    %2484 = vmatpush1.bf16.msra.mxu0 0
    %2485 = vmatprep.subr.bf16.mxu0 0
    %2486 = vmatpush1.bf16.msra.mxu0 0
    %2487 = vmatprep.subr.bf16.mxu0 0
    %2488 = vmatpush1.bf16.msra.mxu0 0
    %2489 = vmatprep.subr.bf16.mxu0 0
    %2490 = vmatpush1.bf16.msra.mxu0 0
    %2491 = vmatprep.subr.bf16.mxu0 0
    %2492 = vmatpush1.bf16.msra.mxu0 0
    %2493 = vmatprep.subr.bf16.mxu0 0
    %2494 = vmatpush1.bf16.msra.mxu0 0
    %2495 = vmatprep.subr.bf16.mxu0 0
    %2496 = vmatpush1.bf16.msra.mxu0 0
    %2497 = vmatprep.subr.bf16.mxu0 0
    %2498 = vmatpush1.bf16.msra.mxu0 0
    %2499 = vmatprep.subr.bf16.mxu0 0
    %2500 = vmatpush1.bf16.msra.mxu0 0
    %2501 = vmatprep.subr.bf16.mxu0 0
    %2502 = vmatpush1.bf16.msra.mxu0 0
    %2503 = vmatprep.subr.bf16.mxu0 0
    %2504 = vmatpush1.bf16.msra.mxu0 0
    %2505 = vmatprep.subr.bf16.mxu0 0
    %2506 = vmatpush1.bf16.msra.mxu0 0
    %2507 = vmatprep.subr.bf16.mxu0 0
    %2508 = vmatpush1.bf16.msra.mxu0 0
    %2509 = vmatprep.mubr.bf16.mxu0 0
    %2510 = vmatmul.mubr.bf16.gmra.mrb[0].mxu0 %v2475
    %v2511 = vpop.f32.mrb[0].mxu0
    %v2512 = vadd.f32 %v2460, %v2511
    %v2513 = vpop.f32.mrb[0].mxu0
    %v2514 = vpop.f32.mrb[0].mxu0
    %v2515 = vadd.f32 %v2460, %v2514
    %v2516 = vpop.f32.mrb[0].mxu0
    %2517 = vdwg.mxu0
    %v2518 = vadd.f32 %v1386, %v2512
    %v2519 = vadd.f32 %v1387, %v2515
    %v2520 = vld [vmem:[#allocation29] sm:$0x1]
    %v2521 = vld [vmem:[#allocation30] sm:$0x1]
    %v2522 = vsel %vm344, %v2518, 0.0
    %2523 = vadd.xlane.f32.xlu0 %v2522
    %v2524 = vpop.xlane.xlu0 %2523
    %v2525 = vsel %vm344, %v2519, 0.0
    %2526 = vadd.xlane.f32.xlu0 %v2525
    %v2527 = vpop.xlane.xlu0 %2526
    %v2528 = vrcp.pop 32.0
    %v2529 = vmul.f32 %v2524, %v2528
    %v2530 = vmul.f32 %v2527, %v2528
    %v2531 = vsub.f32 %v2518, %v2529
    %v2532 = vsub.f32 %v2519, %v2530
    %v2533 = vmul.f32 %v2531, %v2531
    %v2534 = vmul.f32 %v2532, %v2532
    %v2535 = vsel %vm344, %v2533, 0.0
    %2536 = vadd.xlane.f32.xlu0 %v2535
    %v2537 = vpop.xlane.xlu0 %2536
    %v2538 = vsel %vm344, %v2534, 0.0
    %2539 = vadd.xlane.f32.xlu0 %v2538
    %v2540 = vpop.xlane.xlu0 %2539
    %v2541 = vmul.f32 %v2537, %v2528
    %v2542 = vmul.f32 %v2540, %v2528
    %v2543 = vadd.f32 %v2541, 1e-05
    %v2544 = vadd.f32 %v2542, 1e-05
    %v2545 = vrsqrt.pop %v2543
    %v2546 = vrsqrt.pop %v2544
    %v2547 = vmul.f32 %v2531, %v2545
    %v2548 = vmul.f32 %v2532, %v2546
    %v2550 = vlaneseq
    %v2551 = vshrl.u32 %v2550, 7
    %v2552 = vsub.s32 0, %v2551
    %v2553 = vrot.slane %v2520, %v2552
    %v2555 = vmul.f32 %v2547, %v2553
    %v2556 = vmul.f32 %v2548, %v2553
    %v2558 = vlaneseq
    %v2559 = vshrl.u32 %v2558, 7
    %v2560 = vsub.s32 0, %v2559
    %v2561 = vrot.slane %v2521, %v2560
    %v2563 = vadd.f32 %v2555, %v2561
    %v2564 = vadd.f32 %v2556, %v2561
    %v2565 = vpack.c.bf16 %v2564, %v2563
    %v2566 = vld [vmem:[#allocation23] sm:$0xf]
    %v2567 = vld [vmem:[#allocation23 + $0x4] sm:$0xf]
    %v2568 = vld [vmem:[#allocation23 + $0x8] sm:$0xf]
    %v2569 = vld [vmem:[#allocation23 + $0xc] sm:$0xf]
    %v2570 = vld [vmem:[#allocation24] sm:$0x1]
    %v2572 = vlaneseq
    %v2573 = vshrl.u32 %v2572, 7
    %v2574 = vsub.s32 0, %v2573
    %v2575 = vrot.slane %v2570, %v2574
    %v2581 = vunpack.c.l.b16 %v2566
    %v2582 = vunpack.c.l.b16 %v2567
    %v2583 = vunpack.c.l.b16 %v2568
    %v2584 = vunpack.c.l.b16 %v2569
    %v2585 = vpack.c.b16 %v2582, %v2581
    %v2586 = vpack.c.b16 %v2584, %v2583
    %v2590 = vsel %vm344, %v2565, 0
    %2592 = vmatprep.subr.bf16.mxu0 0
    %2593 = vmatpush1.bf16.msra.mxu0 %v2585
    %2594 = vmatprep.subr.bf16.mxu0 0
    %2595 = vmatpush1.bf16.msra.mxu0 %v2586
    %2596 = vmatprep.subr.bf16.mxu0 0
    %2597 = vmatpush1.bf16.msra.mxu0 0
    %2598 = vmatprep.subr.bf16.mxu0 0
    %2599 = vmatpush1.bf16.msra.mxu0 0
    %2600 = vmatprep.subr.bf16.mxu0 0
    %2601 = vmatpush1.bf16.msra.mxu0 0
    %2602 = vmatprep.subr.bf16.mxu0 0
    %2603 = vmatpush1.bf16.msra.mxu0 0
    %2604 = vmatprep.subr.bf16.mxu0 0
    %2605 = vmatpush1.bf16.msra.mxu0 0
    %2606 = vmatprep.subr.bf16.mxu0 0
    %2607 = vmatpush1.bf16.msra.mxu0 0
    %2608 = vmatprep.subr.bf16.mxu0 0
    %2609 = vmatpush1.bf16.msra.mxu0 0
    %2610 = vmatprep.subr.bf16.mxu0 0
    %2611 = vmatpush1.bf16.msra.mxu0 0
    %2612 = vmatprep.subr.bf16.mxu0 0
    %2613 = vmatpush1.bf16.msra.mxu0 0
    %2614 = vmatprep.subr.bf16.mxu0 0
    %2615 = vmatpush1.bf16.msra.mxu0 0
    %2616 = vmatprep.subr.bf16.mxu0 0
    %2617 = vmatpush1.bf16.msra.mxu0 0
    %2618 = vmatprep.subr.bf16.mxu0 0
    %2619 = vmatpush1.bf16.msra.mxu0 0
    %2620 = vmatprep.subr.bf16.mxu0 0
    %2621 = vmatpush1.bf16.msra.mxu0 0
    %2622 = vmatprep.subr.bf16.mxu0 0
    %2623 = vmatpush1.bf16.msra.mxu0 0
    %2624 = vmatprep.mubr.bf16.mxu0 0
    %2625 = vmatmul.mubr.bf16.gmra.mrb[0].mxu0 %v2590
    %v2626 = vpop.f32.mrb[0].mxu0
    %v2627 = vadd.f32 %v2575, %v2626
    %v2628 = vpop.f32.mrb[0].mxu0
    %v2629 = vpop.f32.mrb[0].mxu0
    %v2630 = vadd.f32 %v2575, %v2629
    %v2631 = vpop.f32.mrb[0].mxu0
    %2632 = vdwg.mxu0
    %v2633 = vpack.c.bf16 %v2630, %v2627
    %v2634 = vld [vmem:[#allocation26] sm:$0xf]
    %v2635 = vld [vmem:[#allocation26 + $0x4] sm:$0xf]
    %v2636 = vld [vmem:[#allocation26 + $0x8] sm:$0xf]
    %v2637 = vld [vmem:[#allocation26 + $0xc] sm:$0xf]
    %v2638 = vld [vmem:[#allocation27] sm:$0x1]
    %v2640 = vlaneseq
    %v2641 = vshrl.u32 %v2640, 7
    %v2642 = vsub.s32 0, %v2641
    %v2643 = vrot.slane %v2638, %v2642
    %v2649 = vunpack.c.l.b16 %v2634
    %v2650 = vunpack.c.l.b16 %v2635
    %v2651 = vunpack.c.l.b16 %v2636
    %v2652 = vunpack.c.l.b16 %v2637
    %v2653 = vpack.c.b16 %v2650, %v2649
    %v2654 = vpack.c.b16 %v2652, %v2651
    %v2658 = vsel %vm344, %v2633, 0
    %2660 = vmatprep.subr.bf16.mxu0 0
    %2661 = vmatpush1.bf16.msra.mxu0 %v2653
    %2662 = vmatprep.subr.bf16.mxu0 0
    %2663 = vmatpush1.bf16.msra.mxu0 %v2654
    %2664 = vmatprep.subr.bf16.mxu0 0
    %2665 = vmatpush1.bf16.msra.mxu0 0
    %2666 = vmatprep.subr.bf16.mxu0 0
    %2667 = vmatpush1.bf16.msra.mxu0 0
    %2668 = vmatprep.subr.bf16.mxu0 0
    %2669 = vmatpush1.bf16.msra.mxu0 0
    %2670 = vmatprep.subr.bf16.mxu0 0
    %2671 = vmatpush1.bf16.msra.mxu0 0
    %2672 = vmatprep.subr.bf16.mxu0 0
    %2673 = vmatpush1.bf16.msra.mxu0 0
    %2674 = vmatprep.subr.bf16.mxu0 0
    %2675 = vmatpush1.bf16.msra.mxu0 0
    %2676 = vmatprep.subr.bf16.mxu0 0
    %2677 = vmatpush1.bf16.msra.mxu0 0
    %2678 = vmatprep.subr.bf16.mxu0 0
    %2679 = vmatpush1.bf16.msra.mxu0 0
    %2680 = vmatprep.subr.bf16.mxu0 0
    %2681 = vmatpush1.bf16.msra.mxu0 0
    %2682 = vmatprep.subr.bf16.mxu0 0
    %2683 = vmatpush1.bf16.msra.mxu0 0
    %2684 = vmatprep.subr.bf16.mxu0 0
    %2685 = vmatpush1.bf16.msra.mxu0 0
    %2686 = vmatprep.subr.bf16.mxu0 0
    %2687 = vmatpush1.bf16.msra.mxu0 0
    %2688 = vmatprep.subr.bf16.mxu0 0
    %2689 = vmatpush1.bf16.msra.mxu0 0
    %2690 = vmatprep.subr.bf16.mxu0 0
    %2691 = vmatpush1.bf16.msra.mxu0 0
    %2692 = vmatprep.mubr.bf16.mxu0 0
    %2693 = vmatmul.mubr.bf16.gmra.mrb[0].mxu0 %v2658
    %v2694 = vpop.f32.mrb[0].mxu0
    %v2695 = vadd.f32 %v2643, %v2694
    %v2696 = vpop.f32.mrb[0].mxu0
    %v2697 = vpop.f32.mrb[0].mxu0
    %v2698 = vadd.f32 %v2643, %v2697
    %v2699 = vpop.f32.mrb[0].mxu0
    %2700 = vdwg.mxu0
    %v2701 = vadd.f32 %v2563, %v2695
    %v2702 = vadd.f32 %v2564, %v2698
    %v2703 = vadd.f32 %v2701, %v2563
    %v2704 = vadd.f32 %v2702, %v2564
    %v2705 = vld [vmem:[#allocation32] sm:$0x1]
    %v2706 = vld [vmem:[#allocation33] sm:$0x1]
    %v2707 = vsel %vm344, %v2703, 0.0
    %2708 = vadd.xlane.f32.xlu0 %v2707
    %v2709 = vpop.xlane.xlu0 %2708
    %v2710 = vsel %vm344, %v2704, 0.0
    %2711 = vadd.xlane.f32.xlu0 %v2710
    %v2712 = vpop.xlane.xlu0 %2711
    %v2713 = vmul.f32 %v2709, %v2528
    %v2714 = vmul.f32 %v2712, %v2528
    %v2715 = vsub.f32 %v2703, %v2713
    %v2716 = vsub.f32 %v2704, %v2714
    %v2717 = vmul.f32 %v2715, %v2715
    %v2718 = vmul.f32 %v2716, %v2716
    %v2719 = vsel %vm344, %v2717, 0.0
    %2720 = vadd.xlane.f32.xlu0 %v2719
    %v2721 = vpop.xlane.xlu0 %2720
    %v2722 = vsel %vm344, %v2718, 0.0
    %2723 = vadd.xlane.f32.xlu0 %v2722
    %v2724 = vpop.xlane.xlu0 %2723
    %v2725 = vmul.f32 %v2721, %v2528
    %v2726 = vmul.f32 %v2724, %v2528
    %v2727 = vadd.f32 %v2725, 1e-05
    %v2728 = vadd.f32 %v2726, 1e-05
    %v2729 = vrsqrt.pop %v2727
    %v2730 = vrsqrt.pop %v2728
    %v2731 = vmul.f32 %v2715, %v2729
    %v2732 = vmul.f32 %v2716, %v2730
    %v2734 = vlaneseq
    %v2735 = vshrl.u32 %v2734, 7
    %v2736 = vsub.s32 0, %v2735
    %v2737 = vrot.slane %v2705, %v2736
    %v2739 = vmul.f32 %v2731, %v2737
    %v2740 = vmul.f32 %v2732, %v2737
    %v2742 = vlaneseq
    %v2743 = vshrl.u32 %v2742, 7
    %v2744 = vsub.s32 0, %v2743
    %v2745 = vrot.slane %v2706, %v2744
    %v2747 = vadd.f32 %v2739, %v2745
    %v2748 = vadd.f32 %v2740, %v2745
    %2749 = vst.msk [vmem:[#allocation35] sm:$0xff] %vm344, %v2747
    %2750 = vst.msk [vmem:[#allocation35 + $0x8] sm:$0xff] %vm344, %v2748
    // Predicated region
    $region162: #{tpu_custom_call.1} parent=1 // pred_check
      _
    $region163: #{tpu_custom_call.1} parent=1 // pred_check_branch
      %2752 = sbr.rel (0) target = $region165
    $region164: #{tpu_custom_call.1} parent=1 // pred_region
      %s2754 = ssub.s32 256, 256
      %2755 = vsyncadd [#allocation5], %s2754
      %s2756 = sshll.u32 [#allocation35], 4
      %s2757 = int_to_ptr.vmem [resolvable:$true] %s2756
      %2762 = dma.vmem_to_hbm [thread:$0]  %s2757, 256, %s20, [#allocation5], 128, 128, 8
    $region165: #{tpu_custom_call.1} parent=1 // pred_fallthru
      _
    // Predicated region
    $region166: #{tpu_custom_call.1} parent=1 // pred_check
      _
    $region167: #{tpu_custom_call.1} parent=1 // pred_check_branch
      %2764 = sbr.rel (0) target = $region169
    $region168: #{tpu_custom_call.1} parent=1 // pred_region
      %2765 = dma.done [#allocation5], 256
    $region169: #{tpu_custom_call.1} parent=1 // pred_fallthru
      _
    %2766 = vsyncpa [#allocation4], 1
    %2767 = vsyncpa [#allocation7], 1
    %2768 = vsyncpa [#allocation10], 1
    %2769 = vsyncpa [#allocation13], 1
    %2770 = vsyncpa [#allocation16], 1
    %2771 = vsyncpa [#allocation19], 1
    %2772 = vsyncpa [#allocation22], 1
    %2773 = vsyncpa [#allocation25], 1
    %2774 = vsyncpa [#allocation28], 1
    %2775 = vsyncpa [#allocation31], 1
    %2776 = vsyncpa [#allocation34], 1
    %2777 = vsyncpa [#allocation5], 1

</llo_original>
